<compile_context>
chip_gen: v5e
topology: v5e:2x2
jax: 0.10.0
libtpu: 0.0.40
codegen_flags: <defaults>
</compile_context>

<pallas_src>
import functools
import numpy as np

import jax
import jax.numpy as jnp
from jax.experimental import pallas as pl
from jax.experimental.pallas import tpu as pltpu

# ----------------------------- model config (small, consistent with the module) ---------------
BATCH = 2
TOKEN_NUM = 16          # seq_len
VAE_DIM = 8             # token_embed_dim / vae_embed_dim
EMBED_DIM = 64          # encoder_embed_dim
NUM_HEADS = 4
HEAD_DIM = EMBED_DIM // NUM_HEADS
BUFFER_SIZE = 8
DEPTH = 2               # encoder_depth + decoder_depth
MLP_HIDDEN = 4 * EMBED_DIM
CLASS_NUM = 10
DIFF_MUL = 4            # diffusion_batch_mul
LN_EPS = 1e-5
NEG_INF = -1e30

IMG_ROWS = BATCH * TOKEN_NUM        # 32
COND_ROWS = BATCH * BUFFER_SIZE     # 16
ALL_ROWS = IMG_ROWS + COND_ROWS     # 48
SELF_W_COLS = 5 * EMBED_DIM         # [q | q@rot | k | k@rot | v] = 320
N_VEC = 11                          # per-block (1, D) vectors packed per block
N_WB = 4                            # per-block wide bias rows packed per block
N_KERNEL_INPUTS = 16


# ----------------------------- host-side constant tables --------------------------------------

def _rope_rot():
    """Signed pair-swap: (x @ rot)[2j] = -x[2j+1], (x @ rot)[2j+1] = +x[2j]."""
    rot = np.zeros((EMBED_DIM, EMBED_DIM), np.float32)
    for j in range(0, EMBED_DIM, 2):
        rot[j + 1, j] = -1.0
        rot[j, j + 1] = 1.0
    return rot


def _host_tables():
    T, buf, D, H = TOKEN_NUM, BUFFER_SIZE, EMBED_DIM, NUM_HEADS
    half = HEAD_DIM // 2
    # eval mode => shift bias == 0, cls_token_num == 0
    freqs = 1.0 / (10000.0 ** (np.arange(0, HEAD_DIM, 2)[:half].astype(np.float32) / HEAD_DIM))
    t = np.arange(T, dtype=np.float32)
    ang = np.outer(t, freqs)                                    # (T, hd/2)
    cos_i = np.repeat(np.cos(ang), 2, axis=1)                   # (T, hd), interleaved pairs
    sin_i = np.repeat(np.sin(ang), 2, axis=1)
    cos_big = np.tile(np.tile(cos_i, (1, H)), (BATCH, 1))       # (B*T, D), same freqs per head
    sin_big = np.tile(np.tile(sin_i, (1, H)), (BATCH, 1))
    cos_sin = np.stack([cos_big, sin_big], axis=0).astype(np.float32)

    # additive attention biases with cross-batch blocks masked out (batches fused in one matmul)
    causal = np.where(np.tril(np.ones((T, T), np.float32)) > 0, 0.0, NEG_INF)
    self_bias = np.full((IMG_ROWS, IMG_ROWS), NEG_INF, np.float32)
    cross_bias = np.full((IMG_ROWS, COND_ROWS), NEG_INF, np.float32)
    for b in range(BATCH):
        self_bias[b * T:(b + 1) * T, b * T:(b + 1) * T] = causal
        cross_bias[b * T:(b + 1) * T, b * buf:(b + 1) * buf] = 0.0

    # per-head 0/1 column masks over the concatenated-head feature dim
    hmask = np.zeros((H, 1, D), np.float32)
    for h in range(H):
        hmask[h, 0, h * HEAD_DIM:(h + 1) * HEAD_DIM] = 1.0

    # 0/1 row-selection matrix for the epilogue gather:
    #   z[b*T + 0]   = cond[b*buf + buf - 1]   (last cond token)
    #   z[b*T + i]   = img[b*T + i - 1]        (i >= 1)
    # applied to y = concat([cond, img], axis=0) of ALL_ROWS rows.
    zsel = np.zeros((IMG_ROWS, ALL_ROWS), np.float32)
    for b in range(BATCH):
        zsel[b * T, b * buf + buf - 1] = 1.0
        for i in range(1, T):
            zsel[b * T + i, COND_ROWS + b * T + i - 1] = 1.0

    return (jnp.asarray(cos_sin), jnp.asarray(self_bias), jnp.asarray(cross_bias),
            jnp.asarray(zsel), jnp.asarray(hmask))


COS_SIN, SELF_BIAS, CROSS_BIAS, Z_SELECT, HEAD_MASKS = _host_tables()


# ----------------------------- the fused trunk kernel ------------------------------------------

def _trunk_kernel(imgs_ref, cond0_ref, cossin_ref, sbias_ref, xbias_ref, zsel_ref,
                  hmask_ref, zpw_ref, stem_ref, vecs_ref, sq_ref, selfw_ref, xw_ref,
                  fc1_ref, fc2_ref, wbias_ref, z_out_ref, tgt_out_ref):
    D, HID, H = EMBED_DIM, MLP_HIDDEN, NUM_HEADS
    scale = float(HEAD_DIM) ** -0.5

    cos_t = cossin_ref[0]            # (B*T, D)
    sin_t = cossin_ref[1]
    self_bias = sbias_ref[...]       # (B*T, B*T)
    cross_bias = xbias_ref[...]      # (B*T, B*buf)

    def ln(x, g, b, eps):
        mu = jnp.mean(x, axis=-1, keepdims=True)
        xc = x - mu
        var = jnp.mean(xc * xc, axis=-1, keepdims=True)
        return xc * jax.lax.rsqrt(var + eps) * g + b

    def bdot(x, w):
        # bf16 MXU inputs, f32 accumulation (w slabs are stored in bf16)
        return jnp.dot(x.astype(jnp.bfloat16), w, preferred_element_type=jnp.float32)

    def softmax(s):
        s = s - jnp.max(s, axis=-1, keepdims=True)
        p = jnp.exp(s)
        return p * pl.reciprocal(jnp.sum(p, axis=-1, keepdims=True), approx=True)

    def erf(x):
        # Abramowitz & Stegun 7.1.26 (|err| ~ 1.5e-7) with an EUP approx reciprocal
        a1, a2, a3, a4, a5 = 0.254829592, -0.284496736, 1.421413741, -1.453152027, 1.061405429
        ax = jnp.abs(x)
        tt = pl.reciprocal(1.0 + 0.3275911 * ax, approx=True)
        poly = ((((a5 * tt + a4) * tt + a3) * tt + a2) * tt + a1) * tt
        y = 1.0 - poly * jnp.exp(-ax * ax)
        return jnp.where(x >= 0.0, y, -y)

    def gelu(x):
        return 0.5 * x * (1.0 + erf(x * 0.7071067811865476))

    def mha(q, k, v, bias):
        # q: (B*T, D) f32; k, v: (rows_kv, D) f32.  Batches fused (bias masks cross-batch),
        # per-head 0/1 column masks on q (contraction) and v (output columns) only.
        k16 = k.astype(jnp.bfloat16)
        out = jnp.zeros((IMG_ROWS, D), jnp.float32)
        for h in range(H):
            m = hmask_ref[h]                                            # (1, D)
            qh = (q * m).astype(jnp.bfloat16)
            s = jax.lax.dot_general(qh, k16, (((1,), (1,)), ((), ())),
                                    preferred_element_type=jnp.float32) * scale + bias
            p = softmax(s).astype(jnp.bfloat16)
            vh = (v * m).astype(jnp.bfloat16)
            out = out + jnp.dot(p, vh, preferred_element_type=jnp.float32)
        return out

    # ---------------- stem: z_proj + cond tokens + z_proj_ln (eps 1e-6) ----------------
    img = bdot(imgs_ref[...], zpw_ref[...]) + stem_ref[0:1]             # (B*T, D)
    img = ln(img, stem_ref[1:2], stem_ref[2:3], 1e-6)
    cond = ln(cond0_ref[...], stem_ref[1:2], stem_ref[2:3], 1e-6)       # (B*buf, D)

    # ---------------- DEPTH x MaskedBlockRoPECrossAttn ----------------
    for d in range(DEPTH):
        def bvec(i, _d=d):                                              # (1, D) per-block vector
            r = _d * N_VEC + i
            return vecs_ref[r:r + 1]

        def wbias(i, width, _d=d):                                      # (1, width) wide bias
            r = _d * N_WB + i
            return wbias_ref[r:r + 1, 0:width]

        # self attention over image tokens; RoPE on q & k folded into the fused qkv weight:
        # columns = [q | q@rot | k | k@rot | v]
        h1 = ln(img, bvec(0), bvec(1), LN_EPS)
        qkv = bdot(h1, selfw_ref[d]) + wbias(0, SELF_W_COLS)            # (B*T, 5D)
        q = qkv[:, 0:D] * cos_t + qkv[:, D:2 * D] * sin_t
        k = qkv[:, 2 * D:3 * D] * cos_t + qkv[:, 3 * D:4 * D] * sin_t
        v = qkv[:, 4 * D:5 * D]
        att = mha(q, k, v, self_bias)
        img = img + bdot(att, sq_ref[2 * d + 0]) + bvec(8)

        # cross attention: q from image tokens (RoPE), k/v from cond tokens, no causal mask
        xi = ln(img, bvec(2), bvec(3), LN_EPS)
        xc = ln(cond, bvec(4), bvec(5), LN_EPS)
        q2 = bdot(xi, xw_ref[2 * d + 0]) + wbias(1, 2 * D)              # (B*T, 2D) = [q | q@rot]
        q = q2[:, 0:D] * cos_t + q2[:, D:2 * D] * sin_t
        kv = bdot(xc, xw_ref[2 * d + 1]) + wbias(2, 2 * D)              # (B*buf, 2D) = [k | v]
        att = mha(q, kv[:, 0:D], kv[:, D:2 * D], cross_bias)
        img = img + bdot(att, sq_ref[2 * d + 1]) + bvec(9)

        # MLP over [cond, img] (row-wise) with residual
        xall = jnp.concatenate([cond, img], axis=0)                     # (ALL_ROWS, D)
        hm = ln(xall, bvec(6), bvec(7), LN_EPS)
        hm = gelu(bdot(hm, fc1_ref[d]) + wbias(3, HID))
        hm = bdot(hm, fc2_ref[d]) + bvec(10)
        xall = xall + hm
        cond = xall[0:COND_ROWS]
        img = xall[COND_ROWS:]

    # ---------------- epilogue: encoder_norm, row gather, DIFF_MUL replication -------------
    g, b = stem_ref[3:4], stem_ref[4:5]
    y = jnp.concatenate([ln(cond, g, b, LN_EPS), ln(img, g, b, LN_EPS)], axis=0)   # (ALL_ROWS, D)
    z = jnp.dot(zsel_ref[...], y, preferred_element_type=jnp.float32)               # exact f32 gather
    imgs_flat = imgs_ref[...]
    for rep in range(DIFF_MUL):
        z_out_ref[rep * IMG_ROWS:(rep + 1) * IMG_ROWS, :] = z
        tgt_out_ref[rep * IMG_ROWS:(rep + 1) * IMG_ROWS, :] = imgs_flat


# ----------------------------- wrapper ----------------------------------------------------------

def _zero_index(nd, *_):
    return (0,) * nd


def encoder_forward(params, imgs, class_embedding):
    B, T, V = imgs.shape

    # cond tokens (class_embedding + learned pos embed); trivial one-off XLA broadcast-add
    cond0 = (class_embedding[:, None, :] + params["pos_embed"][None, :, :]
             ).reshape(B * BUFFER_SIZE, EMBED_DIM).astype(jnp.float32)

    inputs = [
        imgs.reshape(B * T, V).astype(jnp.float32),
        cond0,
        COS_SIN, SELF_BIAS, CROSS_BIAS, Z_SELECT, HEAD_MASKS,
        params["z_proj_w"], params["stem_vecs"], params["blk_vecs"],
        params["blk_sq_w"], params["blk_self_w"], params["blk_x_w"],
        params["blk_fc1_w"], params["blk_fc2_w"], params["blk_wide_b"],
    ]
    assert len(inputs) == N_KERNEL_INPUTS

    in_specs = [pl.BlockSpec(a.shape, functools.partial(_zero_index, a.ndim)) for a in inputs]
    out_rows = DIFF_MUL * B * T

    z_rep, target_rep = pl.pallas_call(
        _trunk_kernel,
        out_shape=(jax.ShapeDtypeStruct((out_rows, EMBED_DIM), jnp.float32),
                   jax.ShapeDtypeStruct((out_rows, V), jnp.float32)),
        grid=(1,),
        in_specs=in_specs,
        out_specs=(pl.BlockSpec((out_rows, EMBED_DIM), lambda i: (0, 0)),
                   pl.BlockSpec((out_rows, V), lambda i: (0, 0))),
        compiler_params=pltpu.CompilerParams(dimension_semantics=("arbitrary",)),
    )(*inputs)
    return z_rep, target_rep


@jax.jit
def forward(params, imgs, labels):
    """Eval-mode forward: encoder trunk + forward_loss() input preparation."""
    class_embedding = params["class_emb"][labels]                     # (B, D)
    z_rep, target_rep = encoder_forward(params, imgs, class_embedding)
    # TODO(synk): DiffLoss.forward(z=z_rep, x0=target_rep) — external diffusion head, no source given.
    return z_rep, target_rep


# ----------------------------- parameter init (deterministic, torch-style) ---------------------

def _xavier(key, fan_in, fan_out):
    limit = float(np.sqrt(6.0 / (fan_in + fan_out)))
    # stored as (in, out) i.e. torch weight.T so the kernel does x @ w + b
    return jax.random.uniform(key, (fan_in, fan_out), jnp.float32, -limit, limit)


def init_params(key):
    D, V, HID = EMBED_DIM, VAE_DIM, MLP_HIDDEN
    rot = jnp.asarray(_rope_rot())
    keys = jax.random.split(key, 4 + DEPTH)

    params = {
        "class_emb": 0.02 * jax.random.normal(keys[0], (CLASS_NUM, D), jnp.float32),
        "fake_latent": 0.02 * jax.random.normal(keys[1], (1, D), jnp.float32),   # unused in eval
        "pos_embed": 0.02 * jax.random.normal(keys[3], (BUFFER_SIZE, D), jnp.float32),
        "z_proj_w": _xavier(keys[2], V, D).astype(jnp.bfloat16),
        # [z_proj_b, z_proj_ln_g, z_proj_ln_b, enc_norm_g, enc_norm_b]
        "stem_vecs": jnp.stack([jnp.zeros(D), jnp.ones(D), jnp.zeros(D),
                                jnp.ones(D), jnp.zeros(D)]).astype(jnp.float32),
    }

    def pad_w(x, n):
        return jnp.pad(x, ((0, 0), (0, n - x.shape[1])))

    zD, oD = jnp.zeros((1, D), jnp.float32), jnp.ones((1, D), jnp.float32)
    self_w, x_w, sq_w, fc1_w, fc2_w, wide_b, vecs = [], [], [], [], [], [], []
    for d in range(DEPTH):
        bk = jax.random.split(keys[4 + d], 8)
        qkv = _xavier(bk[0], D, 3 * D)                      # torch qkv layout: [q | k | v] columns
        wq, wk, wv = qkv[:, 0:D], qkv[:, D:2 * D], qkv[:, 2 * D:3 * D]
        bq = jnp.zeros((1, D), jnp.float32)                 # torch init: all linear biases = 0
        # fold the RoPE signed pair-swap into the projection weights/biases at init:
        self_w.append(jnp.concatenate([wq, wq @ rot, wk, wk @ rot, wv], axis=1))        # (D, 5D)
        b_self = jnp.concatenate([bq, bq @ rot, bq, bq @ rot, bq], axis=1)              # (1, 5D)

        xq = _xavier(bk[2], D, D)
        w_xq = jnp.concatenate([xq, xq @ rot], axis=1)                                  # (D, 2D)
        w_xkv = jnp.concatenate([_xavier(bk[3], D, D), _xavier(bk[4], D, D)], axis=1)   # (D, 2D)
        x_w.append(jnp.stack([w_xq, w_xkv], axis=0))
        b_xq = jnp.zeros((1, 2 * D), jnp.float32)
        b_xkv = jnp.zeros((1, 2 * D), jnp.float32)

        sq_w.append(jnp.stack([_xavier(bk[1], D, D), _xavier(bk[5], D, D)], axis=0))    # proj / x_proj
        fc1_w.append(_xavier(bk[6], D, HID))
        fc2_w.append(_xavier(bk[7], HID, D))
        b_fc1 = jnp.zeros((1, HID), jnp.float32)

        wide_b.append(jnp.concatenate(
            [b_self, pad_w(b_xq, SELF_W_COLS), pad_w(b_xkv, SELF_W_COLS),
             pad_w(b_fc1, SELF_W_COLS)], axis=0))                                       # (4, 5D)
        # [norm1_g, norm1_b, xnorm_g, xnorm_b, xcnorm_g, xcnorm_b, norm2_g, norm2_b,
        #  attn_proj_b, x_proj_b, fc2_b]
        vecs.append(jnp.concatenate([oD, zD, oD, zD, oD, zD, oD, zD, zD, zD, zD], axis=0))

    params["blk_self_w"] = jnp.stack(self_w).astype(jnp.bfloat16)                 # (DEPTH, D, 5D)
    params["blk_x_w"] = jnp.stack(x_w).reshape(DEPTH * 2, D, 2 * D).astype(jnp.bfloat16)
    params["blk_sq_w"] = jnp.stack(sq_w).reshape(DEPTH * 2, D, D).astype(jnp.bfloat16)
    params["blk_fc1_w"] = jnp.stack(fc1_w).astype(jnp.bfloat16)                   # (DEPTH, D, HID)
    params["blk_fc2_w"] = jnp.stack(fc2_w).astype(jnp.bfloat16)                   # (DEPTH, HID, D)
    params["blk_wide_b"] = jnp.stack(wide_b).reshape(DEPTH * N_WB, SELF_W_COLS).astype(jnp.float32)
    params["blk_vecs"] = jnp.stack(vecs).reshape(DEPTH * N_VEC, D).astype(jnp.float32)
    return params


# ----------------------------- main ------------------------------------------------------------

if __name__ == "__main__":
    key = jax.random.PRNGKey(0)
    k_param, k_img, k_lbl = jax.random.split(key, 3)

    params = init_params(k_param)
    imgs = jax.random.normal(k_img, (BATCH, TOKEN_NUM, VAE_DIM), jnp.float32)
    labels = jax.random.randint(k_lbl, (BATCH,), 0, CLASS_NUM)

    z_rep, target_rep = forward(params, imgs, labels)
    jax.block_until_ready((z_rep, target_rep))

    assert z_rep.shape == (DIFF_MUL * BATCH * TOKEN_NUM, EMBED_DIM)
    assert target_rep.shape == (DIFF_MUL * BATCH * TOKEN_NUM, VAE_DIM)
    assert bool(jnp.all(jnp.isfinite(z_rep)))
    assert bool(jnp.all(jnp.isfinite(target_rep)))
    print("KERNEL_OK")
</pallas_src>

<mosaic_0001>
module attributes {stable_mosaic.version = 11 : i64} {
  func.func @_trunk_kernel(%arg0: i32, %arg1: memref<32x8xf32, #tpu.memory_space<vmem>>, %arg2: memref<16x64xf32, #tpu.memory_space<vmem>>, %arg3: memref<2x32x64xf32, #tpu.memory_space<vmem>>, %arg4: memref<32x32xf32, #tpu.memory_space<vmem>>, %arg5: memref<32x16xf32, #tpu.memory_space<vmem>>, %arg6: memref<32x48xf32, #tpu.memory_space<vmem>>, %arg7: memref<4x1x64xf32, #tpu.memory_space<vmem>>, %arg8: memref<8x64xbf16, #tpu.memory_space<vmem>>, %arg9: memref<5x64xf32, #tpu.memory_space<vmem>>, %arg10: memref<22x64xf32, #tpu.memory_space<vmem>>, %arg11: memref<4x64x64xbf16, #tpu.memory_space<vmem>>, %arg12: memref<2x64x320xbf16, #tpu.memory_space<vmem>>, %arg13: memref<4x64x128xbf16, #tpu.memory_space<vmem>>, %arg14: memref<2x64x256xbf16, #tpu.memory_space<vmem>>, %arg15: memref<2x256x64xbf16, #tpu.memory_space<vmem>>, %arg16: memref<8x320xf32, #tpu.memory_space<vmem>>, %arg17: memref<128x64xf32, #tpu.memory_space<vmem>>, %arg18: memref<128x8xf32, #tpu.memory_space<vmem>>) attributes {dimension_semantics = [#tpu.dimension_semantics<arbitrary>], iteration_bounds = array<i64: 1>, scalar_prefetch = 0 : i64, scratch_operands = 0 : i64, tpu.core_type = #tpu.core_type<tc>, window_params = [{pipeline_mode = #tpu.pipeline_mode<synchronous>, transform_indices = @transform_0, window_bounds = array<i64: 32, 8>}, {pipeline_mode = #tpu.pipeline_mode<synchronous>, transform_indices = @transform_1, window_bounds = array<i64: 16, 64>}, {pipeline_mode = #tpu.pipeline_mode<synchronous>, transform_indices = @transform_2, window_bounds = array<i64: 2, 32, 64>}, {pipeline_mode = #tpu.pipeline_mode<synchronous>, transform_indices = @transform_3, window_bounds = array<i64: 32, 32>}, {pipeline_mode = #tpu.pipeline_mode<synchronous>, transform_indices = @transform_4, window_bounds = array<i64: 32, 16>}, {pipeline_mode = #tpu.pipeline_mode<synchronous>, transform_indices = @transform_5, window_bounds = array<i64: 32, 48>}, {pipeline_mode = #tpu.pipeline_mode<synchronous>, transform_indices = @transform_6, window_bounds = array<i64: 4, 1, 64>}, {pipeline_mode = #tpu.pipeline_mode<synchronous>, transform_indices = @transform_7, window_bounds = array<i64: 8, 64>}, {pipeline_mode = #tpu.pipeline_mode<synchronous>, transform_indices = @transform_8, window_bounds = array<i64: 5, 64>}, {pipeline_mode = #tpu.pipeline_mode<synchronous>, transform_indices = @transform_9, window_bounds = array<i64: 22, 64>}, {pipeline_mode = #tpu.pipeline_mode<synchronous>, transform_indices = @transform_10, window_bounds = array<i64: 4, 64, 64>}, {pipeline_mode = #tpu.pipeline_mode<synchronous>, transform_indices = @transform_11, window_bounds = array<i64: 2, 64, 320>}, {pipeline_mode = #tpu.pipeline_mode<synchronous>, transform_indices = @transform_12, window_bounds = array<i64: 4, 64, 128>}, {pipeline_mode = #tpu.pipeline_mode<synchronous>, transform_indices = @transform_13, window_bounds = array<i64: 2, 64, 256>}, {pipeline_mode = #tpu.pipeline_mode<synchronous>, transform_indices = @transform_14, window_bounds = array<i64: 2, 256, 64>}, {pipeline_mode = #tpu.pipeline_mode<synchronous>, transform_indices = @transform_15, window_bounds = array<i64: 8, 320>}, {pipeline_mode = #tpu.pipeline_mode<synchronous>, transform_indices = @transform_16, window_bounds = array<i64: 128, 64>}, {pipeline_mode = #tpu.pipeline_mode<synchronous>, transform_indices = @transform_17, window_bounds = array<i64: 128, 8>}]} {
    %c0 = arith.constant 0 : index
    %c0_0 = arith.constant 0 : index
    %c0_1 = arith.constant 0 : index
    %0 = vector.load %arg3[%c0, %c0_0, %c0_1] : memref<2x32x64xf32, #tpu.memory_space<vmem>>, vector<1x32x64xf32>
    %1 = vector.shape_cast %0 : vector<1x32x64xf32> to vector<32x64xf32>
    %c1 = arith.constant 1 : index
    %c0_2 = arith.constant 0 : index
    %c0_3 = arith.constant 0 : index
    %2 = vector.load %arg3[%c1, %c0_2, %c0_3] : memref<2x32x64xf32, #tpu.memory_space<vmem>>, vector<1x32x64xf32>
    %3 = vector.shape_cast %2 : vector<1x32x64xf32> to vector<32x64xf32>
    %c0_4 = arith.constant 0 : index
    %c0_5 = arith.constant 0 : index
    %4 = vector.load %arg4[%c0_4, %c0_5] : memref<32x32xf32, #tpu.memory_space<vmem>>, vector<32x32xf32>
    %c0_6 = arith.constant 0 : index
    %c0_7 = arith.constant 0 : index
    %5 = vector.load %arg5[%c0_6, %c0_7] : memref<32x16xf32, #tpu.memory_space<vmem>>, vector<32x16xf32>
    %c0_8 = arith.constant 0 : index
    %c0_9 = arith.constant 0 : index
    %6 = vector.load %arg1[%c0_8, %c0_9] : memref<32x8xf32, #tpu.memory_space<vmem>>, vector<32x8xf32>
    %c0_10 = arith.constant 0 : index
    %c0_11 = arith.constant 0 : index
    %7 = vector.load %arg8[%c0_10, %c0_11] : memref<8x64xbf16, #tpu.memory_space<vmem>>, vector<8x64xbf16>
    %8 = arith.truncf %6 : vector<32x8xf32> to vector<32x8xbf16>
    %cst = arith.constant dense<0.000000e+00> : vector<32x64xf32>
    %9 = tpu.matmul %8, %7, %cst {dimension_numbers = #tpu.dot_dimension_numbers<[1], [0], [0], [1], [0, 0, 1, 1], [], []>} : vector<32x8xbf16>, vector<8x64xbf16>, vector<32x64xf32> -> vector<32x64xf32>
    %c0_12 = arith.constant 0 : index
    %c0_13 = arith.constant 0 : index
    %10 = vector.load %arg9[%c0_12, %c0_13] : memref<5x64xf32, #tpu.memory_space<vmem>>, vector<1x64xf32>
    %11 = vector.broadcast %10 : vector<1x64xf32> to vector<32x64xf32>
    %12 = arith.addf %9, %11 : vector<32x64xf32>
    %c1_14 = arith.constant 1 : index
    %c0_15 = arith.constant 0 : index
    %13 = vector.load %arg9[%c1_14, %c0_15] : memref<5x64xf32, #tpu.memory_space<vmem>>, vector<1x64xf32>
    %c2 = arith.constant 2 : index
    %c0_16 = arith.constant 0 : index
    %14 = vector.load %arg9[%c2, %c0_16] : memref<5x64xf32, #tpu.memory_space<vmem>>, vector<1x64xf32>
    %cst_17 = arith.constant dense<0.000000e+00> : vector<32xf32>
    %15 = vector.multi_reduction <add>, %12, %cst_17 [1] : vector<32x64xf32> to vector<32xf32>
    %16 = vector.shape_cast %15 : vector<32xf32> to vector<32x1xf32>
    %cst_18 = arith.constant 6.400000e+01 : f32
    %17 = vector.broadcast %cst_18 : f32 to vector<32x1xf32>
    %18 = arith.divf %16, %17 : vector<32x1xf32>
    %19 = vector.broadcast %18 : vector<32x1xf32> to vector<32x64xf32>
    %20 = arith.subf %12, %19 : vector<32x64xf32>
    %21 = arith.mulf %20, %20 : vector<32x64xf32>
    %cst_19 = arith.constant dense<0.000000e+00> : vector<32xf32>
    %22 = vector.multi_reduction <add>, %21, %cst_19 [1] : vector<32x64xf32> to vector<32xf32>
    %23 = vector.shape_cast %22 : vector<32xf32> to vector<32x1xf32>
    %cst_20 = arith.constant 6.400000e+01 : f32
    %24 = vector.broadcast %cst_20 : f32 to vector<32x1xf32>
    %25 = arith.divf %23, %24 : vector<32x1xf32>
    %cst_21 = arith.constant 9.99999997E-7 : f32
    %26 = vector.broadcast %cst_21 : f32 to vector<32x1xf32>
    %27 = arith.addf %25, %26 : vector<32x1xf32>
    %28 = math.rsqrt %27 : vector<32x1xf32>
    %29 = vector.broadcast %28 : vector<32x1xf32> to vector<32x64xf32>
    %30 = arith.mulf %20, %29 : vector<32x64xf32>
    %31 = vector.broadcast %13 : vector<1x64xf32> to vector<32x64xf32>
    %32 = arith.mulf %30, %31 : vector<32x64xf32>
    %33 = vector.broadcast %14 : vector<1x64xf32> to vector<32x64xf32>
    %34 = arith.addf %32, %33 : vector<32x64xf32>
    %c0_22 = arith.constant 0 : index
    %c0_23 = arith.constant 0 : index
    %35 = vector.load %arg2[%c0_22, %c0_23] : memref<16x64xf32, #tpu.memory_space<vmem>>, vector<16x64xf32>
    %c1_24 = arith.constant 1 : index
    %c0_25 = arith.constant 0 : index
    %36 = vector.load %arg9[%c1_24, %c0_25] : memref<5x64xf32, #tpu.memory_space<vmem>>, vector<1x64xf32>
    %c2_26 = arith.constant 2 : index
    %c0_27 = arith.constant 0 : index
    %37 = vector.load %arg9[%c2_26, %c0_27] : memref<5x64xf32, #tpu.memory_space<vmem>>, vector<1x64xf32>
    %cst_28 = arith.constant dense<0.000000e+00> : vector<16xf32>
    %38 = vector.multi_reduction <add>, %35, %cst_28 [1] : vector<16x64xf32> to vector<16xf32>
    %39 = vector.shape_cast %38 : vector<16xf32> to vector<16x1xf32>
    %cst_29 = arith.constant 6.400000e+01 : f32
    %40 = vector.broadcast %cst_29 : f32 to vector<16x1xf32>
    %41 = arith.divf %39, %40 : vector<16x1xf32>
    %42 = vector.broadcast %41 : vector<16x1xf32> to vector<16x64xf32>
    %43 = arith.subf %35, %42 : vector<16x64xf32>
    %44 = arith.mulf %43, %43 : vector<16x64xf32>
    %cst_30 = arith.constant dense<0.000000e+00> : vector<16xf32>
    %45 = vector.multi_reduction <add>, %44, %cst_30 [1] : vector<16x64xf32> to vector<16xf32>
    %46 = vector.shape_cast %45 : vector<16xf32> to vector<16x1xf32>
    %cst_31 = arith.constant 6.400000e+01 : f32
    %47 = vector.broadcast %cst_31 : f32 to vector<16x1xf32>
    %48 = arith.divf %46, %47 : vector<16x1xf32>
    %cst_32 = arith.constant 9.99999997E-7 : f32
    %49 = vector.broadcast %cst_32 : f32 to vector<16x1xf32>
    %50 = arith.addf %48, %49 : vector<16x1xf32>
    %51 = math.rsqrt %50 : vector<16x1xf32>
    %52 = vector.broadcast %51 : vector<16x1xf32> to vector<16x64xf32>
    %53 = arith.mulf %43, %52 : vector<16x64xf32>
    %54 = vector.broadcast %36 : vector<1x64xf32> to vector<16x64xf32>
    %55 = arith.mulf %53, %54 : vector<16x64xf32>
    %56 = vector.broadcast %37 : vector<1x64xf32> to vector<16x64xf32>
    %57 = arith.addf %55, %56 : vector<16x64xf32>
    %c0_33 = arith.constant 0 : index
    %c0_34 = arith.constant 0 : index
    %58 = vector.load %arg10[%c0_33, %c0_34] : memref<22x64xf32, #tpu.memory_space<vmem>>, vector<1x64xf32>
    %c1_35 = arith.constant 1 : index
    %c0_36 = arith.constant 0 : index
    %59 = vector.load %arg10[%c1_35, %c0_36] : memref<22x64xf32, #tpu.memory_space<vmem>>, vector<1x64xf32>
    %cst_37 = arith.constant dense<0.000000e+00> : vector<32xf32>
    %60 = vector.multi_reduction <add>, %34, %cst_37 [1] : vector<32x64xf32> to vector<32xf32>
    %61 = vector.shape_cast %60 : vector<32xf32> to vector<32x1xf32>
    %cst_38 = arith.constant 6.400000e+01 : f32
    %62 = vector.broadcast %cst_38 : f32 to vector<32x1xf32>
    %63 = arith.divf %61, %62 : vector<32x1xf32>
    %64 = vector.broadcast %63 : vector<32x1xf32> to vector<32x64xf32>
    %65 = arith.subf %34, %64 : vector<32x64xf32>
    %66 = arith.mulf %65, %65 : vector<32x64xf32>
    %cst_39 = arith.constant dense<0.000000e+00> : vector<32xf32>
    %67 = vector.multi_reduction <add>, %66, %cst_39 [1] : vector<32x64xf32> to vector<32xf32>
    %68 = vector.shape_cast %67 : vector<32xf32> to vector<32x1xf32>
    %cst_40 = arith.constant 6.400000e+01 : f32
    %69 = vector.broadcast %cst_40 : f32 to vector<32x1xf32>
    %70 = arith.divf %68, %69 : vector<32x1xf32>
    %cst_41 = arith.constant 9.99999974E-6 : f32
    %71 = vector.broadcast %cst_41 : f32 to vector<32x1xf32>
    %72 = arith.addf %70, %71 : vector<32x1xf32>
    %73 = math.rsqrt %72 : vector<32x1xf32>
    %74 = vector.broadcast %73 : vector<32x1xf32> to vector<32x64xf32>
    %75 = arith.mulf %65, %74 : vector<32x64xf32>
    %76 = vector.broadcast %58 : vector<1x64xf32> to vector<32x64xf32>
    %77 = arith.mulf %75, %76 : vector<32x64xf32>
    %78 = vector.broadcast %59 : vector<1x64xf32> to vector<32x64xf32>
    %79 = arith.addf %77, %78 : vector<32x64xf32>
    %c0_42 = arith.constant 0 : index
    %c0_43 = arith.constant 0 : index
    %c0_44 = arith.constant 0 : index
    %80 = vector.load %arg12[%c0_42, %c0_43, %c0_44] : memref<2x64x320xbf16, #tpu.memory_space<vmem>>, vector<1x64x320xbf16>
    %81 = vector.shape_cast %80 : vector<1x64x320xbf16> to vector<64x320xbf16>
    %82 = arith.truncf %79 : vector<32x64xf32> to vector<32x64xbf16>
    %cst_45 = arith.constant dense<0.000000e+00> : vector<32x320xf32>
    %83 = tpu.matmul %82, %81, %cst_45 {dimension_numbers = #tpu.dot_dimension_numbers<[1], [0], [0], [1], [0, 0, 1, 1], [], []>} : vector<32x64xbf16>, vector<64x320xbf16>, vector<32x320xf32> -> vector<32x320xf32>
    %c0_46 = arith.constant 0 : index
    %c0_47 = arith.constant 0 : index
    %84 = vector.load %arg16[%c0_46, %c0_47] : memref<8x320xf32, #tpu.memory_space<vmem>>, vector<1x320xf32>
    %85 = vector.broadcast %84 : vector<1x320xf32> to vector<32x320xf32>
    %86 = arith.addf %83, %85 : vector<32x320xf32>
    %87 = vector.extract_strided_slice %86 {offsets = [0, 0], sizes = [32, 64], strides = [1, 1]} : vector<32x320xf32> to vector<32x64xf32>
    %88 = arith.mulf %87, %1 : vector<32x64xf32>
    %89 = vector.extract_strided_slice %86 {offsets = [0, 64], sizes = [32, 64], strides = [1, 1]} : vector<32x320xf32> to vector<32x64xf32>
    %90 = arith.mulf %89, %3 : vector<32x64xf32>
    %91 = arith.addf %88, %90 : vector<32x64xf32>
    %92 = vector.extract_strided_slice %86 {offsets = [0, 128], sizes = [32, 64], strides = [1, 1]} : vector<32x320xf32> to vector<32x64xf32>
    %93 = arith.mulf %92, %1 : vector<32x64xf32>
    %94 = vector.extract_strided_slice %86 {offsets = [0, 192], sizes = [32, 64], strides = [1, 1]} : vector<32x320xf32> to vector<32x64xf32>
    %95 = arith.mulf %94, %3 : vector<32x64xf32>
    %96 = arith.addf %93, %95 : vector<32x64xf32>
    %97 = vector.extract_strided_slice %86 {offsets = [0, 256], sizes = [32, 64], strides = [1, 1]} : vector<32x320xf32> to vector<32x64xf32>
    %98 = arith.truncf %96 : vector<32x64xf32> to vector<32x64xbf16>
    %cst_48 = arith.constant 0.000000e+00 : f32
    %99 = vector.broadcast %cst_48 : f32 to vector<32x64xf32>
    %c0_49 = arith.constant 0 : index
    %c0_50 = arith.constant 0 : index
    %c0_51 = arith.constant 0 : index
    %100 = vector.load %arg7[%c0_49, %c0_50, %c0_51] : memref<4x1x64xf32, #tpu.memory_space<vmem>>, vector<1x1x64xf32>
    %101 = vector.shape_cast %100 : vector<1x1x64xf32> to vector<1x64xf32>
    %102 = vector.broadcast %101 : vector<1x64xf32> to vector<32x64xf32>
    %103 = arith.mulf %91, %102 : vector<32x64xf32>
    %104 = arith.truncf %103 : vector<32x64xf32> to vector<32x64xbf16>
    %cst_52 = arith.constant dense<0.000000e+00> : vector<32x32xf32>
    %105 = tpu.matmul %104, %98, %cst_52 {dimension_numbers = #tpu.dot_dimension_numbers<[1], [1], [0], [0], [0, 0, 1, 0], [], []>} : vector<32x64xbf16>, vector<32x64xbf16>, vector<32x32xf32> -> vector<32x32xf32>
    %cst_53 = arith.constant 2.500000e-01 : f32
    %106 = vector.broadcast %cst_53 : f32 to vector<32x32xf32>
    %107 = arith.mulf %105, %106 : vector<32x32xf32>
    %108 = arith.addf %107, %4 : vector<32x32xf32>
    %cst_54 = arith.constant dense<0xFF800000> : vector<32xf32>
    %109 = vector.multi_reduction <maximumf>, %108, %cst_54 [1] : vector<32x32xf32> to vector<32xf32>
    %110 = vector.shape_cast %109 : vector<32xf32> to vector<32x1xf32>
    %111 = vector.broadcast %110 : vector<32x1xf32> to vector<32x32xf32>
    %112 = arith.subf %108, %111 : vector<32x32xf32>
    %113 = math.exp %112 : vector<32x32xf32>
    %cst_55 = arith.constant dense<0.000000e+00> : vector<32xf32>
    %114 = vector.multi_reduction <add>, %113, %cst_55 [1] : vector<32x32xf32> to vector<32xf32>
    %115 = vector.shape_cast %114 : vector<32xf32> to vector<32x1xf32>
    %116 = tpu.reciprocal %115 {approx = true} : vector<32x1xf32> -> vector<32x1xf32>
    %117 = vector.broadcast %116 : vector<32x1xf32> to vector<32x32xf32>
    %118 = arith.mulf %113, %117 : vector<32x32xf32>
    %119 = arith.truncf %118 : vector<32x32xf32> to vector<32x32xbf16>
    %120 = vector.broadcast %101 : vector<1x64xf32> to vector<32x64xf32>
    %121 = arith.mulf %97, %120 : vector<32x64xf32>
    %122 = arith.truncf %121 : vector<32x64xf32> to vector<32x64xbf16>
    %cst_56 = arith.constant dense<0.000000e+00> : vector<32x64xf32>
    %123 = tpu.matmul %119, %122, %cst_56 {dimension_numbers = #tpu.dot_dimension_numbers<[1], [0], [0], [1], [0, 0, 1, 1], [], []>} : vector<32x32xbf16>, vector<32x64xbf16>, vector<32x64xf32> -> vector<32x64xf32>
    %124 = arith.addf %99, %123 : vector<32x64xf32>
    %c1_57 = arith.constant 1 : index
    %c0_58 = arith.constant 0 : index
    %c0_59 = arith.constant 0 : index
    %125 = vector.load %arg7[%c1_57, %c0_58, %c0_59] : memref<4x1x64xf32, #tpu.memory_space<vmem>>, vector<1x1x64xf32>
    %126 = vector.shape_cast %125 : vector<1x1x64xf32> to vector<1x64xf32>
    %127 = vector.broadcast %126 : vector<1x64xf32> to vector<32x64xf32>
    %128 = arith.mulf %91, %127 : vector<32x64xf32>
    %129 = arith.truncf %128 : vector<32x64xf32> to vector<32x64xbf16>
    %cst_60 = arith.constant dense<0.000000e+00> : vector<32x32xf32>
    %130 = tpu.matmul %129, %98, %cst_60 {dimension_numbers = #tpu.dot_dimension_numbers<[1], [1], [0], [0], [0, 0, 1, 0], [], []>} : vector<32x64xbf16>, vector<32x64xbf16>, vector<32x32xf32> -> vector<32x32xf32>
    %cst_61 = arith.constant 2.500000e-01 : f32
    %131 = vector.broadcast %cst_61 : f32 to vector<32x32xf32>
    %132 = arith.mulf %130, %131 : vector<32x32xf32>
    %133 = arith.addf %132, %4 : vector<32x32xf32>
    %cst_62 = arith.constant dense<0xFF800000> : vector<32xf32>
    %134 = vector.multi_reduction <maximumf>, %133, %cst_62 [1] : vector<32x32xf32> to vector<32xf32>
    %135 = vector.shape_cast %134 : vector<32xf32> to vector<32x1xf32>
    %136 = vector.broadcast %135 : vector<32x1xf32> to vector<32x32xf32>
    %137 = arith.subf %133, %136 : vector<32x32xf32>
    %138 = math.exp %137 : vector<32x32xf32>
    %cst_63 = arith.constant dense<0.000000e+00> : vector<32xf32>
    %139 = vector.multi_reduction <add>, %138, %cst_63 [1] : vector<32x32xf32> to vector<32xf32>
    %140 = vector.shape_cast %139 : vector<32xf32> to vector<32x1xf32>
    %141 = tpu.reciprocal %140 {approx = true} : vector<32x1xf32> -> vector<32x1xf32>
    %142 = vector.broadcast %141 : vector<32x1xf32> to vector<32x32xf32>
    %143 = arith.mulf %138, %142 : vector<32x32xf32>
    %144 = arith.truncf %143 : vector<32x32xf32> to vector<32x32xbf16>
    %145 = vector.broadcast %126 : vector<1x64xf32> to vector<32x64xf32>
    %146 = arith.mulf %97, %145 : vector<32x64xf32>
    %147 = arith.truncf %146 : vector<32x64xf32> to vector<32x64xbf16>
    %cst_64 = arith.constant dense<0.000000e+00> : vector<32x64xf32>
    %148 = tpu.matmul %144, %147, %cst_64 {dimension_numbers = #tpu.dot_dimension_numbers<[1], [0], [0], [1], [0, 0, 1, 1], [], []>} : vector<32x32xbf16>, vector<32x64xbf16>, vector<32x64xf32> -> vector<32x64xf32>
    %149 = arith.addf %124, %148 : vector<32x64xf32>
    %c2_65 = arith.constant 2 : index
    %c0_66 = arith.constant 0 : index
    %c0_67 = arith.constant 0 : index
    %150 = vector.load %arg7[%c2_65, %c0_66, %c0_67] : memref<4x1x64xf32, #tpu.memory_space<vmem>>, vector<1x1x64xf32>
    %151 = vector.shape_cast %150 : vector<1x1x64xf32> to vector<1x64xf32>
    %152 = vector.broadcast %151 : vector<1x64xf32> to vector<32x64xf32>
    %153 = arith.mulf %91, %152 : vector<32x64xf32>
    %154 = arith.truncf %153 : vector<32x64xf32> to vector<32x64xbf16>
    %cst_68 = arith.constant dense<0.000000e+00> : vector<32x32xf32>
    %155 = tpu.matmul %154, %98, %cst_68 {dimension_numbers = #tpu.dot_dimension_numbers<[1], [1], [0], [0], [0, 0, 1, 0], [], []>} : vector<32x64xbf16>, vector<32x64xbf16>, vector<32x32xf32> -> vector<32x32xf32>
    %cst_69 = arith.constant 2.500000e-01 : f32
    %156 = vector.broadcast %cst_69 : f32 to vector<32x32xf32>
    %157 = arith.mulf %155, %156 : vector<32x32xf32>
    %158 = arith.addf %157, %4 : vector<32x32xf32>
    %cst_70 = arith.constant dense<0xFF800000> : vector<32xf32>
    %159 = vector.multi_reduction <maximumf>, %158, %cst_70 [1] : vector<32x32xf32> to vector<32xf32>
    %160 = vector.shape_cast %159 : vector<32xf32> to vector<32x1xf32>
    %161 = vector.broadcast %160 : vector<32x1xf32> to vector<32x32xf32>
    %162 = arith.subf %158, %161 : vector<32x32xf32>
    %163 = math.exp %162 : vector<32x32xf32>
    %cst_71 = arith.constant dense<0.000000e+00> : vector<32xf32>
    %164 = vector.multi_reduction <add>, %163, %cst_71 [1] : vector<32x32xf32> to vector<32xf32>
    %165 = vector.shape_cast %164 : vector<32xf32> to vector<32x1xf32>
    %166 = tpu.reciprocal %165 {approx = true} : vector<32x1xf32> -> vector<32x1xf32>
    %167 = vector.broadcast %166 : vector<32x1xf32> to vector<32x32xf32>
    %168 = arith.mulf %163, %167 : vector<32x32xf32>
    %169 = arith.truncf %168 : vector<32x32xf32> to vector<32x32xbf16>
    %170 = vector.broadcast %151 : vector<1x64xf32> to vector<32x64xf32>
    %171 = arith.mulf %97, %170 : vector<32x64xf32>
    %172 = arith.truncf %171 : vector<32x64xf32> to vector<32x64xbf16>
    %cst_72 = arith.constant dense<0.000000e+00> : vector<32x64xf32>
    %173 = tpu.matmul %169, %172, %cst_72 {dimension_numbers = #tpu.dot_dimension_numbers<[1], [0], [0], [1], [0, 0, 1, 1], [], []>} : vector<32x32xbf16>, vector<32x64xbf16>, vector<32x64xf32> -> vector<32x64xf32>
    %174 = arith.addf %149, %173 : vector<32x64xf32>
    %c3 = arith.constant 3 : index
    %c0_73 = arith.constant 0 : index
    %c0_74 = arith.constant 0 : index
    %175 = vector.load %arg7[%c3, %c0_73, %c0_74] : memref<4x1x64xf32, #tpu.memory_space<vmem>>, vector<1x1x64xf32>
    %176 = vector.shape_cast %175 : vector<1x1x64xf32> to vector<1x64xf32>
    %177 = vector.broadcast %176 : vector<1x64xf32> to vector<32x64xf32>
    %178 = arith.mulf %91, %177 : vector<32x64xf32>
    %179 = arith.truncf %178 : vector<32x64xf32> to vector<32x64xbf16>
    %cst_75 = arith.constant dense<0.000000e+00> : vector<32x32xf32>
    %180 = tpu.matmul %179, %98, %cst_75 {dimension_numbers = #tpu.dot_dimension_numbers<[1], [1], [0], [0], [0, 0, 1, 0], [], []>} : vector<32x64xbf16>, vector<32x64xbf16>, vector<32x32xf32> -> vector<32x32xf32>
    %cst_76 = arith.constant 2.500000e-01 : f32
    %181 = vector.broadcast %cst_76 : f32 to vector<32x32xf32>
    %182 = arith.mulf %180, %181 : vector<32x32xf32>
    %183 = arith.addf %182, %4 : vector<32x32xf32>
    %cst_77 = arith.constant dense<0xFF800000> : vector<32xf32>
    %184 = vector.multi_reduction <maximumf>, %183, %cst_77 [1] : vector<32x32xf32> to vector<32xf32>
    %185 = vector.shape_cast %184 : vector<32xf32> to vector<32x1xf32>
    %186 = vector.broadcast %185 : vector<32x1xf32> to vector<32x32xf32>
    %187 = arith.subf %183, %186 : vector<32x32xf32>
    %188 = math.exp %187 : vector<32x32xf32>
    %cst_78 = arith.constant dense<0.000000e+00> : vector<32xf32>
    %189 = vector.multi_reduction <add>, %188, %cst_78 [1] : vector<32x32xf32> to vector<32xf32>
    %190 = vector.shape_cast %189 : vector<32xf32> to vector<32x1xf32>
    %191 = tpu.reciprocal %190 {approx = true} : vector<32x1xf32> -> vector<32x1xf32>
    %192 = vector.broadcast %191 : vector<32x1xf32> to vector<32x32xf32>
    %193 = arith.mulf %188, %192 : vector<32x32xf32>
    %194 = arith.truncf %193 : vector<32x32xf32> to vector<32x32xbf16>
    %195 = vector.broadcast %176 : vector<1x64xf32> to vector<32x64xf32>
    %196 = arith.mulf %97, %195 : vector<32x64xf32>
    %197 = arith.truncf %196 : vector<32x64xf32> to vector<32x64xbf16>
    %cst_79 = arith.constant dense<0.000000e+00> : vector<32x64xf32>
    %198 = tpu.matmul %194, %197, %cst_79 {dimension_numbers = #tpu.dot_dimension_numbers<[1], [0], [0], [1], [0, 0, 1, 1], [], []>} : vector<32x32xbf16>, vector<32x64xbf16>, vector<32x64xf32> -> vector<32x64xf32>
    %199 = arith.addf %174, %198 : vector<32x64xf32>
    %c0_80 = arith.constant 0 : index
    %c0_81 = arith.constant 0 : index
    %c0_82 = arith.constant 0 : index
    %200 = vector.load %arg11[%c0_80, %c0_81, %c0_82] : memref<4x64x64xbf16, #tpu.memory_space<vmem>>, vector<1x64x64xbf16>
    %201 = vector.shape_cast %200 : vector<1x64x64xbf16> to vector<64x64xbf16>
    %202 = arith.truncf %199 : vector<32x64xf32> to vector<32x64xbf16>
    %cst_83 = arith.constant dense<0.000000e+00> : vector<32x64xf32>
    %203 = tpu.matmul %202, %201, %cst_83 {dimension_numbers = #tpu.dot_dimension_numbers<[1], [0], [0], [1], [0, 0, 1, 1], [], []>} : vector<32x64xbf16>, vector<64x64xbf16>, vector<32x64xf32> -> vector<32x64xf32>
    %204 = arith.addf %34, %203 : vector<32x64xf32>
    %c8 = arith.constant 8 : index
    %c0_84 = arith.constant 0 : index
    %205 = vector.load %arg10[%c8, %c0_84] : memref<22x64xf32, #tpu.memory_space<vmem>>, vector<1x64xf32>
    %206 = vector.broadcast %205 : vector<1x64xf32> to vector<32x64xf32>
    %207 = arith.addf %204, %206 : vector<32x64xf32>
    %c2_85 = arith.constant 2 : index
    %c0_86 = arith.constant 0 : index
    %208 = vector.load %arg10[%c2_85, %c0_86] : memref<22x64xf32, #tpu.memory_space<vmem>>, vector<1x64xf32>
    %c3_87 = arith.constant 3 : index
    %c0_88 = arith.constant 0 : index
    %209 = vector.load %arg10[%c3_87, %c0_88] : memref<22x64xf32, #tpu.memory_space<vmem>>, vector<1x64xf32>
    %cst_89 = arith.constant dense<0.000000e+00> : vector<32xf32>
    %210 = vector.multi_reduction <add>, %207, %cst_89 [1] : vector<32x64xf32> to vector<32xf32>
    %211 = vector.shape_cast %210 : vector<32xf32> to vector<32x1xf32>
    %cst_90 = arith.constant 6.400000e+01 : f32
    %212 = vector.broadcast %cst_90 : f32 to vector<32x1xf32>
    %213 = arith.divf %211, %212 : vector<32x1xf32>
    %214 = vector.broadcast %213 : vector<32x1xf32> to vector<32x64xf32>
    %215 = arith.subf %207, %214 : vector<32x64xf32>
    %216 = arith.mulf %215, %215 : vector<32x64xf32>
    %cst_91 = arith.constant dense<0.000000e+00> : vector<32xf32>
    %217 = vector.multi_reduction <add>, %216, %cst_91 [1] : vector<32x64xf32> to vector<32xf32>
    %218 = vector.shape_cast %217 : vector<32xf32> to vector<32x1xf32>
    %cst_92 = arith.constant 6.400000e+01 : f32
    %219 = vector.broadcast %cst_92 : f32 to vector<32x1xf32>
    %220 = arith.divf %218, %219 : vector<32x1xf32>
    %cst_93 = arith.constant 9.99999974E-6 : f32
    %221 = vector.broadcast %cst_93 : f32 to vector<32x1xf32>
    %222 = arith.addf %220, %221 : vector<32x1xf32>
    %223 = math.rsqrt %222 : vector<32x1xf32>
    %224 = vector.broadcast %223 : vector<32x1xf32> to vector<32x64xf32>
    %225 = arith.mulf %215, %224 : vector<32x64xf32>
    %226 = vector.broadcast %208 : vector<1x64xf32> to vector<32x64xf32>
    %227 = arith.mulf %225, %226 : vector<32x64xf32>
    %228 = vector.broadcast %209 : vector<1x64xf32> to vector<32x64xf32>
    %229 = arith.addf %227, %228 : vector<32x64xf32>
    %c4 = arith.constant 4 : index
    %c0_94 = arith.constant 0 : index
    %230 = vector.load %arg10[%c4, %c0_94] : memref<22x64xf32, #tpu.memory_space<vmem>>, vector<1x64xf32>
    %c5 = arith.constant 5 : index
    %c0_95 = arith.constant 0 : index
    %231 = vector.load %arg10[%c5, %c0_95] : memref<22x64xf32, #tpu.memory_space<vmem>>, vector<1x64xf32>
    %cst_96 = arith.constant dense<0.000000e+00> : vector<16xf32>
    %232 = vector.multi_reduction <add>, %57, %cst_96 [1] : vector<16x64xf32> to vector<16xf32>
    %233 = vector.shape_cast %232 : vector<16xf32> to vector<16x1xf32>
    %cst_97 = arith.constant 6.400000e+01 : f32
    %234 = vector.broadcast %cst_97 : f32 to vector<16x1xf32>
    %235 = arith.divf %233, %234 : vector<16x1xf32>
    %236 = vector.broadcast %235 : vector<16x1xf32> to vector<16x64xf32>
    %237 = arith.subf %57, %236 : vector<16x64xf32>
    %238 = arith.mulf %237, %237 : vector<16x64xf32>
    %cst_98 = arith.constant dense<0.000000e+00> : vector<16xf32>
    %239 = vector.multi_reduction <add>, %238, %cst_98 [1] : vector<16x64xf32> to vector<16xf32>
    %240 = vector.shape_cast %239 : vector<16xf32> to vector<16x1xf32>
    %cst_99 = arith.constant 6.400000e+01 : f32
    %241 = vector.broadcast %cst_99 : f32 to vector<16x1xf32>
    %242 = arith.divf %240, %241 : vector<16x1xf32>
    %cst_100 = arith.constant 9.99999974E-6 : f32
    %243 = vector.broadcast %cst_100 : f32 to vector<16x1xf32>
    %244 = arith.addf %242, %243 : vector<16x1xf32>
    %245 = math.rsqrt %244 : vector<16x1xf32>
    %246 = vector.broadcast %245 : vector<16x1xf32> to vector<16x64xf32>
    %247 = arith.mulf %237, %246 : vector<16x64xf32>
    %248 = vector.broadcast %230 : vector<1x64xf32> to vector<16x64xf32>
    %249 = arith.mulf %247, %248 : vector<16x64xf32>
    %250 = vector.broadcast %231 : vector<1x64xf32> to vector<16x64xf32>
    %251 = arith.addf %249, %250 : vector<16x64xf32>
    %c0_101 = arith.constant 0 : index
    %c0_102 = arith.constant 0 : index
    %c0_103 = arith.constant 0 : index
    %252 = vector.load %arg13[%c0_101, %c0_102, %c0_103] : memref<4x64x128xbf16, #tpu.memory_space<vmem>>, vector<1x64x128xbf16>
    %253 = vector.shape_cast %252 : vector<1x64x128xbf16> to vector<64x128xbf16>
    %254 = arith.truncf %229 : vector<32x64xf32> to vector<32x64xbf16>
    %cst_104 = arith.constant dense<0.000000e+00> : vector<32x128xf32>
    %255 = tpu.matmul %254, %253, %cst_104 {dimension_numbers = #tpu.dot_dimension_numbers<[1], [0], [0], [1], [0, 0, 1, 1], [], []>} : vector<32x64xbf16>, vector<64x128xbf16>, vector<32x128xf32> -> vector<32x128xf32>
    %c1_105 = arith.constant 1 : index
    %c0_106 = arith.constant 0 : index
    %256 = vector.load %arg16[%c1_105, %c0_106] : memref<8x320xf32, #tpu.memory_space<vmem>>, vector<1x128xf32>
    %257 = vector.broadcast %256 : vector<1x128xf32> to vector<32x128xf32>
    %258 = arith.addf %255, %257 : vector<32x128xf32>
    %259 = vector.extract_strided_slice %258 {offsets = [0, 0], sizes = [32, 64], strides = [1, 1]} : vector<32x128xf32> to vector<32x64xf32>
    %260 = arith.mulf %259, %1 : vector<32x64xf32>
    %261 = vector.extract_strided_slice %258 {offsets = [0, 64], sizes = [32, 64], strides = [1, 1]} : vector<32x128xf32> to vector<32x64xf32>
    %262 = arith.mulf %261, %3 : vector<32x64xf32>
    %263 = arith.addf %260, %262 : vector<32x64xf32>
    %c1_107 = arith.constant 1 : index
    %c0_108 = arith.constant 0 : index
    %c0_109 = arith.constant 0 : index
    %264 = vector.load %arg13[%c1_107, %c0_108, %c0_109] : memref<4x64x128xbf16, #tpu.memory_space<vmem>>, vector<1x64x128xbf16>
    %265 = vector.shape_cast %264 : vector<1x64x128xbf16> to vector<64x128xbf16>
    %266 = arith.truncf %251 : vector<16x64xf32> to vector<16x64xbf16>
    %cst_110 = arith.constant dense<0.000000e+00> : vector<16x128xf32>
    %267 = tpu.matmul %266, %265, %cst_110 {dimension_numbers = #tpu.dot_dimension_numbers<[1], [0], [0], [1], [0, 0, 1, 1], [], []>} : vector<16x64xbf16>, vector<64x128xbf16>, vector<16x128xf32> -> vector<16x128xf32>
    %c2_111 = arith.constant 2 : index
    %c0_112 = arith.constant 0 : index
    %268 = vector.load %arg16[%c2_111, %c0_112] : memref<8x320xf32, #tpu.memory_space<vmem>>, vector<1x128xf32>
    %269 = vector.broadcast %268 : vector<1x128xf32> to vector<16x128xf32>
    %270 = arith.addf %267, %269 : vector<16x128xf32>
    %271 = vector.extract_strided_slice %270 {offsets = [0, 0], sizes = [16, 64], strides = [1, 1]} : vector<16x128xf32> to vector<16x64xf32>
    %272 = vector.extract_strided_slice %270 {offsets = [0, 64], sizes = [16, 64], strides = [1, 1]} : vector<16x128xf32> to vector<16x64xf32>
    %273 = arith.truncf %271 : vector<16x64xf32> to vector<16x64xbf16>
    %cst_113 = arith.constant 0.000000e+00 : f32
    %274 = vector.broadcast %cst_113 : f32 to vector<32x64xf32>
    %c0_114 = arith.constant 0 : index
    %c0_115 = arith.constant 0 : index
    %c0_116 = arith.constant 0 : index
    %275 = vector.load %arg7[%c0_114, %c0_115, %c0_116] : memref<4x1x64xf32, #tpu.memory_space<vmem>>, vector<1x1x64xf32>
    %276 = vector.shape_cast %275 : vector<1x1x64xf32> to vector<1x64xf32>
    %277 = vector.broadcast %276 : vector<1x64xf32> to vector<32x64xf32>
    %278 = arith.mulf %263, %277 : vector<32x64xf32>
    %279 = arith.truncf %278 : vector<32x64xf32> to vector<32x64xbf16>
    %cst_117 = arith.constant dense<0.000000e+00> : vector<32x16xf32>
    %280 = tpu.matmul %279, %273, %cst_117 {dimension_numbers = #tpu.dot_dimension_numbers<[1], [1], [0], [0], [0, 0, 1, 0], [], []>} : vector<32x64xbf16>, vector<16x64xbf16>, vector<32x16xf32> -> vector<32x16xf32>
    %cst_118 = arith.constant 2.500000e-01 : f32
    %281 = vector.broadcast %cst_118 : f32 to vector<32x16xf32>
    %282 = arith.mulf %280, %281 : vector<32x16xf32>
    %283 = arith.addf %282, %5 : vector<32x16xf32>
    %cst_119 = arith.constant dense<0xFF800000> : vector<32xf32>
    %284 = vector.multi_reduction <maximumf>, %283, %cst_119 [1] : vector<32x16xf32> to vector<32xf32>
    %285 = vector.shape_cast %284 : vector<32xf32> to vector<32x1xf32>
    %286 = vector.broadcast %285 : vector<32x1xf32> to vector<32x16xf32>
    %287 = arith.subf %283, %286 : vector<32x16xf32>
    %288 = math.exp %287 : vector<32x16xf32>
    %cst_120 = arith.constant dense<0.000000e+00> : vector<32xf32>
    %289 = vector.multi_reduction <add>, %288, %cst_120 [1] : vector<32x16xf32> to vector<32xf32>
    %290 = vector.shape_cast %289 : vector<32xf32> to vector<32x1xf32>
    %291 = tpu.reciprocal %290 {approx = true} : vector<32x1xf32> -> vector<32x1xf32>
    %292 = vector.broadcast %291 : vector<32x1xf32> to vector<32x16xf32>
    %293 = arith.mulf %288, %292 : vector<32x16xf32>
    %294 = arith.truncf %293 : vector<32x16xf32> to vector<32x16xbf16>
    %295 = vector.broadcast %276 : vector<1x64xf32> to vector<16x64xf32>
    %296 = arith.mulf %272, %295 : vector<16x64xf32>
    %297 = arith.truncf %296 : vector<16x64xf32> to vector<16x64xbf16>
    %cst_121 = arith.constant dense<0.000000e+00> : vector<32x64xf32>
    %298 = tpu.matmul %294, %297, %cst_121 {dimension_numbers = #tpu.dot_dimension_numbers<[1], [0], [0], [1], [0, 0, 1, 1], [], []>} : vector<32x16xbf16>, vector<16x64xbf16>, vector<32x64xf32> -> vector<32x64xf32>
    %299 = arith.addf %274, %298 : vector<32x64xf32>
    %c1_122 = arith.constant 1 : index
    %c0_123 = arith.constant 0 : index
    %c0_124 = arith.constant 0 : index
    %300 = vector.load %arg7[%c1_122, %c0_123, %c0_124] : memref<4x1x64xf32, #tpu.memory_space<vmem>>, vector<1x1x64xf32>
    %301 = vector.shape_cast %300 : vector<1x1x64xf32> to vector<1x64xf32>
    %302 = vector.broadcast %301 : vector<1x64xf32> to vector<32x64xf32>
    %303 = arith.mulf %263, %302 : vector<32x64xf32>
    %304 = arith.truncf %303 : vector<32x64xf32> to vector<32x64xbf16>
    %cst_125 = arith.constant dense<0.000000e+00> : vector<32x16xf32>
    %305 = tpu.matmul %304, %273, %cst_125 {dimension_numbers = #tpu.dot_dimension_numbers<[1], [1], [0], [0], [0, 0, 1, 0], [], []>} : vector<32x64xbf16>, vector<16x64xbf16>, vector<32x16xf32> -> vector<32x16xf32>
    %cst_126 = arith.constant 2.500000e-01 : f32
    %306 = vector.broadcast %cst_126 : f32 to vector<32x16xf32>
    %307 = arith.mulf %305, %306 : vector<32x16xf32>
    %308 = arith.addf %307, %5 : vector<32x16xf32>
    %cst_127 = arith.constant dense<0xFF800000> : vector<32xf32>
    %309 = vector.multi_reduction <maximumf>, %308, %cst_127 [1] : vector<32x16xf32> to vector<32xf32>
    %310 = vector.shape_cast %309 : vector<32xf32> to vector<32x1xf32>
    %311 = vector.broadcast %310 : vector<32x1xf32> to vector<32x16xf32>
    %312 = arith.subf %308, %311 : vector<32x16xf32>
    %313 = math.exp %312 : vector<32x16xf32>
    %cst_128 = arith.constant dense<0.000000e+00> : vector<32xf32>
    %314 = vector.multi_reduction <add>, %313, %cst_128 [1] : vector<32x16xf32> to vector<32xf32>
    %315 = vector.shape_cast %314 : vector<32xf32> to vector<32x1xf32>
    %316 = tpu.reciprocal %315 {approx = true} : vector<32x1xf32> -> vector<32x1xf32>
    %317 = vector.broadcast %316 : vector<32x1xf32> to vector<32x16xf32>
    %318 = arith.mulf %313, %317 : vector<32x16xf32>
    %319 = arith.truncf %318 : vector<32x16xf32> to vector<32x16xbf16>
    %320 = vector.broadcast %301 : vector<1x64xf32> to vector<16x64xf32>
    %321 = arith.mulf %272, %320 : vector<16x64xf32>
    %322 = arith.truncf %321 : vector<16x64xf32> to vector<16x64xbf16>
    %cst_129 = arith.constant dense<0.000000e+00> : vector<32x64xf32>
    %323 = tpu.matmul %319, %322, %cst_129 {dimension_numbers = #tpu.dot_dimension_numbers<[1], [0], [0], [1], [0, 0, 1, 1], [], []>} : vector<32x16xbf16>, vector<16x64xbf16>, vector<32x64xf32> -> vector<32x64xf32>
    %324 = arith.addf %299, %323 : vector<32x64xf32>
    %c2_130 = arith.constant 2 : index
    %c0_131 = arith.constant 0 : index
    %c0_132 = arith.constant 0 : index
    %325 = vector.load %arg7[%c2_130, %c0_131, %c0_132] : memref<4x1x64xf32, #tpu.memory_space<vmem>>, vector<1x1x64xf32>
    %326 = vector.shape_cast %325 : vector<1x1x64xf32> to vector<1x64xf32>
    %327 = vector.broadcast %326 : vector<1x64xf32> to vector<32x64xf32>
    %328 = arith.mulf %263, %327 : vector<32x64xf32>
    %329 = arith.truncf %328 : vector<32x64xf32> to vector<32x64xbf16>
    %cst_133 = arith.constant dense<0.000000e+00> : vector<32x16xf32>
    %330 = tpu.matmul %329, %273, %cst_133 {dimension_numbers = #tpu.dot_dimension_numbers<[1], [1], [0], [0], [0, 0, 1, 0], [], []>} : vector<32x64xbf16>, vector<16x64xbf16>, vector<32x16xf32> -> vector<32x16xf32>
    %cst_134 = arith.constant 2.500000e-01 : f32
    %331 = vector.broadcast %cst_134 : f32 to vector<32x16xf32>
    %332 = arith.mulf %330, %331 : vector<32x16xf32>
    %333 = arith.addf %332, %5 : vector<32x16xf32>
    %cst_135 = arith.constant dense<0xFF800000> : vector<32xf32>
    %334 = vector.multi_reduction <maximumf>, %333, %cst_135 [1] : vector<32x16xf32> to vector<32xf32>
    %335 = vector.shape_cast %334 : vector<32xf32> to vector<32x1xf32>
    %336 = vector.broadcast %335 : vector<32x1xf32> to vector<32x16xf32>
    %337 = arith.subf %333, %336 : vector<32x16xf32>
    %338 = math.exp %337 : vector<32x16xf32>
    %cst_136 = arith.constant dense<0.000000e+00> : vector<32xf32>
    %339 = vector.multi_reduction <add>, %338, %cst_136 [1] : vector<32x16xf32> to vector<32xf32>
    %340 = vector.shape_cast %339 : vector<32xf32> to vector<32x1xf32>
    %341 = tpu.reciprocal %340 {approx = true} : vector<32x1xf32> -> vector<32x1xf32>
    %342 = vector.broadcast %341 : vector<32x1xf32> to vector<32x16xf32>
    %343 = arith.mulf %338, %342 : vector<32x16xf32>
    %344 = arith.truncf %343 : vector<32x16xf32> to vector<32x16xbf16>
    %345 = vector.broadcast %326 : vector<1x64xf32> to vector<16x64xf32>
    %346 = arith.mulf %272, %345 : vector<16x64xf32>
    %347 = arith.truncf %346 : vector<16x64xf32> to vector<16x64xbf16>
    %cst_137 = arith.constant dense<0.000000e+00> : vector<32x64xf32>
    %348 = tpu.matmul %344, %347, %cst_137 {dimension_numbers = #tpu.dot_dimension_numbers<[1], [0], [0], [1], [0, 0, 1, 1], [], []>} : vector<32x16xbf16>, vector<16x64xbf16>, vector<32x64xf32> -> vector<32x64xf32>
    %349 = arith.addf %324, %348 : vector<32x64xf32>
    %c3_138 = arith.constant 3 : index
    %c0_139 = arith.constant 0 : index
    %c0_140 = arith.constant 0 : index
    %350 = vector.load %arg7[%c3_138, %c0_139, %c0_140] : memref<4x1x64xf32, #tpu.memory_space<vmem>>, vector<1x1x64xf32>
    %351 = vector.shape_cast %350 : vector<1x1x64xf32> to vector<1x64xf32>
    %352 = vector.broadcast %351 : vector<1x64xf32> to vector<32x64xf32>
    %353 = arith.mulf %263, %352 : vector<32x64xf32>
    %354 = arith.truncf %353 : vector<32x64xf32> to vector<32x64xbf16>
    %cst_141 = arith.constant dense<0.000000e+00> : vector<32x16xf32>
    %355 = tpu.matmul %354, %273, %cst_141 {dimension_numbers = #tpu.dot_dimension_numbers<[1], [1], [0], [0], [0, 0, 1, 0], [], []>} : vector<32x64xbf16>, vector<16x64xbf16>, vector<32x16xf32> -> vector<32x16xf32>
    %cst_142 = arith.constant 2.500000e-01 : f32
    %356 = vector.broadcast %cst_142 : f32 to vector<32x16xf32>
    %357 = arith.mulf %355, %356 : vector<32x16xf32>
    %358 = arith.addf %357, %5 : vector<32x16xf32>
    %cst_143 = arith.constant dense<0xFF800000> : vector<32xf32>
    %359 = vector.multi_reduction <maximumf>, %358, %cst_143 [1] : vector<32x16xf32> to vector<32xf32>
    %360 = vector.shape_cast %359 : vector<32xf32> to vector<32x1xf32>
    %361 = vector.broadcast %360 : vector<32x1xf32> to vector<32x16xf32>
    %362 = arith.subf %358, %361 : vector<32x16xf32>
    %363 = math.exp %362 : vector<32x16xf32>
    %cst_144 = arith.constant dense<0.000000e+00> : vector<32xf32>
    %364 = vector.multi_reduction <add>, %363, %cst_144 [1] : vector<32x16xf32> to vector<32xf32>
    %365 = vector.shape_cast %364 : vector<32xf32> to vector<32x1xf32>
    %366 = tpu.reciprocal %365 {approx = true} : vector<32x1xf32> -> vector<32x1xf32>
    %367 = vector.broadcast %366 : vector<32x1xf32> to vector<32x16xf32>
    %368 = arith.mulf %363, %367 : vector<32x16xf32>
    %369 = arith.truncf %368 : vector<32x16xf32> to vector<32x16xbf16>
    %370 = vector.broadcast %351 : vector<1x64xf32> to vector<16x64xf32>
    %371 = arith.mulf %272, %370 : vector<16x64xf32>
    %372 = arith.truncf %371 : vector<16x64xf32> to vector<16x64xbf16>
    %cst_145 = arith.constant dense<0.000000e+00> : vector<32x64xf32>
    %373 = tpu.matmul %369, %372, %cst_145 {dimension_numbers = #tpu.dot_dimension_numbers<[1], [0], [0], [1], [0, 0, 1, 1], [], []>} : vector<32x16xbf16>, vector<16x64xbf16>, vector<32x64xf32> -> vector<32x64xf32>
    %374 = arith.addf %349, %373 : vector<32x64xf32>
    %c1_146 = arith.constant 1 : index
    %c0_147 = arith.constant 0 : index
    %c0_148 = arith.constant 0 : index
    %375 = vector.load %arg11[%c1_146, %c0_147, %c0_148] : memref<4x64x64xbf16, #tpu.memory_space<vmem>>, vector<1x64x64xbf16>
    %376 = vector.shape_cast %375 : vector<1x64x64xbf16> to vector<64x64xbf16>
    %377 = arith.truncf %374 : vector<32x64xf32> to vector<32x64xbf16>
    %cst_149 = arith.constant dense<0.000000e+00> : vector<32x64xf32>
    %378 = tpu.matmul %377, %376, %cst_149 {dimension_numbers = #tpu.dot_dimension_numbers<[1], [0], [0], [1], [0, 0, 1, 1], [], []>} : vector<32x64xbf16>, vector<64x64xbf16>, vector<32x64xf32> -> vector<32x64xf32>
    %379 = arith.addf %207, %378 : vector<32x64xf32>
    %c9 = arith.constant 9 : index
    %c0_150 = arith.constant 0 : index
    %380 = vector.load %arg10[%c9, %c0_150] : memref<22x64xf32, #tpu.memory_space<vmem>>, vector<1x64xf32>
    %381 = vector.broadcast %380 : vector<1x64xf32> to vector<32x64xf32>
    %382 = arith.addf %379, %381 : vector<32x64xf32>
    %383 = tpu.concatenate %57, %382 in 0 : vector<16x64xf32>, vector<32x64xf32> -> vector<48x64xf32>
    %c6 = arith.constant 6 : index
    %c0_151 = arith.constant 0 : index
    %384 = vector.load %arg10[%c6, %c0_151] : memref<22x64xf32, #tpu.memory_space<vmem>>, vector<1x64xf32>
    %c7 = arith.constant 7 : index
    %c0_152 = arith.constant 0 : index
    %385 = vector.load %arg10[%c7, %c0_152] : memref<22x64xf32, #tpu.memory_space<vmem>>, vector<1x64xf32>
    %cst_153 = arith.constant dense<0.000000e+00> : vector<48xf32>
    %386 = vector.multi_reduction <add>, %383, %cst_153 [1] : vector<48x64xf32> to vector<48xf32>
    %387 = vector.shape_cast %386 : vector<48xf32> to vector<48x1xf32>
    %cst_154 = arith.constant 6.400000e+01 : f32
    %388 = vector.broadcast %cst_154 : f32 to vector<48x1xf32>
    %389 = arith.divf %387, %388 : vector<48x1xf32>
    %390 = vector.broadcast %389 : vector<48x1xf32> to vector<48x64xf32>
    %391 = arith.subf %383, %390 : vector<48x64xf32>
    %392 = arith.mulf %391, %391 : vector<48x64xf32>
    %cst_155 = arith.constant dense<0.000000e+00> : vector<48xf32>
    %393 = vector.multi_reduction <add>, %392, %cst_155 [1] : vector<48x64xf32> to vector<48xf32>
    %394 = vector.shape_cast %393 : vector<48xf32> to vector<48x1xf32>
    %cst_156 = arith.constant 6.400000e+01 : f32
    %395 = vector.broadcast %cst_156 : f32 to vector<48x1xf32>
    %396 = arith.divf %394, %395 : vector<48x1xf32>
    %cst_157 = arith.constant 9.99999974E-6 : f32
    %397 = vector.broadcast %cst_157 : f32 to vector<48x1xf32>
    %398 = arith.addf %396, %397 : vector<48x1xf32>
    %399 = math.rsqrt %398 : vector<48x1xf32>
    %400 = vector.broadcast %399 : vector<48x1xf32> to vector<48x64xf32>
    %401 = arith.mulf %391, %400 : vector<48x64xf32>
    %402 = vector.broadcast %384 : vector<1x64xf32> to vector<48x64xf32>
    %403 = arith.mulf %401, %402 : vector<48x64xf32>
    %404 = vector.broadcast %385 : vector<1x64xf32> to vector<48x64xf32>
    %405 = arith.addf %403, %404 : vector<48x64xf32>
    %c0_158 = arith.constant 0 : index
    %c0_159 = arith.constant 0 : index
    %c0_160 = arith.constant 0 : index
    %406 = vector.load %arg14[%c0_158, %c0_159, %c0_160] : memref<2x64x256xbf16, #tpu.memory_space<vmem>>, vector<1x64x256xbf16>
    %407 = vector.shape_cast %406 : vector<1x64x256xbf16> to vector<64x256xbf16>
    %408 = arith.truncf %405 : vector<48x64xf32> to vector<48x64xbf16>
    %cst_161 = arith.constant dense<0.000000e+00> : vector<48x256xf32>
    %409 = tpu.matmul %408, %407, %cst_161 {dimension_numbers = #tpu.dot_dimension_numbers<[1], [0], [0], [1], [0, 0, 1, 1], [], []>} : vector<48x64xbf16>, vector<64x256xbf16>, vector<48x256xf32> -> vector<48x256xf32>
    %c3_162 = arith.constant 3 : index
    %c0_163 = arith.constant 0 : index
    %410 = vector.load %arg16[%c3_162, %c0_163] : memref<8x320xf32, #tpu.memory_space<vmem>>, vector<1x256xf32>
    %411 = vector.broadcast %410 : vector<1x256xf32> to vector<48x256xf32>
    %412 = arith.addf %409, %411 : vector<48x256xf32>
    %cst_164 = arith.constant 5.000000e-01 : f32
    %413 = vector.broadcast %cst_164 : f32 to vector<48x256xf32>
    %414 = arith.mulf %413, %412 : vector<48x256xf32>
    %cst_165 = arith.constant 0.707106769 : f32
    %415 = vector.broadcast %cst_165 : f32 to vector<48x256xf32>
    %416 = arith.mulf %412, %415 : vector<48x256xf32>
    %417 = math.absf %416 : vector<48x256xf32>
    %cst_166 = arith.constant 0.327591091 : f32
    %418 = vector.broadcast %cst_166 : f32 to vector<48x256xf32>
    %419 = arith.mulf %418, %417 : vector<48x256xf32>
    %cst_167 = arith.constant 1.000000e+00 : f32
    %420 = vector.broadcast %cst_167 : f32 to vector<48x256xf32>
    %421 = arith.addf %420, %419 : vector<48x256xf32>
    %422 = tpu.reciprocal %421 {approx = true} : vector<48x256xf32> -> vector<48x256xf32>
    %cst_168 = arith.constant 1.06140542 : f32
    %423 = vector.broadcast %cst_168 : f32 to vector<48x256xf32>
    %424 = arith.mulf %423, %422 : vector<48x256xf32>
    %cst_169 = arith.constant -1.45315206 : f32
    %425 = vector.broadcast %cst_169 : f32 to vector<48x256xf32>
    %426 = arith.addf %424, %425 : vector<48x256xf32>
    %427 = arith.mulf %426, %422 : vector<48x256xf32>
    %cst_170 = arith.constant 1.42141378 : f32
    %428 = vector.broadcast %cst_170 : f32 to vector<48x256xf32>
    %429 = arith.addf %427, %428 : vector<48x256xf32>
    %430 = arith.mulf %429, %422 : vector<48x256xf32>
    %cst_171 = arith.constant -0.284496725 : f32
    %431 = vector.broadcast %cst_171 : f32 to vector<48x256xf32>
    %432 = arith.addf %430, %431 : vector<48x256xf32>
    %433 = arith.mulf %432, %422 : vector<48x256xf32>
    %cst_172 = arith.constant 0.254829586 : f32
    %434 = vector.broadcast %cst_172 : f32 to vector<48x256xf32>
    %435 = arith.addf %433, %434 : vector<48x256xf32>
    %436 = arith.mulf %435, %422 : vector<48x256xf32>
    %cst_173 = arith.constant 0.000000e+00 : f32
    %437 = vector.broadcast %cst_173 : f32 to vector<48x256xf32>
    %438 = arith.subf %437, %417 : vector<48x256xf32>
    %439 = arith.mulf %438, %417 : vector<48x256xf32>
    %440 = math.exp %439 : vector<48x256xf32>
    %441 = arith.mulf %436, %440 : vector<48x256xf32>
    %cst_174 = arith.constant 1.000000e+00 : f32
    %442 = vector.broadcast %cst_174 : f32 to vector<48x256xf32>
    %443 = arith.subf %442, %441 : vector<48x256xf32>
    %cst_175 = arith.constant 0.000000e+00 : f32
    %444 = vector.broadcast %cst_175 : f32 to vector<48x256xf32>
    %445 = arith.cmpf oge, %416, %444 : vector<48x256xf32>
    %cst_176 = arith.constant 0.000000e+00 : f32
    %446 = vector.broadcast %cst_176 : f32 to vector<48x256xf32>
    %447 = arith.subf %446, %443 : vector<48x256xf32>
    %448 = arith.select %445, %443, %447 : vector<48x256xi1>, vector<48x256xf32>
    %cst_177 = arith.constant 1.000000e+00 : f32
    %449 = vector.broadcast %cst_177 : f32 to vector<48x256xf32>
    %450 = arith.addf %449, %448 : vector<48x256xf32>
    %451 = arith.mulf %414, %450 : vector<48x256xf32>
    %c0_178 = arith.constant 0 : index
    %c0_179 = arith.constant 0 : index
    %c0_180 = arith.constant 0 : index
    %452 = vector.load %arg15[%c0_178, %c0_179, %c0_180] : memref<2x256x64xbf16, #tpu.memory_space<vmem>>, vector<1x256x64xbf16>
    %453 = vector.shape_cast %452 : vector<1x256x64xbf16> to vector<256x64xbf16>
    %454 = arith.truncf %451 : vector<48x256xf32> to vector<48x256xbf16>
    %cst_181 = arith.constant dense<0.000000e+00> : vector<48x64xf32>
    %455 = tpu.matmul %454, %453, %cst_181 {dimension_numbers = #tpu.dot_dimension_numbers<[1], [0], [0], [1], [0, 0, 1, 1], [], []>} : vector<48x256xbf16>, vector<256x64xbf16>, vector<48x64xf32> -> vector<48x64xf32>
    %c10 = arith.constant 10 : index
    %c0_182 = arith.constant 0 : index
    %456 = vector.load %arg10[%c10, %c0_182] : memref<22x64xf32, #tpu.memory_space<vmem>>, vector<1x64xf32>
    %457 = vector.broadcast %456 : vector<1x64xf32> to vector<48x64xf32>
    %458 = arith.addf %455, %457 : vector<48x64xf32>
    %459 = arith.addf %383, %458 : vector<48x64xf32>
    %460 = vector.extract_strided_slice %459 {offsets = [0, 0], sizes = [16, 64], strides = [1, 1]} : vector<48x64xf32> to vector<16x64xf32>
    %461 = vector.extract_strided_slice %459 {offsets = [16, 0], sizes = [32, 64], strides = [1, 1]} : vector<48x64xf32> to vector<32x64xf32>
    %c11 = arith.constant 11 : index
    %c0_183 = arith.constant 0 : index
    %462 = vector.load %arg10[%c11, %c0_183] : memref<22x64xf32, #tpu.memory_space<vmem>>, vector<1x64xf32>
    %c12 = arith.constant 12 : index
    %c0_184 = arith.constant 0 : index
    %463 = vector.load %arg10[%c12, %c0_184] : memref<22x64xf32, #tpu.memory_space<vmem>>, vector<1x64xf32>
    %cst_185 = arith.constant dense<0.000000e+00> : vector<32xf32>
    %464 = vector.multi_reduction <add>, %461, %cst_185 [1] : vector<32x64xf32> to vector<32xf32>
    %465 = vector.shape_cast %464 : vector<32xf32> to vector<32x1xf32>
    %cst_186 = arith.constant 6.400000e+01 : f32
    %466 = vector.broadcast %cst_186 : f32 to vector<32x1xf32>
    %467 = arith.divf %465, %466 : vector<32x1xf32>
    %468 = vector.broadcast %467 : vector<32x1xf32> to vector<32x64xf32>
    %469 = arith.subf %461, %468 : vector<32x64xf32>
    %470 = arith.mulf %469, %469 : vector<32x64xf32>
    %cst_187 = arith.constant dense<0.000000e+00> : vector<32xf32>
    %471 = vector.multi_reduction <add>, %470, %cst_187 [1] : vector<32x64xf32> to vector<32xf32>
    %472 = vector.shape_cast %471 : vector<32xf32> to vector<32x1xf32>
    %cst_188 = arith.constant 6.400000e+01 : f32
    %473 = vector.broadcast %cst_188 : f32 to vector<32x1xf32>
    %474 = arith.divf %472, %473 : vector<32x1xf32>
    %cst_189 = arith.constant 9.99999974E-6 : f32
    %475 = vector.broadcast %cst_189 : f32 to vector<32x1xf32>
    %476 = arith.addf %474, %475 : vector<32x1xf32>
    %477 = math.rsqrt %476 : vector<32x1xf32>
    %478 = vector.broadcast %477 : vector<32x1xf32> to vector<32x64xf32>
    %479 = arith.mulf %469, %478 : vector<32x64xf32>
    %480 = vector.broadcast %462 : vector<1x64xf32> to vector<32x64xf32>
    %481 = arith.mulf %479, %480 : vector<32x64xf32>
    %482 = vector.broadcast %463 : vector<1x64xf32> to vector<32x64xf32>
    %483 = arith.addf %481, %482 : vector<32x64xf32>
    %c1_190 = arith.constant 1 : index
    %c0_191 = arith.constant 0 : index
    %c0_192 = arith.constant 0 : index
    %484 = vector.load %arg12[%c1_190, %c0_191, %c0_192] : memref<2x64x320xbf16, #tpu.memory_space<vmem>>, vector<1x64x320xbf16>
    %485 = vector.shape_cast %484 : vector<1x64x320xbf16> to vector<64x320xbf16>
    %486 = arith.truncf %483 : vector<32x64xf32> to vector<32x64xbf16>
    %cst_193 = arith.constant dense<0.000000e+00> : vector<32x320xf32>
    %487 = tpu.matmul %486, %485, %cst_193 {dimension_numbers = #tpu.dot_dimension_numbers<[1], [0], [0], [1], [0, 0, 1, 1], [], []>} : vector<32x64xbf16>, vector<64x320xbf16>, vector<32x320xf32> -> vector<32x320xf32>
    %c4_194 = arith.constant 4 : index
    %c0_195 = arith.constant 0 : index
    %488 = vector.load %arg16[%c4_194, %c0_195] : memref<8x320xf32, #tpu.memory_space<vmem>>, vector<1x320xf32>
    %489 = vector.broadcast %488 : vector<1x320xf32> to vector<32x320xf32>
    %490 = arith.addf %487, %489 : vector<32x320xf32>
    %491 = vector.extract_strided_slice %490 {offsets = [0, 0], sizes = [32, 64], strides = [1, 1]} : vector<32x320xf32> to vector<32x64xf32>
    %492 = arith.mulf %491, %1 : vector<32x64xf32>
    %493 = vector.extract_strided_slice %490 {offsets = [0, 64], sizes = [32, 64], strides = [1, 1]} : vector<32x320xf32> to vector<32x64xf32>
    %494 = arith.mulf %493, %3 : vector<32x64xf32>
    %495 = arith.addf %492, %494 : vector<32x64xf32>
    %496 = vector.extract_strided_slice %490 {offsets = [0, 128], sizes = [32, 64], strides = [1, 1]} : vector<32x320xf32> to vector<32x64xf32>
    %497 = arith.mulf %496, %1 : vector<32x64xf32>
    %498 = vector.extract_strided_slice %490 {offsets = [0, 192], sizes = [32, 64], strides = [1, 1]} : vector<32x320xf32> to vector<32x64xf32>
    %499 = arith.mulf %498, %3 : vector<32x64xf32>
    %500 = arith.addf %497, %499 : vector<32x64xf32>
    %501 = vector.extract_strided_slice %490 {offsets = [0, 256], sizes = [32, 64], strides = [1, 1]} : vector<32x320xf32> to vector<32x64xf32>
    %502 = arith.truncf %500 : vector<32x64xf32> to vector<32x64xbf16>
    %cst_196 = arith.constant 0.000000e+00 : f32
    %503 = vector.broadcast %cst_196 : f32 to vector<32x64xf32>
    %c0_197 = arith.constant 0 : index
    %c0_198 = arith.constant 0 : index
    %c0_199 = arith.constant 0 : index
    %504 = vector.load %arg7[%c0_197, %c0_198, %c0_199] : memref<4x1x64xf32, #tpu.memory_space<vmem>>, vector<1x1x64xf32>
    %505 = vector.shape_cast %504 : vector<1x1x64xf32> to vector<1x64xf32>
    %506 = vector.broadcast %505 : vector<1x64xf32> to vector<32x64xf32>
    %507 = arith.mulf %495, %506 : vector<32x64xf32>
    %508 = arith.truncf %507 : vector<32x64xf32> to vector<32x64xbf16>
    %cst_200 = arith.constant dense<0.000000e+00> : vector<32x32xf32>
    %509 = tpu.matmul %508, %502, %cst_200 {dimension_numbers = #tpu.dot_dimension_numbers<[1], [1], [0], [0], [0, 0, 1, 0], [], []>} : vector<32x64xbf16>, vector<32x64xbf16>, vector<32x32xf32> -> vector<32x32xf32>
    %cst_201 = arith.constant 2.500000e-01 : f32
    %510 = vector.broadcast %cst_201 : f32 to vector<32x32xf32>
    %511 = arith.mulf %509, %510 : vector<32x32xf32>
    %512 = arith.addf %511, %4 : vector<32x32xf32>
    %cst_202 = arith.constant dense<0xFF800000> : vector<32xf32>
    %513 = vector.multi_reduction <maximumf>, %512, %cst_202 [1] : vector<32x32xf32> to vector<32xf32>
    %514 = vector.shape_cast %513 : vector<32xf32> to vector<32x1xf32>
    %515 = vector.broadcast %514 : vector<32x1xf32> to vector<32x32xf32>
    %516 = arith.subf %512, %515 : vector<32x32xf32>
    %517 = math.exp %516 : vector<32x32xf32>
    %cst_203 = arith.constant dense<0.000000e+00> : vector<32xf32>
    %518 = vector.multi_reduction <add>, %517, %cst_203 [1] : vector<32x32xf32> to vector<32xf32>
    %519 = vector.shape_cast %518 : vector<32xf32> to vector<32x1xf32>
    %520 = tpu.reciprocal %519 {approx = true} : vector<32x1xf32> -> vector<32x1xf32>
    %521 = vector.broadcast %520 : vector<32x1xf32> to vector<32x32xf32>
    %522 = arith.mulf %517, %521 : vector<32x32xf32>
    %523 = arith.truncf %522 : vector<32x32xf32> to vector<32x32xbf16>
    %524 = vector.broadcast %505 : vector<1x64xf32> to vector<32x64xf32>
    %525 = arith.mulf %501, %524 : vector<32x64xf32>
    %526 = arith.truncf %525 : vector<32x64xf32> to vector<32x64xbf16>
    %cst_204 = arith.constant dense<0.000000e+00> : vector<32x64xf32>
    %527 = tpu.matmul %523, %526, %cst_204 {dimension_numbers = #tpu.dot_dimension_numbers<[1], [0], [0], [1], [0, 0, 1, 1], [], []>} : vector<32x32xbf16>, vector<32x64xbf16>, vector<32x64xf32> -> vector<32x64xf32>
    %528 = arith.addf %503, %527 : vector<32x64xf32>
    %c1_205 = arith.constant 1 : index
    %c0_206 = arith.constant 0 : index
    %c0_207 = arith.constant 0 : index
    %529 = vector.load %arg7[%c1_205, %c0_206, %c0_207] : memref<4x1x64xf32, #tpu.memory_space<vmem>>, vector<1x1x64xf32>
    %530 = vector.shape_cast %529 : vector<1x1x64xf32> to vector<1x64xf32>
    %531 = vector.broadcast %530 : vector<1x64xf32> to vector<32x64xf32>
    %532 = arith.mulf %495, %531 : vector<32x64xf32>
    %533 = arith.truncf %532 : vector<32x64xf32> to vector<32x64xbf16>
    %cst_208 = arith.constant dense<0.000000e+00> : vector<32x32xf32>
    %534 = tpu.matmul %533, %502, %cst_208 {dimension_numbers = #tpu.dot_dimension_numbers<[1], [1], [0], [0], [0, 0, 1, 0], [], []>} : vector<32x64xbf16>, vector<32x64xbf16>, vector<32x32xf32> -> vector<32x32xf32>
    %cst_209 = arith.constant 2.500000e-01 : f32
    %535 = vector.broadcast %cst_209 : f32 to vector<32x32xf32>
    %536 = arith.mulf %534, %535 : vector<32x32xf32>
    %537 = arith.addf %536, %4 : vector<32x32xf32>
    %cst_210 = arith.constant dense<0xFF800000> : vector<32xf32>
    %538 = vector.multi_reduction <maximumf>, %537, %cst_210 [1] : vector<32x32xf32> to vector<32xf32>
    %539 = vector.shape_cast %538 : vector<32xf32> to vector<32x1xf32>
    %540 = vector.broadcast %539 : vector<32x1xf32> to vector<32x32xf32>
    %541 = arith.subf %537, %540 : vector<32x32xf32>
    %542 = math.exp %541 : vector<32x32xf32>
    %cst_211 = arith.constant dense<0.000000e+00> : vector<32xf32>
    %543 = vector.multi_reduction <add>, %542, %cst_211 [1] : vector<32x32xf32> to vector<32xf32>
    %544 = vector.shape_cast %543 : vector<32xf32> to vector<32x1xf32>
    %545 = tpu.reciprocal %544 {approx = true} : vector<32x1xf32> -> vector<32x1xf32>
    %546 = vector.broadcast %545 : vector<32x1xf32> to vector<32x32xf32>
    %547 = arith.mulf %542, %546 : vector<32x32xf32>
    %548 = arith.truncf %547 : vector<32x32xf32> to vector<32x32xbf16>
    %549 = vector.broadcast %530 : vector<1x64xf32> to vector<32x64xf32>
    %550 = arith.mulf %501, %549 : vector<32x64xf32>
    %551 = arith.truncf %550 : vector<32x64xf32> to vector<32x64xbf16>
    %cst_212 = arith.constant dense<0.000000e+00> : vector<32x64xf32>
    %552 = tpu.matmul %548, %551, %cst_212 {dimension_numbers = #tpu.dot_dimension_numbers<[1], [0], [0], [1], [0, 0, 1, 1], [], []>} : vector<32x32xbf16>, vector<32x64xbf16>, vector<32x64xf32> -> vector<32x64xf32>
    %553 = arith.addf %528, %552 : vector<32x64xf32>
    %c2_213 = arith.constant 2 : index
    %c0_214 = arith.constant 0 : index
    %c0_215 = arith.constant 0 : index
    %554 = vector.load %arg7[%c2_213, %c0_214, %c0_215] : memref<4x1x64xf32, #tpu.memory_space<vmem>>, vector<1x1x64xf32>
    %555 = vector.shape_cast %554 : vector<1x1x64xf32> to vector<1x64xf32>
    %556 = vector.broadcast %555 : vector<1x64xf32> to vector<32x64xf32>
    %557 = arith.mulf %495, %556 : vector<32x64xf32>
    %558 = arith.truncf %557 : vector<32x64xf32> to vector<32x64xbf16>
    %cst_216 = arith.constant dense<0.000000e+00> : vector<32x32xf32>
    %559 = tpu.matmul %558, %502, %cst_216 {dimension_numbers = #tpu.dot_dimension_numbers<[1], [1], [0], [0], [0, 0, 1, 0], [], []>} : vector<32x64xbf16>, vector<32x64xbf16>, vector<32x32xf32> -> vector<32x32xf32>
    %cst_217 = arith.constant 2.500000e-01 : f32
    %560 = vector.broadcast %cst_217 : f32 to vector<32x32xf32>
    %561 = arith.mulf %559, %560 : vector<32x32xf32>
    %562 = arith.addf %561, %4 : vector<32x32xf32>
    %cst_218 = arith.constant dense<0xFF800000> : vector<32xf32>
    %563 = vector.multi_reduction <maximumf>, %562, %cst_218 [1] : vector<32x32xf32> to vector<32xf32>
    %564 = vector.shape_cast %563 : vector<32xf32> to vector<32x1xf32>
    %565 = vector.broadcast %564 : vector<32x1xf32> to vector<32x32xf32>
    %566 = arith.subf %562, %565 : vector<32x32xf32>
    %567 = math.exp %566 : vector<32x32xf32>
    %cst_219 = arith.constant dense<0.000000e+00> : vector<32xf32>
    %568 = vector.multi_reduction <add>, %567, %cst_219 [1] : vector<32x32xf32> to vector<32xf32>
    %569 = vector.shape_cast %568 : vector<32xf32> to vector<32x1xf32>
    %570 = tpu.reciprocal %569 {approx = true} : vector<32x1xf32> -> vector<32x1xf32>
    %571 = vector.broadcast %570 : vector<32x1xf32> to vector<32x32xf32>
    %572 = arith.mulf %567, %571 : vector<32x32xf32>
    %573 = arith.truncf %572 : vector<32x32xf32> to vector<32x32xbf16>
    %574 = vector.broadcast %555 : vector<1x64xf32> to vector<32x64xf32>
    %575 = arith.mulf %501, %574 : vector<32x64xf32>
    %576 = arith.truncf %575 : vector<32x64xf32> to vector<32x64xbf16>
    %cst_220 = arith.constant dense<0.000000e+00> : vector<32x64xf32>
    %577 = tpu.matmul %573, %576, %cst_220 {dimension_numbers = #tpu.dot_dimension_numbers<[1], [0], [0], [1], [0, 0, 1, 1], [], []>} : vector<32x32xbf16>, vector<32x64xbf16>, vector<32x64xf32> -> vector<32x64xf32>
    %578 = arith.addf %553, %577 : vector<32x64xf32>
    %c3_221 = arith.constant 3 : index
    %c0_222 = arith.constant 0 : index
    %c0_223 = arith.constant 0 : index
    %579 = vector.load %arg7[%c3_221, %c0_222, %c0_223] : memref<4x1x64xf32, #tpu.memory_space<vmem>>, vector<1x1x64xf32>
    %580 = vector.shape_cast %579 : vector<1x1x64xf32> to vector<1x64xf32>
    %581 = vector.broadcast %580 : vector<1x64xf32> to vector<32x64xf32>
    %582 = arith.mulf %495, %581 : vector<32x64xf32>
    %583 = arith.truncf %582 : vector<32x64xf32> to vector<32x64xbf16>
    %cst_224 = arith.constant dense<0.000000e+00> : vector<32x32xf32>
    %584 = tpu.matmul %583, %502, %cst_224 {dimension_numbers = #tpu.dot_dimension_numbers<[1], [1], [0], [0], [0, 0, 1, 0], [], []>} : vector<32x64xbf16>, vector<32x64xbf16>, vector<32x32xf32> -> vector<32x32xf32>
    %cst_225 = arith.constant 2.500000e-01 : f32
    %585 = vector.broadcast %cst_225 : f32 to vector<32x32xf32>
    %586 = arith.mulf %584, %585 : vector<32x32xf32>
    %587 = arith.addf %586, %4 : vector<32x32xf32>
    %cst_226 = arith.constant dense<0xFF800000> : vector<32xf32>
    %588 = vector.multi_reduction <maximumf>, %587, %cst_226 [1] : vector<32x32xf32> to vector<32xf32>
    %589 = vector.shape_cast %588 : vector<32xf32> to vector<32x1xf32>
    %590 = vector.broadcast %589 : vector<32x1xf32> to vector<32x32xf32>
    %591 = arith.subf %587, %590 : vector<32x32xf32>
    %592 = math.exp %591 : vector<32x32xf32>
    %cst_227 = arith.constant dense<0.000000e+00> : vector<32xf32>
    %593 = vector.multi_reduction <add>, %592, %cst_227 [1] : vector<32x32xf32> to vector<32xf32>
    %594 = vector.shape_cast %593 : vector<32xf32> to vector<32x1xf32>
    %595 = tpu.reciprocal %594 {approx = true} : vector<32x1xf32> -> vector<32x1xf32>
    %596 = vector.broadcast %595 : vector<32x1xf32> to vector<32x32xf32>
    %597 = arith.mulf %592, %596 : vector<32x32xf32>
    %598 = arith.truncf %597 : vector<32x32xf32> to vector<32x32xbf16>
    %599 = vector.broadcast %580 : vector<1x64xf32> to vector<32x64xf32>
    %600 = arith.mulf %501, %599 : vector<32x64xf32>
    %601 = arith.truncf %600 : vector<32x64xf32> to vector<32x64xbf16>
    %cst_228 = arith.constant dense<0.000000e+00> : vector<32x64xf32>
    %602 = tpu.matmul %598, %601, %cst_228 {dimension_numbers = #tpu.dot_dimension_numbers<[1], [0], [0], [1], [0, 0, 1, 1], [], []>} : vector<32x32xbf16>, vector<32x64xbf16>, vector<32x64xf32> -> vector<32x64xf32>
    %603 = arith.addf %578, %602 : vector<32x64xf32>
    %c2_229 = arith.constant 2 : index
    %c0_230 = arith.constant 0 : index
    %c0_231 = arith.constant 0 : index
    %604 = vector.load %arg11[%c2_229, %c0_230, %c0_231] : memref<4x64x64xbf16, #tpu.memory_space<vmem>>, vector<1x64x64xbf16>
    %605 = vector.shape_cast %604 : vector<1x64x64xbf16> to vector<64x64xbf16>
    %606 = arith.truncf %603 : vector<32x64xf32> to vector<32x64xbf16>
    %cst_232 = arith.constant dense<0.000000e+00> : vector<32x64xf32>
    %607 = tpu.matmul %606, %605, %cst_232 {dimension_numbers = #tpu.dot_dimension_numbers<[1], [0], [0], [1], [0, 0, 1, 1], [], []>} : vector<32x64xbf16>, vector<64x64xbf16>, vector<32x64xf32> -> vector<32x64xf32>
    %608 = arith.addf %461, %607 : vector<32x64xf32>
    %c19 = arith.constant 19 : index
    %c0_233 = arith.constant 0 : index
    %609 = vector.load %arg10[%c19, %c0_233] : memref<22x64xf32, #tpu.memory_space<vmem>>, vector<1x64xf32>
    %610 = vector.broadcast %609 : vector<1x64xf32> to vector<32x64xf32>
    %611 = arith.addf %608, %610 : vector<32x64xf32>
    %c13 = arith.constant 13 : index
    %c0_234 = arith.constant 0 : index
    %612 = vector.load %arg10[%c13, %c0_234] : memref<22x64xf32, #tpu.memory_space<vmem>>, vector<1x64xf32>
    %c14 = arith.constant 14 : index
    %c0_235 = arith.constant 0 : index
    %613 = vector.load %arg10[%c14, %c0_235] : memref<22x64xf32, #tpu.memory_space<vmem>>, vector<1x64xf32>
    %cst_236 = arith.constant dense<0.000000e+00> : vector<32xf32>
    %614 = vector.multi_reduction <add>, %611, %cst_236 [1] : vector<32x64xf32> to vector<32xf32>
    %615 = vector.shape_cast %614 : vector<32xf32> to vector<32x1xf32>
    %cst_237 = arith.constant 6.400000e+01 : f32
    %616 = vector.broadcast %cst_237 : f32 to vector<32x1xf32>
    %617 = arith.divf %615, %616 : vector<32x1xf32>
    %618 = vector.broadcast %617 : vector<32x1xf32> to vector<32x64xf32>
    %619 = arith.subf %611, %618 : vector<32x64xf32>
    %620 = arith.mulf %619, %619 : vector<32x64xf32>
    %cst_238 = arith.constant dense<0.000000e+00> : vector<32xf32>
    %621 = vector.multi_reduction <add>, %620, %cst_238 [1] : vector<32x64xf32> to vector<32xf32>
    %622 = vector.shape_cast %621 : vector<32xf32> to vector<32x1xf32>
    %cst_239 = arith.constant 6.400000e+01 : f32
    %623 = vector.broadcast %cst_239 : f32 to vector<32x1xf32>
    %624 = arith.divf %622, %623 : vector<32x1xf32>
    %cst_240 = arith.constant 9.99999974E-6 : f32
    %625 = vector.broadcast %cst_240 : f32 to vector<32x1xf32>
    %626 = arith.addf %624, %625 : vector<32x1xf32>
    %627 = math.rsqrt %626 : vector<32x1xf32>
    %628 = vector.broadcast %627 : vector<32x1xf32> to vector<32x64xf32>
    %629 = arith.mulf %619, %628 : vector<32x64xf32>
    %630 = vector.broadcast %612 : vector<1x64xf32> to vector<32x64xf32>
    %631 = arith.mulf %629, %630 : vector<32x64xf32>
    %632 = vector.broadcast %613 : vector<1x64xf32> to vector<32x64xf32>
    %633 = arith.addf %631, %632 : vector<32x64xf32>
    %c15 = arith.constant 15 : index
    %c0_241 = arith.constant 0 : index
    %634 = vector.load %arg10[%c15, %c0_241] : memref<22x64xf32, #tpu.memory_space<vmem>>, vector<1x64xf32>
    %c16 = arith.constant 16 : index
    %c0_242 = arith.constant 0 : index
    %635 = vector.load %arg10[%c16, %c0_242] : memref<22x64xf32, #tpu.memory_space<vmem>>, vector<1x64xf32>
    %cst_243 = arith.constant dense<0.000000e+00> : vector<16xf32>
    %636 = vector.multi_reduction <add>, %460, %cst_243 [1] : vector<16x64xf32> to vector<16xf32>
    %637 = vector.shape_cast %636 : vector<16xf32> to vector<16x1xf32>
    %cst_244 = arith.constant 6.400000e+01 : f32
    %638 = vector.broadcast %cst_244 : f32 to vector<16x1xf32>
    %639 = arith.divf %637, %638 : vector<16x1xf32>
    %640 = vector.broadcast %639 : vector<16x1xf32> to vector<16x64xf32>
    %641 = arith.subf %460, %640 : vector<16x64xf32>
    %642 = arith.mulf %641, %641 : vector<16x64xf32>
    %cst_245 = arith.constant dense<0.000000e+00> : vector<16xf32>
    %643 = vector.multi_reduction <add>, %642, %cst_245 [1] : vector<16x64xf32> to vector<16xf32>
    %644 = vector.shape_cast %643 : vector<16xf32> to vector<16x1xf32>
    %cst_246 = arith.constant 6.400000e+01 : f32
    %645 = vector.broadcast %cst_246 : f32 to vector<16x1xf32>
    %646 = arith.divf %644, %645 : vector<16x1xf32>
    %cst_247 = arith.constant 9.99999974E-6 : f32
    %647 = vector.broadcast %cst_247 : f32 to vector<16x1xf32>
    %648 = arith.addf %646, %647 : vector<16x1xf32>
    %649 = math.rsqrt %648 : vector<16x1xf32>
    %650 = vector.broadcast %649 : vector<16x1xf32> to vector<16x64xf32>
    %651 = arith.mulf %641, %650 : vector<16x64xf32>
    %652 = vector.broadcast %634 : vector<1x64xf32> to vector<16x64xf32>
    %653 = arith.mulf %651, %652 : vector<16x64xf32>
    %654 = vector.broadcast %635 : vector<1x64xf32> to vector<16x64xf32>
    %655 = arith.addf %653, %654 : vector<16x64xf32>
    %c2_248 = arith.constant 2 : index
    %c0_249 = arith.constant 0 : index
    %c0_250 = arith.constant 0 : index
    %656 = vector.load %arg13[%c2_248, %c0_249, %c0_250] : memref<4x64x128xbf16, #tpu.memory_space<vmem>>, vector<1x64x128xbf16>
    %657 = vector.shape_cast %656 : vector<1x64x128xbf16> to vector<64x128xbf16>
    %658 = arith.truncf %633 : vector<32x64xf32> to vector<32x64xbf16>
    %cst_251 = arith.constant dense<0.000000e+00> : vector<32x128xf32>
    %659 = tpu.matmul %658, %657, %cst_251 {dimension_numbers = #tpu.dot_dimension_numbers<[1], [0], [0], [1], [0, 0, 1, 1], [], []>} : vector<32x64xbf16>, vector<64x128xbf16>, vector<32x128xf32> -> vector<32x128xf32>
    %c5_252 = arith.constant 5 : index
    %c0_253 = arith.constant 0 : index
    %660 = vector.load %arg16[%c5_252, %c0_253] : memref<8x320xf32, #tpu.memory_space<vmem>>, vector<1x128xf32>
    %661 = vector.broadcast %660 : vector<1x128xf32> to vector<32x128xf32>
    %662 = arith.addf %659, %661 : vector<32x128xf32>
    %663 = vector.extract_strided_slice %662 {offsets = [0, 0], sizes = [32, 64], strides = [1, 1]} : vector<32x128xf32> to vector<32x64xf32>
    %664 = arith.mulf %663, %1 : vector<32x64xf32>
    %665 = vector.extract_strided_slice %662 {offsets = [0, 64], sizes = [32, 64], strides = [1, 1]} : vector<32x128xf32> to vector<32x64xf32>
    %666 = arith.mulf %665, %3 : vector<32x64xf32>
    %667 = arith.addf %664, %666 : vector<32x64xf32>
    %c3_254 = arith.constant 3 : index
    %c0_255 = arith.constant 0 : index
    %c0_256 = arith.constant 0 : index
    %668 = vector.load %arg13[%c3_254, %c0_255, %c0_256] : memref<4x64x128xbf16, #tpu.memory_space<vmem>>, vector<1x64x128xbf16>
    %669 = vector.shape_cast %668 : vector<1x64x128xbf16> to vector<64x128xbf16>
    %670 = arith.truncf %655 : vector<16x64xf32> to vector<16x64xbf16>
    %cst_257 = arith.constant dense<0.000000e+00> : vector<16x128xf32>
    %671 = tpu.matmul %670, %669, %cst_257 {dimension_numbers = #tpu.dot_dimension_numbers<[1], [0], [0], [1], [0, 0, 1, 1], [], []>} : vector<16x64xbf16>, vector<64x128xbf16>, vector<16x128xf32> -> vector<16x128xf32>
    %c6_258 = arith.constant 6 : index
    %c0_259 = arith.constant 0 : index
    %672 = vector.load %arg16[%c6_258, %c0_259] : memref<8x320xf32, #tpu.memory_space<vmem>>, vector<1x128xf32>
    %673 = vector.broadcast %672 : vector<1x128xf32> to vector<16x128xf32>
    %674 = arith.addf %671, %673 : vector<16x128xf32>
    %675 = vector.extract_strided_slice %674 {offsets = [0, 0], sizes = [16, 64], strides = [1, 1]} : vector<16x128xf32> to vector<16x64xf32>
    %676 = vector.extract_strided_slice %674 {offsets = [0, 64], sizes = [16, 64], strides = [1, 1]} : vector<16x128xf32> to vector<16x64xf32>
    %677 = arith.truncf %675 : vector<16x64xf32> to vector<16x64xbf16>
    %cst_260 = arith.constant 0.000000e+00 : f32
    %678 = vector.broadcast %cst_260 : f32 to vector<32x64xf32>
    %c0_261 = arith.constant 0 : index
    %c0_262 = arith.constant 0 : index
    %c0_263 = arith.constant 0 : index
    %679 = vector.load %arg7[%c0_261, %c0_262, %c0_263] : memref<4x1x64xf32, #tpu.memory_space<vmem>>, vector<1x1x64xf32>
    %680 = vector.shape_cast %679 : vector<1x1x64xf32> to vector<1x64xf32>
    %681 = vector.broadcast %680 : vector<1x64xf32> to vector<32x64xf32>
    %682 = arith.mulf %667, %681 : vector<32x64xf32>
    %683 = arith.truncf %682 : vector<32x64xf32> to vector<32x64xbf16>
    %cst_264 = arith.constant dense<0.000000e+00> : vector<32x16xf32>
    %684 = tpu.matmul %683, %677, %cst_264 {dimension_numbers = #tpu.dot_dimension_numbers<[1], [1], [0], [0], [0, 0, 1, 0], [], []>} : vector<32x64xbf16>, vector<16x64xbf16>, vector<32x16xf32> -> vector<32x16xf32>
    %cst_265 = arith.constant 2.500000e-01 : f32
    %685 = vector.broadcast %cst_265 : f32 to vector<32x16xf32>
    %686 = arith.mulf %684, %685 : vector<32x16xf32>
    %687 = arith.addf %686, %5 : vector<32x16xf32>
    %cst_266 = arith.constant dense<0xFF800000> : vector<32xf32>
    %688 = vector.multi_reduction <maximumf>, %687, %cst_266 [1] : vector<32x16xf32> to vector<32xf32>
    %689 = vector.shape_cast %688 : vector<32xf32> to vector<32x1xf32>
    %690 = vector.broadcast %689 : vector<32x1xf32> to vector<32x16xf32>
    %691 = arith.subf %687, %690 : vector<32x16xf32>
    %692 = math.exp %691 : vector<32x16xf32>
    %cst_267 = arith.constant dense<0.000000e+00> : vector<32xf32>
    %693 = vector.multi_reduction <add>, %692, %cst_267 [1] : vector<32x16xf32> to vector<32xf32>
    %694 = vector.shape_cast %693 : vector<32xf32> to vector<32x1xf32>
    %695 = tpu.reciprocal %694 {approx = true} : vector<32x1xf32> -> vector<32x1xf32>
    %696 = vector.broadcast %695 : vector<32x1xf32> to vector<32x16xf32>
    %697 = arith.mulf %692, %696 : vector<32x16xf32>
    %698 = arith.truncf %697 : vector<32x16xf32> to vector<32x16xbf16>
    %699 = vector.broadcast %680 : vector<1x64xf32> to vector<16x64xf32>
    %700 = arith.mulf %676, %699 : vector<16x64xf32>
    %701 = arith.truncf %700 : vector<16x64xf32> to vector<16x64xbf16>
    %cst_268 = arith.constant dense<0.000000e+00> : vector<32x64xf32>
    %702 = tpu.matmul %698, %701, %cst_268 {dimension_numbers = #tpu.dot_dimension_numbers<[1], [0], [0], [1], [0, 0, 1, 1], [], []>} : vector<32x16xbf16>, vector<16x64xbf16>, vector<32x64xf32> -> vector<32x64xf32>
    %703 = arith.addf %678, %702 : vector<32x64xf32>
    %c1_269 = arith.constant 1 : index
    %c0_270 = arith.constant 0 : index
    %c0_271 = arith.constant 0 : index
    %704 = vector.load %arg7[%c1_269, %c0_270, %c0_271] : memref<4x1x64xf32, #tpu.memory_space<vmem>>, vector<1x1x64xf32>
    %705 = vector.shape_cast %704 : vector<1x1x64xf32> to vector<1x64xf32>
    %706 = vector.broadcast %705 : vector<1x64xf32> to vector<32x64xf32>
    %707 = arith.mulf %667, %706 : vector<32x64xf32>
    %708 = arith.truncf %707 : vector<32x64xf32> to vector<32x64xbf16>
    %cst_272 = arith.constant dense<0.000000e+00> : vector<32x16xf32>
    %709 = tpu.matmul %708, %677, %cst_272 {dimension_numbers = #tpu.dot_dimension_numbers<[1], [1], [0], [0], [0, 0, 1, 0], [], []>} : vector<32x64xbf16>, vector<16x64xbf16>, vector<32x16xf32> -> vector<32x16xf32>
    %cst_273 = arith.constant 2.500000e-01 : f32
    %710 = vector.broadcast %cst_273 : f32 to vector<32x16xf32>
    %711 = arith.mulf %709, %710 : vector<32x16xf32>
    %712 = arith.addf %711, %5 : vector<32x16xf32>
    %cst_274 = arith.constant dense<0xFF800000> : vector<32xf32>
    %713 = vector.multi_reduction <maximumf>, %712, %cst_274 [1] : vector<32x16xf32> to vector<32xf32>
    %714 = vector.shape_cast %713 : vector<32xf32> to vector<32x1xf32>
    %715 = vector.broadcast %714 : vector<32x1xf32> to vector<32x16xf32>
    %716 = arith.subf %712, %715 : vector<32x16xf32>
    %717 = math.exp %716 : vector<32x16xf32>
    %cst_275 = arith.constant dense<0.000000e+00> : vector<32xf32>
    %718 = vector.multi_reduction <add>, %717, %cst_275 [1] : vector<32x16xf32> to vector<32xf32>
    %719 = vector.shape_cast %718 : vector<32xf32> to vector<32x1xf32>
    %720 = tpu.reciprocal %719 {approx = true} : vector<32x1xf32> -> vector<32x1xf32>
    %721 = vector.broadcast %720 : vector<32x1xf32> to vector<32x16xf32>
    %722 = arith.mulf %717, %721 : vector<32x16xf32>
    %723 = arith.truncf %722 : vector<32x16xf32> to vector<32x16xbf16>
    %724 = vector.broadcast %705 : vector<1x64xf32> to vector<16x64xf32>
    %725 = arith.mulf %676, %724 : vector<16x64xf32>
    %726 = arith.truncf %725 : vector<16x64xf32> to vector<16x64xbf16>
    %cst_276 = arith.constant dense<0.000000e+00> : vector<32x64xf32>
    %727 = tpu.matmul %723, %726, %cst_276 {dimension_numbers = #tpu.dot_dimension_numbers<[1], [0], [0], [1], [0, 0, 1, 1], [], []>} : vector<32x16xbf16>, vector<16x64xbf16>, vector<32x64xf32> -> vector<32x64xf32>
    %728 = arith.addf %703, %727 : vector<32x64xf32>
    %c2_277 = arith.constant 2 : index
    %c0_278 = arith.constant 0 : index
    %c0_279 = arith.constant 0 : index
    %729 = vector.load %arg7[%c2_277, %c0_278, %c0_279] : memref<4x1x64xf32, #tpu.memory_space<vmem>>, vector<1x1x64xf32>
    %730 = vector.shape_cast %729 : vector<1x1x64xf32> to vector<1x64xf32>
    %731 = vector.broadcast %730 : vector<1x64xf32> to vector<32x64xf32>
    %732 = arith.mulf %667, %731 : vector<32x64xf32>
    %733 = arith.truncf %732 : vector<32x64xf32> to vector<32x64xbf16>
    %cst_280 = arith.constant dense<0.000000e+00> : vector<32x16xf32>
    %734 = tpu.matmul %733, %677, %cst_280 {dimension_numbers = #tpu.dot_dimension_numbers<[1], [1], [0], [0], [0, 0, 1, 0], [], []>} : vector<32x64xbf16>, vector<16x64xbf16>, vector<32x16xf32> -> vector<32x16xf32>
    %cst_281 = arith.constant 2.500000e-01 : f32
    %735 = vector.broadcast %cst_281 : f32 to vector<32x16xf32>
    %736 = arith.mulf %734, %735 : vector<32x16xf32>
    %737 = arith.addf %736, %5 : vector<32x16xf32>
    %cst_282 = arith.constant dense<0xFF800000> : vector<32xf32>
    %738 = vector.multi_reduction <maximumf>, %737, %cst_282 [1] : vector<32x16xf32> to vector<32xf32>
    %739 = vector.shape_cast %738 : vector<32xf32> to vector<32x1xf32>
    %740 = vector.broadcast %739 : vector<32x1xf32> to vector<32x16xf32>
    %741 = arith.subf %737, %740 : vector<32x16xf32>
    %742 = math.exp %741 : vector<32x16xf32>
    %cst_283 = arith.constant dense<0.000000e+00> : vector<32xf32>
    %743 = vector.multi_reduction <add>, %742, %cst_283 [1] : vector<32x16xf32> to vector<32xf32>
    %744 = vector.shape_cast %743 : vector<32xf32> to vector<32x1xf32>
    %745 = tpu.reciprocal %744 {approx = true} : vector<32x1xf32> -> vector<32x1xf32>
    %746 = vector.broadcast %745 : vector<32x1xf32> to vector<32x16xf32>
    %747 = arith.mulf %742, %746 : vector<32x16xf32>
    %748 = arith.truncf %747 : vector<32x16xf32> to vector<32x16xbf16>
    %749 = vector.broadcast %730 : vector<1x64xf32> to vector<16x64xf32>
    %750 = arith.mulf %676, %749 : vector<16x64xf32>
    %751 = arith.truncf %750 : vector<16x64xf32> to vector<16x64xbf16>
    %cst_284 = arith.constant dense<0.000000e+00> : vector<32x64xf32>
    %752 = tpu.matmul %748, %751, %cst_284 {dimension_numbers = #tpu.dot_dimension_numbers<[1], [0], [0], [1], [0, 0, 1, 1], [], []>} : vector<32x16xbf16>, vector<16x64xbf16>, vector<32x64xf32> -> vector<32x64xf32>
    %753 = arith.addf %728, %752 : vector<32x64xf32>
    %c3_285 = arith.constant 3 : index
    %c0_286 = arith.constant 0 : index
    %c0_287 = arith.constant 0 : index
    %754 = vector.load %arg7[%c3_285, %c0_286, %c0_287] : memref<4x1x64xf32, #tpu.memory_space<vmem>>, vector<1x1x64xf32>
    %755 = vector.shape_cast %754 : vector<1x1x64xf32> to vector<1x64xf32>
    %756 = vector.broadcast %755 : vector<1x64xf32> to vector<32x64xf32>
    %757 = arith.mulf %667, %756 : vector<32x64xf32>
    %758 = arith.truncf %757 : vector<32x64xf32> to vector<32x64xbf16>
    %cst_288 = arith.constant dense<0.000000e+00> : vector<32x16xf32>
    %759 = tpu.matmul %758, %677, %cst_288 {dimension_numbers = #tpu.dot_dimension_numbers<[1], [1], [0], [0], [0, 0, 1, 0], [], []>} : vector<32x64xbf16>, vector<16x64xbf16>, vector<32x16xf32> -> vector<32x16xf32>
    %cst_289 = arith.constant 2.500000e-01 : f32
    %760 = vector.broadcast %cst_289 : f32 to vector<32x16xf32>
    %761 = arith.mulf %759, %760 : vector<32x16xf32>
    %762 = arith.addf %761, %5 : vector<32x16xf32>
    %cst_290 = arith.constant dense<0xFF800000> : vector<32xf32>
    %763 = vector.multi_reduction <maximumf>, %762, %cst_290 [1] : vector<32x16xf32> to vector<32xf32>
    %764 = vector.shape_cast %763 : vector<32xf32> to vector<32x1xf32>
    %765 = vector.broadcast %764 : vector<32x1xf32> to vector<32x16xf32>
    %766 = arith.subf %762, %765 : vector<32x16xf32>
    %767 = math.exp %766 : vector<32x16xf32>
    %cst_291 = arith.constant dense<0.000000e+00> : vector<32xf32>
    %768 = vector.multi_reduction <add>, %767, %cst_291 [1] : vector<32x16xf32> to vector<32xf32>
    %769 = vector.shape_cast %768 : vector<32xf32> to vector<32x1xf32>
    %770 = tpu.reciprocal %769 {approx = true} : vector<32x1xf32> -> vector<32x1xf32>
    %771 = vector.broadcast %770 : vector<32x1xf32> to vector<32x16xf32>
    %772 = arith.mulf %767, %771 : vector<32x16xf32>
    %773 = arith.truncf %772 : vector<32x16xf32> to vector<32x16xbf16>
    %774 = vector.broadcast %755 : vector<1x64xf32> to vector<16x64xf32>
    %775 = arith.mulf %676, %774 : vector<16x64xf32>
    %776 = arith.truncf %775 : vector<16x64xf32> to vector<16x64xbf16>
    %cst_292 = arith.constant dense<0.000000e+00> : vector<32x64xf32>
    %777 = tpu.matmul %773, %776, %cst_292 {dimension_numbers = #tpu.dot_dimension_numbers<[1], [0], [0], [1], [0, 0, 1, 1], [], []>} : vector<32x16xbf16>, vector<16x64xbf16>, vector<32x64xf32> -> vector<32x64xf32>
    %778 = arith.addf %753, %777 : vector<32x64xf32>
    %c3_293 = arith.constant 3 : index
    %c0_294 = arith.constant 0 : index
    %c0_295 = arith.constant 0 : index
    %779 = vector.load %arg11[%c3_293, %c0_294, %c0_295] : memref<4x64x64xbf16, #tpu.memory_space<vmem>>, vector<1x64x64xbf16>
    %780 = vector.shape_cast %779 : vector<1x64x64xbf16> to vector<64x64xbf16>
    %781 = arith.truncf %778 : vector<32x64xf32> to vector<32x64xbf16>
    %cst_296 = arith.constant dense<0.000000e+00> : vector<32x64xf32>
    %782 = tpu.matmul %781, %780, %cst_296 {dimension_numbers = #tpu.dot_dimension_numbers<[1], [0], [0], [1], [0, 0, 1, 1], [], []>} : vector<32x64xbf16>, vector<64x64xbf16>, vector<32x64xf32> -> vector<32x64xf32>
    %783 = arith.addf %611, %782 : vector<32x64xf32>
    %c20 = arith.constant 20 : index
    %c0_297 = arith.constant 0 : index
    %784 = vector.load %arg10[%c20, %c0_297] : memref<22x64xf32, #tpu.memory_space<vmem>>, vector<1x64xf32>
    %785 = vector.broadcast %784 : vector<1x64xf32> to vector<32x64xf32>
    %786 = arith.addf %783, %785 : vector<32x64xf32>
    %787 = tpu.concatenate %460, %786 in 0 : vector<16x64xf32>, vector<32x64xf32> -> vector<48x64xf32>
    %c17 = arith.constant 17 : index
    %c0_298 = arith.constant 0 : index
    %788 = vector.load %arg10[%c17, %c0_298] : memref<22x64xf32, #tpu.memory_space<vmem>>, vector<1x64xf32>
    %c18 = arith.constant 18 : index
    %c0_299 = arith.constant 0 : index
    %789 = vector.load %arg10[%c18, %c0_299] : memref<22x64xf32, #tpu.memory_space<vmem>>, vector<1x64xf32>
    %cst_300 = arith.constant dense<0.000000e+00> : vector<48xf32>
    %790 = vector.multi_reduction <add>, %787, %cst_300 [1] : vector<48x64xf32> to vector<48xf32>
    %791 = vector.shape_cast %790 : vector<48xf32> to vector<48x1xf32>
    %cst_301 = arith.constant 6.400000e+01 : f32
    %792 = vector.broadcast %cst_301 : f32 to vector<48x1xf32>
    %793 = arith.divf %791, %792 : vector<48x1xf32>
    %794 = vector.broadcast %793 : vector<48x1xf32> to vector<48x64xf32>
    %795 = arith.subf %787, %794 : vector<48x64xf32>
    %796 = arith.mulf %795, %795 : vector<48x64xf32>
    %cst_302 = arith.constant dense<0.000000e+00> : vector<48xf32>
    %797 = vector.multi_reduction <add>, %796, %cst_302 [1] : vector<48x64xf32> to vector<48xf32>
    %798 = vector.shape_cast %797 : vector<48xf32> to vector<48x1xf32>
    %cst_303 = arith.constant 6.400000e+01 : f32
    %799 = vector.broadcast %cst_303 : f32 to vector<48x1xf32>
    %800 = arith.divf %798, %799 : vector<48x1xf32>
    %cst_304 = arith.constant 9.99999974E-6 : f32
    %801 = vector.broadcast %cst_304 : f32 to vector<48x1xf32>
    %802 = arith.addf %800, %801 : vector<48x1xf32>
    %803 = math.rsqrt %802 : vector<48x1xf32>
    %804 = vector.broadcast %803 : vector<48x1xf32> to vector<48x64xf32>
    %805 = arith.mulf %795, %804 : vector<48x64xf32>
    %806 = vector.broadcast %788 : vector<1x64xf32> to vector<48x64xf32>
    %807 = arith.mulf %805, %806 : vector<48x64xf32>
    %808 = vector.broadcast %789 : vector<1x64xf32> to vector<48x64xf32>
    %809 = arith.addf %807, %808 : vector<48x64xf32>
    %c1_305 = arith.constant 1 : index
    %c0_306 = arith.constant 0 : index
    %c0_307 = arith.constant 0 : index
    %810 = vector.load %arg14[%c1_305, %c0_306, %c0_307] : memref<2x64x256xbf16, #tpu.memory_space<vmem>>, vector<1x64x256xbf16>
    %811 = vector.shape_cast %810 : vector<1x64x256xbf16> to vector<64x256xbf16>
    %812 = arith.truncf %809 : vector<48x64xf32> to vector<48x64xbf16>
    %cst_308 = arith.constant dense<0.000000e+00> : vector<48x256xf32>
    %813 = tpu.matmul %812, %811, %cst_308 {dimension_numbers = #tpu.dot_dimension_numbers<[1], [0], [0], [1], [0, 0, 1, 1], [], []>} : vector<48x64xbf16>, vector<64x256xbf16>, vector<48x256xf32> -> vector<48x256xf32>
    %c7_309 = arith.constant 7 : index
    %c0_310 = arith.constant 0 : index
    %814 = vector.load %arg16[%c7_309, %c0_310] : memref<8x320xf32, #tpu.memory_space<vmem>>, vector<1x256xf32>
    %815 = vector.broadcast %814 : vector<1x256xf32> to vector<48x256xf32>
    %816 = arith.addf %813, %815 : vector<48x256xf32>
    %cst_311 = arith.constant 5.000000e-01 : f32
    %817 = vector.broadcast %cst_311 : f32 to vector<48x256xf32>
    %818 = arith.mulf %817, %816 : vector<48x256xf32>
    %cst_312 = arith.constant 0.707106769 : f32
    %819 = vector.broadcast %cst_312 : f32 to vector<48x256xf32>
    %820 = arith.mulf %816, %819 : vector<48x256xf32>
    %821 = math.absf %820 : vector<48x256xf32>
    %cst_313 = arith.constant 0.327591091 : f32
    %822 = vector.broadcast %cst_313 : f32 to vector<48x256xf32>
    %823 = arith.mulf %822, %821 : vector<48x256xf32>
    %cst_314 = arith.constant 1.000000e+00 : f32
    %824 = vector.broadcast %cst_314 : f32 to vector<48x256xf32>
    %825 = arith.addf %824, %823 : vector<48x256xf32>
    %826 = tpu.reciprocal %825 {approx = true} : vector<48x256xf32> -> vector<48x256xf32>
    %cst_315 = arith.constant 1.06140542 : f32
    %827 = vector.broadcast %cst_315 : f32 to vector<48x256xf32>
    %828 = arith.mulf %827, %826 : vector<48x256xf32>
    %cst_316 = arith.constant -1.45315206 : f32
    %829 = vector.broadcast %cst_316 : f32 to vector<48x256xf32>
    %830 = arith.addf %828, %829 : vector<48x256xf32>
    %831 = arith.mulf %830, %826 : vector<48x256xf32>
    %cst_317 = arith.constant 1.42141378 : f32
    %832 = vector.broadcast %cst_317 : f32 to vector<48x256xf32>
    %833 = arith.addf %831, %832 : vector<48x256xf32>
    %834 = arith.mulf %833, %826 : vector<48x256xf32>
    %cst_318 = arith.constant -0.284496725 : f32
    %835 = vector.broadcast %cst_318 : f32 to vector<48x256xf32>
    %836 = arith.addf %834, %835 : vector<48x256xf32>
    %837 = arith.mulf %836, %826 : vector<48x256xf32>
    %cst_319 = arith.constant 0.254829586 : f32
    %838 = vector.broadcast %cst_319 : f32 to vector<48x256xf32>
    %839 = arith.addf %837, %838 : vector<48x256xf32>
    %840 = arith.mulf %839, %826 : vector<48x256xf32>
    %cst_320 = arith.constant 0.000000e+00 : f32
    %841 = vector.broadcast %cst_320 : f32 to vector<48x256xf32>
    %842 = arith.subf %841, %821 : vector<48x256xf32>
    %843 = arith.mulf %842, %821 : vector<48x256xf32>
    %844 = math.exp %843 : vector<48x256xf32>
    %845 = arith.mulf %840, %844 : vector<48x256xf32>
    %cst_321 = arith.constant 1.000000e+00 : f32
    %846 = vector.broadcast %cst_321 : f32 to vector<48x256xf32>
    %847 = arith.subf %846, %845 : vector<48x256xf32>
    %cst_322 = arith.constant 0.000000e+00 : f32
    %848 = vector.broadcast %cst_322 : f32 to vector<48x256xf32>
    %849 = arith.cmpf oge, %820, %848 : vector<48x256xf32>
    %cst_323 = arith.constant 0.000000e+00 : f32
    %850 = vector.broadcast %cst_323 : f32 to vector<48x256xf32>
    %851 = arith.subf %850, %847 : vector<48x256xf32>
    %852 = arith.select %849, %847, %851 : vector<48x256xi1>, vector<48x256xf32>
    %cst_324 = arith.constant 1.000000e+00 : f32
    %853 = vector.broadcast %cst_324 : f32 to vector<48x256xf32>
    %854 = arith.addf %853, %852 : vector<48x256xf32>
    %855 = arith.mulf %818, %854 : vector<48x256xf32>
    %c1_325 = arith.constant 1 : index
    %c0_326 = arith.constant 0 : index
    %c0_327 = arith.constant 0 : index
    %856 = vector.load %arg15[%c1_325, %c0_326, %c0_327] : memref<2x256x64xbf16, #tpu.memory_space<vmem>>, vector<1x256x64xbf16>
    %857 = vector.shape_cast %856 : vector<1x256x64xbf16> to vector<256x64xbf16>
    %858 = arith.truncf %855 : vector<48x256xf32> to vector<48x256xbf16>
    %cst_328 = arith.constant dense<0.000000e+00> : vector<48x64xf32>
    %859 = tpu.matmul %858, %857, %cst_328 {dimension_numbers = #tpu.dot_dimension_numbers<[1], [0], [0], [1], [0, 0, 1, 1], [], []>} : vector<48x256xbf16>, vector<256x64xbf16>, vector<48x64xf32> -> vector<48x64xf32>
    %c21 = arith.constant 21 : index
    %c0_329 = arith.constant 0 : index
    %860 = vector.load %arg10[%c21, %c0_329] : memref<22x64xf32, #tpu.memory_space<vmem>>, vector<1x64xf32>
    %861 = vector.broadcast %860 : vector<1x64xf32> to vector<48x64xf32>
    %862 = arith.addf %859, %861 : vector<48x64xf32>
    %863 = arith.addf %787, %862 : vector<48x64xf32>
    %864 = vector.extract_strided_slice %863 {offsets = [0, 0], sizes = [16, 64], strides = [1, 1]} : vector<48x64xf32> to vector<16x64xf32>
    %865 = vector.extract_strided_slice %863 {offsets = [16, 0], sizes = [32, 64], strides = [1, 1]} : vector<48x64xf32> to vector<32x64xf32>
    %c3_330 = arith.constant 3 : index
    %c0_331 = arith.constant 0 : index
    %866 = vector.load %arg9[%c3_330, %c0_331] : memref<5x64xf32, #tpu.memory_space<vmem>>, vector<1x64xf32>
    %c4_332 = arith.constant 4 : index
    %c0_333 = arith.constant 0 : index
    %867 = vector.load %arg9[%c4_332, %c0_333] : memref<5x64xf32, #tpu.memory_space<vmem>>, vector<1x64xf32>
    %cst_334 = arith.constant dense<0.000000e+00> : vector<16xf32>
    %868 = vector.multi_reduction <add>, %864, %cst_334 [1] : vector<16x64xf32> to vector<16xf32>
    %869 = vector.shape_cast %868 : vector<16xf32> to vector<16x1xf32>
    %cst_335 = arith.constant 6.400000e+01 : f32
    %870 = vector.broadcast %cst_335 : f32 to vector<16x1xf32>
    %871 = arith.divf %869, %870 : vector<16x1xf32>
    %872 = vector.broadcast %871 : vector<16x1xf32> to vector<16x64xf32>
    %873 = arith.subf %864, %872 : vector<16x64xf32>
    %874 = arith.mulf %873, %873 : vector<16x64xf32>
    %cst_336 = arith.constant dense<0.000000e+00> : vector<16xf32>
    %875 = vector.multi_reduction <add>, %874, %cst_336 [1] : vector<16x64xf32> to vector<16xf32>
    %876 = vector.shape_cast %875 : vector<16xf32> to vector<16x1xf32>
    %cst_337 = arith.constant 6.400000e+01 : f32
    %877 = vector.broadcast %cst_337 : f32 to vector<16x1xf32>
    %878 = arith.divf %876, %877 : vector<16x1xf32>
    %cst_338 = arith.constant 9.99999974E-6 : f32
    %879 = vector.broadcast %cst_338 : f32 to vector<16x1xf32>
    %880 = arith.addf %878, %879 : vector<16x1xf32>
    %881 = math.rsqrt %880 : vector<16x1xf32>
    %882 = vector.broadcast %881 : vector<16x1xf32> to vector<16x64xf32>
    %883 = arith.mulf %873, %882 : vector<16x64xf32>
    %884 = vector.broadcast %866 : vector<1x64xf32> to vector<16x64xf32>
    %885 = arith.mulf %883, %884 : vector<16x64xf32>
    %886 = vector.broadcast %867 : vector<1x64xf32> to vector<16x64xf32>
    %887 = arith.addf %885, %886 : vector<16x64xf32>
    %cst_339 = arith.constant dense<0.000000e+00> : vector<32xf32>
    %888 = vector.multi_reduction <add>, %865, %cst_339 [1] : vector<32x64xf32> to vector<32xf32>
    %889 = vector.shape_cast %888 : vector<32xf32> to vector<32x1xf32>
    %cst_340 = arith.constant 6.400000e+01 : f32
    %890 = vector.broadcast %cst_340 : f32 to vector<32x1xf32>
    %891 = arith.divf %889, %890 : vector<32x1xf32>
    %892 = vector.broadcast %891 : vector<32x1xf32> to vector<32x64xf32>
    %893 = arith.subf %865, %892 : vector<32x64xf32>
    %894 = arith.mulf %893, %893 : vector<32x64xf32>
    %cst_341 = arith.constant dense<0.000000e+00> : vector<32xf32>
    %895 = vector.multi_reduction <add>, %894, %cst_341 [1] : vector<32x64xf32> to vector<32xf32>
    %896 = vector.shape_cast %895 : vector<32xf32> to vector<32x1xf32>
    %cst_342 = arith.constant 6.400000e+01 : f32
    %897 = vector.broadcast %cst_342 : f32 to vector<32x1xf32>
    %898 = arith.divf %896, %897 : vector<32x1xf32>
    %cst_343 = arith.constant 9.99999974E-6 : f32
    %899 = vector.broadcast %cst_343 : f32 to vector<32x1xf32>
    %900 = arith.addf %898, %899 : vector<32x1xf32>
    %901 = math.rsqrt %900 : vector<32x1xf32>
    %902 = vector.broadcast %901 : vector<32x1xf32> to vector<32x64xf32>
    %903 = arith.mulf %893, %902 : vector<32x64xf32>
    %904 = vector.broadcast %866 : vector<1x64xf32> to vector<32x64xf32>
    %905 = arith.mulf %903, %904 : vector<32x64xf32>
    %906 = vector.broadcast %867 : vector<1x64xf32> to vector<32x64xf32>
    %907 = arith.addf %905, %906 : vector<32x64xf32>
    %908 = tpu.concatenate %887, %907 in 0 : vector<16x64xf32>, vector<32x64xf32> -> vector<48x64xf32>
    %c0_344 = arith.constant 0 : index
    %c0_345 = arith.constant 0 : index
    %909 = vector.load %arg6[%c0_344, %c0_345] : memref<32x48xf32, #tpu.memory_space<vmem>>, vector<32x48xf32>
    %cst_346 = arith.constant dense<0.000000e+00> : vector<32x64xf32>
    %910 = tpu.matmul %909, %908, %cst_346 {dimension_numbers = #tpu.dot_dimension_numbers<[1], [0], [0], [1], [0, 0, 1, 1], [], []>} : vector<32x48xf32>, vector<48x64xf32>, vector<32x64xf32> -> vector<32x64xf32>
    %c0_347 = arith.constant 0 : index
    %c0_348 = arith.constant 0 : index
    %911 = vector.load %arg1[%c0_347, %c0_348] : memref<32x8xf32, #tpu.memory_space<vmem>>, vector<32x8xf32>
    %c0_349 = arith.constant 0 : index
    %c0_350 = arith.constant 0 : index
    %912 = vector.load %arg17[%c0_349, %c0_350] : memref<128x64xf32, #tpu.memory_space<vmem>>, vector<32x64xf32>
    tpu.vector_store %arg17[%c0_349, %c0_350], %910 {strides = array<i32>} : memref<128x64xf32, #tpu.memory_space<vmem>>, vector<32x64xf32>,
    %c0_351 = arith.constant 0 : index
    %c0_352 = arith.constant 0 : index
    %913 = vector.load %arg18[%c0_351, %c0_352] : memref<128x8xf32, #tpu.memory_space<vmem>>, vector<32x8xf32>
    tpu.vector_store %arg18[%c0_351, %c0_352], %911 {strides = array<i32>} : memref<128x8xf32, #tpu.memory_space<vmem>>, vector<32x8xf32>,
    %c32 = arith.constant 32 : index
    %c0_353 = arith.constant 0 : index
    %914 = vector.load %arg17[%c32, %c0_353] : memref<128x64xf32, #tpu.memory_space<vmem>>, vector<32x64xf32>
    tpu.vector_store %arg17[%c32, %c0_353], %910 {strides = array<i32>} : memref<128x64xf32, #tpu.memory_space<vmem>>, vector<32x64xf32>,
    %c32_354 = arith.constant 32 : index
    %c0_355 = arith.constant 0 : index
    %915 = vector.load %arg18[%c32_354, %c0_355] : memref<128x8xf32, #tpu.memory_space<vmem>>, vector<32x8xf32>
    tpu.vector_store %arg18[%c32_354, %c0_355], %911 {strides = array<i32>} : memref<128x8xf32, #tpu.memory_space<vmem>>, vector<32x8xf32>,
    %c64 = arith.constant 64 : index
    %c0_356 = arith.constant 0 : index
    %916 = vector.load %arg17[%c64, %c0_356] : memref<128x64xf32, #tpu.memory_space<vmem>>, vector<32x64xf32>
    tpu.vector_store %arg17[%c64, %c0_356], %910 {strides = array<i32>} : memref<128x64xf32, #tpu.memory_space<vmem>>, vector<32x64xf32>,
    %c64_357 = arith.constant 64 : index
    %c0_358 = arith.constant 0 : index
    %917 = vector.load %arg18[%c64_357, %c0_358] : memref<128x8xf32, #tpu.memory_space<vmem>>, vector<32x8xf32>
    tpu.vector_store %arg18[%c64_357, %c0_358], %911 {strides = array<i32>} : memref<128x8xf32, #tpu.memory_space<vmem>>, vector<32x8xf32>,
    %c96 = arith.constant 96 : index
    %c0_359 = arith.constant 0 : index
    %918 = vector.load %arg17[%c96, %c0_359] : memref<128x64xf32, #tpu.memory_space<vmem>>, vector<32x64xf32>
    tpu.vector_store %arg17[%c96, %c0_359], %910 {strides = array<i32>} : memref<128x64xf32, #tpu.memory_space<vmem>>, vector<32x64xf32>,
    %c96_360 = arith.constant 96 : index
    %c0_361 = arith.constant 0 : index
    %919 = vector.load %arg18[%c96_360, %c0_361] : memref<128x8xf32, #tpu.memory_space<vmem>>, vector<32x8xf32>
    tpu.vector_store %arg18[%c96_360, %c0_361], %911 {strides = array<i32>} : memref<128x8xf32, #tpu.memory_space<vmem>>, vector<32x8xf32>,
    return
  }
  func.func @transform_0(%arg0: i32) -> (i32, i32) {
    %c0_i32 = arith.constant 0 : i32
    %c0_i32_0 = arith.constant 0 : i32
    %c0_i32_1 = arith.constant 0 : i32
    return %c0_i32, %c0_i32_0 : i32, i32
  }
  func.func @transform_1(%arg0: i32) -> (i32, i32) {
    %c0_i32 = arith.constant 0 : i32
    %c0_i32_0 = arith.constant 0 : i32
    %c0_i32_1 = arith.constant 0 : i32
    return %c0_i32, %c0_i32_0 : i32, i32
  }
  func.func @transform_2(%arg0: i32) -> (i32, i32, i32) {
    %c0_i32 = arith.constant 0 : i32
    %c0_i32_0 = arith.constant 0 : i32
    %c0_i32_1 = arith.constant 0 : i32
    %c0_i32_2 = arith.constant 0 : i32
    return %c0_i32, %c0_i32_0, %c0_i32_1 : i32, i32, i32
  }
  func.func @transform_3(%arg0: i32) -> (i32, i32) {
    %c0_i32 = arith.constant 0 : i32
    %c0_i32_0 = arith.constant 0 : i32
    %c0_i32_1 = arith.constant 0 : i32
    return %c0_i32, %c0_i32_0 : i32, i32
  }
  func.func @transform_4(%arg0: i32) -> (i32, i32) {
    %c0_i32 = arith.constant 0 : i32
    %c0_i32_0 = arith.constant 0 : i32
    %c0_i32_1 = arith.constant 0 : i32
    return %c0_i32, %c0_i32_0 : i32, i32
  }
  func.func @transform_5(%arg0: i32) -> (i32, i32) {
    %c0_i32 = arith.constant 0 : i32
    %c0_i32_0 = arith.constant 0 : i32
    %c0_i32_1 = arith.constant 0 : i32
    return %c0_i32, %c0_i32_0 : i32, i32
  }
  func.func @transform_6(%arg0: i32) -> (i32, i32, i32) {
    %c0_i32 = arith.constant 0 : i32
    %c0_i32_0 = arith.constant 0 : i32
    %c0_i32_1 = arith.constant 0 : i32
    %c0_i32_2 = arith.constant 0 : i32
    return %c0_i32, %c0_i32_0, %c0_i32_1 : i32, i32, i32
  }
  func.func @transform_7(%arg0: i32) -> (i32, i32) {
    %c0_i32 = arith.constant 0 : i32
    %c0_i32_0 = arith.constant 0 : i32
    %c0_i32_1 = arith.constant 0 : i32
    return %c0_i32, %c0_i32_0 : i32, i32
  }
  func.func @transform_8(%arg0: i32) -> (i32, i32) {
    %c0_i32 = arith.constant 0 : i32
    %c0_i32_0 = arith.constant 0 : i32
    %c0_i32_1 = arith.constant 0 : i32
    return %c0_i32, %c0_i32_0 : i32, i32
  }
  func.func @transform_9(%arg0: i32) -> (i32, i32) {
    %c0_i32 = arith.constant 0 : i32
    %c0_i32_0 = arith.constant 0 : i32
    %c0_i32_1 = arith.constant 0 : i32
    return %c0_i32, %c0_i32_0 : i32, i32
  }
  func.func @transform_10(%arg0: i32) -> (i32, i32, i32) {
    %c0_i32 = arith.constant 0 : i32
    %c0_i32_0 = arith.constant 0 : i32
    %c0_i32_1 = arith.constant 0 : i32
    %c0_i32_2 = arith.constant 0 : i32
    return %c0_i32, %c0_i32_0, %c0_i32_1 : i32, i32, i32
  }
  func.func @transform_11(%arg0: i32) -> (i32, i32, i32) {
    %c0_i32 = arith.constant 0 : i32
    %c0_i32_0 = arith.constant 0 : i32
    %c0_i32_1 = arith.constant 0 : i32
    %c0_i32_2 = arith.constant 0 : i32
    return %c0_i32, %c0_i32_0, %c0_i32_1 : i32, i32, i32
  }
  func.func @transform_12(%arg0: i32) -> (i32, i32, i32) {
    %c0_i32 = arith.constant 0 : i32
    %c0_i32_0 = arith.constant 0 : i32
    %c0_i32_1 = arith.constant 0 : i32
    %c0_i32_2 = arith.constant 0 : i32
    return %c0_i32, %c0_i32_0, %c0_i32_1 : i32, i32, i32
  }
  func.func @transform_13(%arg0: i32) -> (i32, i32, i32) {
    %c0_i32 = arith.constant 0 : i32
    %c0_i32_0 = arith.constant 0 : i32
    %c0_i32_1 = arith.constant 0 : i32
    %c0_i32_2 = arith.constant 0 : i32
    return %c0_i32, %c0_i32_0, %c0_i32_1 : i32, i32, i32
  }
  func.func @transform_14(%arg0: i32) -> (i32, i32, i32) {
    %c0_i32 = arith.constant 0 : i32
    %c0_i32_0 = arith.constant 0 : i32
    %c0_i32_1 = arith.constant 0 : i32
    %c0_i32_2 = arith.constant 0 : i32
    return %c0_i32, %c0_i32_0, %c0_i32_1 : i32, i32, i32
  }
  func.func @transform_15(%arg0: i32) -> (i32, i32) {
    %c0_i32 = arith.constant 0 : i32
    %c0_i32_0 = arith.constant 0 : i32
    %c0_i32_1 = arith.constant 0 : i32
    return %c0_i32, %c0_i32_0 : i32, i32
  }
  func.func @transform_16(%arg0: i32) -> (i32, i32) {
    %c0_i32 = arith.constant 0 : i32
    %c0_i32_0 = arith.constant 0 : i32
    %c0_i32_1 = arith.constant 0 : i32
    return %c0_i32, %c0_i32_0 : i32, i32
  }
  func.func @transform_17(%arg0: i32) -> (i32, i32) {
    %c0_i32 = arith.constant 0 : i32
    %c0_i32_0 = arith.constant 0 : i32
    %c0_i32_1 = arith.constant 0 : i32
    return %c0_i32, %c0_i32_0 : i32, i32
  }
}

</mosaic_0001>

<llo_original>
// kernel: forward.1
$region0: #{forward.1}
  #allocation0 [shape = 'u32[]', space=smem, size = 0x4, offset = 0x4, fixed_abs, tag = 'smem constant byte address 0x4 - core index']
  #allocation1 [shape = 'u32[72,128]{1,0:T(1,128)}', space=vmem, size = 0x9000, scoped, tag = 'internal scratch']
  %s0 = inlined_call_operand.vmem [shape: f32[32,8], index: 0, kind: input, shape index: {}]
  %s1 = inlined_call_operand.vmem [shape: f32[16,64], index: 1, kind: input, shape index: {}]
  %s2 = inlined_call_operand.vmem [shape: f32[2,32,64], index: 2, kind: input, shape index: {}]
  %s3 = inlined_call_operand.hbm [shape: f32[32,32], index: 3, kind: input, shape index: {}]
  %s4 = inlined_call_operand.hbm [shape: f32[32,16], index: 4, kind: input, shape index: {}]
  %s5 = inlined_call_operand.vmem [shape: f32[32,48], index: 5, kind: input, shape index: {}]
  %s6 = inlined_call_operand.vmem [shape: f32[4,1,64], index: 6, kind: input, shape index: {}]
  %s7 = inlined_call_operand.vmem [shape: bf16[8,64], index: 7, kind: input, shape index: {}]
  %s8 = inlined_call_operand.vmem [shape: f32[5,64], index: 8, kind: input, shape index: {}]
  %s9 = inlined_call_operand.vmem [shape: f32[22,64], index: 9, kind: input, shape index: {}]
  %s10 = inlined_call_operand.vmem [shape: bf16[4,64,64], index: 10, kind: input, shape index: {}]
  %s11 = inlined_call_operand.vmem [shape: bf16[2,64,320], index: 11, kind: input, shape index: {}]
  %s12 = inlined_call_operand.hbm [shape: bf16[4,64,128], index: 12, kind: input, shape index: {}]
  %s13 = inlined_call_operand.hbm [shape: bf16[2,64,256], index: 13, kind: input, shape index: {}]
  %s14 = inlined_call_operand.vmem [shape: bf16[2,256,64], index: 14, kind: input, shape index: {}]
  %s15 = inlined_call_operand.hbm [shape: f32[8,320], index: 15, kind: input, shape index: {}]
  %s16 = inlined_call_operand.vmem [shape: f32[128,64], index: 16, kind: output, shape index: {0}]
  %s17 = inlined_call_operand.vmem [shape: f32[128,8], index: 17, kind: output, shape index: {1}]
  %18 = xla_tuple %s16, %s17
  %s19 = sld [smem:[#allocation0]]
  $region102: #{forward.1} parent=0
    _
  %s21 = ssub.s32 1, %s19
  %s22 = scalar_select 0, %s21, %s19
  $region1: #{forward.1} parent=0
    #allocation2 [shape = 'u8[16384]{0}', space=vmem, size = 0x4000, scoped, tag = 'input window, operand 3, single buffered']
    #allocation3 [shape = 's32[1]{0}', space=sflag, size = 0x4, scoped, tag = 'scoped memory for forward.1']
    #allocation4 [shape = 'u8[16384]{0}', space=vmem, size = 0x4000, scoped, tag = 'input window, operand 4, single buffered']
    #allocation5 [shape = 's32[1]{0}', space=sflag, size = 0x4, scoped, tag = 'scoped memory for forward.1']
    #allocation6 [shape = 'u8[65536]{0}', space=vmem, size = 0x10000, scoped, tag = 'input window, operand 12, single buffered']
    #allocation7 [shape = 'u8[65536]{0}', space=vmem, size = 0x10000, scoped, tag = 'input window, operand 13, single buffered']
    #allocation8 [shape = 's32[1]{0}', space=sflag, size = 0x4, scoped, tag = 'scoped memory for forward.1']
    #allocation9 [shape = 'u8[12288]{0}', space=vmem, size = 0x3000, scoped, tag = 'input window, operand 15, single buffered']
    %23 = vsyncpa [#allocation3], 0
    %24 = vsyncpa [#allocation5], 0
    %25 = vsyncpa [#allocation8], 0
    // Predicated region
    $region2: #{forward.1} parent=1 // pred_check
      _
    $region3: #{forward.1} parent=1 // pred_check_branch
      %27 = sbr.rel (0) target = $region5
    $region4: #{forward.1} parent=1 // pred_region
      _
    $region5: #{forward.1} parent=1 // pred_fallthru
      _
    // Predicated region
    $region6: #{forward.1} parent=1 // pred_check
      _
    $region7: #{forward.1} parent=1 // pred_check_branch
      %29 = sbr.rel (0) target = $region9
    $region8: #{forward.1} parent=1 // pred_region
      _
    $region9: #{forward.1} parent=1 // pred_fallthru
      _
    // Predicated region
    $region10: #{forward.1} parent=1 // pred_check
      _
    $region11: #{forward.1} parent=1 // pred_check_branch
      %31 = sbr.rel (0) target = $region13
    $region12: #{forward.1} parent=1 // pred_region
      _
    $region13: #{forward.1} parent=1 // pred_fallthru
      _
    // Predicated region
    $region14: #{forward.1} parent=1 // pred_check
      _
    $region15: #{forward.1} parent=1 // pred_check_branch
      %33 = sbr.rel (0) target = $region17
    $region16: #{forward.1} parent=1 // pred_region
      %35 = vsyncadd [#allocation3], 0
      %s36 = sshll.u32 %s3, 4
      %s37 = int_to_ptr.hbm [resolvable:$true] %s36
      %s38 = sshll.u32 [#allocation2], 4
      %s39 = int_to_ptr.vmem [resolvable:$true] %s38
      %44 = dma.hbm_to_vmem [thread:$0]  %s37, 512, %s39, [#allocation3], 128, 128, 8
    $region17: #{forward.1} parent=1 // pred_fallthru
      _
    // Predicated region
    $region18: #{forward.1} parent=1 // pred_check
      _
    $region19: #{forward.1} parent=1 // pred_check_branch
      %46 = sbr.rel (0) target = $region21
    $region20: #{forward.1} parent=1 // pred_region
      %48 = vsyncadd [#allocation5], 0
      %s49 = sshll.u32 %s4, 4
      %s50 = int_to_ptr.hbm [resolvable:$true] %s49
      %s51 = sshll.u32 [#allocation4], 4
      %s52 = int_to_ptr.vmem [resolvable:$true] %s51
      %57 = dma.hbm_to_vmem [thread:$0]  %s50, 512, %s52, [#allocation5], 128, 128, 8
    $region21: #{forward.1} parent=1 // pred_fallthru
      _
    // Predicated region
    $region22: #{forward.1} parent=1 // pred_check
      _
    $region23: #{forward.1} parent=1 // pred_check_branch
      %59 = sbr.rel (0) target = $region25
    $region24: #{forward.1} parent=1 // pred_region
      _
    $region25: #{forward.1} parent=1 // pred_fallthru
      _
    // Predicated region
    $region26: #{forward.1} parent=1 // pred_check
      _
    $region27: #{forward.1} parent=1 // pred_check_branch
      %61 = sbr.rel (0) target = $region29
    $region28: #{forward.1} parent=1 // pred_region
      _
    $region29: #{forward.1} parent=1 // pred_fallthru
      _
    // Predicated region
    $region30: #{forward.1} parent=1 // pred_check
      _
    $region31: #{forward.1} parent=1 // pred_check_branch
      %63 = sbr.rel (0) target = $region33
    $region32: #{forward.1} parent=1 // pred_region
      _
    $region33: #{forward.1} parent=1 // pred_fallthru
      _
    // Predicated region
    $region34: #{forward.1} parent=1 // pred_check
      _
    $region35: #{forward.1} parent=1 // pred_check_branch
      %65 = sbr.rel (0) target = $region37
    $region36: #{forward.1} parent=1 // pred_region
      _
    $region37: #{forward.1} parent=1 // pred_fallthru
      _
    // Predicated region
    $region38: #{forward.1} parent=1 // pred_check
      _
    $region39: #{forward.1} parent=1 // pred_check_branch
      %67 = sbr.rel (0) target = $region41
    $region40: #{forward.1} parent=1 // pred_region
      _
    $region41: #{forward.1} parent=1 // pred_fallthru
      _
    // Predicated region
    $region42: #{forward.1} parent=1 // pred_check
      _
    $region43: #{forward.1} parent=1 // pred_check_branch
      %69 = sbr.rel (0) target = $region45
    $region44: #{forward.1} parent=1 // pred_region
      _
    $region45: #{forward.1} parent=1 // pred_fallthru
      _
    // Predicated region
    $region46: #{forward.1} parent=1 // pred_check
      _
    $region47: #{forward.1} parent=1 // pred_check_branch
      %71 = sbr.rel (0) target = $region49
    $region48: #{forward.1} parent=1 // pred_region
      _
    $region49: #{forward.1} parent=1 // pred_fallthru
      _
    // Predicated region
    $region50: #{forward.1} parent=1 // pred_check
      _
    $region51: #{forward.1} parent=1 // pred_check_branch
      %73 = sbr.rel (0) target = $region53
    $region52: #{forward.1} parent=1 // pred_region
      %75 = vsyncadd [#allocation5], 0
      %s76 = sshll.u32 %s12, 4
      %s77 = int_to_ptr.hbm [resolvable:$true] %s76
      %s78 = sshll.u32 [#allocation6], 4
      %s79 = int_to_ptr.vmem [resolvable:$true] %s78
      %84 = dma.hbm_to_vmem [thread:$0]  %s77, 2048, %s79, [#allocation5], 64, 64, 4
    $region53: #{forward.1} parent=1 // pred_fallthru
      _
    // Predicated region
    $region54: #{forward.1} parent=1 // pred_check
      _
    $region55: #{forward.1} parent=1 // pred_check_branch
      %86 = sbr.rel (0) target = $region57
    $region56: #{forward.1} parent=1 // pred_region
      %88 = vsyncadd [#allocation8], 0
      %s89 = sshll.u32 %s13, 4
      %s90 = int_to_ptr.hbm [resolvable:$true] %s89
      %s91 = sshll.u32 [#allocation7], 4
      %s92 = int_to_ptr.vmem [resolvable:$true] %s91
      %97 = dma.hbm_to_vmem [thread:$0]  %s90, 2048, %s92, [#allocation8], 128, 128, 8
    $region57: #{forward.1} parent=1 // pred_fallthru
      _
    // Predicated region
    $region58: #{forward.1} parent=1 // pred_check
      _
    $region59: #{forward.1} parent=1 // pred_check_branch
      %99 = sbr.rel (0) target = $region61
    $region60: #{forward.1} parent=1 // pred_region
      _
    $region61: #{forward.1} parent=1 // pred_fallthru
      _
    // Predicated region
    $region62: #{forward.1} parent=1 // pred_check
      _
    $region63: #{forward.1} parent=1 // pred_check_branch
      %101 = sbr.rel (0) target = $region65
    $region64: #{forward.1} parent=1 // pred_region
      %103 = vsyncadd [#allocation8], 0
      %s105 = sshll.u32 %s15, 4
      %s106 = int_to_ptr.hbm [resolvable:$true] %s105
      %s107 = sshll.u32 [#allocation9], 4
      %s108 = int_to_ptr.vmem [resolvable:$true] %s107
      %110 = dma.hbm_to_vmem [thread:$0]  %s106, 384, %s108, [#allocation8]
    $region65: #{forward.1} parent=1 // pred_fallthru
      _
    // Predicated region
    $region66: #{forward.1} parent=1 // pred_check
      _
    $region67: #{forward.1} parent=1 // pred_check_branch
      %112 = sbr.rel (0) target = $region69
    $region68: #{forward.1} parent=1 // pred_region
      %114 = dma.done [#allocation3], 512
    $region69: #{forward.1} parent=1 // pred_fallthru
      _
    // Predicated region
    $region70: #{forward.1} parent=1 // pred_check
      _
    $region71: #{forward.1} parent=1 // pred_check_branch
      %116 = sbr.rel (0) target = $region73
    $region72: #{forward.1} parent=1 // pred_region
      %118 = dma.done [#allocation5], 512
    $region73: #{forward.1} parent=1 // pred_fallthru
      _
    // Predicated region
    $region74: #{forward.1} parent=1 // pred_check
      _
    $region75: #{forward.1} parent=1 // pred_check_branch
      %120 = sbr.rel (0) target = $region77
    $region76: #{forward.1} parent=1 // pred_region
      %122 = dma.done [#allocation5], 2048
    $region77: #{forward.1} parent=1 // pred_fallthru
      _
    // Predicated region
    $region78: #{forward.1} parent=1 // pred_check
      _
    $region79: #{forward.1} parent=1 // pred_check_branch
      %124 = sbr.rel (0) target = $region81
    $region80: #{forward.1} parent=1 // pred_region
      %126 = dma.done [#allocation8], 2048
    $region81: #{forward.1} parent=1 // pred_fallthru
      _
    // Predicated region
    $region82: #{forward.1} parent=1 // pred_check
      _
    $region83: #{forward.1} parent=1 // pred_check_branch
      %128 = sbr.rel (0) target = $region85
    $region84: #{forward.1} parent=1 // pred_region
      %130 = dma.done [#allocation8], 384
    $region85: #{forward.1} parent=1 // pred_fallthru
      _
    %v132 = vld [vmem:[%s2] sm:$0xff]
    %v133 = vld [vmem:[%s2 + $0x8] sm:$0xff]
    %v134 = vld [vmem:[%s2 + $0x10] sm:$0xff]
    %v135 = vld [vmem:[%s2 + $0x18] sm:$0xff]
    %s136 = scalar_lea.vmem %s2, 32
    %v137 = vld [vmem:[%s136] sm:$0xff]
    %v138 = vld [vmem:[%s136 + $0x8] sm:$0xff]
    %v139 = vld [vmem:[%s136 + $0x10] sm:$0xff]
    %v140 = vld [vmem:[%s136 + $0x18] sm:$0xff]
    %v141 = vld [vmem:[#allocation2] sm:$0xff]
    %v142 = vld [vmem:[#allocation2 + $0x8] sm:$0xff]
    %v143 = vld [vmem:[#allocation2 + $0x10] sm:$0xff]
    %v144 = vld [vmem:[#allocation2 + $0x18] sm:$0xff]
    %v145 = vld [vmem:[#allocation4] sm:$0xff]
    %v146 = vld [vmem:[#allocation4 + $0x8] sm:$0xff]
    %v147 = vld [vmem:[#allocation4 + $0x10] sm:$0xff]
    %v148 = vld [vmem:[#allocation4 + $0x18] sm:$0xff]
    %v149 = vld [vmem:[%s0] sm:$0xff]
    %v150 = vld [vmem:[%s0 + $0x8] sm:$0xff]
    %v151 = vld [vmem:[%s0 + $0x10] sm:$0xff]
    %v152 = vld [vmem:[%s0 + $0x18] sm:$0xff]
    %v153 = vld [vmem:[%s7] sm:$0xf]
    %v154 = vpack.c.bf16 %v150, %v149
    %v155 = vpack.c.bf16 %v152, %v151
    %v156 = vld [vmem:[%s8] sm:$0x1]
    %v157 = vperm.slane %v156, 0
    %vm158 = vcmask 64512
    %v160 = vsel %vm158, %v154, 0
    %v163 = vsel %vm158, %v155, 0
    %vm165 = vcmask 1043456
    %v167 = vsel %vm165, %v153, 0
    %169 = vmatpush.bf16.msra.mxu0 0
    %170 = vmatpush.bf16.msra.mxu0 0
    %171 = vmatpush.bf16.msra.mxu0 0
    %172 = vmatpush.bf16.msra.mxu0 0
    %173 = vmatpush.bf16.msra.mxu0 0
    %174 = vmatpush.bf16.msra.mxu0 0
    %175 = vmatpush.bf16.msra.mxu0 0
    %176 = vmatpush.bf16.msra.mxu0 %v167
    %177 = vmatmul.bf16.gmra.mxu0 %v160
    %v178 = vpop.f32.mrf.mxu0
    %v179 = vadd.f32 %v157, %v178
    %v180 = vpop.f32.mrf.mxu0
    %v181 = vadd.f32 %v157, %v180
    %182 = vmatmul.bf16.gmra.mxu0 %v163
    %v183 = vpop.f32.mrf.mxu0
    %v184 = vadd.f32 %v157, %v183
    %v185 = vpop.f32.mrf.mxu0
    %v186 = vadd.f32 %v157, %v185
    %187 = vdwg.mxu0
    %v188 = vld [vmem:[%s8 + $0x1] sm:$0x1]
    %v189 = vld [vmem:[%s8 + $0x2] sm:$0x1]
    %vm190 = vcmask 523264
    %v191 = vsel %vm190, %v179, 0.0
    %192 = vadd.xlane.f32.xlu0 %v191
    %v193 = vpop.xlane.xlu0 %192
    %v194 = vsel %vm190, %v181, 0.0
    %195 = vadd.xlane.f32.xlu0 %v194
    %v196 = vpop.xlane.xlu0 %195
    %v197 = vsel %vm190, %v184, 0.0
    %198 = vadd.xlane.f32.xlu0 %v197
    %v199 = vpop.xlane.xlu0 %198
    %v200 = vsel %vm190, %v186, 0.0
    %201 = vadd.xlane.f32.xlu0 %v200
    %v202 = vpop.xlane.xlu0 %201
    %v203 = vrcp.pop 64.0
    %v204 = vmul.f32 64.0, %v203
    %v205 = vsub.f32 1.0, %v204
    %v206 = vmul.f32 %v203, %v205
    %v207 = vadd.f32 %v203, %v206
    %vm208 = vweird.f32 %v203
    %v209 = vsel %vm208, %v203, %v207
    %v210 = vmul.f32 %v193, %v209
    %v211 = vmul.f32 %v196, %v209
    %v212 = vmul.f32 %v199, %v209
    %v213 = vmul.f32 %v202, %v209
    %v214 = vsub.f32 %v179, %v210
    %v215 = vsub.f32 %v181, %v211
    %v216 = vsub.f32 %v184, %v212
    %v217 = vsub.f32 %v186, %v213
    %v218 = vmul.f32 %v214, %v214
    %v219 = vmul.f32 %v215, %v215
    %v220 = vmul.f32 %v216, %v216
    %v221 = vmul.f32 %v217, %v217
    %v222 = vsel %vm190, %v218, 0.0
    %223 = vadd.xlane.f32.xlu0 %v222
    %v224 = vpop.xlane.xlu0 %223
    %v225 = vsel %vm190, %v219, 0.0
    %226 = vadd.xlane.f32.xlu0 %v225
    %v227 = vpop.xlane.xlu0 %226
    %v228 = vsel %vm190, %v220, 0.0
    %229 = vadd.xlane.f32.xlu0 %v228
    %v230 = vpop.xlane.xlu0 %229
    %v231 = vsel %vm190, %v221, 0.0
    %232 = vadd.xlane.f32.xlu0 %v231
    %v233 = vpop.xlane.xlu0 %232
    %v234 = vmul.f32 %v224, %v209
    %v235 = vmul.f32 %v227, %v209
    %v236 = vmul.f32 %v230, %v209
    %v237 = vmul.f32 %v233, %v209
    %v238 = vadd.f32 %v234, 1e-06
    %v239 = vadd.f32 %v235, 1e-06
    %v240 = vadd.f32 %v236, 1e-06
    %v241 = vadd.f32 %v237, 1e-06
    %v242 = vrsqrt.pop %v238
    %v243 = vmul.f32 %v242, %v238
    %v244 = vmul.f32 %v243, %v242
    %v245 = vmul.f32 0.5, %v244
    %v246 = vsub.f32 1.5, %v245
    %v247 = vmul.f32 %v242, %v246
    %vm248 = vweird.f32 %v238
    %vm249 = vweird.f32 %v242
    %vm250 = vmor %vm248, %vm249
    %v251 = vsel %vm250, %v242, %v247
    %v252 = vrsqrt.pop %v239
    %v253 = vmul.f32 %v252, %v239
    %v254 = vmul.f32 %v253, %v252
    %v255 = vmul.f32 0.5, %v254
    %v256 = vsub.f32 1.5, %v255
    %v257 = vmul.f32 %v252, %v256
    %vm258 = vweird.f32 %v239
    %vm259 = vweird.f32 %v252
    %vm260 = vmor %vm258, %vm259
    %v261 = vsel %vm260, %v252, %v257
    %v262 = vrsqrt.pop %v240
    %v263 = vmul.f32 %v262, %v240
    %v264 = vmul.f32 %v263, %v262
    %v265 = vmul.f32 0.5, %v264
    %v266 = vsub.f32 1.5, %v265
    %v267 = vmul.f32 %v262, %v266
    %vm268 = vweird.f32 %v240
    %vm269 = vweird.f32 %v262
    %vm270 = vmor %vm268, %vm269
    %v271 = vsel %vm270, %v262, %v267
    %v272 = vrsqrt.pop %v241
    %v273 = vmul.f32 %v272, %v241
    %v274 = vmul.f32 %v273, %v272
    %v275 = vmul.f32 0.5, %v274
    %v276 = vsub.f32 1.5, %v275
    %v277 = vmul.f32 %v272, %v276
    %vm278 = vweird.f32 %v241
    %vm279 = vweird.f32 %v272
    %vm280 = vmor %vm278, %vm279
    %v281 = vsel %vm280, %v272, %v277
    %v282 = vmul.f32 %v214, %v251
    %v283 = vmul.f32 %v215, %v261
    %v284 = vmul.f32 %v216, %v271
    %v285 = vmul.f32 %v217, %v281
    %v286 = vperm.slane %v188, 0
    %v287 = vmul.f32 %v282, %v286
    %v288 = vmul.f32 %v283, %v286
    %v289 = vmul.f32 %v284, %v286
    %v290 = vmul.f32 %v285, %v286
    %v291 = vperm.slane %v189, 0
    %v292 = vadd.f32 %v287, %v291
    %v293 = vadd.f32 %v288, %v291
    %v294 = vadd.f32 %v289, %v291
    %v295 = vadd.f32 %v290, %v291
    %v296 = vld [vmem:[%s1] sm:$0xff]
    %v297 = vld [vmem:[%s1 + $0x8] sm:$0xff]
    %v298 = vsel %vm190, %v296, 0.0
    %299 = vadd.xlane.f32.xlu0 %v298
    %v300 = vpop.xlane.xlu0 %299
    %v301 = vsel %vm190, %v297, 0.0
    %302 = vadd.xlane.f32.xlu0 %v301
    %v303 = vpop.xlane.xlu0 %302
    %v304 = vmul.f32 %v300, %v209
    %v305 = vmul.f32 %v303, %v209
    %v306 = vsub.f32 %v296, %v304
    %v307 = vsub.f32 %v297, %v305
    %v308 = vmul.f32 %v306, %v306
    %v309 = vmul.f32 %v307, %v307
    %v310 = vsel %vm190, %v308, 0.0
    %311 = vadd.xlane.f32.xlu0 %v310
    %v312 = vpop.xlane.xlu0 %311
    %v313 = vsel %vm190, %v309, 0.0
    %314 = vadd.xlane.f32.xlu0 %v313
    %v315 = vpop.xlane.xlu0 %314
    %v316 = vmul.f32 %v312, %v209
    %v317 = vmul.f32 %v315, %v209
    %v318 = vadd.f32 %v316, 1e-06
    %v319 = vadd.f32 %v317, 1e-06
    %v320 = vrsqrt.pop %v318
    %v321 = vmul.f32 %v320, %v318
    %v322 = vmul.f32 %v321, %v320
    %v323 = vmul.f32 0.5, %v322
    %v324 = vsub.f32 1.5, %v323
    %v325 = vmul.f32 %v320, %v324
    %vm326 = vweird.f32 %v318
    %vm327 = vweird.f32 %v320
    %vm328 = vmor %vm326, %vm327
    %v329 = vsel %vm328, %v320, %v325
    %v330 = vrsqrt.pop %v319
    %v331 = vmul.f32 %v330, %v319
    %v332 = vmul.f32 %v331, %v330
    %v333 = vmul.f32 0.5, %v332
    %v334 = vsub.f32 1.5, %v333
    %v335 = vmul.f32 %v330, %v334
    %vm336 = vweird.f32 %v319
    %vm337 = vweird.f32 %v330
    %vm338 = vmor %vm336, %vm337
    %v339 = vsel %vm338, %v330, %v335
    %v340 = vmul.f32 %v306, %v329
    %v341 = vmul.f32 %v307, %v339
    %v342 = vmul.f32 %v340, %v286
    %v343 = vmul.f32 %v341, %v286
    %v344 = vadd.f32 %v342, %v291
    %v345 = vadd.f32 %v343, %v291
    %v346 = vld [vmem:[%s9] sm:$0x1]
    %v347 = vld [vmem:[%s9 + $0x1] sm:$0x1]
    %v348 = vsel %vm190, %v292, 0.0
    %349 = vadd.xlane.f32.xlu0 %v348
    %v350 = vpop.xlane.xlu0 %349
    %v351 = vsel %vm190, %v293, 0.0
    %352 = vadd.xlane.f32.xlu0 %v351
    %v353 = vpop.xlane.xlu0 %352
    %v354 = vsel %vm190, %v294, 0.0
    %355 = vadd.xlane.f32.xlu0 %v354
    %v356 = vpop.xlane.xlu0 %355
    %v357 = vsel %vm190, %v295, 0.0
    %358 = vadd.xlane.f32.xlu0 %v357
    %v359 = vpop.xlane.xlu0 %358
    %v360 = vmul.f32 %v350, %v209
    %v361 = vmul.f32 %v353, %v209
    %v362 = vmul.f32 %v356, %v209
    %v363 = vmul.f32 %v359, %v209
    %v364 = vsub.f32 %v292, %v360
    %v365 = vsub.f32 %v293, %v361
    %v366 = vsub.f32 %v294, %v362
    %v367 = vsub.f32 %v295, %v363
    %v368 = vmul.f32 %v364, %v364
    %v369 = vmul.f32 %v365, %v365
    %v370 = vmul.f32 %v366, %v366
    %v371 = vmul.f32 %v367, %v367
    %v372 = vsel %vm190, %v368, 0.0
    %373 = vadd.xlane.f32.xlu0 %v372
    %v374 = vpop.xlane.xlu0 %373
    %v375 = vsel %vm190, %v369, 0.0
    %376 = vadd.xlane.f32.xlu0 %v375
    %v377 = vpop.xlane.xlu0 %376
    %v378 = vsel %vm190, %v370, 0.0
    %379 = vadd.xlane.f32.xlu0 %v378
    %v380 = vpop.xlane.xlu0 %379
    %v381 = vsel %vm190, %v371, 0.0
    %382 = vadd.xlane.f32.xlu0 %v381
    %v383 = vpop.xlane.xlu0 %382
    %v384 = vmul.f32 %v374, %v209
    %v385 = vmul.f32 %v377, %v209
    %v386 = vmul.f32 %v380, %v209
    %v387 = vmul.f32 %v383, %v209
    %v388 = vadd.f32 %v384, 1e-05
    %v389 = vadd.f32 %v385, 1e-05
    %v390 = vadd.f32 %v386, 1e-05
    %v391 = vadd.f32 %v387, 1e-05
    %v392 = vrsqrt.pop %v388
    %v393 = vmul.f32 %v392, %v388
    %v394 = vmul.f32 %v393, %v392
    %v395 = vmul.f32 0.5, %v394
    %v396 = vsub.f32 1.5, %v395
    %v397 = vmul.f32 %v392, %v396
    %vm398 = vweird.f32 %v388
    %vm399 = vweird.f32 %v392
    %vm400 = vmor %vm398, %vm399
    %v401 = vsel %vm400, %v392, %v397
    %v402 = vrsqrt.pop %v389
    %v403 = vmul.f32 %v402, %v389
    %v404 = vmul.f32 %v403, %v402
    %v405 = vmul.f32 0.5, %v404
    %v406 = vsub.f32 1.5, %v405
    %v407 = vmul.f32 %v402, %v406
    %vm408 = vweird.f32 %v389
    %vm409 = vweird.f32 %v402
    %vm410 = vmor %vm408, %vm409
    %v411 = vsel %vm410, %v402, %v407
    %v412 = vrsqrt.pop %v390
    %v413 = vmul.f32 %v412, %v390
    %v414 = vmul.f32 %v413, %v412
    %v415 = vmul.f32 0.5, %v414
    %v416 = vsub.f32 1.5, %v415
    %v417 = vmul.f32 %v412, %v416
    %vm418 = vweird.f32 %v390
    %vm419 = vweird.f32 %v412
    %vm420 = vmor %vm418, %vm419
    %v421 = vsel %vm420, %v412, %v417
    %v422 = vrsqrt.pop %v391
    %v423 = vmul.f32 %v422, %v391
    %v424 = vmul.f32 %v423, %v422
    %v425 = vmul.f32 0.5, %v424
    %v426 = vsub.f32 1.5, %v425
    %v427 = vmul.f32 %v422, %v426
    %vm428 = vweird.f32 %v391
    %vm429 = vweird.f32 %v422
    %vm430 = vmor %vm428, %vm429
    %v431 = vsel %vm430, %v422, %v427
    %v432 = vmul.f32 %v364, %v401
    %v433 = vmul.f32 %v365, %v411
    %v434 = vmul.f32 %v366, %v421
    %v435 = vmul.f32 %v367, %v431
    %v436 = vperm.slane %v346, 0
    %v437 = vmul.f32 %v432, %v436
    %v438 = vmul.f32 %v433, %v436
    %v439 = vmul.f32 %v434, %v436
    %v440 = vmul.f32 %v435, %v436
    %v441 = vperm.slane %v347, 0
    %v442 = vadd.f32 %v437, %v441
    %v443 = vadd.f32 %v438, %v441
    %v444 = vadd.f32 %v439, %v441
    %v445 = vadd.f32 %v440, %v441
    %v446 = vld [vmem:[%s11] sm:$0xff]
    %v447 = vld [vmem:[%s11 + $0x8] sm:$0xf]
    %v448 = vld [vmem:[%s11 + $0xc] sm:$0xff]
    %v449 = vld [vmem:[%s11 + $0x14] sm:$0xf]
    %v450 = vld [vmem:[%s11 + $0x18] sm:$0xff]
    %v451 = vld [vmem:[%s11 + $0x20] sm:$0xf]
    %v452 = vld [vmem:[%s11 + $0x24] sm:$0xff]
    %v453 = vld [vmem:[%s11 + $0x2c] sm:$0xf]
    %v454 = vld [vmem:[%s11 + $0x30] sm:$0xff]
    %v455 = vld [vmem:[%s11 + $0x38] sm:$0xf]
    %v456 = vld [vmem:[%s11 + $0x3c] sm:$0xff]
    %v457 = vld [vmem:[%s11 + $0x44] sm:$0xf]
    %v458 = vld [vmem:[%s11 + $0x48] sm:$0xff]
    %v459 = vld [vmem:[%s11 + $0x50] sm:$0xf]
    %v460 = vld [vmem:[%s11 + $0x54] sm:$0xff]
    %v461 = vld [vmem:[%s11 + $0x5c] sm:$0xf]
    %v462 = vpack.c.bf16 %v443, %v442
    %v463 = vpack.c.bf16 %v445, %v444
    %v464 = vld [vmem:[#allocation9] ss:$8 sm:$0x7]
    %v466 = vperm.slane %v464, 0
    %v467 = vperm.slane %v464, 1
    %v468 = vperm.slane %v464, 2
    %v488 = vunpack.c.l.b16 %v446
    %v489 = vunpack.c.h.b16 %v446
    %v490 = vunpack.c.l.b16 %v447
    %v491 = vunpack.c.l.b16 %v448
    %v492 = vunpack.c.h.b16 %v448
    %v493 = vunpack.c.l.b16 %v449
    %v494 = vunpack.c.l.b16 %v450
    %v495 = vunpack.c.h.b16 %v450
    %v496 = vunpack.c.l.b16 %v451
    %v497 = vunpack.c.l.b16 %v452
    %v498 = vunpack.c.h.b16 %v452
    %v499 = vunpack.c.l.b16 %v453
    %v500 = vunpack.c.l.b16 %v454
    %v501 = vunpack.c.h.b16 %v454
    %v502 = vunpack.c.l.b16 %v455
    %v503 = vunpack.c.l.b16 %v456
    %v504 = vunpack.c.h.b16 %v456
    %v505 = vunpack.c.l.b16 %v457
    %v506 = vunpack.c.l.b16 %v458
    %v507 = vunpack.c.h.b16 %v458
    %v508 = vunpack.c.l.b16 %v459
    %v509 = vunpack.c.l.b16 %v460
    %v510 = vunpack.c.h.b16 %v460
    %v511 = vunpack.c.l.b16 %v461
    %v512 = vpack.c.b16 %v491, %v488
    %v513 = vpack.c.b16 %v492, %v489
    %v514 = vpack.c.b16 %v493, %v490
    %v515 = vpack.c.b16 %v497, %v494
    %v516 = vpack.c.b16 %v498, %v495
    %v517 = vpack.c.b16 %v499, %v496
    %v518 = vpack.c.b16 %v503, %v500
    %v519 = vpack.c.b16 %v504, %v501
    %v520 = vpack.c.b16 %v505, %v502
    %v521 = vpack.c.b16 %v509, %v506
    %v522 = vpack.c.b16 %v510, %v507
    %v523 = vpack.c.b16 %v511, %v508
    %v537 = vsel %vm190, %v462, 0
    %v540 = vsel %vm190, %v463, 0
    %542 = vmatpush.bf16.msra.mxu0 0
    %543 = vmatpush.bf16.msra.mxu0 0
    %544 = vmatpush.bf16.msra.mxu0 0
    %545 = vmatpush.bf16.msra.mxu0 0
    %546 = vmatpush.bf16.msra.mxu0 %v521
    %547 = vmatpush.bf16.msra.mxu0 %v518
    %548 = vmatpush.bf16.msra.mxu0 %v515
    %549 = vmatpush.bf16.msra.mxu0 %v512
    %550 = vmatmul.bf16.gmra.mxu0 %v537
    %v551 = vpop.f32.mrf.mxu0
    %v552 = vadd.f32 %v466, %v551
    %v553 = vpop.f32.mrf.mxu0
    %v554 = vadd.f32 %v466, %v553
    %555 = vmatmul.bf16.gmra.mxu0 %v540
    %v556 = vpop.f32.mrf.mxu0
    %v557 = vadd.f32 %v466, %v556
    %v558 = vpop.f32.mrf.mxu0
    %v559 = vadd.f32 %v466, %v558
    %560 = vdwg.mxu0
    %561 = vmatpush.bf16.msra.mxu0 0
    %562 = vmatpush.bf16.msra.mxu0 0
    %563 = vmatpush.bf16.msra.mxu0 0
    %564 = vmatpush.bf16.msra.mxu0 0
    %565 = vmatpush.bf16.msra.mxu0 %v522
    %566 = vmatpush.bf16.msra.mxu0 %v519
    %567 = vmatpush.bf16.msra.mxu0 %v516
    %568 = vmatpush.bf16.msra.mxu0 %v513
    %569 = vmatmul.bf16.gmra.mxu0 %v537
    %v570 = vpop.f32.mrf.mxu0
    %v571 = vadd.f32 %v467, %v570
    %v572 = vpop.f32.mrf.mxu0
    %v573 = vadd.f32 %v467, %v572
    %574 = vmatmul.bf16.gmra.mxu0 %v540
    %v575 = vpop.f32.mrf.mxu0
    %v576 = vadd.f32 %v467, %v575
    %v577 = vpop.f32.mrf.mxu0
    %v578 = vadd.f32 %v467, %v577
    %579 = vdwg.mxu0
    %580 = vmatpush.bf16.msra.mxu0 0
    %581 = vmatpush.bf16.msra.mxu0 0
    %582 = vmatpush.bf16.msra.mxu0 0
    %583 = vmatpush.bf16.msra.mxu0 0
    %584 = vmatpush.bf16.msra.mxu0 %v523
    %585 = vmatpush.bf16.msra.mxu0 %v520
    %586 = vmatpush.bf16.msra.mxu0 %v517
    %587 = vmatpush.bf16.msra.mxu0 %v514
    %588 = vmatmul.bf16.gmra.mxu0 %v537
    %v589 = vpop.f32.mrf.mxu0
    %v590 = vadd.f32 %v468, %v589
    %v591 = vpop.f32.mrf.mxu0
    %v592 = vadd.f32 %v468, %v591
    %593 = vmatmul.bf16.gmra.mxu0 %v540
    %v594 = vpop.f32.mrf.mxu0
    %v595 = vadd.f32 %v468, %v594
    %v596 = vpop.f32.mrf.mxu0
    %v597 = vadd.f32 %v468, %v596
    %598 = vdwg.mxu0
    %v599 = vmul.f32 %v552, %v132
    %v600 = vmul.f32 %v554, %v133
    %v601 = vmul.f32 %v557, %v134
    %v602 = vmul.f32 %v559, %v135
    %607 = vrot.lane.b32.xlu0 %v137, 64
    %v608 = vpop.permute.xlu0 %607
    %609 = vrot.lane.b32.xlu0 %v138, 64
    %v610 = vpop.permute.xlu0 %609
    %611 = vrot.lane.b32.xlu0 %v139, 64
    %v612 = vpop.permute.xlu0 %611
    %613 = vrot.lane.b32.xlu0 %v140, 64
    %v614 = vpop.permute.xlu0 %613
    %v619 = vmul.f32 %v552, %v608
    %v620 = vmul.f32 %v554, %v610
    %v621 = vmul.f32 %v557, %v612
    %v622 = vmul.f32 %v559, %v614
    %627 = vrot.lane.b32.xlu0 %v619, 64
    %v628 = vpop.permute.xlu0 %627
    %629 = vrot.lane.b32.xlu0 %v620, 64
    %v630 = vpop.permute.xlu0 %629
    %631 = vrot.lane.b32.xlu0 %v621, 64
    %v632 = vpop.permute.xlu0 %631
    %633 = vrot.lane.b32.xlu0 %v622, 64
    %v634 = vpop.permute.xlu0 %633
    %v639 = vadd.f32 %v599, %v628
    %v640 = vadd.f32 %v600, %v630
    %v641 = vadd.f32 %v601, %v632
    %v642 = vadd.f32 %v602, %v634
    %v643 = vmul.f32 %v571, %v132
    %v644 = vmul.f32 %v573, %v133
    %v645 = vmul.f32 %v576, %v134
    %v646 = vmul.f32 %v578, %v135
    %v647 = vmul.f32 %v571, %v608
    %v648 = vmul.f32 %v573, %v610
    %v649 = vmul.f32 %v576, %v612
    %v650 = vmul.f32 %v578, %v614
    %655 = vrot.lane.b32.xlu0 %v647, 64
    %v656 = vpop.permute.xlu0 %655
    %657 = vrot.lane.b32.xlu0 %v648, 64
    %v658 = vpop.permute.xlu0 %657
    %659 = vrot.lane.b32.xlu0 %v649, 64
    %v660 = vpop.permute.xlu0 %659
    %661 = vrot.lane.b32.xlu0 %v650, 64
    %v662 = vpop.permute.xlu0 %661
    %v667 = vadd.f32 %v643, %v656
    %v668 = vadd.f32 %v644, %v658
    %v669 = vadd.f32 %v645, %v660
    %v670 = vadd.f32 %v646, %v662
    %v671 = vpack.c.bf16 %v668, %v667
    %v672 = vpack.c.bf16 %v670, %v669
    %v673 = vld [vmem:[%s6] sm:$0x1]
    %v675 = vperm.slane %v673, 0
    %v677 = vmul.f32 %v639, %v675
    %v678 = vmul.f32 %v640, %v675
    %v679 = vmul.f32 %v641, %v675
    %v680 = vmul.f32 %v642, %v675
    %v681 = vpack.c.bf16 %v678, %v677
    %v682 = vpack.c.bf16 %v680, %v679
    %v684 = vsel %vm190, %v681, 0
    %v687 = vsel %vm190, %v682, 0
    %v690 = vsel %vm190, %v671, 0
    %v693 = vsel %vm190, %v672, 0
    %695 = vmatpush.bf16.xpose.msra.mxu0 0
    %696 = vmatpush.bf16.xpose.msra.mxu0 0
    %697 = vmatpush.bf16.xpose.msra.mxu0 0
    %698 = vmatpush.bf16.xpose.msra.mxu0 0
    %699 = vmatpush.bf16.xpose.msra.mxu0 0
    %700 = vmatpush.bf16.xpose.msra.mxu0 0
    %701 = vmatpush.bf16.xpose.msra.mxu0 %v693
    %702 = vmatpush.bf16.xpose.msra.mxu0 %v690
    %703 = vmatmul.bf16.gmra.mxu0 %v684
    %v704 = vpop.f32.mrf.mxu0
    %v705 = vadd.f32 0.0, %v704
    %v706 = vpop.f32.mrf.mxu0
    %v707 = vadd.f32 0.0, %v706
    %708 = vmatmul.bf16.gmra.mxu0 %v687
    %v709 = vpop.f32.mrf.mxu0
    %v710 = vadd.f32 0.0, %v709
    %v711 = vpop.f32.mrf.mxu0
    %v712 = vadd.f32 0.0, %v711
    %713 = vdwg.mxu0
    %v714 = vmul.f32 %v705, 0.25
    %v715 = vmul.f32 %v707, 0.25
    %v716 = vmul.f32 %v710, 0.25
    %v717 = vmul.f32 %v712, 0.25
    %v718 = vadd.f32 %v714, %v141
    %v719 = vadd.f32 %v715, %v142
    %v720 = vadd.f32 %v716, %v143
    %v721 = vadd.f32 %v717, %v144
    %vm722 = vcmask 261120
    %v723 = vsel %vm722, %v718, -inf
    %724 = vmax.xlane.f32.xlu0 %v723
    %v725 = vpop.xlane.xlu0 %724
    %v726 = vsel %vm722, %v719, -inf
    %727 = vmax.xlane.f32.xlu0 %v726
    %v728 = vpop.xlane.xlu0 %727
    %v729 = vsel %vm722, %v720, -inf
    %730 = vmax.xlane.f32.xlu0 %v729
    %v731 = vpop.xlane.xlu0 %730
    %v732 = vsel %vm722, %v721, -inf
    %733 = vmax.xlane.f32.xlu0 %v732
    %v734 = vpop.xlane.xlu0 %733
    %v735 = vsub.f32 %v718, %v725
    %v736 = vsub.f32 %v719, %v728
    %v737 = vsub.f32 %v720, %v731
    %v738 = vsub.f32 %v721, %v734
    %v739 = vmul.f32 %v735, 1.442695
    %v740 = vpow.pop %v739
    %v741 = vmul.f32 %v736, 1.442695
    %v742 = vpow.pop %v741
    %v743 = vmul.f32 %v737, 1.442695
    %v744 = vpow.pop %v743
    %v745 = vmul.f32 %v738, 1.442695
    %v746 = vpow.pop %v745
    %v747 = vsel %vm722, %v740, 0.0
    %748 = vadd.xlane.f32.xlu0 %v747
    %v749 = vpop.xlane.xlu0 %748
    %v750 = vsel %vm722, %v742, 0.0
    %751 = vadd.xlane.f32.xlu0 %v750
    %v752 = vpop.xlane.xlu0 %751
    %v753 = vsel %vm722, %v744, 0.0
    %754 = vadd.xlane.f32.xlu0 %v753
    %v755 = vpop.xlane.xlu0 %754
    %v756 = vsel %vm722, %v746, 0.0
    %757 = vadd.xlane.f32.xlu0 %v756
    %v758 = vpop.xlane.xlu0 %757
    %v759 = vrcp.pop %v749
    %v760 = vrcp.pop %v752
    %v761 = vrcp.pop %v755
    %v762 = vrcp.pop %v758
    %v763 = vmul.f32 %v740, %v759
    %v764 = vmul.f32 %v742, %v760
    %v765 = vmul.f32 %v744, %v761
    %v766 = vmul.f32 %v746, %v762
    %v767 = vpack.c.bf16 %v764, %v763
    %v768 = vpack.c.bf16 %v766, %v765
    %v769 = vmul.f32 %v590, %v675
    %v770 = vmul.f32 %v592, %v675
    %v771 = vmul.f32 %v595, %v675
    %v772 = vmul.f32 %v597, %v675
    %v773 = vpack.c.bf16 %v770, %v769
    %v774 = vpack.c.bf16 %v772, %v771
    %s775 = scalar_lea.vmem %s6, 1
    %v776 = vld [vmem:[%s775] sm:$0x1]
    %v778 = vperm.slane %v776, 0
    %v780 = vmul.f32 %v639, %v778
    %v781 = vmul.f32 %v640, %v778
    %v782 = vmul.f32 %v641, %v778
    %v783 = vmul.f32 %v642, %v778
    %v784 = vpack.c.bf16 %v781, %v780
    %v785 = vpack.c.bf16 %v783, %v782
    %v787 = vsel %vm190, %v784, 0
    %v790 = vsel %vm190, %v785, 0
    %792 = vmatpush.bf16.xpose.msra.mxu0 0
    %793 = vmatpush.bf16.xpose.msra.mxu0 0
    %794 = vmatpush.bf16.xpose.msra.mxu0 0
    %795 = vmatpush.bf16.xpose.msra.mxu0 0
    %796 = vmatpush.bf16.xpose.msra.mxu0 0
    %797 = vmatpush.bf16.xpose.msra.mxu0 0
    %798 = vmatpush.bf16.xpose.msra.mxu0 %v693
    %799 = vmatpush.bf16.xpose.msra.mxu0 %v690
    %800 = vmatmul.bf16.gmra.mxu0 %v787
    %v801 = vpop.f32.mrf.mxu0
    %v802 = vadd.f32 0.0, %v801
    %v803 = vpop.f32.mrf.mxu0
    %v804 = vadd.f32 0.0, %v803
    %805 = vmatmul.bf16.gmra.mxu0 %v790
    %v806 = vpop.f32.mrf.mxu0
    %v807 = vadd.f32 0.0, %v806
    %v808 = vpop.f32.mrf.mxu0
    %v809 = vadd.f32 0.0, %v808
    %810 = vdwg.mxu0
    %v811 = vmul.f32 %v802, 0.25
    %v812 = vmul.f32 %v804, 0.25
    %v813 = vmul.f32 %v807, 0.25
    %v814 = vmul.f32 %v809, 0.25
    %v815 = vadd.f32 %v811, %v141
    %v816 = vadd.f32 %v812, %v142
    %v817 = vadd.f32 %v813, %v143
    %v818 = vadd.f32 %v814, %v144
    %v819 = vsel %vm722, %v815, -inf
    %820 = vmax.xlane.f32.xlu0 %v819
    %v821 = vpop.xlane.xlu0 %820
    %v822 = vsel %vm722, %v816, -inf
    %823 = vmax.xlane.f32.xlu0 %v822
    %v824 = vpop.xlane.xlu0 %823
    %v825 = vsel %vm722, %v817, -inf
    %826 = vmax.xlane.f32.xlu0 %v825
    %v827 = vpop.xlane.xlu0 %826
    %v828 = vsel %vm722, %v818, -inf
    %829 = vmax.xlane.f32.xlu0 %v828
    %v830 = vpop.xlane.xlu0 %829
    %v831 = vsub.f32 %v815, %v821
    %v832 = vsub.f32 %v816, %v824
    %v833 = vsub.f32 %v817, %v827
    %v834 = vsub.f32 %v818, %v830
    %v835 = vmul.f32 %v831, 1.442695
    %v836 = vpow.pop %v835
    %v837 = vmul.f32 %v832, 1.442695
    %v838 = vpow.pop %v837
    %v839 = vmul.f32 %v833, 1.442695
    %v840 = vpow.pop %v839
    %v841 = vmul.f32 %v834, 1.442695
    %v842 = vpow.pop %v841
    %v843 = vsel %vm722, %v836, 0.0
    %844 = vadd.xlane.f32.xlu0 %v843
    %v845 = vpop.xlane.xlu0 %844
    %v846 = vsel %vm722, %v838, 0.0
    %847 = vadd.xlane.f32.xlu0 %v846
    %v848 = vpop.xlane.xlu0 %847
    %v849 = vsel %vm722, %v840, 0.0
    %850 = vadd.xlane.f32.xlu0 %v849
    %v851 = vpop.xlane.xlu0 %850
    %v852 = vsel %vm722, %v842, 0.0
    %853 = vadd.xlane.f32.xlu0 %v852
    %v854 = vpop.xlane.xlu0 %853
    %v855 = vrcp.pop %v845
    %v856 = vrcp.pop %v848
    %v857 = vrcp.pop %v851
    %v858 = vrcp.pop %v854
    %v859 = vmul.f32 %v836, %v855
    %v860 = vmul.f32 %v838, %v856
    %v861 = vmul.f32 %v840, %v857
    %v862 = vmul.f32 %v842, %v858
    %v863 = vpack.c.bf16 %v860, %v859
    %v864 = vpack.c.bf16 %v862, %v861
    %v865 = vmul.f32 %v590, %v778
    %v866 = vmul.f32 %v592, %v778
    %v867 = vmul.f32 %v595, %v778
    %v868 = vmul.f32 %v597, %v778
    %v869 = vpack.c.bf16 %v866, %v865
    %v870 = vpack.c.bf16 %v868, %v867
    %v872 = vsel %vm722, %v863, 0
    %v875 = vsel %vm722, %v864, 0
    %877 = vmatpush.bf16.msra.mxu0 0
    %878 = vmatpush.bf16.msra.mxu0 0
    %879 = vmatpush.bf16.msra.mxu0 0
    %880 = vmatpush.bf16.msra.mxu0 0
    %881 = vmatpush.bf16.msra.mxu0 0
    %882 = vmatpush.bf16.msra.mxu0 0
    %883 = vmatpush.bf16.msra.mxu0 %v870
    %884 = vmatpush.bf16.msra.mxu0 %v869
    %885 = vmatmul.bf16.gmra.mxu0 %v872
    %v886 = vpop.f32.mrf.mxu0
    %v887 = vadd.f32 0.0, %v886
    %v888 = vpop.f32.mrf.mxu0
    %v889 = vadd.f32 0.0, %v888
    %890 = vmatmul.bf16.gmra.mxu0 %v875
    %v891 = vpop.f32.mrf.mxu0
    %v892 = vadd.f32 0.0, %v891
    %v893 = vpop.f32.mrf.mxu0
    %v894 = vadd.f32 0.0, %v893
    %895 = vdwg.mxu0
    %v897 = vsel %vm722, %v767, 0
    %v900 = vsel %vm722, %v768, 0
    %902 = vmatpush.bf16.msra.mxu0 0
    %903 = vmatpush.bf16.msra.mxu0 0
    %904 = vmatpush.bf16.msra.mxu0 0
    %905 = vmatpush.bf16.msra.mxu0 0
    %906 = vmatpush.bf16.msra.mxu0 0
    %907 = vmatpush.bf16.msra.mxu0 0
    %908 = vmatpush.bf16.msra.mxu0 %v774
    %909 = vmatpush.bf16.msra.mxu0 %v773
    %910 = vmatmul.bf16.gmra.mxu0 %v897
    %v911 = vpop.f32.mrf.mxu0
    %v912 = vadd.f32 %v887, %v911
    %v913 = vpop.f32.mrf.mxu0
    %v914 = vadd.f32 %v889, %v913
    %915 = vmatmul.bf16.gmra.mxu0 %v900
    %v916 = vpop.f32.mrf.mxu0
    %v917 = vadd.f32 %v892, %v916
    %v918 = vpop.f32.mrf.mxu0
    %v919 = vadd.f32 %v894, %v918
    %920 = vdwg.mxu0
    %s921 = scalar_lea.vmem %s6, 2
    %v922 = vld [vmem:[%s921] sm:$0x1]
    %v924 = vperm.slane %v922, 0
    %v926 = vmul.f32 %v639, %v924
    %v927 = vmul.f32 %v640, %v924
    %v928 = vmul.f32 %v641, %v924
    %v929 = vmul.f32 %v642, %v924
    %v930 = vpack.c.bf16 %v927, %v926
    %v931 = vpack.c.bf16 %v929, %v928
    %v933 = vsel %vm190, %v930, 0
    %v936 = vsel %vm190, %v931, 0
    %938 = vmatpush.bf16.xpose.msra.mxu0 0
    %939 = vmatpush.bf16.xpose.msra.mxu0 0
    %940 = vmatpush.bf16.xpose.msra.mxu0 0
    %941 = vmatpush.bf16.xpose.msra.mxu0 0
    %942 = vmatpush.bf16.xpose.msra.mxu0 0
    %943 = vmatpush.bf16.xpose.msra.mxu0 0
    %944 = vmatpush.bf16.xpose.msra.mxu0 %v693
    %945 = vmatpush.bf16.xpose.msra.mxu0 %v690
    %946 = vmatmul.bf16.gmra.mxu0 %v933
    %v947 = vpop.f32.mrf.mxu0
    %v948 = vadd.f32 0.0, %v947
    %v949 = vpop.f32.mrf.mxu0
    %v950 = vadd.f32 0.0, %v949
    %951 = vmatmul.bf16.gmra.mxu0 %v936
    %v952 = vpop.f32.mrf.mxu0
    %v953 = vadd.f32 0.0, %v952
    %v954 = vpop.f32.mrf.mxu0
    %v955 = vadd.f32 0.0, %v954
    %956 = vdwg.mxu0
    %v957 = vmul.f32 %v948, 0.25
    %v958 = vmul.f32 %v950, 0.25
    %v959 = vmul.f32 %v953, 0.25
    %v960 = vmul.f32 %v955, 0.25
    %v961 = vadd.f32 %v957, %v141
    %v962 = vadd.f32 %v958, %v142
    %v963 = vadd.f32 %v959, %v143
    %v964 = vadd.f32 %v960, %v144
    %v965 = vsel %vm722, %v961, -inf
    %966 = vmax.xlane.f32.xlu0 %v965
    %v967 = vpop.xlane.xlu0 %966
    %v968 = vsel %vm722, %v962, -inf
    %969 = vmax.xlane.f32.xlu0 %v968
    %v970 = vpop.xlane.xlu0 %969
    %v971 = vsel %vm722, %v963, -inf
    %972 = vmax.xlane.f32.xlu0 %v971
    %v973 = vpop.xlane.xlu0 %972
    %v974 = vsel %vm722, %v964, -inf
    %975 = vmax.xlane.f32.xlu0 %v974
    %v976 = vpop.xlane.xlu0 %975
    %v977 = vsub.f32 %v961, %v967
    %v978 = vsub.f32 %v962, %v970
    %v979 = vsub.f32 %v963, %v973
    %v980 = vsub.f32 %v964, %v976
    %v981 = vmul.f32 %v977, 1.442695
    %v982 = vpow.pop %v981
    %v983 = vmul.f32 %v978, 1.442695
    %v984 = vpow.pop %v983
    %v985 = vmul.f32 %v979, 1.442695
    %v986 = vpow.pop %v985
    %v987 = vmul.f32 %v980, 1.442695
    %v988 = vpow.pop %v987
    %v989 = vsel %vm722, %v982, 0.0
    %990 = vadd.xlane.f32.xlu0 %v989
    %v991 = vpop.xlane.xlu0 %990
    %v992 = vsel %vm722, %v984, 0.0
    %993 = vadd.xlane.f32.xlu0 %v992
    %v994 = vpop.xlane.xlu0 %993
    %v995 = vsel %vm722, %v986, 0.0
    %996 = vadd.xlane.f32.xlu0 %v995
    %v997 = vpop.xlane.xlu0 %996
    %v998 = vsel %vm722, %v988, 0.0
    %999 = vadd.xlane.f32.xlu0 %v998
    %v1000 = vpop.xlane.xlu0 %999
    %v1001 = vrcp.pop %v991
    %v1002 = vrcp.pop %v994
    %v1003 = vrcp.pop %v997
    %v1004 = vrcp.pop %v1000
    %v1005 = vmul.f32 %v982, %v1001
    %v1006 = vmul.f32 %v984, %v1002
    %v1007 = vmul.f32 %v986, %v1003
    %v1008 = vmul.f32 %v988, %v1004
    %v1009 = vpack.c.bf16 %v1006, %v1005
    %v1010 = vpack.c.bf16 %v1008, %v1007
    %v1011 = vmul.f32 %v590, %v924
    %v1012 = vmul.f32 %v592, %v924
    %v1013 = vmul.f32 %v595, %v924
    %v1014 = vmul.f32 %v597, %v924
    %v1015 = vpack.c.bf16 %v1012, %v1011
    %v1016 = vpack.c.bf16 %v1014, %v1013
    %v1018 = vsel %vm722, %v1009, 0
    %v1021 = vsel %vm722, %v1010, 0
    %1023 = vmatpush.bf16.msra.mxu0 0
    %1024 = vmatpush.bf16.msra.mxu0 0
    %1025 = vmatpush.bf16.msra.mxu0 0
    %1026 = vmatpush.bf16.msra.mxu0 0
    %1027 = vmatpush.bf16.msra.mxu0 0
    %1028 = vmatpush.bf16.msra.mxu0 0
    %1029 = vmatpush.bf16.msra.mxu0 %v1016
    %1030 = vmatpush.bf16.msra.mxu0 %v1015
    %1031 = vmatmul.bf16.gmra.mxu0 %v1018
    %v1032 = vpop.f32.mrf.mxu0
    %v1033 = vadd.f32 0.0, %v1032
    %v1034 = vpop.f32.mrf.mxu0
    %v1035 = vadd.f32 0.0, %v1034
    %1036 = vmatmul.bf16.gmra.mxu0 %v1021
    %v1037 = vpop.f32.mrf.mxu0
    %v1038 = vadd.f32 0.0, %v1037
    %v1039 = vpop.f32.mrf.mxu0
    %v1040 = vadd.f32 0.0, %v1039
    %1041 = vdwg.mxu0
    %v1042 = vadd.f32 %v912, %v1033
    %v1043 = vadd.f32 %v914, %v1035
    %v1044 = vadd.f32 %v917, %v1038
    %v1045 = vadd.f32 %v919, %v1040
    %s1046 = scalar_lea.vmem %s6, 3
    %v1047 = vld [vmem:[%s1046] sm:$0x1]
    %v1049 = vperm.slane %v1047, 0
    %v1051 = vmul.f32 %v639, %v1049
    %v1052 = vmul.f32 %v640, %v1049
    %v1053 = vmul.f32 %v641, %v1049
    %v1054 = vmul.f32 %v642, %v1049
    %v1055 = vpack.c.bf16 %v1052, %v1051
    %v1056 = vpack.c.bf16 %v1054, %v1053
    %v1058 = vsel %vm190, %v1055, 0
    %v1061 = vsel %vm190, %v1056, 0
    %1063 = vmatpush.bf16.xpose.msra.mxu0 0
    %1064 = vmatpush.bf16.xpose.msra.mxu0 0
    %1065 = vmatpush.bf16.xpose.msra.mxu0 0
    %1066 = vmatpush.bf16.xpose.msra.mxu0 0
    %1067 = vmatpush.bf16.xpose.msra.mxu0 0
    %1068 = vmatpush.bf16.xpose.msra.mxu0 0
    %1069 = vmatpush.bf16.xpose.msra.mxu0 %v693
    %1070 = vmatpush.bf16.xpose.msra.mxu0 %v690
    %1071 = vmatmul.bf16.gmra.mxu0 %v1058
    %v1072 = vpop.f32.mrf.mxu0
    %v1073 = vadd.f32 0.0, %v1072
    %v1074 = vpop.f32.mrf.mxu0
    %v1075 = vadd.f32 0.0, %v1074
    %1076 = vmatmul.bf16.gmra.mxu0 %v1061
    %v1077 = vpop.f32.mrf.mxu0
    %v1078 = vadd.f32 0.0, %v1077
    %v1079 = vpop.f32.mrf.mxu0
    %v1080 = vadd.f32 0.0, %v1079
    %1081 = vdwg.mxu0
    %v1082 = vmul.f32 %v1073, 0.25
    %v1083 = vmul.f32 %v1075, 0.25
    %v1084 = vmul.f32 %v1078, 0.25
    %v1085 = vmul.f32 %v1080, 0.25
    %v1086 = vadd.f32 %v1082, %v141
    %v1087 = vadd.f32 %v1083, %v142
    %v1088 = vadd.f32 %v1084, %v143
    %v1089 = vadd.f32 %v1085, %v144
    %v1090 = vsel %vm722, %v1086, -inf
    %1091 = vmax.xlane.f32.xlu0 %v1090
    %v1092 = vpop.xlane.xlu0 %1091
    %v1093 = vsel %vm722, %v1087, -inf
    %1094 = vmax.xlane.f32.xlu0 %v1093
    %v1095 = vpop.xlane.xlu0 %1094
    %v1096 = vsel %vm722, %v1088, -inf
    %1097 = vmax.xlane.f32.xlu0 %v1096
    %v1098 = vpop.xlane.xlu0 %1097
    %v1099 = vsel %vm722, %v1089, -inf
    %1100 = vmax.xlane.f32.xlu0 %v1099
    %v1101 = vpop.xlane.xlu0 %1100
    %v1102 = vsub.f32 %v1086, %v1092
    %v1103 = vsub.f32 %v1087, %v1095
    %v1104 = vsub.f32 %v1088, %v1098
    %v1105 = vsub.f32 %v1089, %v1101
    %v1106 = vmul.f32 %v1102, 1.442695
    %v1107 = vpow.pop %v1106
    %v1108 = vmul.f32 %v1103, 1.442695
    %v1109 = vpow.pop %v1108
    %v1110 = vmul.f32 %v1104, 1.442695
    %v1111 = vpow.pop %v1110
    %v1112 = vmul.f32 %v1105, 1.442695
    %v1113 = vpow.pop %v1112
    %v1114 = vsel %vm722, %v1107, 0.0
    %1115 = vadd.xlane.f32.xlu0 %v1114
    %v1116 = vpop.xlane.xlu0 %1115
    %v1117 = vsel %vm722, %v1109, 0.0
    %1118 = vadd.xlane.f32.xlu0 %v1117
    %v1119 = vpop.xlane.xlu0 %1118
    %v1120 = vsel %vm722, %v1111, 0.0
    %1121 = vadd.xlane.f32.xlu0 %v1120
    %v1122 = vpop.xlane.xlu0 %1121
    %v1123 = vsel %vm722, %v1113, 0.0
    %1124 = vadd.xlane.f32.xlu0 %v1123
    %v1125 = vpop.xlane.xlu0 %1124
    %v1126 = vrcp.pop %v1116
    %v1127 = vrcp.pop %v1119
    %v1128 = vrcp.pop %v1122
    %v1129 = vrcp.pop %v1125
    %v1130 = vmul.f32 %v1107, %v1126
    %v1131 = vmul.f32 %v1109, %v1127
    %v1132 = vmul.f32 %v1111, %v1128
    %v1133 = vmul.f32 %v1113, %v1129
    %v1134 = vpack.c.bf16 %v1131, %v1130
    %v1135 = vpack.c.bf16 %v1133, %v1132
    %v1136 = vmul.f32 %v590, %v1049
    %v1137 = vmul.f32 %v592, %v1049
    %v1138 = vmul.f32 %v595, %v1049
    %v1139 = vmul.f32 %v597, %v1049
    %v1140 = vpack.c.bf16 %v1137, %v1136
    %v1141 = vpack.c.bf16 %v1139, %v1138
    %v1143 = vsel %vm722, %v1134, 0
    %v1146 = vsel %vm722, %v1135, 0
    %1148 = vmatpush.bf16.msra.mxu0 0
    %1149 = vmatpush.bf16.msra.mxu0 0
    %1150 = vmatpush.bf16.msra.mxu0 0
    %1151 = vmatpush.bf16.msra.mxu0 0
    %1152 = vmatpush.bf16.msra.mxu0 0
    %1153 = vmatpush.bf16.msra.mxu0 0
    %1154 = vmatpush.bf16.msra.mxu0 %v1141
    %1155 = vmatpush.bf16.msra.mxu0 %v1140
    %1156 = vmatmul.bf16.gmra.mxu0 %v1143
    %v1157 = vpop.f32.mrf.mxu0
    %v1158 = vadd.f32 0.0, %v1157
    %v1159 = vpop.f32.mrf.mxu0
    %v1160 = vadd.f32 0.0, %v1159
    %1161 = vmatmul.bf16.gmra.mxu0 %v1146
    %v1162 = vpop.f32.mrf.mxu0
    %v1163 = vadd.f32 0.0, %v1162
    %v1164 = vpop.f32.mrf.mxu0
    %v1165 = vadd.f32 0.0, %v1164
    %1166 = vdwg.mxu0
    %v1167 = vadd.f32 %v1042, %v1158
    %v1168 = vadd.f32 %v1043, %v1160
    %v1169 = vadd.f32 %v1044, %v1163
    %v1170 = vadd.f32 %v1045, %v1165
    %v1171 = vld [vmem:[%s10] sm:$0xf]
    %v1172 = vld [vmem:[%s10 + $0x4] sm:$0xf]
    %v1173 = vld [vmem:[%s10 + $0x8] sm:$0xf]
    %v1174 = vld [vmem:[%s10 + $0xc] sm:$0xf]
    %v1175 = vld [vmem:[%s10 + $0x10] sm:$0xf]
    %v1176 = vld [vmem:[%s10 + $0x14] sm:$0xf]
    %v1177 = vld [vmem:[%s10 + $0x18] sm:$0xf]
    %v1178 = vld [vmem:[%s10 + $0x1c] sm:$0xf]
    %v1179 = vpack.c.bf16 %v1168, %v1167
    %v1180 = vpack.c.bf16 %v1170, %v1169
    %v1189 = vunpack.c.l.b16 %v1171
    %v1190 = vunpack.c.l.b16 %v1172
    %v1191 = vunpack.c.l.b16 %v1173
    %v1192 = vunpack.c.l.b16 %v1174
    %v1193 = vunpack.c.l.b16 %v1175
    %v1194 = vunpack.c.l.b16 %v1176
    %v1195 = vunpack.c.l.b16 %v1177
    %v1196 = vunpack.c.l.b16 %v1178
    %v1197 = vpack.c.b16 %v1190, %v1189
    %v1198 = vpack.c.b16 %v1192, %v1191
    %v1199 = vpack.c.b16 %v1194, %v1193
    %v1200 = vpack.c.b16 %v1196, %v1195
    %v1206 = vsel %vm190, %v1179, 0
    %v1209 = vsel %vm190, %v1180, 0
    %1211 = vmatpush.bf16.msra.mxu0 0
    %1212 = vmatpush.bf16.msra.mxu0 0
    %1213 = vmatpush.bf16.msra.mxu0 0
    %1214 = vmatpush.bf16.msra.mxu0 0
    %1215 = vmatpush.bf16.msra.mxu0 %v1200
    %1216 = vmatpush.bf16.msra.mxu0 %v1199
    %1217 = vmatpush.bf16.msra.mxu0 %v1198
    %1218 = vmatpush.bf16.msra.mxu0 %v1197
    %1219 = vmatmul.bf16.gmra.mxu0 %v1206
    %v1220 = vpop.f32.mrf.mxu0
    %v1221 = vadd.f32 0.0, %v1220
    %v1222 = vpop.f32.mrf.mxu0
    %v1223 = vadd.f32 0.0, %v1222
    %1224 = vmatmul.bf16.gmra.mxu0 %v1209
    %v1225 = vpop.f32.mrf.mxu0
    %v1226 = vadd.f32 0.0, %v1225
    %v1227 = vpop.f32.mrf.mxu0
    %v1228 = vadd.f32 0.0, %v1227
    %1229 = vdwg.mxu0
    %v1230 = vadd.f32 %v292, %v1221
    %v1231 = vadd.f32 %v293, %v1223
    %v1232 = vadd.f32 %v294, %v1226
    %v1233 = vadd.f32 %v295, %v1228
    %v1234 = vld [vmem:[%s9 + $0x8] sm:$0x1]
    %v1235 = vperm.slane %v1234, 0
    %v1236 = vadd.f32 %v1230, %v1235
    %v1237 = vadd.f32 %v1231, %v1235
    %v1238 = vadd.f32 %v1232, %v1235
    %v1239 = vadd.f32 %v1233, %v1235
    %v1240 = vld [vmem:[%s9 + $0x2] sm:$0x1]
    %v1241 = vld [vmem:[%s9 + $0x3] sm:$0x1]
    %v1242 = vsel %vm190, %v1236, 0.0
    %1243 = vadd.xlane.f32.xlu0 %v1242
    %v1244 = vpop.xlane.xlu0 %1243
    %v1245 = vsel %vm190, %v1237, 0.0
    %1246 = vadd.xlane.f32.xlu0 %v1245
    %v1247 = vpop.xlane.xlu0 %1246
    %v1248 = vsel %vm190, %v1238, 0.0
    %1249 = vadd.xlane.f32.xlu0 %v1248
    %v1250 = vpop.xlane.xlu0 %1249
    %v1251 = vsel %vm190, %v1239, 0.0
    %1252 = vadd.xlane.f32.xlu0 %v1251
    %v1253 = vpop.xlane.xlu0 %1252
    %v1254 = vmul.f32 %v1244, %v209
    %v1255 = vmul.f32 %v1247, %v209
    %v1256 = vmul.f32 %v1250, %v209
    %v1257 = vmul.f32 %v1253, %v209
    %v1258 = vsub.f32 %v1236, %v1254
    %v1259 = vsub.f32 %v1237, %v1255
    %v1260 = vsub.f32 %v1238, %v1256
    %v1261 = vsub.f32 %v1239, %v1257
    %v1262 = vmul.f32 %v1258, %v1258
    %v1263 = vmul.f32 %v1259, %v1259
    %v1264 = vmul.f32 %v1260, %v1260
    %v1265 = vmul.f32 %v1261, %v1261
    %v1266 = vsel %vm190, %v1262, 0.0
    %1267 = vadd.xlane.f32.xlu0 %v1266
    %v1268 = vpop.xlane.xlu0 %1267
    %v1269 = vsel %vm190, %v1263, 0.0
    %1270 = vadd.xlane.f32.xlu0 %v1269
    %v1271 = vpop.xlane.xlu0 %1270
    %v1272 = vsel %vm190, %v1264, 0.0
    %1273 = vadd.xlane.f32.xlu0 %v1272
    %v1274 = vpop.xlane.xlu0 %1273
    %v1275 = vsel %vm190, %v1265, 0.0
    %1276 = vadd.xlane.f32.xlu0 %v1275
    %v1277 = vpop.xlane.xlu0 %1276
    %v1278 = vmul.f32 %v1268, %v209
    %v1279 = vmul.f32 %v1271, %v209
    %v1280 = vmul.f32 %v1274, %v209
    %v1281 = vmul.f32 %v1277, %v209
    %v1282 = vadd.f32 %v1278, 1e-05
    %v1283 = vadd.f32 %v1279, 1e-05
    %v1284 = vadd.f32 %v1280, 1e-05
    %v1285 = vadd.f32 %v1281, 1e-05
    %v1286 = vrsqrt.pop %v1282
    %v1287 = vmul.f32 %v1286, %v1282
    %v1288 = vmul.f32 %v1287, %v1286
    %v1289 = vmul.f32 0.5, %v1288
    %v1290 = vsub.f32 1.5, %v1289
    %v1291 = vmul.f32 %v1286, %v1290
    %vm1292 = vweird.f32 %v1282
    %vm1293 = vweird.f32 %v1286
    %vm1294 = vmor %vm1292, %vm1293
    %v1295 = vsel %vm1294, %v1286, %v1291
    %v1296 = vrsqrt.pop %v1283
    %v1297 = vmul.f32 %v1296, %v1283
    %v1298 = vmul.f32 %v1297, %v1296
    %v1299 = vmul.f32 0.5, %v1298
    %v1300 = vsub.f32 1.5, %v1299
    %v1301 = vmul.f32 %v1296, %v1300
    %vm1302 = vweird.f32 %v1283
    %vm1303 = vweird.f32 %v1296
    %vm1304 = vmor %vm1302, %vm1303
    %v1305 = vsel %vm1304, %v1296, %v1301
    %v1306 = vrsqrt.pop %v1284
    %v1307 = vmul.f32 %v1306, %v1284
    %v1308 = vmul.f32 %v1307, %v1306
    %v1309 = vmul.f32 0.5, %v1308
    %v1310 = vsub.f32 1.5, %v1309
    %v1311 = vmul.f32 %v1306, %v1310
    %vm1312 = vweird.f32 %v1284
    %vm1313 = vweird.f32 %v1306
    %vm1314 = vmor %vm1312, %vm1313
    %v1315 = vsel %vm1314, %v1306, %v1311
    %v1316 = vrsqrt.pop %v1285
    %v1317 = vmul.f32 %v1316, %v1285
    %v1318 = vmul.f32 %v1317, %v1316
    %v1319 = vmul.f32 0.5, %v1318
    %v1320 = vsub.f32 1.5, %v1319
    %v1321 = vmul.f32 %v1316, %v1320
    %vm1322 = vweird.f32 %v1285
    %vm1323 = vweird.f32 %v1316
    %vm1324 = vmor %vm1322, %vm1323
    %v1325 = vsel %vm1324, %v1316, %v1321
    %v1326 = vmul.f32 %v1258, %v1295
    %v1327 = vmul.f32 %v1259, %v1305
    %v1328 = vmul.f32 %v1260, %v1315
    %v1329 = vmul.f32 %v1261, %v1325
    %v1330 = vperm.slane %v1240, 0
    %v1331 = vmul.f32 %v1326, %v1330
    %v1332 = vmul.f32 %v1327, %v1330
    %v1333 = vmul.f32 %v1328, %v1330
    %v1334 = vmul.f32 %v1329, %v1330
    %v1335 = vperm.slane %v1241, 0
    %v1336 = vadd.f32 %v1331, %v1335
    %v1337 = vadd.f32 %v1332, %v1335
    %v1338 = vadd.f32 %v1333, %v1335
    %v1339 = vadd.f32 %v1334, %v1335
    %v1340 = vld [vmem:[%s9 + $0x4] sm:$0x1]
    %v1341 = vld [vmem:[%s9 + $0x5] sm:$0x1]
    %v1342 = vsel %vm190, %v344, 0.0
    %1343 = vadd.xlane.f32.xlu0 %v1342
    %v1344 = vpop.xlane.xlu0 %1343
    %v1345 = vsel %vm190, %v345, 0.0
    %1346 = vadd.xlane.f32.xlu0 %v1345
    %v1347 = vpop.xlane.xlu0 %1346
    %v1348 = vmul.f32 %v1344, %v209
    %v1349 = vmul.f32 %v1347, %v209
    %v1350 = vsub.f32 %v344, %v1348
    %v1351 = vsub.f32 %v345, %v1349
    %v1352 = vmul.f32 %v1350, %v1350
    %v1353 = vmul.f32 %v1351, %v1351
    %v1354 = vsel %vm190, %v1352, 0.0
    %1355 = vadd.xlane.f32.xlu0 %v1354
    %v1356 = vpop.xlane.xlu0 %1355
    %v1357 = vsel %vm190, %v1353, 0.0
    %1358 = vadd.xlane.f32.xlu0 %v1357
    %v1359 = vpop.xlane.xlu0 %1358
    %v1360 = vmul.f32 %v1356, %v209
    %v1361 = vmul.f32 %v1359, %v209
    %v1362 = vadd.f32 %v1360, 1e-05
    %v1363 = vadd.f32 %v1361, 1e-05
    %v1364 = vrsqrt.pop %v1362
    %v1365 = vmul.f32 %v1364, %v1362
    %v1366 = vmul.f32 %v1365, %v1364
    %v1367 = vmul.f32 0.5, %v1366
    %v1368 = vsub.f32 1.5, %v1367
    %v1369 = vmul.f32 %v1364, %v1368
    %vm1370 = vweird.f32 %v1362
    %vm1371 = vweird.f32 %v1364
    %vm1372 = vmor %vm1370, %vm1371
    %v1373 = vsel %vm1372, %v1364, %v1369
    %v1374 = vrsqrt.pop %v1363
    %v1375 = vmul.f32 %v1374, %v1363
    %v1376 = vmul.f32 %v1375, %v1374
    %v1377 = vmul.f32 0.5, %v1376
    %v1378 = vsub.f32 1.5, %v1377
    %v1379 = vmul.f32 %v1374, %v1378
    %vm1380 = vweird.f32 %v1363
    %vm1381 = vweird.f32 %v1374
    %vm1382 = vmor %vm1380, %vm1381
    %v1383 = vsel %vm1382, %v1374, %v1379
    %v1384 = vmul.f32 %v1350, %v1373
    %v1385 = vmul.f32 %v1351, %v1383
    %v1386 = vperm.slane %v1340, 0
    %v1387 = vmul.f32 %v1384, %v1386
    %v1388 = vmul.f32 %v1385, %v1386
    %v1389 = vperm.slane %v1341, 0
    %v1390 = vadd.f32 %v1387, %v1389
    %v1391 = vadd.f32 %v1388, %v1389
    %v1392 = vld [vmem:[#allocation6] sm:$0xf]
    %v1393 = vld [vmem:[#allocation6 + $0x4] sm:$0xf]
    %v1394 = vld [vmem:[#allocation6 + $0x8] sm:$0xf]
    %v1395 = vld [vmem:[#allocation6 + $0xc] sm:$0xf]
    %v1396 = vld [vmem:[#allocation6 + $0x10] sm:$0xf]
    %v1397 = vld [vmem:[#allocation6 + $0x14] sm:$0xf]
    %v1398 = vld [vmem:[#allocation6 + $0x18] sm:$0xf]
    %v1399 = vld [vmem:[#allocation6 + $0x1c] sm:$0xf]
    %v1400 = vpack.c.bf16 %v1337, %v1336
    %v1401 = vpack.c.bf16 %v1339, %v1338
    %v1402 = vld [vmem:[#allocation9 + $0x1] ss:$0 sm:$0xff]
    %v1411 = vunpack.c.l.b16 %v1392
    %v1412 = vunpack.c.l.b16 %v1393
    %v1413 = vunpack.c.l.b16 %v1394
    %v1414 = vunpack.c.l.b16 %v1395
    %v1415 = vunpack.c.l.b16 %v1396
    %v1416 = vunpack.c.l.b16 %v1397
    %v1417 = vunpack.c.l.b16 %v1398
    %v1418 = vunpack.c.l.b16 %v1399
    %v1419 = vpack.c.b16 %v1412, %v1411
    %v1420 = vpack.c.b16 %v1414, %v1413
    %v1421 = vpack.c.b16 %v1416, %v1415
    %v1422 = vpack.c.b16 %v1418, %v1417
    %v1428 = vsel %vm190, %v1400, 0
    %v1431 = vsel %vm190, %v1401, 0
    %1433 = vmatpush.bf16.msra.mxu0 0
    %1434 = vmatpush.bf16.msra.mxu0 0
    %1435 = vmatpush.bf16.msra.mxu0 0
    %1436 = vmatpush.bf16.msra.mxu0 0
    %1437 = vmatpush.bf16.msra.mxu0 %v1422
    %1438 = vmatpush.bf16.msra.mxu0 %v1421
    %1439 = vmatpush.bf16.msra.mxu0 %v1420
    %1440 = vmatpush.bf16.msra.mxu0 %v1419
    %1441 = vmatmul.bf16.gmra.mxu0 %v1428
    %v1442 = vpop.f32.mrf.mxu0
    %v1443 = vadd.f32 %v1402, %v1442
    %v1444 = vpop.f32.mrf.mxu0
    %v1445 = vadd.f32 %v1402, %v1444
    %1446 = vmatmul.bf16.gmra.mxu0 %v1431
    %v1447 = vpop.f32.mrf.mxu0
    %v1448 = vadd.f32 %v1402, %v1447
    %v1449 = vpop.f32.mrf.mxu0
    %v1450 = vadd.f32 %v1402, %v1449
    %1451 = vdwg.mxu0
    %v1452 = vmul.f32 %v1443, %v132
    %v1453 = vmul.f32 %v1445, %v133
    %v1454 = vmul.f32 %v1448, %v134
    %v1455 = vmul.f32 %v1450, %v135
    %v1456 = vmul.f32 %v1443, %v608
    %v1457 = vmul.f32 %v1445, %v610
    %v1458 = vmul.f32 %v1448, %v612
    %v1459 = vmul.f32 %v1450, %v614
    %1464 = vrot.lane.b32.xlu0 %v1456, 64
    %v1465 = vpop.permute.xlu0 %1464
    %1466 = vrot.lane.b32.xlu0 %v1457, 64
    %v1467 = vpop.permute.xlu0 %1466
    %1468 = vrot.lane.b32.xlu0 %v1458, 64
    %v1469 = vpop.permute.xlu0 %1468
    %1470 = vrot.lane.b32.xlu0 %v1459, 64
    %v1471 = vpop.permute.xlu0 %1470
    %v1476 = vadd.f32 %v1452, %v1465
    %v1477 = vadd.f32 %v1453, %v1467
    %v1478 = vadd.f32 %v1454, %v1469
    %v1479 = vadd.f32 %v1455, %v1471
    %s1480 = scalar_lea.vmem [#allocation6], 32
    %v1481 = vld [vmem:[%s1480] sm:$0xf]
    %v1482 = vld [vmem:[%s1480 + $0x4] sm:$0xf]
    %v1483 = vld [vmem:[%s1480 + $0x8] sm:$0xf]
    %v1484 = vld [vmem:[%s1480 + $0xc] sm:$0xf]
    %v1485 = vld [vmem:[%s1480 + $0x10] sm:$0xf]
    %v1486 = vld [vmem:[%s1480 + $0x14] sm:$0xf]
    %v1487 = vld [vmem:[%s1480 + $0x18] sm:$0xf]
    %v1488 = vld [vmem:[%s1480 + $0x1c] sm:$0xf]
    %v1489 = vpack.c.bf16 %v1391, %v1390
    %v1490 = vld [vmem:[#allocation9 + $0x2] ss:$0 sm:$0xff]
    %v1499 = vunpack.c.l.b16 %v1481
    %v1500 = vunpack.c.l.b16 %v1482
    %v1501 = vunpack.c.l.b16 %v1483
    %v1502 = vunpack.c.l.b16 %v1484
    %v1503 = vunpack.c.l.b16 %v1485
    %v1504 = vunpack.c.l.b16 %v1486
    %v1505 = vunpack.c.l.b16 %v1487
    %v1506 = vunpack.c.l.b16 %v1488
    %v1507 = vpack.c.b16 %v1500, %v1499
    %v1508 = vpack.c.b16 %v1502, %v1501
    %v1509 = vpack.c.b16 %v1504, %v1503
    %v1510 = vpack.c.b16 %v1506, %v1505
    %v1516 = vsel %vm190, %v1489, 0
    %1518 = vmatpush.bf16.msra.mxu0 0
    %1519 = vmatpush.bf16.msra.mxu0 0
    %1520 = vmatpush.bf16.msra.mxu0 0
    %1521 = vmatpush.bf16.msra.mxu0 0
    %1522 = vmatpush.bf16.msra.mxu0 %v1510
    %1523 = vmatpush.bf16.msra.mxu0 %v1509
    %1524 = vmatpush.bf16.msra.mxu0 %v1508
    %1525 = vmatpush.bf16.msra.mxu0 %v1507
    %1526 = vmatmul.bf16.gmra.mxu0 %v1516
    %v1527 = vpop.f32.mrf.mxu0
    %v1528 = vadd.f32 %v1490, %v1527
    %v1529 = vpop.f32.mrf.mxu0
    %v1530 = vadd.f32 %v1490, %v1529
    %1531 = vdwg.mxu0
    %v1532 = vpack.c.bf16 %v1530, %v1528
    %v1533 = vmul.f32 %v1476, %v675
    %v1534 = vmul.f32 %v1477, %v675
    %v1535 = vmul.f32 %v1478, %v675
    %v1536 = vmul.f32 %v1479, %v675
    %v1537 = vpack.c.bf16 %v1534, %v1533
    %v1538 = vpack.c.bf16 %v1536, %v1535
    %v1540 = vsel %vm190, %v1537, 0
    %v1543 = vsel %vm190, %v1538, 0
    %v1546 = vsel %vm190, %v1532, 0
    %1548 = vmatpush.bf16.xpose.msra.mxu0 0
    %1549 = vmatpush.bf16.xpose.msra.mxu0 0
    %1550 = vmatpush.bf16.xpose.msra.mxu0 0
    %1551 = vmatpush.bf16.xpose.msra.mxu0 0
    %1552 = vmatpush.bf16.xpose.msra.mxu0 0
    %1553 = vmatpush.bf16.xpose.msra.mxu0 0
    %1554 = vmatpush.bf16.xpose.msra.mxu0 0
    %1555 = vmatpush.bf16.xpose.msra.mxu0 %v1546
    %1556 = vmatmul.bf16.gmra.mxu0 %v1540
    %v1557 = vpop.f32.mrf.mxu0
    %v1558 = vadd.f32 0.0, %v1557
    %v1559 = vpop.f32.mrf.mxu0
    %v1560 = vadd.f32 0.0, %v1559
    %1561 = vmatmul.bf16.gmra.mxu0 %v1543
    %v1562 = vpop.f32.mrf.mxu0
    %v1563 = vadd.f32 0.0, %v1562
    %v1564 = vpop.f32.mrf.mxu0
    %v1565 = vadd.f32 0.0, %v1564
    %1566 = vdwg.mxu0
    %v1567 = vmul.f32 %v1558, 0.25
    %v1568 = vmul.f32 %v1560, 0.25
    %v1569 = vmul.f32 %v1563, 0.25
    %v1570 = vmul.f32 %v1565, 0.25
    %v1571 = vadd.f32 %v1567, %v145
    %v1572 = vadd.f32 %v1568, %v146
    %v1573 = vadd.f32 %v1569, %v147
    %v1574 = vadd.f32 %v1570, %v148
    %vm1575 = vcmask 130048
    %v1576 = vsel %vm1575, %v1571, -inf
    %1577 = vmax.xlane.f32.xlu0 %v1576
    %v1578 = vpop.xlane.xlu0 %1577
    %v1579 = vsel %vm1575, %v1572, -inf
    %1580 = vmax.xlane.f32.xlu0 %v1579
    %v1581 = vpop.xlane.xlu0 %1580
    %v1582 = vsel %vm1575, %v1573, -inf
    %1583 = vmax.xlane.f32.xlu0 %v1582
    %v1584 = vpop.xlane.xlu0 %1583
    %v1585 = vsel %vm1575, %v1574, -inf
    %1586 = vmax.xlane.f32.xlu0 %v1585
    %v1587 = vpop.xlane.xlu0 %1586
    %v1588 = vsub.f32 %v1571, %v1578
    %v1589 = vsub.f32 %v1572, %v1581
    %v1590 = vsub.f32 %v1573, %v1584
    %v1591 = vsub.f32 %v1574, %v1587
    %v1592 = vmul.f32 %v1588, 1.442695
    %v1593 = vpow.pop %v1592
    %v1594 = vmul.f32 %v1589, 1.442695
    %v1595 = vpow.pop %v1594
    %v1596 = vmul.f32 %v1590, 1.442695
    %v1597 = vpow.pop %v1596
    %v1598 = vmul.f32 %v1591, 1.442695
    %v1599 = vpow.pop %v1598
    %v1600 = vsel %vm1575, %v1593, 0.0
    %1601 = vadd.xlane.f32.xlu0 %v1600
    %v1602 = vpop.xlane.xlu0 %1601
    %v1603 = vsel %vm1575, %v1595, 0.0
    %1604 = vadd.xlane.f32.xlu0 %v1603
    %v1605 = vpop.xlane.xlu0 %1604
    %v1606 = vsel %vm1575, %v1597, 0.0
    %1607 = vadd.xlane.f32.xlu0 %v1606
    %v1608 = vpop.xlane.xlu0 %1607
    %v1609 = vsel %vm1575, %v1599, 0.0
    %1610 = vadd.xlane.f32.xlu0 %v1609
    %v1611 = vpop.xlane.xlu0 %1610
    %v1612 = vrcp.pop %v1602
    %v1613 = vrcp.pop %v1605
    %v1614 = vrcp.pop %v1608
    %v1615 = vrcp.pop %v1611
    %v1616 = vmul.f32 %v1593, %v1612
    %v1617 = vmul.f32 %v1595, %v1613
    %v1618 = vmul.f32 %v1597, %v1614
    %v1619 = vmul.f32 %v1599, %v1615
    %v1620 = vpack.c.bf16 %v1617, %v1616
    %v1621 = vpack.c.bf16 %v1619, %v1618
    %1622 = vrot.lane.b32.xlu0 %v675, 64
    %v1623 = vpop.permute.xlu0 %1622
    %v1625 = vmul.f32 %v1528, %v1623
    %v1626 = vmul.f32 %v1530, %v1623
    %v1627 = vpack.c.bf16 %v1626, %v1625
    %v1628 = vmul.f32 %v1476, %v778
    %v1629 = vmul.f32 %v1477, %v778
    %v1630 = vmul.f32 %v1478, %v778
    %v1631 = vmul.f32 %v1479, %v778
    %v1632 = vpack.c.bf16 %v1629, %v1628
    %v1633 = vpack.c.bf16 %v1631, %v1630
    %v1635 = vsel %vm190, %v1632, 0
    %v1638 = vsel %vm190, %v1633, 0
    %1640 = vmatpush.bf16.xpose.msra.mxu0 0
    %1641 = vmatpush.bf16.xpose.msra.mxu0 0
    %1642 = vmatpush.bf16.xpose.msra.mxu0 0
    %1643 = vmatpush.bf16.xpose.msra.mxu0 0
    %1644 = vmatpush.bf16.xpose.msra.mxu0 0
    %1645 = vmatpush.bf16.xpose.msra.mxu0 0
    %1646 = vmatpush.bf16.xpose.msra.mxu0 0
    %1647 = vmatpush.bf16.xpose.msra.mxu0 %v1546
    %1648 = vmatmul.bf16.gmra.mxu0 %v1635
    %v1649 = vpop.f32.mrf.mxu0
    %v1650 = vadd.f32 0.0, %v1649
    %v1651 = vpop.f32.mrf.mxu0
    %v1652 = vadd.f32 0.0, %v1651
    %1653 = vmatmul.bf16.gmra.mxu0 %v1638
    %v1654 = vpop.f32.mrf.mxu0
    %v1655 = vadd.f32 0.0, %v1654
    %v1656 = vpop.f32.mrf.mxu0
    %v1657 = vadd.f32 0.0, %v1656
    %1658 = vdwg.mxu0
    %v1659 = vmul.f32 %v1650, 0.25
    %v1660 = vmul.f32 %v1652, 0.25
    %v1661 = vmul.f32 %v1655, 0.25
    %v1662 = vmul.f32 %v1657, 0.25
    %v1663 = vadd.f32 %v1659, %v145
    %v1664 = vadd.f32 %v1660, %v146
    %v1665 = vadd.f32 %v1661, %v147
    %v1666 = vadd.f32 %v1662, %v148
    %v1667 = vsel %vm1575, %v1663, -inf
    %1668 = vmax.xlane.f32.xlu0 %v1667
    %v1669 = vpop.xlane.xlu0 %1668
    %v1670 = vsel %vm1575, %v1664, -inf
    %1671 = vmax.xlane.f32.xlu0 %v1670
    %v1672 = vpop.xlane.xlu0 %1671
    %v1673 = vsel %vm1575, %v1665, -inf
    %1674 = vmax.xlane.f32.xlu0 %v1673
    %v1675 = vpop.xlane.xlu0 %1674
    %v1676 = vsel %vm1575, %v1666, -inf
    %1677 = vmax.xlane.f32.xlu0 %v1676
    %v1678 = vpop.xlane.xlu0 %1677
    %v1679 = vsub.f32 %v1663, %v1669
    %v1680 = vsub.f32 %v1664, %v1672
    %v1681 = vsub.f32 %v1665, %v1675
    %v1682 = vsub.f32 %v1666, %v1678
    %v1683 = vmul.f32 %v1679, 1.442695
    %v1684 = vpow.pop %v1683
    %v1685 = vmul.f32 %v1680, 1.442695
    %v1686 = vpow.pop %v1685
    %v1687 = vmul.f32 %v1681, 1.442695
    %v1688 = vpow.pop %v1687
    %v1689 = vmul.f32 %v1682, 1.442695
    %v1690 = vpow.pop %v1689
    %v1691 = vsel %vm1575, %v1684, 0.0
    %1692 = vadd.xlane.f32.xlu0 %v1691
    %v1693 = vpop.xlane.xlu0 %1692
    %v1694 = vsel %vm1575, %v1686, 0.0
    %1695 = vadd.xlane.f32.xlu0 %v1694
    %v1696 = vpop.xlane.xlu0 %1695
    %v1697 = vsel %vm1575, %v1688, 0.0
    %1698 = vadd.xlane.f32.xlu0 %v1697
    %v1699 = vpop.xlane.xlu0 %1698
    %v1700 = vsel %vm1575, %v1690, 0.0
    %1701 = vadd.xlane.f32.xlu0 %v1700
    %v1702 = vpop.xlane.xlu0 %1701
    %v1703 = vrcp.pop %v1693
    %v1704 = vrcp.pop %v1696
    %v1705 = vrcp.pop %v1699
    %v1706 = vrcp.pop %v1702
    %v1707 = vmul.f32 %v1684, %v1703
    %v1708 = vmul.f32 %v1686, %v1704
    %v1709 = vmul.f32 %v1688, %v1705
    %v1710 = vmul.f32 %v1690, %v1706
    %v1711 = vpack.c.bf16 %v1708, %v1707
    %v1712 = vpack.c.bf16 %v1710, %v1709
    %1713 = vrot.lane.b32.xlu0 %v778, 64
    %v1714 = vpop.permute.xlu0 %1713
    %v1716 = vmul.f32 %v1528, %v1714
    %v1717 = vmul.f32 %v1530, %v1714
    %v1718 = vpack.c.bf16 %v1717, %v1716
    %1720 = vrot.lane.b32.xlu0 %v1718, 64
    %v1721 = vpop.permute.xlu0 %1720
    %v1724 = vsel %vm1575, %v1711, 0
    %v1727 = vsel %vm1575, %v1712, 0
    %1729 = vmatpush.bf16.msra.mxu0 0
    %1730 = vmatpush.bf16.msra.mxu0 0
    %1731 = vmatpush.bf16.msra.mxu0 0
    %1732 = vmatpush.bf16.msra.mxu0 0
    %1733 = vmatpush.bf16.msra.mxu0 0
    %1734 = vmatpush.bf16.msra.mxu0 0
    %1735 = vmatpush.bf16.msra.mxu0 0
    %1736 = vmatpush.bf16.msra.mxu0 %v1721
    %1737 = vmatmul.bf16.gmra.mxu0 %v1724
    %v1738 = vpop.f32.mrf.mxu0
    %v1739 = vadd.f32 0.0, %v1738
    %v1740 = vpop.f32.mrf.mxu0
    %v1741 = vadd.f32 0.0, %v1740
    %1742 = vmatmul.bf16.gmra.mxu0 %v1727
    %v1743 = vpop.f32.mrf.mxu0
    %v1744 = vadd.f32 0.0, %v1743
    %v1745 = vpop.f32.mrf.mxu0
    %v1746 = vadd.f32 0.0, %v1745
    %1747 = vdwg.mxu0
    %1749 = vrot.lane.b32.xlu0 %v1627, 64
    %v1750 = vpop.permute.xlu0 %1749
    %v1753 = vsel %vm1575, %v1620, 0
    %v1756 = vsel %vm1575, %v1621, 0
    %1758 = vmatpush.bf16.msra.mxu0 0
    %1759 = vmatpush.bf16.msra.mxu0 0
    %1760 = vmatpush.bf16.msra.mxu0 0
    %1761 = vmatpush.bf16.msra.mxu0 0
    %1762 = vmatpush.bf16.msra.mxu0 0
    %1763 = vmatpush.bf16.msra.mxu0 0
    %1764 = vmatpush.bf16.msra.mxu0 0
    %1765 = vmatpush.bf16.msra.mxu0 %v1750
    %1766 = vmatmul.bf16.gmra.mxu0 %v1753
    %v1767 = vpop.f32.mrf.mxu0
    %v1768 = vadd.f32 %v1739, %v1767
    %v1769 = vpop.f32.mrf.mxu0
    %v1770 = vadd.f32 %v1741, %v1769
    %1771 = vmatmul.bf16.gmra.mxu0 %v1756
    %v1772 = vpop.f32.mrf.mxu0
    %v1773 = vadd.f32 %v1744, %v1772
    %v1774 = vpop.f32.mrf.mxu0
    %v1775 = vadd.f32 %v1746, %v1774
    %1776 = vdwg.mxu0
    %v1777 = vmul.f32 %v1476, %v924
    %v1778 = vmul.f32 %v1477, %v924
    %v1779 = vmul.f32 %v1478, %v924
    %v1780 = vmul.f32 %v1479, %v924
    %v1781 = vpack.c.bf16 %v1778, %v1777
    %v1782 = vpack.c.bf16 %v1780, %v1779
    %v1784 = vsel %vm190, %v1781, 0
    %v1787 = vsel %vm190, %v1782, 0
    %1789 = vmatpush.bf16.xpose.msra.mxu0 0
    %1790 = vmatpush.bf16.xpose.msra.mxu0 0
    %1791 = vmatpush.bf16.xpose.msra.mxu0 0
    %1792 = vmatpush.bf16.xpose.msra.mxu0 0
    %1793 = vmatpush.bf16.xpose.msra.mxu0 0
    %1794 = vmatpush.bf16.xpose.msra.mxu0 0
    %1795 = vmatpush.bf16.xpose.msra.mxu0 0
    %1796 = vmatpush.bf16.xpose.msra.mxu0 %v1546
    %1797 = vmatmul.bf16.gmra.mxu0 %v1784
    %v1798 = vpop.f32.mrf.mxu0
    %v1799 = vadd.f32 0.0, %v1798
    %v1800 = vpop.f32.mrf.mxu0
    %v1801 = vadd.f32 0.0, %v1800
    %1802 = vmatmul.bf16.gmra.mxu0 %v1787
    %v1803 = vpop.f32.mrf.mxu0
    %v1804 = vadd.f32 0.0, %v1803
    %v1805 = vpop.f32.mrf.mxu0
    %v1806 = vadd.f32 0.0, %v1805
    %1807 = vdwg.mxu0
    %v1808 = vmul.f32 %v1799, 0.25
    %v1809 = vmul.f32 %v1801, 0.25
    %v1810 = vmul.f32 %v1804, 0.25
    %v1811 = vmul.f32 %v1806, 0.25
    %v1812 = vadd.f32 %v1808, %v145
    %v1813 = vadd.f32 %v1809, %v146
    %v1814 = vadd.f32 %v1810, %v147
    %v1815 = vadd.f32 %v1811, %v148
    %v1816 = vsel %vm1575, %v1812, -inf
    %1817 = vmax.xlane.f32.xlu0 %v1816
    %v1818 = vpop.xlane.xlu0 %1817
    %v1819 = vsel %vm1575, %v1813, -inf
    %1820 = vmax.xlane.f32.xlu0 %v1819
    %v1821 = vpop.xlane.xlu0 %1820
    %v1822 = vsel %vm1575, %v1814, -inf
    %1823 = vmax.xlane.f32.xlu0 %v1822
    %v1824 = vpop.xlane.xlu0 %1823
    %v1825 = vsel %vm1575, %v1815, -inf
    %1826 = vmax.xlane.f32.xlu0 %v1825
    %v1827 = vpop.xlane.xlu0 %1826
    %v1828 = vsub.f32 %v1812, %v1818
    %v1829 = vsub.f32 %v1813, %v1821
    %v1830 = vsub.f32 %v1814, %v1824
    %v1831 = vsub.f32 %v1815, %v1827
    %v1832 = vmul.f32 %v1828, 1.442695
    %v1833 = vpow.pop %v1832
    %v1834 = vmul.f32 %v1829, 1.442695
    %v1835 = vpow.pop %v1834
    %v1836 = vmul.f32 %v1830, 1.442695
    %v1837 = vpow.pop %v1836
    %v1838 = vmul.f32 %v1831, 1.442695
    %v1839 = vpow.pop %v1838
    %v1840 = vsel %vm1575, %v1833, 0.0
    %1841 = vadd.xlane.f32.xlu0 %v1840
    %v1842 = vpop.xlane.xlu0 %1841
    %v1843 = vsel %vm1575, %v1835, 0.0
    %1844 = vadd.xlane.f32.xlu0 %v1843
    %v1845 = vpop.xlane.xlu0 %1844
    %v1846 = vsel %vm1575, %v1837, 0.0
    %1847 = vadd.xlane.f32.xlu0 %v1846
    %v1848 = vpop.xlane.xlu0 %1847
    %v1849 = vsel %vm1575, %v1839, 0.0
    %1850 = vadd.xlane.f32.xlu0 %v1849
    %v1851 = vpop.xlane.xlu0 %1850
    %v1852 = vrcp.pop %v1842
    %v1853 = vrcp.pop %v1845
    %v1854 = vrcp.pop %v1848
    %v1855 = vrcp.pop %v1851
    %v1856 = vmul.f32 %v1833, %v1852
    %v1857 = vmul.f32 %v1835, %v1853
    %v1858 = vmul.f32 %v1837, %v1854
    %v1859 = vmul.f32 %v1839, %v1855
    %v1860 = vpack.c.bf16 %v1857, %v1856
    %v1861 = vpack.c.bf16 %v1859, %v1858
    %1862 = vrot.lane.b32.xlu0 %v924, 64
    %v1863 = vpop.permute.xlu0 %1862
    %v1865 = vmul.f32 %v1528, %v1863
    %v1866 = vmul.f32 %v1530, %v1863
    %v1867 = vpack.c.bf16 %v1866, %v1865
    %1869 = vrot.lane.b32.xlu0 %v1867, 64
    %v1870 = vpop.permute.xlu0 %1869
    %v1873 = vsel %vm1575, %v1860, 0
    %v1876 = vsel %vm1575, %v1861, 0
    %1878 = vmatpush.bf16.msra.mxu0 0
    %1879 = vmatpush.bf16.msra.mxu0 0
    %1880 = vmatpush.bf16.msra.mxu0 0
    %1881 = vmatpush.bf16.msra.mxu0 0
    %1882 = vmatpush.bf16.msra.mxu0 0
    %1883 = vmatpush.bf16.msra.mxu0 0
    %1884 = vmatpush.bf16.msra.mxu0 0
    %1885 = vmatpush.bf16.msra.mxu0 %v1870
    %1886 = vmatmul.bf16.gmra.mxu0 %v1873
    %v1887 = vpop.f32.mrf.mxu0
    %v1888 = vadd.f32 0.0, %v1887
    %v1889 = vpop.f32.mrf.mxu0
    %v1890 = vadd.f32 0.0, %v1889
    %1891 = vmatmul.bf16.gmra.mxu0 %v1876
    %v1892 = vpop.f32.mrf.mxu0
    %v1893 = vadd.f32 0.0, %v1892
    %v1894 = vpop.f32.mrf.mxu0
    %v1895 = vadd.f32 0.0, %v1894
    %1896 = vdwg.mxu0
    %v1897 = vadd.f32 %v1768, %v1888
    %v1898 = vadd.f32 %v1770, %v1890
    %v1899 = vadd.f32 %v1773, %v1893
    %v1900 = vadd.f32 %v1775, %v1895
    %v1901 = vmul.f32 %v1476, %v1049
    %v1902 = vmul.f32 %v1477, %v1049
    %v1903 = vmul.f32 %v1478, %v1049
    %v1904 = vmul.f32 %v1479, %v1049
    %v1905 = vpack.c.bf16 %v1902, %v1901
    %v1906 = vpack.c.bf16 %v1904, %v1903
    %v1908 = vsel %vm190, %v1905, 0
    %v1911 = vsel %vm190, %v1906, 0
    %1913 = vmatpush.bf16.xpose.msra.mxu0 0
    %1914 = vmatpush.bf16.xpose.msra.mxu0 0
    %1915 = vmatpush.bf16.xpose.msra.mxu0 0
    %1916 = vmatpush.bf16.xpose.msra.mxu0 0
    %1917 = vmatpush.bf16.xpose.msra.mxu0 0
    %1918 = vmatpush.bf16.xpose.msra.mxu0 0
    %1919 = vmatpush.bf16.xpose.msra.mxu0 0
    %1920 = vmatpush.bf16.xpose.msra.mxu0 %v1546
    %1921 = vmatmul.bf16.gmra.mxu0 %v1908
    %v1922 = vpop.f32.mrf.mxu0
    %v1923 = vadd.f32 0.0, %v1922
    %v1924 = vpop.f32.mrf.mxu0
    %v1925 = vadd.f32 0.0, %v1924
    %1926 = vmatmul.bf16.gmra.mxu0 %v1911
    %v1927 = vpop.f32.mrf.mxu0
    %v1928 = vadd.f32 0.0, %v1927
    %v1929 = vpop.f32.mrf.mxu0
    %v1930 = vadd.f32 0.0, %v1929
    %1931 = vdwg.mxu0
    %v1932 = vmul.f32 %v1923, 0.25
    %v1933 = vmul.f32 %v1925, 0.25
    %v1934 = vmul.f32 %v1928, 0.25
    %v1935 = vmul.f32 %v1930, 0.25
    %v1936 = vadd.f32 %v1932, %v145
    %v1937 = vadd.f32 %v1933, %v146
    %v1938 = vadd.f32 %v1934, %v147
    %v1939 = vadd.f32 %v1935, %v148
    %v1940 = vsel %vm1575, %v1936, -inf
    %1941 = vmax.xlane.f32.xlu0 %v1940
    %v1942 = vpop.xlane.xlu0 %1941
    %v1943 = vsel %vm1575, %v1937, -inf
    %1944 = vmax.xlane.f32.xlu0 %v1943
    %v1945 = vpop.xlane.xlu0 %1944
    %v1946 = vsel %vm1575, %v1938, -inf
    %1947 = vmax.xlane.f32.xlu0 %v1946
    %v1948 = vpop.xlane.xlu0 %1947
    %v1949 = vsel %vm1575, %v1939, -inf
    %1950 = vmax.xlane.f32.xlu0 %v1949
    %v1951 = vpop.xlane.xlu0 %1950
    %v1952 = vsub.f32 %v1936, %v1942
    %v1953 = vsub.f32 %v1937, %v1945
    %v1954 = vsub.f32 %v1938, %v1948
    %v1955 = vsub.f32 %v1939, %v1951
    %v1956 = vmul.f32 %v1952, 1.442695
    %v1957 = vpow.pop %v1956
    %v1958 = vmul.f32 %v1953, 1.442695
    %v1959 = vpow.pop %v1958
    %v1960 = vmul.f32 %v1954, 1.442695
    %v1961 = vpow.pop %v1960
    %v1962 = vmul.f32 %v1955, 1.442695
    %v1963 = vpow.pop %v1962
    %v1964 = vsel %vm1575, %v1957, 0.0
    %1965 = vadd.xlane.f32.xlu0 %v1964
    %v1966 = vpop.xlane.xlu0 %1965
    %v1967 = vsel %vm1575, %v1959, 0.0
    %1968 = vadd.xlane.f32.xlu0 %v1967
    %v1969 = vpop.xlane.xlu0 %1968
    %v1970 = vsel %vm1575, %v1961, 0.0
    %1971 = vadd.xlane.f32.xlu0 %v1970
    %v1972 = vpop.xlane.xlu0 %1971
    %v1973 = vsel %vm1575, %v1963, 0.0
    %1974 = vadd.xlane.f32.xlu0 %v1973
    %v1975 = vpop.xlane.xlu0 %1974
    %v1976 = vrcp.pop %v1966
    %v1977 = vrcp.pop %v1969
    %v1978 = vrcp.pop %v1972
    %v1979 = vrcp.pop %v1975
    %v1980 = vmul.f32 %v1957, %v1976
    %v1981 = vmul.f32 %v1959, %v1977
    %v1982 = vmul.f32 %v1961, %v1978
    %v1983 = vmul.f32 %v1963, %v1979
    %v1984 = vpack.c.bf16 %v1981, %v1980
    %v1985 = vpack.c.bf16 %v1983, %v1982
    %1986 = vrot.lane.b32.xlu0 %v1049, 64
    %v1987 = vpop.permute.xlu0 %1986
    %v1989 = vmul.f32 %v1528, %v1987
    %v1990 = vmul.f32 %v1530, %v1987
    %v1991 = vpack.c.bf16 %v1990, %v1989
    %1993 = vrot.lane.b32.xlu0 %v1991, 64
    %v1994 = vpop.permute.xlu0 %1993
    %v1997 = vsel %vm1575, %v1984, 0
    %v2000 = vsel %vm1575, %v1985, 0
    %2002 = vmatpush.bf16.msra.mxu0 0
    %2003 = vmatpush.bf16.msra.mxu0 0
    %2004 = vmatpush.bf16.msra.mxu0 0
    %2005 = vmatpush.bf16.msra.mxu0 0
    %2006 = vmatpush.bf16.msra.mxu0 0
    %2007 = vmatpush.bf16.msra.mxu0 0
    %2008 = vmatpush.bf16.msra.mxu0 0
    %2009 = vmatpush.bf16.msra.mxu0 %v1994
    %2010 = vmatmul.bf16.gmra.mxu0 %v1997
    %v2011 = vpop.f32.mrf.mxu0
    %v2012 = vadd.f32 0.0, %v2011
    %v2013 = vpop.f32.mrf.mxu0
    %v2014 = vadd.f32 0.0, %v2013
    %2015 = vmatmul.bf16.gmra.mxu0 %v2000
    %v2016 = vpop.f32.mrf.mxu0
    %v2017 = vadd.f32 0.0, %v2016
    %v2018 = vpop.f32.mrf.mxu0
    %v2019 = vadd.f32 0.0, %v2018
    %2020 = vdwg.mxu0
    %v2021 = vadd.f32 %v1897, %v2012
    %v2022 = vadd.f32 %v1898, %v2014
    %v2023 = vadd.f32 %v1899, %v2017
    %v2024 = vadd.f32 %v1900, %v2019
    %s2025 = scalar_lea.vmem %s10, 32
    %v2026 = vld [vmem:[%s2025] sm:$0xf]
    %v2027 = vld [vmem:[%s2025 + $0x4] sm:$0xf]
    %v2028 = vld [vmem:[%s2025 + $0x8] sm:$0xf]
    %v2029 = vld [vmem:[%s2025 + $0xc] sm:$0xf]
    %v2030 = vld [vmem:[%s2025 + $0x10] sm:$0xf]
    %v2031 = vld [vmem:[%s2025 + $0x14] sm:$0xf]
    %v2032 = vld [vmem:[%s2025 + $0x18] sm:$0xf]
    %v2033 = vld [vmem:[%s2025 + $0x1c] sm:$0xf]
    %v2034 = vpack.c.bf16 %v2022, %v2021
    %v2035 = vpack.c.bf16 %v2024, %v2023
    %v2044 = vunpack.c.l.b16 %v2026
    %v2045 = vunpack.c.l.b16 %v2027
    %v2046 = vunpack.c.l.b16 %v2028
    %v2047 = vunpack.c.l.b16 %v2029
    %v2048 = vunpack.c.l.b16 %v2030
    %v2049 = vunpack.c.l.b16 %v2031
    %v2050 = vunpack.c.l.b16 %v2032
    %v2051 = vunpack.c.l.b16 %v2033
    %v2052 = vpack.c.b16 %v2045, %v2044
    %v2053 = vpack.c.b16 %v2047, %v2046
    %v2054 = vpack.c.b16 %v2049, %v2048
    %v2055 = vpack.c.b16 %v2051, %v2050
    %v2061 = vsel %vm190, %v2034, 0
    %v2064 = vsel %vm190, %v2035, 0
    %2066 = vmatpush.bf16.msra.mxu0 0
    %2067 = vmatpush.bf16.msra.mxu0 0
    %2068 = vmatpush.bf16.msra.mxu0 0
    %2069 = vmatpush.bf16.msra.mxu0 0
    %2070 = vmatpush.bf16.msra.mxu0 %v2055
    %2071 = vmatpush.bf16.msra.mxu0 %v2054
    %2072 = vmatpush.bf16.msra.mxu0 %v2053
    %2073 = vmatpush.bf16.msra.mxu0 %v2052
    %2074 = vmatmul.bf16.gmra.mxu0 %v2061
    %v2075 = vpop.f32.mrf.mxu0
    %v2076 = vadd.f32 0.0, %v2075
    %v2077 = vpop.f32.mrf.mxu0
    %v2078 = vadd.f32 0.0, %v2077
    %2079 = vmatmul.bf16.gmra.mxu0 %v2064
    %v2080 = vpop.f32.mrf.mxu0
    %v2081 = vadd.f32 0.0, %v2080
    %v2082 = vpop.f32.mrf.mxu0
    %v2083 = vadd.f32 0.0, %v2082
    %2084 = vdwg.mxu0
    %v2085 = vadd.f32 %v1236, %v2076
    %v2086 = vadd.f32 %v1237, %v2078
    %v2087 = vadd.f32 %v1238, %v2081
    %v2088 = vadd.f32 %v1239, %v2083
    %v2089 = vld [vmem:[%s9 + $0x9] sm:$0x1]
    %v2090 = vperm.slane %v2089, 0
    %v2091 = vadd.f32 %v2085, %v2090
    %v2092 = vadd.f32 %v2086, %v2090
    %v2093 = vadd.f32 %v2087, %v2090
    %v2094 = vadd.f32 %v2088, %v2090
    %v2095 = vld [vmem:[%s9 + $0x6] sm:$0x1]
    %v2096 = vld [vmem:[%s9 + $0x7] sm:$0x1]
    %v2097 = vsel %vm190, %v2091, 0.0
    %2098 = vadd.xlane.f32.xlu0 %v2097
    %v2099 = vpop.xlane.xlu0 %2098
    %v2100 = vsel %vm190, %v2092, 0.0
    %2101 = vadd.xlane.f32.xlu0 %v2100
    %v2102 = vpop.xlane.xlu0 %2101
    %v2103 = vsel %vm190, %v2093, 0.0
    %2104 = vadd.xlane.f32.xlu0 %v2103
    %v2105 = vpop.xlane.xlu0 %2104
    %v2106 = vsel %vm190, %v2094, 0.0
    %2107 = vadd.xlane.f32.xlu0 %v2106
    %v2108 = vpop.xlane.xlu0 %2107
    %v2109 = vmul.f32 %v2099, %v209
    %v2110 = vmul.f32 %v2102, %v209
    %v2111 = vmul.f32 %v2105, %v209
    %v2112 = vmul.f32 %v2108, %v209
    %v2113 = vsub.f32 %v2091, %v2109
    %v2114 = vsub.f32 %v2092, %v2110
    %v2115 = vsub.f32 %v2093, %v2111
    %v2116 = vsub.f32 %v2094, %v2112
    %v2117 = vmul.f32 %v2113, %v2113
    %v2118 = vmul.f32 %v2114, %v2114
    %v2119 = vmul.f32 %v2115, %v2115
    %v2120 = vmul.f32 %v2116, %v2116
    %v2121 = vsel %vm190, %v2117, 0.0
    %2122 = vadd.xlane.f32.xlu0 %v2121
    %v2123 = vpop.xlane.xlu0 %2122
    %v2124 = vsel %vm190, %v2118, 0.0
    %2125 = vadd.xlane.f32.xlu0 %v2124
    %v2126 = vpop.xlane.xlu0 %2125
    %v2127 = vsel %vm190, %v2119, 0.0
    %2128 = vadd.xlane.f32.xlu0 %v2127
    %v2129 = vpop.xlane.xlu0 %2128
    %v2130 = vsel %vm190, %v2120, 0.0
    %2131 = vadd.xlane.f32.xlu0 %v2130
    %v2132 = vpop.xlane.xlu0 %2131
    %v2133 = vmul.f32 %v2123, %v209
    %v2134 = vmul.f32 %v2126, %v209
    %v2135 = vmul.f32 %v2129, %v209
    %v2136 = vmul.f32 %v2132, %v209
    %v2137 = vadd.f32 %v2133, 1e-05
    %v2138 = vadd.f32 %v2134, 1e-05
    %v2139 = vadd.f32 %v2135, 1e-05
    %v2140 = vadd.f32 %v2136, 1e-05
    %v2141 = vrsqrt.pop %v2137
    %v2142 = vmul.f32 %v2141, %v2137
    %v2143 = vmul.f32 %v2142, %v2141
    %v2144 = vmul.f32 0.5, %v2143
    %v2145 = vsub.f32 1.5, %v2144
    %v2146 = vmul.f32 %v2141, %v2145
    %vm2147 = vweird.f32 %v2137
    %vm2148 = vweird.f32 %v2141
    %vm2149 = vmor %vm2147, %vm2148
    %v2150 = vsel %vm2149, %v2141, %v2146
    %v2151 = vrsqrt.pop %v2138
    %v2152 = vmul.f32 %v2151, %v2138
    %v2153 = vmul.f32 %v2152, %v2151
    %v2154 = vmul.f32 0.5, %v2153
    %v2155 = vsub.f32 1.5, %v2154
    %v2156 = vmul.f32 %v2151, %v2155
    %vm2157 = vweird.f32 %v2138
    %vm2158 = vweird.f32 %v2151
    %vm2159 = vmor %vm2157, %vm2158
    %v2160 = vsel %vm2159, %v2151, %v2156
    %v2161 = vrsqrt.pop %v2139
    %v2162 = vmul.f32 %v2161, %v2139
    %v2163 = vmul.f32 %v2162, %v2161
    %v2164 = vmul.f32 0.5, %v2163
    %v2165 = vsub.f32 1.5, %v2164
    %v2166 = vmul.f32 %v2161, %v2165
    %vm2167 = vweird.f32 %v2139
    %vm2168 = vweird.f32 %v2161
    %vm2169 = vmor %vm2167, %vm2168
    %v2170 = vsel %vm2169, %v2161, %v2166
    %v2171 = vrsqrt.pop %v2140
    %v2172 = vmul.f32 %v2171, %v2140
    %v2173 = vmul.f32 %v2172, %v2171
    %v2174 = vmul.f32 0.5, %v2173
    %v2175 = vsub.f32 1.5, %v2174
    %v2176 = vmul.f32 %v2171, %v2175
    %vm2177 = vweird.f32 %v2140
    %vm2178 = vweird.f32 %v2171
    %vm2179 = vmor %vm2177, %vm2178
    %v2180 = vsel %vm2179, %v2171, %v2176
    %v2181 = vmul.f32 %v2113, %v2150
    %v2182 = vmul.f32 %v2114, %v2160
    %v2183 = vmul.f32 %v2115, %v2170
    %v2184 = vmul.f32 %v2116, %v2180
    %v2185 = vperm.slane %v2095, 0
    %v2186 = vmul.f32 %v1384, %v2185
    %v2187 = vmul.f32 %v1385, %v2185
    %v2188 = vmul.f32 %v2181, %v2185
    %v2189 = vmul.f32 %v2182, %v2185
    %v2190 = vmul.f32 %v2183, %v2185
    %v2191 = vmul.f32 %v2184, %v2185
    %v2192 = vperm.slane %v2096, 0
    %v2193 = vadd.f32 %v2186, %v2192
    %v2194 = vadd.f32 %v2187, %v2192
    %v2195 = vadd.f32 %v2188, %v2192
    %v2196 = vadd.f32 %v2189, %v2192
    %v2197 = vadd.f32 %v2190, %v2192
    %v2198 = vadd.f32 %v2191, %v2192
    %v2199 = vld [vmem:[#allocation7] sm:$0xff]
    %v2200 = vld [vmem:[#allocation7 + $0x8] sm:$0xff]
    %v2201 = vld [vmem:[#allocation7 + $0x10] sm:$0xff]
    %v2202 = vld [vmem:[#allocation7 + $0x18] sm:$0xff]
    %v2203 = vld [vmem:[#allocation7 + $0x20] sm:$0xff]
    %v2204 = vld [vmem:[#allocation7 + $0x28] sm:$0xff]
    %v2205 = vld [vmem:[#allocation7 + $0x30] sm:$0xff]
    %v2206 = vld [vmem:[#allocation7 + $0x38] sm:$0xff]
    %v2207 = vpack.c.bf16 %v2194, %v2193
    %v2208 = vpack.c.bf16 %v2196, %v2195
    %v2209 = vpack.c.bf16 %v2198, %v2197
    %s2210 = scalar_lea.vmem [#allocation9], 3
    %v2211 = vld [vmem:[%s2210] ss:$8 sm:$0x3]
    %v2213 = vperm.slane %v2211, 0
    %v2214 = vperm.slane %v2211, 1
    %v2225 = vunpack.c.l.b16 %v2199
    %v2226 = vunpack.c.h.b16 %v2199
    %v2227 = vunpack.c.l.b16 %v2200
    %v2228 = vunpack.c.h.b16 %v2200
    %v2229 = vunpack.c.l.b16 %v2201
    %v2230 = vunpack.c.h.b16 %v2201
    %v2231 = vunpack.c.l.b16 %v2202
    %v2232 = vunpack.c.h.b16 %v2202
    %v2233 = vunpack.c.l.b16 %v2203
    %v2234 = vunpack.c.h.b16 %v2203
    %v2235 = vunpack.c.l.b16 %v2204
    %v2236 = vunpack.c.h.b16 %v2204
    %v2237 = vunpack.c.l.b16 %v2205
    %v2238 = vunpack.c.h.b16 %v2205
    %v2239 = vunpack.c.l.b16 %v2206
    %v2240 = vunpack.c.h.b16 %v2206
    %v2241 = vpack.c.b16 %v2227, %v2225
    %v2242 = vpack.c.b16 %v2228, %v2226
    %v2243 = vpack.c.b16 %v2231, %v2229
    %v2244 = vpack.c.b16 %v2232, %v2230
    %v2245 = vpack.c.b16 %v2235, %v2233
    %v2246 = vpack.c.b16 %v2236, %v2234
    %v2247 = vpack.c.b16 %v2239, %v2237
    %v2248 = vpack.c.b16 %v2240, %v2238
    %v2258 = vsel %vm190, %v2207, 0
    %v2261 = vsel %vm190, %v2208, 0
    %v2264 = vsel %vm190, %v2209, 0
    %2266 = vmatpush.bf16.msra.mxu0 0
    %2267 = vmatpush.bf16.msra.mxu0 0
    %2268 = vmatpush.bf16.msra.mxu0 0
    %2269 = vmatpush.bf16.msra.mxu0 0
    %2270 = vmatpush.bf16.msra.mxu0 %v2247
    %2271 = vmatpush.bf16.msra.mxu0 %v2245
    %2272 = vmatpush.bf16.msra.mxu0 %v2243
    %2273 = vmatpush.bf16.msra.mxu0 %v2241
    %2274 = vmatmul.bf16.gmra.mxu0 %v2258
    %v2275 = vpop.f32.mrf.mxu0
    %v2276 = vadd.f32 %v2213, %v2275
    %v2277 = vpop.f32.mrf.mxu0
    %v2278 = vadd.f32 %v2213, %v2277
    %2279 = vmatmul.bf16.gmra.mxu0 %v2261
    %v2280 = vpop.f32.mrf.mxu0
    %v2281 = vadd.f32 %v2213, %v2280
    %v2282 = vpop.f32.mrf.mxu0
    %v2283 = vadd.f32 %v2213, %v2282
    %2284 = vmatmul.bf16.gmra.mxu0 %v2264
    %v2285 = vpop.f32.mrf.mxu0
    %v2286 = vadd.f32 %v2213, %v2285
    %v2287 = vpop.f32.mrf.mxu0
    %v2288 = vadd.f32 %v2213, %v2287
    %2289 = vdwg.mxu0
    %2290 = vmatpush.bf16.msra.mxu0 0
    %2291 = vmatpush.bf16.msra.mxu0 0
    %2292 = vmatpush.bf16.msra.mxu0 0
    %2293 = vmatpush.bf16.msra.mxu0 0
    %2294 = vmatpush.bf16.msra.mxu0 %v2248
    %2295 = vmatpush.bf16.msra.mxu0 %v2246
    %2296 = vmatpush.bf16.msra.mxu0 %v2244
    %2297 = vmatpush.bf16.msra.mxu0 %v2242
    %2298 = vmatmul.bf16.gmra.mxu0 %v2258
    %v2299 = vpop.f32.mrf.mxu0
    %v2300 = vadd.f32 %v2214, %v2299
    %v2301 = vpop.f32.mrf.mxu0
    %v2302 = vadd.f32 %v2214, %v2301
    %2303 = vmatmul.bf16.gmra.mxu0 %v2261
    %v2304 = vpop.f32.mrf.mxu0
    %v2305 = vadd.f32 %v2214, %v2304
    %v2306 = vpop.f32.mrf.mxu0
    %v2307 = vadd.f32 %v2214, %v2306
    %2308 = vmatmul.bf16.gmra.mxu0 %v2264
    %v2309 = vpop.f32.mrf.mxu0
    %v2310 = vadd.f32 %v2214, %v2309
    %v2311 = vpop.f32.mrf.mxu0
    %v2312 = vadd.f32 %v2214, %v2311
    %2313 = vdwg.mxu0
    %v2314 = vmul.f32 %v2276, 0.5
    %v2315 = vmul.f32 %v2300, 0.5
    %v2316 = vmul.f32 %v2278, 0.5
    %v2317 = vmul.f32 %v2302, 0.5
    %v2318 = vmul.f32 %v2281, 0.5
    %v2319 = vmul.f32 %v2305, 0.5
    %v2320 = vmul.f32 %v2283, 0.5
    %v2321 = vmul.f32 %v2307, 0.5
    %v2322 = vmul.f32 %v2286, 0.5
    %v2323 = vmul.f32 %v2310, 0.5
    %v2324 = vmul.f32 %v2288, 0.5
    %v2325 = vmul.f32 %v2312, 0.5
    %v2326 = vmul.f32 %v2276, 0.70710677
    %v2327 = vmul.f32 %v2300, 0.70710677
    %v2328 = vmul.f32 %v2278, 0.70710677
    %v2329 = vmul.f32 %v2302, 0.70710677
    %v2330 = vmul.f32 %v2281, 0.70710677
    %v2331 = vmul.f32 %v2305, 0.70710677
    %v2332 = vmul.f32 %v2283, 0.70710677
    %v2333 = vmul.f32 %v2307, 0.70710677
    %v2334 = vmul.f32 %v2286, 0.70710677
    %v2335 = vmul.f32 %v2310, 0.70710677
    %v2336 = vmul.f32 %v2288, 0.70710677
    %v2337 = vmul.f32 %v2312, 0.70710677
    %v2338 = vand.u32 2147483647, %v2326
    %v2339 = vand.u32 2147483647, %v2327
    %v2340 = vand.u32 2147483647, %v2328
    %v2341 = vand.u32 2147483647, %v2329
    %v2342 = vand.u32 2147483647, %v2330
    %v2343 = vand.u32 2147483647, %v2331
    %v2344 = vand.u32 2147483647, %v2332
    %v2345 = vand.u32 2147483647, %v2333
    %v2346 = vand.u32 2147483647, %v2334
    %v2347 = vand.u32 2147483647, %v2335
    %v2348 = vand.u32 2147483647, %v2336
    %v2349 = vand.u32 2147483647, %v2337
    %v2350 = vmul.f32 %v2338, 0.3275911
    %v2351 = vmul.f32 %v2339, 0.3275911
    %v2352 = vmul.f32 %v2340, 0.3275911
    %v2353 = vmul.f32 %v2341, 0.3275911
    %v2354 = vmul.f32 %v2342, 0.3275911
    %v2355 = vmul.f32 %v2343, 0.3275911
    %v2356 = vmul.f32 %v2344, 0.3275911
    %v2357 = vmul.f32 %v2345, 0.3275911
    %v2358 = vmul.f32 %v2346, 0.3275911
    %v2359 = vmul.f32 %v2347, 0.3275911
    %v2360 = vmul.f32 %v2348, 0.3275911
    %v2361 = vmul.f32 %v2349, 0.3275911
    %v2362 = vadd.f32 %v2350, 1.0
    %v2363 = vadd.f32 %v2351, 1.0
    %v2364 = vadd.f32 %v2352, 1.0
    %v2365 = vadd.f32 %v2353, 1.0
    %v2366 = vadd.f32 %v2354, 1.0
    %v2367 = vadd.f32 %v2355, 1.0
    %v2368 = vadd.f32 %v2356, 1.0
    %v2369 = vadd.f32 %v2357, 1.0
    %v2370 = vadd.f32 %v2358, 1.0
    %v2371 = vadd.f32 %v2359, 1.0
    %v2372 = vadd.f32 %v2360, 1.0
    %v2373 = vadd.f32 %v2361, 1.0
    %v2374 = vrcp.pop %v2362
    %v2375 = vrcp.pop %v2363
    %v2376 = vrcp.pop %v2364
    %v2377 = vrcp.pop %v2365
    %v2378 = vrcp.pop %v2366
    %v2379 = vrcp.pop %v2367
    %v2380 = vrcp.pop %v2368
    %v2381 = vrcp.pop %v2369
    %v2382 = vrcp.pop %v2370
    %v2383 = vrcp.pop %v2371
    %v2384 = vrcp.pop %v2372
    %v2385 = vrcp.pop %v2373
    %v2386 = vmul.f32 %v2374, 1.0614054
    %v2387 = vmul.f32 %v2375, 1.0614054
    %v2388 = vmul.f32 %v2376, 1.0614054
    %v2389 = vmul.f32 %v2377, 1.0614054
    %v2390 = vmul.f32 %v2378, 1.0614054
    %v2391 = vmul.f32 %v2379, 1.0614054
    %v2392 = vmul.f32 %v2380, 1.0614054
    %v2393 = vmul.f32 %v2381, 1.0614054
    %v2394 = vmul.f32 %v2382, 1.0614054
    %v2395 = vmul.f32 %v2383, 1.0614054
    %v2396 = vmul.f32 %v2384, 1.0614054
    %v2397 = vmul.f32 %v2385, 1.0614054
    %v2398 = vadd.f32 %v2386, -1.4531521
    %v2399 = vadd.f32 %v2387, -1.4531521
    %v2400 = vadd.f32 %v2388, -1.4531521
    %v2401 = vadd.f32 %v2389, -1.4531521
    %v2402 = vadd.f32 %v2390, -1.4531521
    %v2403 = vadd.f32 %v2391, -1.4531521
    %v2404 = vadd.f32 %v2392, -1.4531521
    %v2405 = vadd.f32 %v2393, -1.4531521
    %v2406 = vadd.f32 %v2394, -1.4531521
    %v2407 = vadd.f32 %v2395, -1.4531521
    %v2408 = vadd.f32 %v2396, -1.4531521
    %v2409 = vadd.f32 %v2397, -1.4531521
    %v2410 = vmul.f32 %v2398, %v2374
    %v2411 = vmul.f32 %v2399, %v2375
    %v2412 = vmul.f32 %v2400, %v2376
    %v2413 = vmul.f32 %v2401, %v2377
    %v2414 = vmul.f32 %v2402, %v2378
    %v2415 = vmul.f32 %v2403, %v2379
    %v2416 = vmul.f32 %v2404, %v2380
    %v2417 = vmul.f32 %v2405, %v2381
    %v2418 = vmul.f32 %v2406, %v2382
    %v2419 = vmul.f32 %v2407, %v2383
    %v2420 = vmul.f32 %v2408, %v2384
    %v2421 = vmul.f32 %v2409, %v2385
    %v2422 = vadd.f32 %v2410, 1.4214138
    %v2423 = vadd.f32 %v2411, 1.4214138
    %v2424 = vadd.f32 %v2412, 1.4214138
    %v2425 = vadd.f32 %v2413, 1.4214138
    %v2426 = vadd.f32 %v2414, 1.4214138
    %v2427 = vadd.f32 %v2415, 1.4214138
    %v2428 = vadd.f32 %v2416, 1.4214138
    %v2429 = vadd.f32 %v2417, 1.4214138
    %v2430 = vadd.f32 %v2418, 1.4214138
    %v2431 = vadd.f32 %v2419, 1.4214138
    %v2432 = vadd.f32 %v2420, 1.4214138
    %v2433 = vadd.f32 %v2421, 1.4214138
    %v2434 = vmul.f32 %v2422, %v2374
    %v2435 = vmul.f32 %v2423, %v2375
    %v2436 = vmul.f32 %v2424, %v2376
    %v2437 = vmul.f32 %v2425, %v2377
    %v2438 = vmul.f32 %v2426, %v2378
    %v2439 = vmul.f32 %v2427, %v2379
    %v2440 = vmul.f32 %v2428, %v2380
    %v2441 = vmul.f32 %v2429, %v2381
    %v2442 = vmul.f32 %v2430, %v2382
    %v2443 = vmul.f32 %v2431, %v2383
    %v2444 = vmul.f32 %v2432, %v2384
    %v2445 = vmul.f32 %v2433, %v2385
    %v2446 = vadd.f32 %v2434, -0.28449672
    %v2447 = vadd.f32 %v2435, -0.28449672
    %v2448 = vadd.f32 %v2436, -0.28449672
    %v2449 = vadd.f32 %v2437, -0.28449672
    %v2450 = vadd.f32 %v2438, -0.28449672
    %v2451 = vadd.f32 %v2439, -0.28449672
    %v2452 = vadd.f32 %v2440, -0.28449672
    %v2453 = vadd.f32 %v2441, -0.28449672
    %v2454 = vadd.f32 %v2442, -0.28449672
    %v2455 = vadd.f32 %v2443, -0.28449672
    %v2456 = vadd.f32 %v2444, -0.28449672
    %v2457 = vadd.f32 %v2445, -0.28449672
    %v2458 = vmul.f32 %v2446, %v2374
    %v2459 = vmul.f32 %v2447, %v2375
    %v2460 = vmul.f32 %v2448, %v2376
    %v2461 = vmul.f32 %v2449, %v2377
    %v2462 = vmul.f32 %v2450, %v2378
    %v2463 = vmul.f32 %v2451, %v2379
    %v2464 = vmul.f32 %v2452, %v2380
    %v2465 = vmul.f32 %v2453, %v2381
    %v2466 = vmul.f32 %v2454, %v2382
    %v2467 = vmul.f32 %v2455, %v2383
    %v2468 = vmul.f32 %v2456, %v2384
    %v2469 = vmul.f32 %v2457, %v2385
    %v2470 = vadd.f32 %v2458, 0.2548296
    %v2471 = vadd.f32 %v2459, 0.2548296
    %v2472 = vadd.f32 %v2460, 0.2548296
    %v2473 = vadd.f32 %v2461, 0.2548296
    %v2474 = vadd.f32 %v2462, 0.2548296
    %v2475 = vadd.f32 %v2463, 0.2548296
    %v2476 = vadd.f32 %v2464, 0.2548296
    %v2477 = vadd.f32 %v2465, 0.2548296
    %v2478 = vadd.f32 %v2466, 0.2548296
    %v2479 = vadd.f32 %v2467, 0.2548296
    %v2480 = vadd.f32 %v2468, 0.2548296
    %v2481 = vadd.f32 %v2469, 0.2548296
    %v2482 = vmul.f32 %v2470, %v2374
    %v2483 = vmul.f32 %v2471, %v2375
    %v2484 = vmul.f32 %v2472, %v2376
    %v2485 = vmul.f32 %v2473, %v2377
    %v2486 = vmul.f32 %v2474, %v2378
    %v2487 = vmul.f32 %v2475, %v2379
    %v2488 = vmul.f32 %v2476, %v2380
    %v2489 = vmul.f32 %v2477, %v2381
    %v2490 = vmul.f32 %v2478, %v2382
    %v2491 = vmul.f32 %v2479, %v2383
    %v2492 = vmul.f32 %v2480, %v2384
    %v2493 = vmul.f32 %v2481, %v2385
    %v2494 = vsub.f32 0.0, %v2338
    %v2495 = vsub.f32 0.0, %v2339
    %v2496 = vsub.f32 0.0, %v2340
    %v2497 = vsub.f32 0.0, %v2341
    %v2498 = vsub.f32 0.0, %v2342
    %v2499 = vsub.f32 0.0, %v2343
    %v2500 = vsub.f32 0.0, %v2344
    %v2501 = vsub.f32 0.0, %v2345
    %v2502 = vsub.f32 0.0, %v2346
    %v2503 = vsub.f32 0.0, %v2347
    %v2504 = vsub.f32 0.0, %v2348
    %v2505 = vsub.f32 0.0, %v2349
    %v2506 = vmul.f32 %v2494, %v2338
    %v2507 = vmul.f32 %v2495, %v2339
    %v2508 = vmul.f32 %v2496, %v2340
    %v2509 = vmul.f32 %v2497, %v2341
    %v2510 = vmul.f32 %v2498, %v2342
    %v2511 = vmul.f32 %v2499, %v2343
    %v2512 = vmul.f32 %v2500, %v2344
    %v2513 = vmul.f32 %v2501, %v2345
    %v2514 = vmul.f32 %v2502, %v2346
    %v2515 = vmul.f32 %v2503, %v2347
    %v2516 = vmul.f32 %v2504, %v2348
    %v2517 = vmul.f32 %v2505, %v2349
    %v2518 = vmul.f32 %v2506, 1.442695
    %v2519 = vpow.pop %v2518
    %v2520 = vmul.f32 %v2507, 1.442695
    %v2521 = vpow.pop %v2520
    %v2522 = vmul.f32 %v2508, 1.442695
    %v2523 = vpow.pop %v2522
    %v2524 = vmul.f32 %v2509, 1.442695
    %v2525 = vpow.pop %v2524
    %v2526 = vmul.f32 %v2510, 1.442695
    %v2527 = vpow.pop %v2526
    %v2528 = vmul.f32 %v2511, 1.442695
    %v2529 = vpow.pop %v2528
    %v2530 = vmul.f32 %v2512, 1.442695
    %v2531 = vpow.pop %v2530
    %v2532 = vmul.f32 %v2513, 1.442695
    %v2533 = vpow.pop %v2532
    %v2534 = vmul.f32 %v2514, 1.442695
    %v2535 = vpow.pop %v2534
    %v2536 = vmul.f32 %v2515, 1.442695
    %v2537 = vpow.pop %v2536
    %v2538 = vmul.f32 %v2516, 1.442695
    %v2539 = vpow.pop %v2538
    %v2540 = vmul.f32 %v2517, 1.442695
    %v2541 = vpow.pop %v2540
    %v2542 = vmul.f32 %v2482, %v2519
    %v2543 = vmul.f32 %v2483, %v2521
    %v2544 = vmul.f32 %v2484, %v2523
    %v2545 = vmul.f32 %v2485, %v2525
    %v2546 = vmul.f32 %v2486, %v2527
    %v2547 = vmul.f32 %v2487, %v2529
    %v2548 = vmul.f32 %v2488, %v2531
    %v2549 = vmul.f32 %v2489, %v2533
    %v2550 = vmul.f32 %v2490, %v2535
    %v2551 = vmul.f32 %v2491, %v2537
    %v2552 = vmul.f32 %v2492, %v2539
    %v2553 = vmul.f32 %v2493, %v2541
    %v2554 = vsub.f32 1.0, %v2542
    %v2555 = vsub.f32 1.0, %v2543
    %v2556 = vsub.f32 1.0, %v2544
    %v2557 = vsub.f32 1.0, %v2545
    %v2558 = vsub.f32 1.0, %v2546
    %v2559 = vsub.f32 1.0, %v2547
    %v2560 = vsub.f32 1.0, %v2548
    %v2561 = vsub.f32 1.0, %v2549
    %v2562 = vsub.f32 1.0, %v2550
    %v2563 = vsub.f32 1.0, %v2551
    %v2564 = vsub.f32 1.0, %v2552
    %v2565 = vsub.f32 1.0, %v2553
    %vm2566 = vcmp.ge.f32.partialorder %v2326, 0.0
    %vm2567 = vcmp.ge.f32.partialorder %v2327, 0.0
    %vm2568 = vcmp.ge.f32.partialorder %v2328, 0.0
    %vm2569 = vcmp.ge.f32.partialorder %v2329, 0.0
    %vm2570 = vcmp.ge.f32.partialorder %v2330, 0.0
    %vm2571 = vcmp.ge.f32.partialorder %v2331, 0.0
    %vm2572 = vcmp.ge.f32.partialorder %v2332, 0.0
    %vm2573 = vcmp.ge.f32.partialorder %v2333, 0.0
    %vm2574 = vcmp.ge.f32.partialorder %v2334, 0.0
    %vm2575 = vcmp.ge.f32.partialorder %v2335, 0.0
    %vm2576 = vcmp.ge.f32.partialorder %v2336, 0.0
    %vm2577 = vcmp.ge.f32.partialorder %v2337, 0.0
    %v2578 = vsub.f32 0.0, %v2554
    %v2579 = vsub.f32 0.0, %v2555
    %v2580 = vsub.f32 0.0, %v2556
    %v2581 = vsub.f32 0.0, %v2557
    %v2582 = vsub.f32 0.0, %v2558
    %v2583 = vsub.f32 0.0, %v2559
    %v2584 = vsub.f32 0.0, %v2560
    %v2585 = vsub.f32 0.0, %v2561
    %v2586 = vsub.f32 0.0, %v2562
    %v2587 = vsub.f32 0.0, %v2563
    %v2588 = vsub.f32 0.0, %v2564
    %v2589 = vsub.f32 0.0, %v2565
    %v2590 = vsel %vm2566, %v2554, %v2578
    %v2591 = vsel %vm2567, %v2555, %v2579
    %v2592 = vsel %vm2568, %v2556, %v2580
    %v2593 = vsel %vm2569, %v2557, %v2581
    %v2594 = vsel %vm2570, %v2558, %v2582
    %v2595 = vsel %vm2571, %v2559, %v2583
    %v2596 = vsel %vm2572, %v2560, %v2584
    %v2597 = vsel %vm2573, %v2561, %v2585
    %v2598 = vsel %vm2574, %v2562, %v2586
    %v2599 = vsel %vm2575, %v2563, %v2587
    %v2600 = vsel %vm2576, %v2564, %v2588
    %v2601 = vsel %vm2577, %v2565, %v2589
    %v2602 = vadd.f32 %v2590, 1.0
    %v2603 = vadd.f32 %v2591, 1.0
    %v2604 = vadd.f32 %v2592, 1.0
    %v2605 = vadd.f32 %v2593, 1.0
    %v2606 = vadd.f32 %v2594, 1.0
    %v2607 = vadd.f32 %v2595, 1.0
    %v2608 = vadd.f32 %v2596, 1.0
    %v2609 = vadd.f32 %v2597, 1.0
    %v2610 = vadd.f32 %v2598, 1.0
    %v2611 = vadd.f32 %v2599, 1.0
    %v2612 = vadd.f32 %v2600, 1.0
    %v2613 = vadd.f32 %v2601, 1.0
    %v2614 = vmul.f32 %v2314, %v2602
    %v2615 = vmul.f32 %v2315, %v2603
    %v2616 = vmul.f32 %v2316, %v2604
    %v2617 = vmul.f32 %v2317, %v2605
    %v2618 = vmul.f32 %v2318, %v2606
    %v2619 = vmul.f32 %v2319, %v2607
    %v2620 = vmul.f32 %v2320, %v2608
    %v2621 = vmul.f32 %v2321, %v2609
    %v2622 = vmul.f32 %v2322, %v2610
    %v2623 = vmul.f32 %v2323, %v2611
    %v2624 = vmul.f32 %v2324, %v2612
    %v2625 = vmul.f32 %v2325, %v2613
    %v2626 = vld [vmem:[%s14] sm:$0xf]
    %v2627 = vld [vmem:[%s14 + $0x4] sm:$0xf]
    %v2628 = vld [vmem:[%s14 + $0x8] sm:$0xf]
    %v2629 = vld [vmem:[%s14 + $0xc] sm:$0xf]
    %v2630 = vld [vmem:[%s14 + $0x10] sm:$0xf]
    %v2631 = vld [vmem:[%s14 + $0x14] sm:$0xf]
    %v2632 = vld [vmem:[%s14 + $0x18] sm:$0xf]
    %v2633 = vld [vmem:[%s14 + $0x1c] sm:$0xf]
    %v2634 = vld [vmem:[%s14 + $0x20] sm:$0xf]
    %v2635 = vld [vmem:[%s14 + $0x24] sm:$0xf]
    %v2636 = vld [vmem:[%s14 + $0x28] sm:$0xf]
    %v2637 = vld [vmem:[%s14 + $0x2c] sm:$0xf]
    %v2638 = vld [vmem:[%s14 + $0x30] sm:$0xf]
    %v2639 = vld [vmem:[%s14 + $0x34] sm:$0xf]
    %v2640 = vld [vmem:[%s14 + $0x38] sm:$0xf]
    %v2641 = vld [vmem:[%s14 + $0x3c] sm:$0xf]
    %v2642 = vld [vmem:[%s14 + $0x40] sm:$0xf]
    %v2643 = vld [vmem:[%s14 + $0x44] sm:$0xf]
    %v2644 = vld [vmem:[%s14 + $0x48] sm:$0xf]
    %v2645 = vld [vmem:[%s14 + $0x4c] sm:$0xf]
    %v2646 = vld [vmem:[%s14 + $0x50] sm:$0xf]
    %v2647 = vld [vmem:[%s14 + $0x54] sm:$0xf]
    %v2648 = vld [vmem:[%s14 + $0x58] sm:$0xf]
    %v2649 = vld [vmem:[%s14 + $0x5c] sm:$0xf]
    %v2650 = vld [vmem:[%s14 + $0x60] sm:$0xf]
    %v2651 = vld [vmem:[%s14 + $0x64] sm:$0xf]
    %v2652 = vld [vmem:[%s14 + $0x68] sm:$0xf]
    %v2653 = vld [vmem:[%s14 + $0x6c] sm:$0xf]
    %v2654 = vld [vmem:[%s14 + $0x70] sm:$0xf]
    %v2655 = vld [vmem:[%s14 + $0x74] sm:$0xf]
    %v2656 = vld [vmem:[%s14 + $0x78] sm:$0xf]
    %v2657 = vld [vmem:[%s14 + $0x7c] sm:$0xf]
    %v2658 = vpack.c.bf16 %v2616, %v2614
    %v2659 = vpack.c.bf16 %v2617, %v2615
    %v2660 = vpack.c.bf16 %v2620, %v2618
    %v2661 = vpack.c.bf16 %v2621, %v2619
    %v2662 = vpack.c.bf16 %v2624, %v2622
    %v2663 = vpack.c.bf16 %v2625, %v2623
    %v2664 = vld [vmem:[%s9 + $0xa] sm:$0x1]
    %v2665 = vperm.slane %v2664, 0
    %v2698 = vunpack.c.l.b16 %v2626
    %v2699 = vunpack.c.l.b16 %v2627
    %v2700 = vunpack.c.l.b16 %v2628
    %v2701 = vunpack.c.l.b16 %v2629
    %v2702 = vunpack.c.l.b16 %v2630
    %v2703 = vunpack.c.l.b16 %v2631
    %v2704 = vunpack.c.l.b16 %v2632
    %v2705 = vunpack.c.l.b16 %v2633
    %v2706 = vunpack.c.l.b16 %v2634
    %v2707 = vunpack.c.l.b16 %v2635
    %v2708 = vunpack.c.l.b16 %v2636
    %v2709 = vunpack.c.l.b16 %v2637
    %v2710 = vunpack.c.l.b16 %v2638
    %v2711 = vunpack.c.l.b16 %v2639
    %v2712 = vunpack.c.l.b16 %v2640
    %v2713 = vunpack.c.l.b16 %v2641
    %v2714 = vunpack.c.l.b16 %v2642
    %v2715 = vunpack.c.l.b16 %v2643
    %v2716 = vunpack.c.l.b16 %v2644
    %v2717 = vunpack.c.l.b16 %v2645
    %v2718 = vunpack.c.l.b16 %v2646
    %v2719 = vunpack.c.l.b16 %v2647
    %v2720 = vunpack.c.l.b16 %v2648
    %v2721 = vunpack.c.l.b16 %v2649
    %v2722 = vunpack.c.l.b16 %v2650
    %v2723 = vunpack.c.l.b16 %v2651
    %v2724 = vunpack.c.l.b16 %v2652
    %v2725 = vunpack.c.l.b16 %v2653
    %v2726 = vunpack.c.l.b16 %v2654
    %v2727 = vunpack.c.l.b16 %v2655
    %v2728 = vunpack.c.l.b16 %v2656
    %v2729 = vunpack.c.l.b16 %v2657
    %v2730 = vpack.c.b16 %v2699, %v2698
    %v2731 = vpack.c.b16 %v2701, %v2700
    %v2732 = vpack.c.b16 %v2703, %v2702
    %v2733 = vpack.c.b16 %v2705, %v2704
    %v2734 = vpack.c.b16 %v2707, %v2706
    %v2735 = vpack.c.b16 %v2709, %v2708
    %v2736 = vpack.c.b16 %v2711, %v2710
    %v2737 = vpack.c.b16 %v2713, %v2712
    %v2738 = vpack.c.b16 %v2715, %v2714
    %v2739 = vpack.c.b16 %v2717, %v2716
    %v2740 = vpack.c.b16 %v2719, %v2718
    %v2741 = vpack.c.b16 %v2721, %v2720
    %v2742 = vpack.c.b16 %v2723, %v2722
    %v2743 = vpack.c.b16 %v2725, %v2724
    %v2744 = vpack.c.b16 %v2727, %v2726
    %v2745 = vpack.c.b16 %v2729, %v2728
    %2762 = vmatpush.bf16.msra.mxu0 %v2737
    %2763 = vmatpush.bf16.msra.mxu0 %v2736
    %2764 = vmatpush.bf16.msra.mxu0 %v2735
    %2765 = vmatpush.bf16.msra.mxu0 %v2734
    %2766 = vmatpush.bf16.msra.mxu0 %v2733
    %2767 = vmatpush.bf16.msra.mxu0 %v2732
    %2768 = vmatpush.bf16.msra.mxu0 %v2731
    %2769 = vmatpush.bf16.msra.mxu0 %v2730
    %2770 = vmatmul.bf16.gmra.mxu0 %v2658
    %v2771 = vpop.f32.mrf.mxu0
    %v2772 = vadd.f32 %v2665, %v2771
    %v2773 = vpop.f32.mrf.mxu0
    %v2774 = vadd.f32 %v2665, %v2773
    %2775 = vmatmul.bf16.gmra.mxu0 %v2660
    %v2776 = vpop.f32.mrf.mxu0
    %v2777 = vadd.f32 %v2665, %v2776
    %v2778 = vpop.f32.mrf.mxu0
    %v2779 = vadd.f32 %v2665, %v2778
    %2780 = vmatmul.bf16.gmra.mxu0 %v2662
    %v2781 = vpop.f32.mrf.mxu0
    %v2782 = vadd.f32 %v2665, %v2781
    %v2783 = vpop.f32.mrf.mxu0
    %v2784 = vadd.f32 %v2665, %v2783
    %2785 = vdwg.mxu0
    %2786 = vmatpush.bf16.msra.mxu0 %v2745
    %2787 = vmatpush.bf16.msra.mxu0 %v2744
    %2788 = vmatpush.bf16.msra.mxu0 %v2743
    %2789 = vmatpush.bf16.msra.mxu0 %v2742
    %2790 = vmatpush.bf16.msra.mxu0 %v2741
    %2791 = vmatpush.bf16.msra.mxu0 %v2740
    %2792 = vmatpush.bf16.msra.mxu0 %v2739
    %2793 = vmatpush.bf16.msra.mxu0 %v2738
    %2794 = vmatmul.bf16.gmra.mxu0 %v2659
    %v2795 = vpop.f32.mrf.mxu0
    %v2796 = vadd.f32 %v2772, %v2795
    %v2797 = vpop.f32.mrf.mxu0
    %v2798 = vadd.f32 %v2774, %v2797
    %2799 = vmatmul.bf16.gmra.mxu0 %v2661
    %v2800 = vpop.f32.mrf.mxu0
    %v2801 = vadd.f32 %v2777, %v2800
    %v2802 = vpop.f32.mrf.mxu0
    %v2803 = vadd.f32 %v2779, %v2802
    %2804 = vmatmul.bf16.gmra.mxu0 %v2663
    %v2805 = vpop.f32.mrf.mxu0
    %v2806 = vadd.f32 %v2782, %v2805
    %v2807 = vpop.f32.mrf.mxu0
    %v2808 = vadd.f32 %v2784, %v2807
    %2809 = vdwg.mxu0
    %v2810 = vadd.f32 %v344, %v2796
    %v2811 = vadd.f32 %v345, %v2798
    %v2812 = vadd.f32 %v2091, %v2801
    %v2813 = vadd.f32 %v2092, %v2803
    %v2814 = vadd.f32 %v2093, %v2806
    %v2815 = vadd.f32 %v2094, %v2808
    %v2816 = vld [vmem:[%s9 + $0xb] sm:$0x1]
    %v2817 = vld [vmem:[%s9 + $0xc] sm:$0x1]
    %v2818 = vsel %vm190, %v2812, 0.0
    %2819 = vadd.xlane.f32.xlu0 %v2818
    %v2820 = vpop.xlane.xlu0 %2819
    %v2821 = vsel %vm190, %v2813, 0.0
    %2822 = vadd.xlane.f32.xlu0 %v2821
    %v2823 = vpop.xlane.xlu0 %2822
    %v2824 = vsel %vm190, %v2814, 0.0
    %2825 = vadd.xlane.f32.xlu0 %v2824
    %v2826 = vpop.xlane.xlu0 %2825
    %v2827 = vsel %vm190, %v2815, 0.0
    %2828 = vadd.xlane.f32.xlu0 %v2827
    %v2829 = vpop.xlane.xlu0 %2828
    %v2830 = vmul.f32 %v2820, %v209
    %v2831 = vmul.f32 %v2823, %v209
    %v2832 = vmul.f32 %v2826, %v209
    %v2833 = vmul.f32 %v2829, %v209
    %v2834 = vsub.f32 %v2812, %v2830
    %v2835 = vsub.f32 %v2813, %v2831
    %v2836 = vsub.f32 %v2814, %v2832
    %v2837 = vsub.f32 %v2815, %v2833
    %v2838 = vmul.f32 %v2834, %v2834
    %v2839 = vmul.f32 %v2835, %v2835
    %v2840 = vmul.f32 %v2836, %v2836
    %v2841 = vmul.f32 %v2837, %v2837
    %v2842 = vsel %vm190, %v2838, 0.0
    %2843 = vadd.xlane.f32.xlu0 %v2842
    %v2844 = vpop.xlane.xlu0 %2843
    %v2845 = vsel %vm190, %v2839, 0.0
    %2846 = vadd.xlane.f32.xlu0 %v2845
    %v2847 = vpop.xlane.xlu0 %2846
    %v2848 = vsel %vm190, %v2840, 0.0
    %2849 = vadd.xlane.f32.xlu0 %v2848
    %v2850 = vpop.xlane.xlu0 %2849
    %v2851 = vsel %vm190, %v2841, 0.0
    %2852 = vadd.xlane.f32.xlu0 %v2851
    %v2853 = vpop.xlane.xlu0 %2852
    %v2854 = vmul.f32 %v2844, %v209
    %v2855 = vmul.f32 %v2847, %v209
    %v2856 = vmul.f32 %v2850, %v209
    %v2857 = vmul.f32 %v2853, %v209
    %v2858 = vadd.f32 %v2854, 1e-05
    %v2859 = vadd.f32 %v2855, 1e-05
    %v2860 = vadd.f32 %v2856, 1e-05
    %v2861 = vadd.f32 %v2857, 1e-05
    %v2862 = vrsqrt.pop %v2858
    %v2863 = vmul.f32 %v2862, %v2858
    %v2864 = vmul.f32 %v2863, %v2862
    %v2865 = vmul.f32 0.5, %v2864
    %v2866 = vsub.f32 1.5, %v2865
    %v2867 = vmul.f32 %v2862, %v2866
    %vm2868 = vweird.f32 %v2858
    %vm2869 = vweird.f32 %v2862
    %vm2870 = vmor %vm2868, %vm2869
    %v2871 = vsel %vm2870, %v2862, %v2867
    %v2872 = vrsqrt.pop %v2859
    %v2873 = vmul.f32 %v2872, %v2859
    %v2874 = vmul.f32 %v2873, %v2872
    %v2875 = vmul.f32 0.5, %v2874
    %v2876 = vsub.f32 1.5, %v2875
    %v2877 = vmul.f32 %v2872, %v2876
    %vm2878 = vweird.f32 %v2859
    %vm2879 = vweird.f32 %v2872
    %vm2880 = vmor %vm2878, %vm2879
    %v2881 = vsel %vm2880, %v2872, %v2877
    %v2882 = vrsqrt.pop %v2860
    %v2883 = vmul.f32 %v2882, %v2860
    %v2884 = vmul.f32 %v2883, %v2882
    %v2885 = vmul.f32 0.5, %v2884
    %v2886 = vsub.f32 1.5, %v2885
    %v2887 = vmul.f32 %v2882, %v2886
    %vm2888 = vweird.f32 %v2860
    %vm2889 = vweird.f32 %v2882
    %vm2890 = vmor %vm2888, %vm2889
    %v2891 = vsel %vm2890, %v2882, %v2887
    %v2892 = vrsqrt.pop %v2861
    %v2893 = vmul.f32 %v2892, %v2861
    %v2894 = vmul.f32 %v2893, %v2892
    %v2895 = vmul.f32 0.5, %v2894
    %v2896 = vsub.f32 1.5, %v2895
    %v2897 = vmul.f32 %v2892, %v2896
    %vm2898 = vweird.f32 %v2861
    %vm2899 = vweird.f32 %v2892
    %vm2900 = vmor %vm2898, %vm2899
    %v2901 = vsel %vm2900, %v2892, %v2897
    %v2902 = vmul.f32 %v2834, %v2871
    %v2903 = vmul.f32 %v2835, %v2881
    %v2904 = vmul.f32 %v2836, %v2891
    %v2905 = vmul.f32 %v2837, %v2901
    %v2906 = vperm.slane %v2816, 0
    %v2907 = vmul.f32 %v2902, %v2906
    %v2908 = vmul.f32 %v2903, %v2906
    %v2909 = vmul.f32 %v2904, %v2906
    %v2910 = vmul.f32 %v2905, %v2906
    %v2911 = vperm.slane %v2817, 0
    %v2912 = vadd.f32 %v2907, %v2911
    %v2913 = vadd.f32 %v2908, %v2911
    %v2914 = vadd.f32 %v2909, %v2911
    %v2915 = vadd.f32 %v2910, %v2911
    %s2916 = scalar_lea.vmem %s11, 96
    %v2917 = vld [vmem:[%s2916] sm:$0xff]
    %v2918 = vld [vmem:[%s2916 + $0x8] sm:$0xf]
    %v2919 = vld [vmem:[%s2916 + $0xc] sm:$0xff]
    %v2920 = vld [vmem:[%s2916 + $0x14] sm:$0xf]
    %v2921 = vld [vmem:[%s2916 + $0x18] sm:$0xff]
    %v2922 = vld [vmem:[%s2916 + $0x20] sm:$0xf]
    %v2923 = vld [vmem:[%s2916 + $0x24] sm:$0xff]
    %v2924 = vld [vmem:[%s2916 + $0x2c] sm:$0xf]
    %v2925 = vld [vmem:[%s2916 + $0x30] sm:$0xff]
    %v2926 = vld [vmem:[%s2916 + $0x38] sm:$0xf]
    %v2927 = vld [vmem:[%s2916 + $0x3c] sm:$0xff]
    %v2928 = vld [vmem:[%s2916 + $0x44] sm:$0xf]
    %v2929 = vld [vmem:[%s2916 + $0x48] sm:$0xff]
    %v2930 = vld [vmem:[%s2916 + $0x50] sm:$0xf]
    %v2931 = vld [vmem:[%s2916 + $0x54] sm:$0xff]
    %v2932 = vld [vmem:[%s2916 + $0x5c] sm:$0xf]
    %v2933 = vpack.c.bf16 %v2913, %v2912
    %v2934 = vpack.c.bf16 %v2915, %v2914
    %s2935 = scalar_lea.vmem [#allocation9], 4
    %v2936 = vld [vmem:[%s2935] ss:$8 sm:$0x7]
    %v2938 = vperm.slane %v2936, 0
    %v2939 = vperm.slane %v2936, 1
    %v2940 = vperm.slane %v2936, 2
    %v2960 = vunpack.c.l.b16 %v2917
    %v2961 = vunpack.c.h.b16 %v2917
    %v2962 = vunpack.c.l.b16 %v2918
    %v2963 = vunpack.c.l.b16 %v2919
    %v2964 = vunpack.c.h.b16 %v2919
    %v2965 = vunpack.c.l.b16 %v2920
    %v2966 = vunpack.c.l.b16 %v2921
    %v2967 = vunpack.c.h.b16 %v2921
    %v2968 = vunpack.c.l.b16 %v2922
    %v2969 = vunpack.c.l.b16 %v2923
    %v2970 = vunpack.c.h.b16 %v2923
    %v2971 = vunpack.c.l.b16 %v2924
    %v2972 = vunpack.c.l.b16 %v2925
    %v2973 = vunpack.c.h.b16 %v2925
    %v2974 = vunpack.c.l.b16 %v2926
    %v2975 = vunpack.c.l.b16 %v2927
    %v2976 = vunpack.c.h.b16 %v2927
    %v2977 = vunpack.c.l.b16 %v2928
    %v2978 = vunpack.c.l.b16 %v2929
    %v2979 = vunpack.c.h.b16 %v2929
    %v2980 = vunpack.c.l.b16 %v2930
    %v2981 = vunpack.c.l.b16 %v2931
    %v2982 = vunpack.c.h.b16 %v2931
    %v2983 = vunpack.c.l.b16 %v2932
    %v2984 = vpack.c.b16 %v2963, %v2960
    %v2985 = vpack.c.b16 %v2964, %v2961
    %v2986 = vpack.c.b16 %v2965, %v2962
    %v2987 = vpack.c.b16 %v2969, %v2966
    %v2988 = vpack.c.b16 %v2970, %v2967
    %v2989 = vpack.c.b16 %v2971, %v2968
    %v2990 = vpack.c.b16 %v2975, %v2972
    %v2991 = vpack.c.b16 %v2976, %v2973
    %v2992 = vpack.c.b16 %v2977, %v2974
    %v2993 = vpack.c.b16 %v2981, %v2978
    %v2994 = vpack.c.b16 %v2982, %v2979
    %v2995 = vpack.c.b16 %v2983, %v2980
    %v3009 = vsel %vm190, %v2933, 0
    %v3012 = vsel %vm190, %v2934, 0
    %3014 = vmatpush.bf16.msra.mxu0 0
    %3015 = vmatpush.bf16.msra.mxu0 0
    %3016 = vmatpush.bf16.msra.mxu0 0
    %3017 = vmatpush.bf16.msra.mxu0 0
    %3018 = vmatpush.bf16.msra.mxu0 %v2993
    %3019 = vmatpush.bf16.msra.mxu0 %v2990
    %3020 = vmatpush.bf16.msra.mxu0 %v2987
    %3021 = vmatpush.bf16.msra.mxu0 %v2984
    %3022 = vmatmul.bf16.gmra.mxu0 %v3009
    %v3023 = vpop.f32.mrf.mxu0
    %v3024 = vadd.f32 %v2938, %v3023
    %v3025 = vpop.f32.mrf.mxu0
    %v3026 = vadd.f32 %v2938, %v3025
    %3027 = vmatmul.bf16.gmra.mxu0 %v3012
    %v3028 = vpop.f32.mrf.mxu0
    %v3029 = vadd.f32 %v2938, %v3028
    %v3030 = vpop.f32.mrf.mxu0
    %v3031 = vadd.f32 %v2938, %v3030
    %3032 = vdwg.mxu0
    %3033 = vmatpush.bf16.msra.mxu0 0
    %3034 = vmatpush.bf16.msra.mxu0 0
    %3035 = vmatpush.bf16.msra.mxu0 0
    %3036 = vmatpush.bf16.msra.mxu0 0
    %3037 = vmatpush.bf16.msra.mxu0 %v2994
    %3038 = vmatpush.bf16.msra.mxu0 %v2991
    %3039 = vmatpush.bf16.msra.mxu0 %v2988
    %3040 = vmatpush.bf16.msra.mxu0 %v2985
    %3041 = vmatmul.bf16.gmra.mxu0 %v3009
    %v3042 = vpop.f32.mrf.mxu0
    %v3043 = vadd.f32 %v2939, %v3042
    %v3044 = vpop.f32.mrf.mxu0
    %v3045 = vadd.f32 %v2939, %v3044
    %3046 = vmatmul.bf16.gmra.mxu0 %v3012
    %v3047 = vpop.f32.mrf.mxu0
    %v3048 = vadd.f32 %v2939, %v3047
    %v3049 = vpop.f32.mrf.mxu0
    %v3050 = vadd.f32 %v2939, %v3049
    %3051 = vdwg.mxu0
    %3052 = vmatpush.bf16.msra.mxu0 0
    %3053 = vmatpush.bf16.msra.mxu0 0
    %3054 = vmatpush.bf16.msra.mxu0 0
    %3055 = vmatpush.bf16.msra.mxu0 0
    %3056 = vmatpush.bf16.msra.mxu0 %v2995
    %3057 = vmatpush.bf16.msra.mxu0 %v2992
    %3058 = vmatpush.bf16.msra.mxu0 %v2989
    %3059 = vmatpush.bf16.msra.mxu0 %v2986
    %3060 = vmatmul.bf16.gmra.mxu0 %v3009
    %v3061 = vpop.f32.mrf.mxu0
    %v3062 = vadd.f32 %v2940, %v3061
    %v3063 = vpop.f32.mrf.mxu0
    %v3064 = vadd.f32 %v2940, %v3063
    %3065 = vmatmul.bf16.gmra.mxu0 %v3012
    %v3066 = vpop.f32.mrf.mxu0
    %v3067 = vadd.f32 %v2940, %v3066
    %v3068 = vpop.f32.mrf.mxu0
    %v3069 = vadd.f32 %v2940, %v3068
    %3070 = vdwg.mxu0
    %v3071 = vmul.f32 %v3024, %v132
    %v3072 = vmul.f32 %v3026, %v133
    %v3073 = vmul.f32 %v3029, %v134
    %v3074 = vmul.f32 %v3031, %v135
    %v3075 = vmul.f32 %v3024, %v608
    %v3076 = vmul.f32 %v3026, %v610
    %v3077 = vmul.f32 %v3029, %v612
    %v3078 = vmul.f32 %v3031, %v614
    %3083 = vrot.lane.b32.xlu0 %v3075, 64
    %v3084 = vpop.permute.xlu0 %3083
    %3085 = vrot.lane.b32.xlu0 %v3076, 64
    %v3086 = vpop.permute.xlu0 %3085
    %3087 = vrot.lane.b32.xlu0 %v3077, 64
    %v3088 = vpop.permute.xlu0 %3087
    %3089 = vrot.lane.b32.xlu0 %v3078, 64
    %v3090 = vpop.permute.xlu0 %3089
    %v3095 = vadd.f32 %v3071, %v3084
    %v3096 = vadd.f32 %v3072, %v3086
    %v3097 = vadd.f32 %v3073, %v3088
    %v3098 = vadd.f32 %v3074, %v3090
    %v3099 = vmul.f32 %v3043, %v132
    %v3100 = vmul.f32 %v3045, %v133
    %v3101 = vmul.f32 %v3048, %v134
    %v3102 = vmul.f32 %v3050, %v135
    %v3103 = vmul.f32 %v3043, %v608
    %v3104 = vmul.f32 %v3045, %v610
    %v3105 = vmul.f32 %v3048, %v612
    %v3106 = vmul.f32 %v3050, %v614
    %3111 = vrot.lane.b32.xlu0 %v3103, 64
    %v3112 = vpop.permute.xlu0 %3111
    %3113 = vrot.lane.b32.xlu0 %v3104, 64
    %v3114 = vpop.permute.xlu0 %3113
    %3115 = vrot.lane.b32.xlu0 %v3105, 64
    %v3116 = vpop.permute.xlu0 %3115
    %3117 = vrot.lane.b32.xlu0 %v3106, 64
    %v3118 = vpop.permute.xlu0 %3117
    %v3123 = vadd.f32 %v3099, %v3112
    %v3124 = vadd.f32 %v3100, %v3114
    %v3125 = vadd.f32 %v3101, %v3116
    %v3126 = vadd.f32 %v3102, %v3118
    %v3127 = vpack.c.bf16 %v3124, %v3123
    %v3128 = vpack.c.bf16 %v3126, %v3125
    %v3129 = vmul.f32 %v3095, %v675
    %v3130 = vmul.f32 %v3096, %v675
    %v3131 = vmul.f32 %v3097, %v675
    %v3132 = vmul.f32 %v3098, %v675
    %v3133 = vpack.c.bf16 %v3130, %v3129
    %v3134 = vpack.c.bf16 %v3132, %v3131
    %v3136 = vsel %vm190, %v3133, 0
    %v3139 = vsel %vm190, %v3134, 0
    %v3142 = vsel %vm190, %v3127, 0
    %v3145 = vsel %vm190, %v3128, 0
    %3147 = vmatpush.bf16.xpose.msra.mxu0 0
    %3148 = vmatpush.bf16.xpose.msra.mxu0 0
    %3149 = vmatpush.bf16.xpose.msra.mxu0 0
    %3150 = vmatpush.bf16.xpose.msra.mxu0 0
    %3151 = vmatpush.bf16.xpose.msra.mxu0 0
    %3152 = vmatpush.bf16.xpose.msra.mxu0 0
    %3153 = vmatpush.bf16.xpose.msra.mxu0 %v3145
    %3154 = vmatpush.bf16.xpose.msra.mxu0 %v3142
    %3155 = vmatmul.bf16.gmra.mxu0 %v3136
    %v3156 = vpop.f32.mrf.mxu0
    %v3157 = vadd.f32 0.0, %v3156
    %v3158 = vpop.f32.mrf.mxu0
    %v3159 = vadd.f32 0.0, %v3158
    %3160 = vmatmul.bf16.gmra.mxu0 %v3139
    %v3161 = vpop.f32.mrf.mxu0
    %v3162 = vadd.f32 0.0, %v3161
    %v3163 = vpop.f32.mrf.mxu0
    %v3164 = vadd.f32 0.0, %v3163
    %3165 = vdwg.mxu0
    %v3166 = vmul.f32 %v3157, 0.25
    %v3167 = vmul.f32 %v3159, 0.25
    %v3168 = vmul.f32 %v3162, 0.25
    %v3169 = vmul.f32 %v3164, 0.25
    %v3170 = vadd.f32 %v3166, %v141
    %v3171 = vadd.f32 %v3167, %v142
    %v3172 = vadd.f32 %v3168, %v143
    %v3173 = vadd.f32 %v3169, %v144
    %v3174 = vsel %vm722, %v3170, -inf
    %3175 = vmax.xlane.f32.xlu0 %v3174
    %v3176 = vpop.xlane.xlu0 %3175
    %v3177 = vsel %vm722, %v3171, -inf
    %3178 = vmax.xlane.f32.xlu0 %v3177
    %v3179 = vpop.xlane.xlu0 %3178
    %v3180 = vsel %vm722, %v3172, -inf
    %3181 = vmax.xlane.f32.xlu0 %v3180
    %v3182 = vpop.xlane.xlu0 %3181
    %v3183 = vsel %vm722, %v3173, -inf
    %3184 = vmax.xlane.f32.xlu0 %v3183
    %v3185 = vpop.xlane.xlu0 %3184
    %v3186 = vsub.f32 %v3170, %v3176
    %v3187 = vsub.f32 %v3171, %v3179
    %v3188 = vsub.f32 %v3172, %v3182
    %v3189 = vsub.f32 %v3173, %v3185
    %v3190 = vmul.f32 %v3186, 1.442695
    %v3191 = vpow.pop %v3190
    %v3192 = vmul.f32 %v3187, 1.442695
    %v3193 = vpow.pop %v3192
    %v3194 = vmul.f32 %v3188, 1.442695
    %v3195 = vpow.pop %v3194
    %v3196 = vmul.f32 %v3189, 1.442695
    %v3197 = vpow.pop %v3196
    %v3198 = vsel %vm722, %v3191, 0.0
    %3199 = vadd.xlane.f32.xlu0 %v3198
    %v3200 = vpop.xlane.xlu0 %3199
    %v3201 = vsel %vm722, %v3193, 0.0
    %3202 = vadd.xlane.f32.xlu0 %v3201
    %v3203 = vpop.xlane.xlu0 %3202
    %v3204 = vsel %vm722, %v3195, 0.0
    %3205 = vadd.xlane.f32.xlu0 %v3204
    %v3206 = vpop.xlane.xlu0 %3205
    %v3207 = vsel %vm722, %v3197, 0.0
    %3208 = vadd.xlane.f32.xlu0 %v3207
    %v3209 = vpop.xlane.xlu0 %3208
    %v3210 = vrcp.pop %v3200
    %v3211 = vrcp.pop %v3203
    %v3212 = vrcp.pop %v3206
    %v3213 = vrcp.pop %v3209
    %v3214 = vmul.f32 %v3191, %v3210
    %v3215 = vmul.f32 %v3193, %v3211
    %v3216 = vmul.f32 %v3195, %v3212
    %v3217 = vmul.f32 %v3197, %v3213
    %v3218 = vpack.c.bf16 %v3215, %v3214
    %v3219 = vpack.c.bf16 %v3217, %v3216
    %v3220 = vmul.f32 %v3062, %v675
    %v3221 = vmul.f32 %v3064, %v675
    %v3222 = vmul.f32 %v3067, %v675
    %v3223 = vmul.f32 %v3069, %v675
    %v3224 = vpack.c.bf16 %v3221, %v3220
    %v3225 = vpack.c.bf16 %v3223, %v3222
    %v3226 = vmul.f32 %v3095, %v778
    %v3227 = vmul.f32 %v3096, %v778
    %v3228 = vmul.f32 %v3097, %v778
    %v3229 = vmul.f32 %v3098, %v778
    %v3230 = vpack.c.bf16 %v3227, %v3226
    %v3231 = vpack.c.bf16 %v3229, %v3228
    %v3233 = vsel %vm190, %v3230, 0
    %v3236 = vsel %vm190, %v3231, 0
    %3238 = vmatpush.bf16.xpose.msra.mxu0 0
    %3239 = vmatpush.bf16.xpose.msra.mxu0 0
    %3240 = vmatpush.bf16.xpose.msra.mxu0 0
    %3241 = vmatpush.bf16.xpose.msra.mxu0 0
    %3242 = vmatpush.bf16.xpose.msra.mxu0 0
    %3243 = vmatpush.bf16.xpose.msra.mxu0 0
    %3244 = vmatpush.bf16.xpose.msra.mxu0 %v3145
    %3245 = vmatpush.bf16.xpose.msra.mxu0 %v3142
    %3246 = vmatmul.bf16.gmra.mxu0 %v3233
    %v3247 = vpop.f32.mrf.mxu0
    %v3248 = vadd.f32 0.0, %v3247
    %v3249 = vpop.f32.mrf.mxu0
    %v3250 = vadd.f32 0.0, %v3249
    %3251 = vmatmul.bf16.gmra.mxu0 %v3236
    %v3252 = vpop.f32.mrf.mxu0
    %v3253 = vadd.f32 0.0, %v3252
    %v3254 = vpop.f32.mrf.mxu0
    %v3255 = vadd.f32 0.0, %v3254
    %3256 = vdwg.mxu0
    %v3257 = vmul.f32 %v3248, 0.25
    %v3258 = vmul.f32 %v3250, 0.25
    %v3259 = vmul.f32 %v3253, 0.25
    %v3260 = vmul.f32 %v3255, 0.25
    %v3261 = vadd.f32 %v3257, %v141
    %v3262 = vadd.f32 %v3258, %v142
    %v3263 = vadd.f32 %v3259, %v143
    %v3264 = vadd.f32 %v3260, %v144
    %v3265 = vsel %vm722, %v3261, -inf
    %3266 = vmax.xlane.f32.xlu0 %v3265
    %v3267 = vpop.xlane.xlu0 %3266
    %v3268 = vsel %vm722, %v3262, -inf
    %3269 = vmax.xlane.f32.xlu0 %v3268
    %v3270 = vpop.xlane.xlu0 %3269
    %v3271 = vsel %vm722, %v3263, -inf
    %3272 = vmax.xlane.f32.xlu0 %v3271
    %v3273 = vpop.xlane.xlu0 %3272
    %v3274 = vsel %vm722, %v3264, -inf
    %3275 = vmax.xlane.f32.xlu0 %v3274
    %v3276 = vpop.xlane.xlu0 %3275
    %v3277 = vsub.f32 %v3261, %v3267
    %v3278 = vsub.f32 %v3262, %v3270
    %v3279 = vsub.f32 %v3263, %v3273
    %v3280 = vsub.f32 %v3264, %v3276
    %v3281 = vmul.f32 %v3277, 1.442695
    %v3282 = vpow.pop %v3281
    %v3283 = vmul.f32 %v3278, 1.442695
    %v3284 = vpow.pop %v3283
    %v3285 = vmul.f32 %v3279, 1.442695
    %v3286 = vpow.pop %v3285
    %v3287 = vmul.f32 %v3280, 1.442695
    %v3288 = vpow.pop %v3287
    %v3289 = vsel %vm722, %v3282, 0.0
    %3290 = vadd.xlane.f32.xlu0 %v3289
    %v3291 = vpop.xlane.xlu0 %3290
    %v3292 = vsel %vm722, %v3284, 0.0
    %3293 = vadd.xlane.f32.xlu0 %v3292
    %v3294 = vpop.xlane.xlu0 %3293
    %v3295 = vsel %vm722, %v3286, 0.0
    %3296 = vadd.xlane.f32.xlu0 %v3295
    %v3297 = vpop.xlane.xlu0 %3296
    %v3298 = vsel %vm722, %v3288, 0.0
    %3299 = vadd.xlane.f32.xlu0 %v3298
    %v3300 = vpop.xlane.xlu0 %3299
    %v3301 = vrcp.pop %v3291
    %v3302 = vrcp.pop %v3294
    %v3303 = vrcp.pop %v3297
    %v3304 = vrcp.pop %v3300
    %v3305 = vmul.f32 %v3282, %v3301
    %v3306 = vmul.f32 %v3284, %v3302
    %v3307 = vmul.f32 %v3286, %v3303
    %v3308 = vmul.f32 %v3288, %v3304
    %v3309 = vpack.c.bf16 %v3306, %v3305
    %v3310 = vpack.c.bf16 %v3308, %v3307
    %v3311 = vmul.f32 %v3062, %v778
    %v3312 = vmul.f32 %v3064, %v778
    %v3313 = vmul.f32 %v3067, %v778
    %v3314 = vmul.f32 %v3069, %v778
    %v3315 = vpack.c.bf16 %v3312, %v3311
    %v3316 = vpack.c.bf16 %v3314, %v3313
    %v3318 = vsel %vm722, %v3309, 0
    %v3321 = vsel %vm722, %v3310, 0
    %3323 = vmatpush.bf16.msra.mxu0 0
    %3324 = vmatpush.bf16.msra.mxu0 0
    %3325 = vmatpush.bf16.msra.mxu0 0
    %3326 = vmatpush.bf16.msra.mxu0 0
    %3327 = vmatpush.bf16.msra.mxu0 0
    %3328 = vmatpush.bf16.msra.mxu0 0
    %3329 = vmatpush.bf16.msra.mxu0 %v3316
    %3330 = vmatpush.bf16.msra.mxu0 %v3315
    %3331 = vmatmul.bf16.gmra.mxu0 %v3318
    %v3332 = vpop.f32.mrf.mxu0
    %v3333 = vadd.f32 0.0, %v3332
    %v3334 = vpop.f32.mrf.mxu0
    %v3335 = vadd.f32 0.0, %v3334
    %3336 = vmatmul.bf16.gmra.mxu0 %v3321
    %v3337 = vpop.f32.mrf.mxu0
    %v3338 = vadd.f32 0.0, %v3337
    %v3339 = vpop.f32.mrf.mxu0
    %v3340 = vadd.f32 0.0, %v3339
    %3341 = vdwg.mxu0
    %v3343 = vsel %vm722, %v3218, 0
    %v3346 = vsel %vm722, %v3219, 0
    %3348 = vmatpush.bf16.msra.mxu0 0
    %3349 = vmatpush.bf16.msra.mxu0 0
    %3350 = vmatpush.bf16.msra.mxu0 0
    %3351 = vmatpush.bf16.msra.mxu0 0
    %3352 = vmatpush.bf16.msra.mxu0 0
    %3353 = vmatpush.bf16.msra.mxu0 0
    %3354 = vmatpush.bf16.msra.mxu0 %v3225
    %3355 = vmatpush.bf16.msra.mxu0 %v3224
    %3356 = vmatmul.bf16.gmra.mxu0 %v3343
    %v3357 = vpop.f32.mrf.mxu0
    %v3358 = vadd.f32 %v3333, %v3357
    %v3359 = vpop.f32.mrf.mxu0
    %v3360 = vadd.f32 %v3335, %v3359
    %3361 = vmatmul.bf16.gmra.mxu0 %v3346
    %v3362 = vpop.f32.mrf.mxu0
    %v3363 = vadd.f32 %v3338, %v3362
    %v3364 = vpop.f32.mrf.mxu0
    %v3365 = vadd.f32 %v3340, %v3364
    %3366 = vdwg.mxu0
    %v3367 = vmul.f32 %v3095, %v924
    %v3368 = vmul.f32 %v3096, %v924
    %v3369 = vmul.f32 %v3097, %v924
    %v3370 = vmul.f32 %v3098, %v924
    %v3371 = vpack.c.bf16 %v3368, %v3367
    %v3372 = vpack.c.bf16 %v3370, %v3369
    %v3374 = vsel %vm190, %v3371, 0
    %v3377 = vsel %vm190, %v3372, 0
    %3379 = vmatpush.bf16.xpose.msra.mxu0 0
    %3380 = vmatpush.bf16.xpose.msra.mxu0 0
    %3381 = vmatpush.bf16.xpose.msra.mxu0 0
    %3382 = vmatpush.bf16.xpose.msra.mxu0 0
    %3383 = vmatpush.bf16.xpose.msra.mxu0 0
    %3384 = vmatpush.bf16.xpose.msra.mxu0 0
    %3385 = vmatpush.bf16.xpose.msra.mxu0 %v3145
    %3386 = vmatpush.bf16.xpose.msra.mxu0 %v3142
    %3387 = vmatmul.bf16.gmra.mxu0 %v3374
    %v3388 = vpop.f32.mrf.mxu0
    %v3389 = vadd.f32 0.0, %v3388
    %v3390 = vpop.f32.mrf.mxu0
    %v3391 = vadd.f32 0.0, %v3390
    %3392 = vmatmul.bf16.gmra.mxu0 %v3377
    %v3393 = vpop.f32.mrf.mxu0
    %v3394 = vadd.f32 0.0, %v3393
    %v3395 = vpop.f32.mrf.mxu0
    %v3396 = vadd.f32 0.0, %v3395
    %3397 = vdwg.mxu0
    %v3398 = vmul.f32 %v3389, 0.25
    %v3399 = vmul.f32 %v3391, 0.25
    %v3400 = vmul.f32 %v3394, 0.25
    %v3401 = vmul.f32 %v3396, 0.25
    %v3402 = vadd.f32 %v3398, %v141
    %v3403 = vadd.f32 %v3399, %v142
    %v3404 = vadd.f32 %v3400, %v143
    %v3405 = vadd.f32 %v3401, %v144
    %v3406 = vsel %vm722, %v3402, -inf
    %3407 = vmax.xlane.f32.xlu0 %v3406
    %v3408 = vpop.xlane.xlu0 %3407
    %v3409 = vsel %vm722, %v3403, -inf
    %3410 = vmax.xlane.f32.xlu0 %v3409
    %v3411 = vpop.xlane.xlu0 %3410
    %v3412 = vsel %vm722, %v3404, -inf
    %3413 = vmax.xlane.f32.xlu0 %v3412
    %v3414 = vpop.xlane.xlu0 %3413
    %v3415 = vsel %vm722, %v3405, -inf
    %3416 = vmax.xlane.f32.xlu0 %v3415
    %v3417 = vpop.xlane.xlu0 %3416
    %v3418 = vsub.f32 %v3402, %v3408
    %v3419 = vsub.f32 %v3403, %v3411
    %v3420 = vsub.f32 %v3404, %v3414
    %v3421 = vsub.f32 %v3405, %v3417
    %v3422 = vmul.f32 %v3418, 1.442695
    %v3423 = vpow.pop %v3422
    %v3424 = vmul.f32 %v3419, 1.442695
    %v3425 = vpow.pop %v3424
    %v3426 = vmul.f32 %v3420, 1.442695
    %v3427 = vpow.pop %v3426
    %v3428 = vmul.f32 %v3421, 1.442695
    %v3429 = vpow.pop %v3428
    %v3430 = vsel %vm722, %v3423, 0.0
    %3431 = vadd.xlane.f32.xlu0 %v3430
    %v3432 = vpop.xlane.xlu0 %3431
    %v3433 = vsel %vm722, %v3425, 0.0
    %3434 = vadd.xlane.f32.xlu0 %v3433
    %v3435 = vpop.xlane.xlu0 %3434
    %v3436 = vsel %vm722, %v3427, 0.0
    %3437 = vadd.xlane.f32.xlu0 %v3436
    %v3438 = vpop.xlane.xlu0 %3437
    %v3439 = vsel %vm722, %v3429, 0.0
    %3440 = vadd.xlane.f32.xlu0 %v3439
    %v3441 = vpop.xlane.xlu0 %3440
    %v3442 = vrcp.pop %v3432
    %v3443 = vrcp.pop %v3435
    %v3444 = vrcp.pop %v3438
    %v3445 = vrcp.pop %v3441
    %v3446 = vmul.f32 %v3423, %v3442
    %v3447 = vmul.f32 %v3425, %v3443
    %v3448 = vmul.f32 %v3427, %v3444
    %v3449 = vmul.f32 %v3429, %v3445
    %v3450 = vpack.c.bf16 %v3447, %v3446
    %v3451 = vpack.c.bf16 %v3449, %v3448
    %v3452 = vmul.f32 %v3062, %v924
    %v3453 = vmul.f32 %v3064, %v924
    %v3454 = vmul.f32 %v3067, %v924
    %v3455 = vmul.f32 %v3069, %v924
    %v3456 = vpack.c.bf16 %v3453, %v3452
    %v3457 = vpack.c.bf16 %v3455, %v3454
    %v3459 = vsel %vm722, %v3450, 0
    %v3462 = vsel %vm722, %v3451, 0
    %3464 = vmatpush.bf16.msra.mxu0 0
    %3465 = vmatpush.bf16.msra.mxu0 0
    %3466 = vmatpush.bf16.msra.mxu0 0
    %3467 = vmatpush.bf16.msra.mxu0 0
    %3468 = vmatpush.bf16.msra.mxu0 0
    %3469 = vmatpush.bf16.msra.mxu0 0
    %3470 = vmatpush.bf16.msra.mxu0 %v3457
    %3471 = vmatpush.bf16.msra.mxu0 %v3456
    %3472 = vmatmul.bf16.gmra.mxu0 %v3459
    %v3473 = vpop.f32.mrf.mxu0
    %v3474 = vadd.f32 0.0, %v3473
    %v3475 = vpop.f32.mrf.mxu0
    %v3476 = vadd.f32 0.0, %v3475
    %3477 = vmatmul.bf16.gmra.mxu0 %v3462
    %v3478 = vpop.f32.mrf.mxu0
    %v3479 = vadd.f32 0.0, %v3478
    %v3480 = vpop.f32.mrf.mxu0
    %v3481 = vadd.f32 0.0, %v3480
    %3482 = vdwg.mxu0
    %v3483 = vadd.f32 %v3358, %v3474
    %v3484 = vadd.f32 %v3360, %v3476
    %v3485 = vadd.f32 %v3363, %v3479
    %v3486 = vadd.f32 %v3365, %v3481
    %v3487 = vmul.f32 %v3095, %v1049
    %v3488 = vmul.f32 %v3096, %v1049
    %v3489 = vmul.f32 %v3097, %v1049
    %v3490 = vmul.f32 %v3098, %v1049
    %v3491 = vpack.c.bf16 %v3488, %v3487
    %v3492 = vpack.c.bf16 %v3490, %v3489
    %v3494 = vsel %vm190, %v3491, 0
    %v3497 = vsel %vm190, %v3492, 0
    %3499 = vmatpush.bf16.xpose.msra.mxu0 0
    %3500 = vmatpush.bf16.xpose.msra.mxu0 0
    %3501 = vmatpush.bf16.xpose.msra.mxu0 0
    %3502 = vmatpush.bf16.xpose.msra.mxu0 0
    %3503 = vmatpush.bf16.xpose.msra.mxu0 0
    %3504 = vmatpush.bf16.xpose.msra.mxu0 0
    %3505 = vmatpush.bf16.xpose.msra.mxu0 %v3145
    %3506 = vmatpush.bf16.xpose.msra.mxu0 %v3142
    %3507 = vmatmul.bf16.gmra.mxu0 %v3494
    %v3508 = vpop.f32.mrf.mxu0
    %v3509 = vadd.f32 0.0, %v3508
    %v3510 = vpop.f32.mrf.mxu0
    %v3511 = vadd.f32 0.0, %v3510
    %3512 = vmatmul.bf16.gmra.mxu0 %v3497
    %v3513 = vpop.f32.mrf.mxu0
    %v3514 = vadd.f32 0.0, %v3513
    %v3515 = vpop.f32.mrf.mxu0
    %v3516 = vadd.f32 0.0, %v3515
    %3517 = vdwg.mxu0
    %v3518 = vmul.f32 %v3509, 0.25
    %v3519 = vmul.f32 %v3511, 0.25
    %v3520 = vmul.f32 %v3514, 0.25
    %v3521 = vmul.f32 %v3516, 0.25
    %v3522 = vadd.f32 %v3518, %v141
    %v3523 = vadd.f32 %v3519, %v142
    %v3524 = vadd.f32 %v3520, %v143
    %v3525 = vadd.f32 %v3521, %v144
    %v3526 = vsel %vm722, %v3522, -inf
    %3527 = vmax.xlane.f32.xlu0 %v3526
    %v3528 = vpop.xlane.xlu0 %3527
    %v3529 = vsel %vm722, %v3523, -inf
    %3530 = vmax.xlane.f32.xlu0 %v3529
    %v3531 = vpop.xlane.xlu0 %3530
    %v3532 = vsel %vm722, %v3524, -inf
    %3533 = vmax.xlane.f32.xlu0 %v3532
    %v3534 = vpop.xlane.xlu0 %3533
    %v3535 = vsel %vm722, %v3525, -inf
    %3536 = vmax.xlane.f32.xlu0 %v3535
    %v3537 = vpop.xlane.xlu0 %3536
    %v3538 = vsub.f32 %v3522, %v3528
    %v3539 = vsub.f32 %v3523, %v3531
    %v3540 = vsub.f32 %v3524, %v3534
    %v3541 = vsub.f32 %v3525, %v3537
    %v3542 = vmul.f32 %v3538, 1.442695
    %v3543 = vpow.pop %v3542
    %v3544 = vmul.f32 %v3539, 1.442695
    %v3545 = vpow.pop %v3544
    %v3546 = vmul.f32 %v3540, 1.442695
    %v3547 = vpow.pop %v3546
    %v3548 = vmul.f32 %v3541, 1.442695
    %v3549 = vpow.pop %v3548
    %v3550 = vsel %vm722, %v3543, 0.0
    %3551 = vadd.xlane.f32.xlu0 %v3550
    %v3552 = vpop.xlane.xlu0 %3551
    %v3553 = vsel %vm722, %v3545, 0.0
    %3554 = vadd.xlane.f32.xlu0 %v3553
    %v3555 = vpop.xlane.xlu0 %3554
    %v3556 = vsel %vm722, %v3547, 0.0
    %3557 = vadd.xlane.f32.xlu0 %v3556
    %v3558 = vpop.xlane.xlu0 %3557
    %v3559 = vsel %vm722, %v3549, 0.0
    %3560 = vadd.xlane.f32.xlu0 %v3559
    %v3561 = vpop.xlane.xlu0 %3560
    %v3562 = vrcp.pop %v3552
    %v3563 = vrcp.pop %v3555
    %v3564 = vrcp.pop %v3558
    %v3565 = vrcp.pop %v3561
    %v3566 = vmul.f32 %v3543, %v3562
    %v3567 = vmul.f32 %v3545, %v3563
    %v3568 = vmul.f32 %v3547, %v3564
    %v3569 = vmul.f32 %v3549, %v3565
    %v3570 = vpack.c.bf16 %v3567, %v3566
    %v3571 = vpack.c.bf16 %v3569, %v3568
    %v3572 = vmul.f32 %v3062, %v1049
    %v3573 = vmul.f32 %v3064, %v1049
    %v3574 = vmul.f32 %v3067, %v1049
    %v3575 = vmul.f32 %v3069, %v1049
    %v3576 = vpack.c.bf16 %v3573, %v3572
    %v3577 = vpack.c.bf16 %v3575, %v3574
    %v3579 = vsel %vm722, %v3570, 0
    %v3582 = vsel %vm722, %v3571, 0
    %3584 = vmatpush.bf16.msra.mxu0 0
    %3585 = vmatpush.bf16.msra.mxu0 0
    %3586 = vmatpush.bf16.msra.mxu0 0
    %3587 = vmatpush.bf16.msra.mxu0 0
    %3588 = vmatpush.bf16.msra.mxu0 0
    %3589 = vmatpush.bf16.msra.mxu0 0
    %3590 = vmatpush.bf16.msra.mxu0 %v3577
    %3591 = vmatpush.bf16.msra.mxu0 %v3576
    %3592 = vmatmul.bf16.gmra.mxu0 %v3579
    %v3593 = vpop.f32.mrf.mxu0
    %v3594 = vadd.f32 0.0, %v3593
    %v3595 = vpop.f32.mrf.mxu0
    %v3596 = vadd.f32 0.0, %v3595
    %3597 = vmatmul.bf16.gmra.mxu0 %v3582
    %v3598 = vpop.f32.mrf.mxu0
    %v3599 = vadd.f32 0.0, %v3598
    %v3600 = vpop.f32.mrf.mxu0
    %v3601 = vadd.f32 0.0, %v3600
    %3602 = vdwg.mxu0
    %v3603 = vadd.f32 %v3483, %v3594
    %v3604 = vadd.f32 %v3484, %v3596
    %v3605 = vadd.f32 %v3485, %v3599
    %v3606 = vadd.f32 %v3486, %v3601
    %s3607 = scalar_lea.vmem %s10, 64
    %v3608 = vld [vmem:[%s3607] sm:$0xf]
    %v3609 = vld [vmem:[%s3607 + $0x4] sm:$0xf]
    %v3610 = vld [vmem:[%s3607 + $0x8] sm:$0xf]
    %v3611 = vld [vmem:[%s3607 + $0xc] sm:$0xf]
    %v3612 = vld [vmem:[%s3607 + $0x10] sm:$0xf]
    %v3613 = vld [vmem:[%s3607 + $0x14] sm:$0xf]
    %v3614 = vld [vmem:[%s3607 + $0x18] sm:$0xf]
    %v3615 = vld [vmem:[%s3607 + $0x1c] sm:$0xf]
    %v3616 = vpack.c.bf16 %v3604, %v3603
    %v3617 = vpack.c.bf16 %v3606, %v3605
    %v3626 = vunpack.c.l.b16 %v3608
    %v3627 = vunpack.c.l.b16 %v3609
    %v3628 = vunpack.c.l.b16 %v3610
    %v3629 = vunpack.c.l.b16 %v3611
    %v3630 = vunpack.c.l.b16 %v3612
    %v3631 = vunpack.c.l.b16 %v3613
    %v3632 = vunpack.c.l.b16 %v3614
    %v3633 = vunpack.c.l.b16 %v3615
    %v3634 = vpack.c.b16 %v3627, %v3626
    %v3635 = vpack.c.b16 %v3629, %v3628
    %v3636 = vpack.c.b16 %v3631, %v3630
    %v3637 = vpack.c.b16 %v3633, %v3632
    %v3643 = vsel %vm190, %v3616, 0
    %v3646 = vsel %vm190, %v3617, 0
    %3648 = vmatpush.bf16.msra.mxu0 0
    %3649 = vmatpush.bf16.msra.mxu0 0
    %3650 = vmatpush.bf16.msra.mxu0 0
    %3651 = vmatpush.bf16.msra.mxu0 0
    %3652 = vmatpush.bf16.msra.mxu0 %v3637
    %3653 = vmatpush.bf16.msra.mxu0 %v3636
    %3654 = vmatpush.bf16.msra.mxu0 %v3635
    %3655 = vmatpush.bf16.msra.mxu0 %v3634
    %3656 = vmatmul.bf16.gmra.mxu0 %v3643
    %v3657 = vpop.f32.mrf.mxu0
    %v3658 = vadd.f32 0.0, %v3657
    %v3659 = vpop.f32.mrf.mxu0
    %v3660 = vadd.f32 0.0, %v3659
    %3661 = vmatmul.bf16.gmra.mxu0 %v3646
    %v3662 = vpop.f32.mrf.mxu0
    %v3663 = vadd.f32 0.0, %v3662
    %v3664 = vpop.f32.mrf.mxu0
    %v3665 = vadd.f32 0.0, %v3664
    %3666 = vdwg.mxu0
    %v3667 = vadd.f32 %v2812, %v3658
    %v3668 = vadd.f32 %v2813, %v3660
    %v3669 = vadd.f32 %v2814, %v3663
    %v3670 = vadd.f32 %v2815, %v3665
    %v3671 = vld [vmem:[%s9 + $0x13] sm:$0x1]
    %v3672 = vperm.slane %v3671, 0
    %v3673 = vadd.f32 %v3667, %v3672
    %v3674 = vadd.f32 %v3668, %v3672
    %v3675 = vadd.f32 %v3669, %v3672
    %v3676 = vadd.f32 %v3670, %v3672
    %v3677 = vld [vmem:[%s9 + $0xd] sm:$0x1]
    %v3678 = vld [vmem:[%s9 + $0xe] sm:$0x1]
    %v3679 = vsel %vm190, %v3673, 0.0
    %3680 = vadd.xlane.f32.xlu0 %v3679
    %v3681 = vpop.xlane.xlu0 %3680
    %v3682 = vsel %vm190, %v3674, 0.0
    %3683 = vadd.xlane.f32.xlu0 %v3682
    %v3684 = vpop.xlane.xlu0 %3683
    %v3685 = vsel %vm190, %v3675, 0.0
    %3686 = vadd.xlane.f32.xlu0 %v3685
    %v3687 = vpop.xlane.xlu0 %3686
    %v3688 = vsel %vm190, %v3676, 0.0
    %3689 = vadd.xlane.f32.xlu0 %v3688
    %v3690 = vpop.xlane.xlu0 %3689
    %v3691 = vmul.f32 %v3681, %v209
    %v3692 = vmul.f32 %v3684, %v209
    %v3693 = vmul.f32 %v3687, %v209
    %v3694 = vmul.f32 %v3690, %v209
    %v3695 = vsub.f32 %v3673, %v3691
    %v3696 = vsub.f32 %v3674, %v3692
    %v3697 = vsub.f32 %v3675, %v3693
    %v3698 = vsub.f32 %v3676, %v3694
    %v3699 = vmul.f32 %v3695, %v3695
    %v3700 = vmul.f32 %v3696, %v3696
    %v3701 = vmul.f32 %v3697, %v3697
    %v3702 = vmul.f32 %v3698, %v3698
    %v3703 = vsel %vm190, %v3699, 0.0
    %3704 = vadd.xlane.f32.xlu0 %v3703
    %v3705 = vpop.xlane.xlu0 %3704
    %v3706 = vsel %vm190, %v3700, 0.0
    %3707 = vadd.xlane.f32.xlu0 %v3706
    %v3708 = vpop.xlane.xlu0 %3707
    %v3709 = vsel %vm190, %v3701, 0.0
    %3710 = vadd.xlane.f32.xlu0 %v3709
    %v3711 = vpop.xlane.xlu0 %3710
    %v3712 = vsel %vm190, %v3702, 0.0
    %3713 = vadd.xlane.f32.xlu0 %v3712
    %v3714 = vpop.xlane.xlu0 %3713
    %v3715 = vmul.f32 %v3705, %v209
    %v3716 = vmul.f32 %v3708, %v209
    %v3717 = vmul.f32 %v3711, %v209
    %v3718 = vmul.f32 %v3714, %v209
    %v3719 = vadd.f32 %v3715, 1e-05
    %v3720 = vadd.f32 %v3716, 1e-05
    %v3721 = vadd.f32 %v3717, 1e-05
    %v3722 = vadd.f32 %v3718, 1e-05
    %v3723 = vrsqrt.pop %v3719
    %v3724 = vmul.f32 %v3723, %v3719
    %v3725 = vmul.f32 %v3724, %v3723
    %v3726 = vmul.f32 0.5, %v3725
    %v3727 = vsub.f32 1.5, %v3726
    %v3728 = vmul.f32 %v3723, %v3727
    %vm3729 = vweird.f32 %v3719
    %vm3730 = vweird.f32 %v3723
    %vm3731 = vmor %vm3729, %vm3730
    %v3732 = vsel %vm3731, %v3723, %v3728
    %v3733 = vrsqrt.pop %v3720
    %v3734 = vmul.f32 %v3733, %v3720
    %v3735 = vmul.f32 %v3734, %v3733
    %v3736 = vmul.f32 0.5, %v3735
    %v3737 = vsub.f32 1.5, %v3736
    %v3738 = vmul.f32 %v3733, %v3737
    %vm3739 = vweird.f32 %v3720
    %vm3740 = vweird.f32 %v3733
    %vm3741 = vmor %vm3739, %vm3740
    %v3742 = vsel %vm3741, %v3733, %v3738
    %v3743 = vrsqrt.pop %v3721
    %v3744 = vmul.f32 %v3743, %v3721
    %v3745 = vmul.f32 %v3744, %v3743
    %v3746 = vmul.f32 0.5, %v3745
    %v3747 = vsub.f32 1.5, %v3746
    %v3748 = vmul.f32 %v3743, %v3747
    %vm3749 = vweird.f32 %v3721
    %vm3750 = vweird.f32 %v3743
    %vm3751 = vmor %vm3749, %vm3750
    %v3752 = vsel %vm3751, %v3743, %v3748
    %v3753 = vrsqrt.pop %v3722
    %v3754 = vmul.f32 %v3753, %v3722
    %v3755 = vmul.f32 %v3754, %v3753
    %v3756 = vmul.f32 0.5, %v3755
    %v3757 = vsub.f32 1.5, %v3756
    %v3758 = vmul.f32 %v3753, %v3757
    %vm3759 = vweird.f32 %v3722
    %vm3760 = vweird.f32 %v3753
    %vm3761 = vmor %vm3759, %vm3760
    %v3762 = vsel %vm3761, %v3753, %v3758
    %v3763 = vmul.f32 %v3695, %v3732
    %v3764 = vmul.f32 %v3696, %v3742
    %v3765 = vmul.f32 %v3697, %v3752
    %v3766 = vmul.f32 %v3698, %v3762
    %v3767 = vperm.slane %v3677, 0
    %v3768 = vmul.f32 %v3763, %v3767
    %v3769 = vmul.f32 %v3764, %v3767
    %v3770 = vmul.f32 %v3765, %v3767
    %v3771 = vmul.f32 %v3766, %v3767
    %v3772 = vperm.slane %v3678, 0
    %v3773 = vadd.f32 %v3768, %v3772
    %v3774 = vadd.f32 %v3769, %v3772
    %v3775 = vadd.f32 %v3770, %v3772
    %v3776 = vadd.f32 %v3771, %v3772
    %v3777 = vld [vmem:[%s9 + $0xf] sm:$0x1]
    %v3778 = vld [vmem:[%s9 + $0x10] sm:$0x1]
    %v3779 = vsel %vm190, %v2810, 0.0
    %3780 = vadd.xlane.f32.xlu0 %v3779
    %v3781 = vpop.xlane.xlu0 %3780
    %v3782 = vsel %vm190, %v2811, 0.0
    %3783 = vadd.xlane.f32.xlu0 %v3782
    %v3784 = vpop.xlane.xlu0 %3783
    %v3785 = vmul.f32 %v3781, %v209
    %v3786 = vmul.f32 %v3784, %v209
    %v3787 = vsub.f32 %v2810, %v3785
    %v3788 = vsub.f32 %v2811, %v3786
    %v3789 = vmul.f32 %v3787, %v3787
    %v3790 = vmul.f32 %v3788, %v3788
    %v3791 = vsel %vm190, %v3789, 0.0
    %3792 = vadd.xlane.f32.xlu0 %v3791
    %v3793 = vpop.xlane.xlu0 %3792
    %v3794 = vsel %vm190, %v3790, 0.0
    %3795 = vadd.xlane.f32.xlu0 %v3794
    %v3796 = vpop.xlane.xlu0 %3795
    %v3797 = vmul.f32 %v3793, %v209
    %v3798 = vmul.f32 %v3796, %v209
    %v3799 = vadd.f32 %v3797, 1e-05
    %v3800 = vadd.f32 %v3798, 1e-05
    %v3801 = vrsqrt.pop %v3799
    %v3802 = vmul.f32 %v3801, %v3799
    %v3803 = vmul.f32 %v3802, %v3801
    %v3804 = vmul.f32 0.5, %v3803
    %v3805 = vsub.f32 1.5, %v3804
    %v3806 = vmul.f32 %v3801, %v3805
    %vm3807 = vweird.f32 %v3799
    %vm3808 = vweird.f32 %v3801
    %vm3809 = vmor %vm3807, %vm3808
    %v3810 = vsel %vm3809, %v3801, %v3806
    %v3811 = vrsqrt.pop %v3800
    %v3812 = vmul.f32 %v3811, %v3800
    %v3813 = vmul.f32 %v3812, %v3811
    %v3814 = vmul.f32 0.5, %v3813
    %v3815 = vsub.f32 1.5, %v3814
    %v3816 = vmul.f32 %v3811, %v3815
    %vm3817 = vweird.f32 %v3800
    %vm3818 = vweird.f32 %v3811
    %vm3819 = vmor %vm3817, %vm3818
    %v3820 = vsel %vm3819, %v3811, %v3816
    %v3821 = vmul.f32 %v3787, %v3810
    %v3822 = vmul.f32 %v3788, %v3820
    %v3823 = vperm.slane %v3777, 0
    %v3824 = vmul.f32 %v3821, %v3823
    %v3825 = vmul.f32 %v3822, %v3823
    %v3826 = vperm.slane %v3778, 0
    %v3827 = vadd.f32 %v3824, %v3826
    %v3828 = vadd.f32 %v3825, %v3826
    %s3829 = scalar_lea.vmem [#allocation6], 64
    %v3830 = vld [vmem:[%s3829] sm:$0xf]
    %v3831 = vld [vmem:[%s3829 + $0x4] sm:$0xf]
    %v3832 = vld [vmem:[%s3829 + $0x8] sm:$0xf]
    %v3833 = vld [vmem:[%s3829 + $0xc] sm:$0xf]
    %v3834 = vld [vmem:[%s3829 + $0x10] sm:$0xf]
    %v3835 = vld [vmem:[%s3829 + $0x14] sm:$0xf]
    %v3836 = vld [vmem:[%s3829 + $0x18] sm:$0xf]
    %v3837 = vld [vmem:[%s3829 + $0x1c] sm:$0xf]
    %v3838 = vpack.c.bf16 %v3774, %v3773
    %v3839 = vpack.c.bf16 %v3776, %v3775
    %v3840 = vld [vmem:[#allocation9 + $0x5] ss:$0 sm:$0xff]
    %v3849 = vunpack.c.l.b16 %v3830
    %v3850 = vunpack.c.l.b16 %v3831
    %v3851 = vunpack.c.l.b16 %v3832
    %v3852 = vunpack.c.l.b16 %v3833
    %v3853 = vunpack.c.l.b16 %v3834
    %v3854 = vunpack.c.l.b16 %v3835
    %v3855 = vunpack.c.l.b16 %v3836
    %v3856 = vunpack.c.l.b16 %v3837
    %v3857 = vpack.c.b16 %v3850, %v3849
    %v3858 = vpack.c.b16 %v3852, %v3851
    %v3859 = vpack.c.b16 %v3854, %v3853
    %v3860 = vpack.c.b16 %v3856, %v3855
    %v3866 = vsel %vm190, %v3838, 0
    %v3869 = vsel %vm190, %v3839, 0
    %3871 = vmatpush.bf16.msra.mxu0 0
    %3872 = vmatpush.bf16.msra.mxu0 0
    %3873 = vmatpush.bf16.msra.mxu0 0
    %3874 = vmatpush.bf16.msra.mxu0 0
    %3875 = vmatpush.bf16.msra.mxu0 %v3860
    %3876 = vmatpush.bf16.msra.mxu0 %v3859
    %3877 = vmatpush.bf16.msra.mxu0 %v3858
    %3878 = vmatpush.bf16.msra.mxu0 %v3857
    %3879 = vmatmul.bf16.gmra.mxu0 %v3866
    %v3880 = vpop.f32.mrf.mxu0
    %v3881 = vadd.f32 %v3840, %v3880
    %v3882 = vpop.f32.mrf.mxu0
    %v3883 = vadd.f32 %v3840, %v3882
    %3884 = vmatmul.bf16.gmra.mxu0 %v3869
    %v3885 = vpop.f32.mrf.mxu0
    %v3886 = vadd.f32 %v3840, %v3885
    %v3887 = vpop.f32.mrf.mxu0
    %v3888 = vadd.f32 %v3840, %v3887
    %3889 = vdwg.mxu0
    %v3890 = vmul.f32 %v3881, %v132
    %v3891 = vmul.f32 %v3883, %v133
    %v3892 = vmul.f32 %v3886, %v134
    %v3893 = vmul.f32 %v3888, %v135
    %v3894 = vmul.f32 %v3881, %v608
    %v3895 = vmul.f32 %v3883, %v610
    %v3896 = vmul.f32 %v3886, %v612
    %v3897 = vmul.f32 %v3888, %v614
    %3902 = vrot.lane.b32.xlu0 %v3894, 64
    %v3903 = vpop.permute.xlu0 %3902
    %3904 = vrot.lane.b32.xlu0 %v3895, 64
    %v3905 = vpop.permute.xlu0 %3904
    %3906 = vrot.lane.b32.xlu0 %v3896, 64
    %v3907 = vpop.permute.xlu0 %3906
    %3908 = vrot.lane.b32.xlu0 %v3897, 64
    %v3909 = vpop.permute.xlu0 %3908
    %v3914 = vadd.f32 %v3890, %v3903
    %v3915 = vadd.f32 %v3891, %v3905
    %v3916 = vadd.f32 %v3892, %v3907
    %v3917 = vadd.f32 %v3893, %v3909
    %s3918 = scalar_lea.vmem [#allocation6], 96
    %v3919 = vld [vmem:[%s3918] sm:$0xf]
    %v3920 = vld [vmem:[%s3918 + $0x4] sm:$0xf]
    %v3921 = vld [vmem:[%s3918 + $0x8] sm:$0xf]
    %v3922 = vld [vmem:[%s3918 + $0xc] sm:$0xf]
    %v3923 = vld [vmem:[%s3918 + $0x10] sm:$0xf]
    %v3924 = vld [vmem:[%s3918 + $0x14] sm:$0xf]
    %v3925 = vld [vmem:[%s3918 + $0x18] sm:$0xf]
    %v3926 = vld [vmem:[%s3918 + $0x1c] sm:$0xf]
    %v3927 = vpack.c.bf16 %v3828, %v3827
    %v3928 = vld [vmem:[#allocation9 + $0x6] ss:$0 sm:$0xff]
    %v3937 = vunpack.c.l.b16 %v3919
    %v3938 = vunpack.c.l.b16 %v3920
    %v3939 = vunpack.c.l.b16 %v3921
    %v3940 = vunpack.c.l.b16 %v3922
    %v3941 = vunpack.c.l.b16 %v3923
    %v3942 = vunpack.c.l.b16 %v3924
    %v3943 = vunpack.c.l.b16 %v3925
    %v3944 = vunpack.c.l.b16 %v3926
    %v3945 = vpack.c.b16 %v3938, %v3937
    %v3946 = vpack.c.b16 %v3940, %v3939
    %v3947 = vpack.c.b16 %v3942, %v3941
    %v3948 = vpack.c.b16 %v3944, %v3943
    %v3954 = vsel %vm190, %v3927, 0
    %3956 = vmatpush.bf16.msra.mxu0 0
    %3957 = vmatpush.bf16.msra.mxu0 0
    %3958 = vmatpush.bf16.msra.mxu0 0
    %3959 = vmatpush.bf16.msra.mxu0 0
    %3960 = vmatpush.bf16.msra.mxu0 %v3948
    %3961 = vmatpush.bf16.msra.mxu0 %v3947
    %3962 = vmatpush.bf16.msra.mxu0 %v3946
    %3963 = vmatpush.bf16.msra.mxu0 %v3945
    %3964 = vmatmul.bf16.gmra.mxu0 %v3954
    %v3965 = vpop.f32.mrf.mxu0
    %v3966 = vadd.f32 %v3928, %v3965
    %v3967 = vpop.f32.mrf.mxu0
    %v3968 = vadd.f32 %v3928, %v3967
    %3969 = vdwg.mxu0
    %v3970 = vpack.c.bf16 %v3968, %v3966
    %v3971 = vmul.f32 %v3914, %v675
    %v3972 = vmul.f32 %v3915, %v675
    %v3973 = vmul.f32 %v3916, %v675
    %v3974 = vmul.f32 %v3917, %v675
    %v3975 = vpack.c.bf16 %v3972, %v3971
    %v3976 = vpack.c.bf16 %v3974, %v3973
    %v3978 = vsel %vm190, %v3975, 0
    %v3981 = vsel %vm190, %v3976, 0
    %v3984 = vsel %vm190, %v3970, 0
    %3986 = vmatpush.bf16.xpose.msra.mxu0 0
    %3987 = vmatpush.bf16.xpose.msra.mxu0 0
    %3988 = vmatpush.bf16.xpose.msra.mxu0 0
    %3989 = vmatpush.bf16.xpose.msra.mxu0 0
    %3990 = vmatpush.bf16.xpose.msra.mxu0 0
    %3991 = vmatpush.bf16.xpose.msra.mxu0 0
    %3992 = vmatpush.bf16.xpose.msra.mxu0 0
    %3993 = vmatpush.bf16.xpose.msra.mxu0 %v3984
    %3994 = vmatmul.bf16.gmra.mxu0 %v3978
    %v3995 = vpop.f32.mrf.mxu0
    %v3996 = vadd.f32 0.0, %v3995
    %v3997 = vpop.f32.mrf.mxu0
    %v3998 = vadd.f32 0.0, %v3997
    %3999 = vmatmul.bf16.gmra.mxu0 %v3981
    %v4000 = vpop.f32.mrf.mxu0
    %v4001 = vadd.f32 0.0, %v4000
    %v4002 = vpop.f32.mrf.mxu0
    %v4003 = vadd.f32 0.0, %v4002
    %4004 = vdwg.mxu0
    %v4005 = vmul.f32 %v3996, 0.25
    %v4006 = vmul.f32 %v3998, 0.25
    %v4007 = vmul.f32 %v4001, 0.25
    %v4008 = vmul.f32 %v4003, 0.25
    %v4009 = vadd.f32 %v4005, %v145
    %v4010 = vadd.f32 %v4006, %v146
    %v4011 = vadd.f32 %v4007, %v147
    %v4012 = vadd.f32 %v4008, %v148
    %v4013 = vsel %vm1575, %v4009, -inf
    %4014 = vmax.xlane.f32.xlu0 %v4013
    %v4015 = vpop.xlane.xlu0 %4014
    %v4016 = vsel %vm1575, %v4010, -inf
    %4017 = vmax.xlane.f32.xlu0 %v4016
    %v4018 = vpop.xlane.xlu0 %4017
    %v4019 = vsel %vm1575, %v4011, -inf
    %4020 = vmax.xlane.f32.xlu0 %v4019
    %v4021 = vpop.xlane.xlu0 %4020
    %v4022 = vsel %vm1575, %v4012, -inf
    %4023 = vmax.xlane.f32.xlu0 %v4022
    %v4024 = vpop.xlane.xlu0 %4023
    %v4025 = vsub.f32 %v4009, %v4015
    %v4026 = vsub.f32 %v4010, %v4018
    %v4027 = vsub.f32 %v4011, %v4021
    %v4028 = vsub.f32 %v4012, %v4024
    %v4029 = vmul.f32 %v4025, 1.442695
    %v4030 = vpow.pop %v4029
    %v4031 = vmul.f32 %v4026, 1.442695
    %v4032 = vpow.pop %v4031
    %v4033 = vmul.f32 %v4027, 1.442695
    %v4034 = vpow.pop %v4033
    %v4035 = vmul.f32 %v4028, 1.442695
    %v4036 = vpow.pop %v4035
    %v4037 = vsel %vm1575, %v4030, 0.0
    %4038 = vadd.xlane.f32.xlu0 %v4037
    %v4039 = vpop.xlane.xlu0 %4038
    %v4040 = vsel %vm1575, %v4032, 0.0
    %4041 = vadd.xlane.f32.xlu0 %v4040
    %v4042 = vpop.xlane.xlu0 %4041
    %v4043 = vsel %vm1575, %v4034, 0.0
    %4044 = vadd.xlane.f32.xlu0 %v4043
    %v4045 = vpop.xlane.xlu0 %4044
    %v4046 = vsel %vm1575, %v4036, 0.0
    %4047 = vadd.xlane.f32.xlu0 %v4046
    %v4048 = vpop.xlane.xlu0 %4047
    %v4049 = vrcp.pop %v4039
    %v4050 = vrcp.pop %v4042
    %v4051 = vrcp.pop %v4045
    %v4052 = vrcp.pop %v4048
    %v4053 = vmul.f32 %v4030, %v4049
    %v4054 = vmul.f32 %v4032, %v4050
    %v4055 = vmul.f32 %v4034, %v4051
    %v4056 = vmul.f32 %v4036, %v4052
    %v4057 = vpack.c.bf16 %v4054, %v4053
    %v4058 = vpack.c.bf16 %v4056, %v4055
    %v4059 = vmul.f32 %v3966, %v1623
    %v4060 = vmul.f32 %v3968, %v1623
    %v4061 = vpack.c.bf16 %v4060, %v4059
    %v4062 = vmul.f32 %v3914, %v778
    %v4063 = vmul.f32 %v3915, %v778
    %v4064 = vmul.f32 %v3916, %v778
    %v4065 = vmul.f32 %v3917, %v778
    %v4066 = vpack.c.bf16 %v4063, %v4062
    %v4067 = vpack.c.bf16 %v4065, %v4064
    %v4069 = vsel %vm190, %v4066, 0
    %v4072 = vsel %vm190, %v4067, 0
    %4074 = vmatpush.bf16.xpose.msra.mxu0 0
    %4075 = vmatpush.bf16.xpose.msra.mxu0 0
    %4076 = vmatpush.bf16.xpose.msra.mxu0 0
    %4077 = vmatpush.bf16.xpose.msra.mxu0 0
    %4078 = vmatpush.bf16.xpose.msra.mxu0 0
    %4079 = vmatpush.bf16.xpose.msra.mxu0 0
    %4080 = vmatpush.bf16.xpose.msra.mxu0 0
    %4081 = vmatpush.bf16.xpose.msra.mxu0 %v3984
    %4082 = vmatmul.bf16.gmra.mxu0 %v4069
    %v4083 = vpop.f32.mrf.mxu0
    %v4084 = vadd.f32 0.0, %v4083
    %v4085 = vpop.f32.mrf.mxu0
    %v4086 = vadd.f32 0.0, %v4085
    %4087 = vmatmul.bf16.gmra.mxu0 %v4072
    %v4088 = vpop.f32.mrf.mxu0
    %v4089 = vadd.f32 0.0, %v4088
    %v4090 = vpop.f32.mrf.mxu0
    %v4091 = vadd.f32 0.0, %v4090
    %4092 = vdwg.mxu0
    %v4093 = vmul.f32 %v4084, 0.25
    %v4094 = vmul.f32 %v4086, 0.25
    %v4095 = vmul.f32 %v4089, 0.25
    %v4096 = vmul.f32 %v4091, 0.25
    %v4097 = vadd.f32 %v4093, %v145
    %v4098 = vadd.f32 %v4094, %v146
    %v4099 = vadd.f32 %v4095, %v147
    %v4100 = vadd.f32 %v4096, %v148
    %v4101 = vsel %vm1575, %v4097, -inf
    %4102 = vmax.xlane.f32.xlu0 %v4101
    %v4103 = vpop.xlane.xlu0 %4102
    %v4104 = vsel %vm1575, %v4098, -inf
    %4105 = vmax.xlane.f32.xlu0 %v4104
    %v4106 = vpop.xlane.xlu0 %4105
    %v4107 = vsel %vm1575, %v4099, -inf
    %4108 = vmax.xlane.f32.xlu0 %v4107
    %v4109 = vpop.xlane.xlu0 %4108
    %v4110 = vsel %vm1575, %v4100, -inf
    %4111 = vmax.xlane.f32.xlu0 %v4110
    %v4112 = vpop.xlane.xlu0 %4111
    %v4113 = vsub.f32 %v4097, %v4103
    %v4114 = vsub.f32 %v4098, %v4106
    %v4115 = vsub.f32 %v4099, %v4109
    %v4116 = vsub.f32 %v4100, %v4112
    %v4117 = vmul.f32 %v4113, 1.442695
    %v4118 = vpow.pop %v4117
    %v4119 = vmul.f32 %v4114, 1.442695
    %v4120 = vpow.pop %v4119
    %v4121 = vmul.f32 %v4115, 1.442695
    %v4122 = vpow.pop %v4121
    %v4123 = vmul.f32 %v4116, 1.442695
    %v4124 = vpow.pop %v4123
    %v4125 = vsel %vm1575, %v4118, 0.0
    %4126 = vadd.xlane.f32.xlu0 %v4125
    %v4127 = vpop.xlane.xlu0 %4126
    %v4128 = vsel %vm1575, %v4120, 0.0
    %4129 = vadd.xlane.f32.xlu0 %v4128
    %v4130 = vpop.xlane.xlu0 %4129
    %v4131 = vsel %vm1575, %v4122, 0.0
    %4132 = vadd.xlane.f32.xlu0 %v4131
    %v4133 = vpop.xlane.xlu0 %4132
    %v4134 = vsel %vm1575, %v4124, 0.0
    %4135 = vadd.xlane.f32.xlu0 %v4134
    %v4136 = vpop.xlane.xlu0 %4135
    %v4137 = vrcp.pop %v4127
    %v4138 = vrcp.pop %v4130
    %v4139 = vrcp.pop %v4133
    %v4140 = vrcp.pop %v4136
    %v4141 = vmul.f32 %v4118, %v4137
    %v4142 = vmul.f32 %v4120, %v4138
    %v4143 = vmul.f32 %v4122, %v4139
    %v4144 = vmul.f32 %v4124, %v4140
    %v4145 = vpack.c.bf16 %v4142, %v4141
    %v4146 = vpack.c.bf16 %v4144, %v4143
    %v4147 = vmul.f32 %v3966, %v1714
    %v4148 = vmul.f32 %v3968, %v1714
    %v4149 = vpack.c.bf16 %v4148, %v4147
    %4151 = vrot.lane.b32.xlu0 %v4149, 64
    %v4152 = vpop.permute.xlu0 %4151
    %v4155 = vsel %vm1575, %v4145, 0
    %v4158 = vsel %vm1575, %v4146, 0
    %4160 = vmatpush.bf16.msra.mxu0 0
    %4161 = vmatpush.bf16.msra.mxu0 0
    %4162 = vmatpush.bf16.msra.mxu0 0
    %4163 = vmatpush.bf16.msra.mxu0 0
    %4164 = vmatpush.bf16.msra.mxu0 0
    %4165 = vmatpush.bf16.msra.mxu0 0
    %4166 = vmatpush.bf16.msra.mxu0 0
    %4167 = vmatpush.bf16.msra.mxu0 %v4152
    %4168 = vmatmul.bf16.gmra.mxu0 %v4155
    %v4169 = vpop.f32.mrf.mxu0
    %v4170 = vadd.f32 0.0, %v4169
    %v4171 = vpop.f32.mrf.mxu0
    %v4172 = vadd.f32 0.0, %v4171
    %4173 = vmatmul.bf16.gmra.mxu0 %v4158
    %v4174 = vpop.f32.mrf.mxu0
    %v4175 = vadd.f32 0.0, %v4174
    %v4176 = vpop.f32.mrf.mxu0
    %v4177 = vadd.f32 0.0, %v4176
    %4178 = vdwg.mxu0
    %4180 = vrot.lane.b32.xlu0 %v4061, 64
    %v4181 = vpop.permute.xlu0 %4180
    %v4184 = vsel %vm1575, %v4057, 0
    %v4187 = vsel %vm1575, %v4058, 0
    %4189 = vmatpush.bf16.msra.mxu0 0
    %4190 = vmatpush.bf16.msra.mxu0 0
    %4191 = vmatpush.bf16.msra.mxu0 0
    %4192 = vmatpush.bf16.msra.mxu0 0
    %4193 = vmatpush.bf16.msra.mxu0 0
    %4194 = vmatpush.bf16.msra.mxu0 0
    %4195 = vmatpush.bf16.msra.mxu0 0
    %4196 = vmatpush.bf16.msra.mxu0 %v4181
    %4197 = vmatmul.bf16.gmra.mxu0 %v4184
    %v4198 = vpop.f32.mrf.mxu0
    %v4199 = vadd.f32 %v4170, %v4198
    %v4200 = vpop.f32.mrf.mxu0
    %v4201 = vadd.f32 %v4172, %v4200
    %4202 = vmatmul.bf16.gmra.mxu0 %v4187
    %v4203 = vpop.f32.mrf.mxu0
    %v4204 = vadd.f32 %v4175, %v4203
    %v4205 = vpop.f32.mrf.mxu0
    %v4206 = vadd.f32 %v4177, %v4205
    %4207 = vdwg.mxu0
    %v4208 = vmul.f32 %v3914, %v924
    %v4209 = vmul.f32 %v3915, %v924
    %v4210 = vmul.f32 %v3916, %v924
    %v4211 = vmul.f32 %v3917, %v924
    %v4212 = vpack.c.bf16 %v4209, %v4208
    %v4213 = vpack.c.bf16 %v4211, %v4210
    %v4215 = vsel %vm190, %v4212, 0
    %v4218 = vsel %vm190, %v4213, 0
    %4220 = vmatpush.bf16.xpose.msra.mxu0 0
    %4221 = vmatpush.bf16.xpose.msra.mxu0 0
    %4222 = vmatpush.bf16.xpose.msra.mxu0 0
    %4223 = vmatpush.bf16.xpose.msra.mxu0 0
    %4224 = vmatpush.bf16.xpose.msra.mxu0 0
    %4225 = vmatpush.bf16.xpose.msra.mxu0 0
    %4226 = vmatpush.bf16.xpose.msra.mxu0 0
    %4227 = vmatpush.bf16.xpose.msra.mxu0 %v3984
    %4228 = vmatmul.bf16.gmra.mxu0 %v4215
    %v4229 = vpop.f32.mrf.mxu0
    %v4230 = vadd.f32 0.0, %v4229
    %v4231 = vpop.f32.mrf.mxu0
    %v4232 = vadd.f32 0.0, %v4231
    %4233 = vmatmul.bf16.gmra.mxu0 %v4218
    %v4234 = vpop.f32.mrf.mxu0
    %v4235 = vadd.f32 0.0, %v4234
    %v4236 = vpop.f32.mrf.mxu0
    %v4237 = vadd.f32 0.0, %v4236
    %4238 = vdwg.mxu0
    %v4239 = vmul.f32 %v4230, 0.25
    %v4240 = vmul.f32 %v4232, 0.25
    %v4241 = vmul.f32 %v4235, 0.25
    %v4242 = vmul.f32 %v4237, 0.25
    %v4243 = vadd.f32 %v4239, %v145
    %v4244 = vadd.f32 %v4240, %v146
    %v4245 = vadd.f32 %v4241, %v147
    %v4246 = vadd.f32 %v4242, %v148
    %v4247 = vsel %vm1575, %v4243, -inf
    %4248 = vmax.xlane.f32.xlu0 %v4247
    %v4249 = vpop.xlane.xlu0 %4248
    %v4250 = vsel %vm1575, %v4244, -inf
    %4251 = vmax.xlane.f32.xlu0 %v4250
    %v4252 = vpop.xlane.xlu0 %4251
    %v4253 = vsel %vm1575, %v4245, -inf
    %4254 = vmax.xlane.f32.xlu0 %v4253
    %v4255 = vpop.xlane.xlu0 %4254
    %v4256 = vsel %vm1575, %v4246, -inf
    %4257 = vmax.xlane.f32.xlu0 %v4256
    %v4258 = vpop.xlane.xlu0 %4257
    %v4259 = vsub.f32 %v4243, %v4249
    %v4260 = vsub.f32 %v4244, %v4252
    %v4261 = vsub.f32 %v4245, %v4255
    %v4262 = vsub.f32 %v4246, %v4258
    %v4263 = vmul.f32 %v4259, 1.442695
    %v4264 = vpow.pop %v4263
    %v4265 = vmul.f32 %v4260, 1.442695
    %v4266 = vpow.pop %v4265
    %v4267 = vmul.f32 %v4261, 1.442695
    %v4268 = vpow.pop %v4267
    %v4269 = vmul.f32 %v4262, 1.442695
    %v4270 = vpow.pop %v4269
    %v4271 = vsel %vm1575, %v4264, 0.0
    %4272 = vadd.xlane.f32.xlu0 %v4271
    %v4273 = vpop.xlane.xlu0 %4272
    %v4274 = vsel %vm1575, %v4266, 0.0
    %4275 = vadd.xlane.f32.xlu0 %v4274
    %v4276 = vpop.xlane.xlu0 %4275
    %v4277 = vsel %vm1575, %v4268, 0.0
    %4278 = vadd.xlane.f32.xlu0 %v4277
    %v4279 = vpop.xlane.xlu0 %4278
    %v4280 = vsel %vm1575, %v4270, 0.0
    %4281 = vadd.xlane.f32.xlu0 %v4280
    %v4282 = vpop.xlane.xlu0 %4281
    %v4283 = vrcp.pop %v4273
    %v4284 = vrcp.pop %v4276
    %v4285 = vrcp.pop %v4279
    %v4286 = vrcp.pop %v4282
    %v4287 = vmul.f32 %v4264, %v4283
    %v4288 = vmul.f32 %v4266, %v4284
    %v4289 = vmul.f32 %v4268, %v4285
    %v4290 = vmul.f32 %v4270, %v4286
    %v4291 = vpack.c.bf16 %v4288, %v4287
    %v4292 = vpack.c.bf16 %v4290, %v4289
    %v4293 = vmul.f32 %v3966, %v1863
    %v4294 = vmul.f32 %v3968, %v1863
    %v4295 = vpack.c.bf16 %v4294, %v4293
    %4297 = vrot.lane.b32.xlu0 %v4295, 64
    %v4298 = vpop.permute.xlu0 %4297
    %v4301 = vsel %vm1575, %v4291, 0
    %v4304 = vsel %vm1575, %v4292, 0
    %4306 = vmatpush.bf16.msra.mxu0 0
    %4307 = vmatpush.bf16.msra.mxu0 0
    %4308 = vmatpush.bf16.msra.mxu0 0
    %4309 = vmatpush.bf16.msra.mxu0 0
    %4310 = vmatpush.bf16.msra.mxu0 0
    %4311 = vmatpush.bf16.msra.mxu0 0
    %4312 = vmatpush.bf16.msra.mxu0 0
    %4313 = vmatpush.bf16.msra.mxu0 %v4298
    %4314 = vmatmul.bf16.gmra.mxu0 %v4301
    %v4315 = vpop.f32.mrf.mxu0
    %v4316 = vadd.f32 0.0, %v4315
    %v4317 = vpop.f32.mrf.mxu0
    %v4318 = vadd.f32 0.0, %v4317
    %4319 = vmatmul.bf16.gmra.mxu0 %v4304
    %v4320 = vpop.f32.mrf.mxu0
    %v4321 = vadd.f32 0.0, %v4320
    %v4322 = vpop.f32.mrf.mxu0
    %v4323 = vadd.f32 0.0, %v4322
    %4324 = vdwg.mxu0
    %v4325 = vadd.f32 %v4199, %v4316
    %v4326 = vadd.f32 %v4201, %v4318
    %v4327 = vadd.f32 %v4204, %v4321
    %v4328 = vadd.f32 %v4206, %v4323
    %v4329 = vmul.f32 %v3914, %v1049
    %v4330 = vmul.f32 %v3915, %v1049
    %v4331 = vmul.f32 %v3916, %v1049
    %v4332 = vmul.f32 %v3917, %v1049
    %v4333 = vpack.c.bf16 %v4330, %v4329
    %v4334 = vpack.c.bf16 %v4332, %v4331
    %v4336 = vsel %vm190, %v4333, 0
    %v4339 = vsel %vm190, %v4334, 0
    %4341 = vmatpush.bf16.xpose.msra.mxu0 0
    %4342 = vmatpush.bf16.xpose.msra.mxu0 0
    %4343 = vmatpush.bf16.xpose.msra.mxu0 0
    %4344 = vmatpush.bf16.xpose.msra.mxu0 0
    %4345 = vmatpush.bf16.xpose.msra.mxu0 0
    %4346 = vmatpush.bf16.xpose.msra.mxu0 0
    %4347 = vmatpush.bf16.xpose.msra.mxu0 0
    %4348 = vmatpush.bf16.xpose.msra.mxu0 %v3984
    %4349 = vmatmul.bf16.gmra.mxu0 %v4336
    %v4350 = vpop.f32.mrf.mxu0
    %v4351 = vadd.f32 0.0, %v4350
    %v4352 = vpop.f32.mrf.mxu0
    %v4353 = vadd.f32 0.0, %v4352
    %4354 = vmatmul.bf16.gmra.mxu0 %v4339
    %v4355 = vpop.f32.mrf.mxu0
    %v4356 = vadd.f32 0.0, %v4355
    %v4357 = vpop.f32.mrf.mxu0
    %v4358 = vadd.f32 0.0, %v4357
    %4359 = vdwg.mxu0
    %v4360 = vmul.f32 %v4351, 0.25
    %v4361 = vmul.f32 %v4353, 0.25
    %v4362 = vmul.f32 %v4356, 0.25
    %v4363 = vmul.f32 %v4358, 0.25
    %v4364 = vadd.f32 %v4360, %v145
    %v4365 = vadd.f32 %v4361, %v146
    %v4366 = vadd.f32 %v4362, %v147
    %v4367 = vadd.f32 %v4363, %v148
    %v4368 = vsel %vm1575, %v4364, -inf
    %4369 = vmax.xlane.f32.xlu0 %v4368
    %v4370 = vpop.xlane.xlu0 %4369
    %v4371 = vsel %vm1575, %v4365, -inf
    %4372 = vmax.xlane.f32.xlu0 %v4371
    %v4373 = vpop.xlane.xlu0 %4372
    %v4374 = vsel %vm1575, %v4366, -inf
    %4375 = vmax.xlane.f32.xlu0 %v4374
    %v4376 = vpop.xlane.xlu0 %4375
    %v4377 = vsel %vm1575, %v4367, -inf
    %4378 = vmax.xlane.f32.xlu0 %v4377
    %v4379 = vpop.xlane.xlu0 %4378
    %v4380 = vsub.f32 %v4364, %v4370
    %v4381 = vsub.f32 %v4365, %v4373
    %v4382 = vsub.f32 %v4366, %v4376
    %v4383 = vsub.f32 %v4367, %v4379
    %v4384 = vmul.f32 %v4380, 1.442695
    %v4385 = vpow.pop %v4384
    %v4386 = vmul.f32 %v4381, 1.442695
    %v4387 = vpow.pop %v4386
    %v4388 = vmul.f32 %v4382, 1.442695
    %v4389 = vpow.pop %v4388
    %v4390 = vmul.f32 %v4383, 1.442695
    %v4391 = vpow.pop %v4390
    %v4392 = vsel %vm1575, %v4385, 0.0
    %4393 = vadd.xlane.f32.xlu0 %v4392
    %v4394 = vpop.xlane.xlu0 %4393
    %v4395 = vsel %vm1575, %v4387, 0.0
    %4396 = vadd.xlane.f32.xlu0 %v4395
    %v4397 = vpop.xlane.xlu0 %4396
    %v4398 = vsel %vm1575, %v4389, 0.0
    %4399 = vadd.xlane.f32.xlu0 %v4398
    %v4400 = vpop.xlane.xlu0 %4399
    %v4401 = vsel %vm1575, %v4391, 0.0
    %4402 = vadd.xlane.f32.xlu0 %v4401
    %v4403 = vpop.xlane.xlu0 %4402
    %v4404 = vrcp.pop %v4394
    %v4405 = vrcp.pop %v4397
    %v4406 = vrcp.pop %v4400
    %v4407 = vrcp.pop %v4403
    %v4408 = vmul.f32 %v4385, %v4404
    %v4409 = vmul.f32 %v4387, %v4405
    %v4410 = vmul.f32 %v4389, %v4406
    %v4411 = vmul.f32 %v4391, %v4407
    %v4412 = vpack.c.bf16 %v4409, %v4408
    %v4413 = vpack.c.bf16 %v4411, %v4410
    %v4414 = vmul.f32 %v3966, %v1987
    %v4415 = vmul.f32 %v3968, %v1987
    %v4416 = vpack.c.bf16 %v4415, %v4414
    %4418 = vrot.lane.b32.xlu0 %v4416, 64
    %v4419 = vpop.permute.xlu0 %4418
    %v4422 = vsel %vm1575, %v4412, 0
    %v4425 = vsel %vm1575, %v4413, 0
    %4427 = vmatpush.bf16.msra.mxu0 0
    %4428 = vmatpush.bf16.msra.mxu0 0
    %4429 = vmatpush.bf16.msra.mxu0 0
    %4430 = vmatpush.bf16.msra.mxu0 0
    %4431 = vmatpush.bf16.msra.mxu0 0
    %4432 = vmatpush.bf16.msra.mxu0 0
    %4433 = vmatpush.bf16.msra.mxu0 0
    %4434 = vmatpush.bf16.msra.mxu0 %v4419
    %4435 = vmatmul.bf16.gmra.mxu0 %v4422
    %v4436 = vpop.f32.mrf.mxu0
    %v4437 = vadd.f32 0.0, %v4436
    %v4438 = vpop.f32.mrf.mxu0
    %v4439 = vadd.f32 0.0, %v4438
    %4440 = vmatmul.bf16.gmra.mxu0 %v4425
    %v4441 = vpop.f32.mrf.mxu0
    %v4442 = vadd.f32 0.0, %v4441
    %v4443 = vpop.f32.mrf.mxu0
    %v4444 = vadd.f32 0.0, %v4443
    %4445 = vdwg.mxu0
    %v4446 = vadd.f32 %v4325, %v4437
    %v4447 = vadd.f32 %v4326, %v4439
    %v4448 = vadd.f32 %v4327, %v4442
    %v4449 = vadd.f32 %v4328, %v4444
    %s4450 = scalar_lea.vmem %s10, 96
    %v4451 = vld [vmem:[%s4450] sm:$0xf]
    %v4452 = vld [vmem:[%s4450 + $0x4] sm:$0xf]
    %v4453 = vld [vmem:[%s4450 + $0x8] sm:$0xf]
    %v4454 = vld [vmem:[%s4450 + $0xc] sm:$0xf]
    %v4455 = vld [vmem:[%s4450 + $0x10] sm:$0xf]
    %v4456 = vld [vmem:[%s4450 + $0x14] sm:$0xf]
    %v4457 = vld [vmem:[%s4450 + $0x18] sm:$0xf]
    %v4458 = vld [vmem:[%s4450 + $0x1c] sm:$0xf]
    %v4459 = vpack.c.bf16 %v4447, %v4446
    %v4460 = vpack.c.bf16 %v4449, %v4448
    %v4469 = vunpack.c.l.b16 %v4451
    %v4470 = vunpack.c.l.b16 %v4452
    %v4471 = vunpack.c.l.b16 %v4453
    %v4472 = vunpack.c.l.b16 %v4454
    %v4473 = vunpack.c.l.b16 %v4455
    %v4474 = vunpack.c.l.b16 %v4456
    %v4475 = vunpack.c.l.b16 %v4457
    %v4476 = vunpack.c.l.b16 %v4458
    %v4477 = vpack.c.b16 %v4470, %v4469
    %v4478 = vpack.c.b16 %v4472, %v4471
    %v4479 = vpack.c.b16 %v4474, %v4473
    %v4480 = vpack.c.b16 %v4476, %v4475
    %v4486 = vsel %vm190, %v4459, 0
    %v4489 = vsel %vm190, %v4460, 0
    %4491 = vmatpush.bf16.msra.mxu0 0
    %4492 = vmatpush.bf16.msra.mxu0 0
    %4493 = vmatpush.bf16.msra.mxu0 0
    %4494 = vmatpush.bf16.msra.mxu0 0
    %4495 = vmatpush.bf16.msra.mxu0 %v4480
    %4496 = vmatpush.bf16.msra.mxu0 %v4479
    %4497 = vmatpush.bf16.msra.mxu0 %v4478
    %4498 = vmatpush.bf16.msra.mxu0 %v4477
    %4499 = vmatmul.bf16.gmra.mxu0 %v4486
    %v4500 = vpop.f32.mrf.mxu0
    %v4501 = vadd.f32 0.0, %v4500
    %v4502 = vpop.f32.mrf.mxu0
    %v4503 = vadd.f32 0.0, %v4502
    %4504 = vmatmul.bf16.gmra.mxu0 %v4489
    %v4505 = vpop.f32.mrf.mxu0
    %v4506 = vadd.f32 0.0, %v4505
    %v4507 = vpop.f32.mrf.mxu0
    %v4508 = vadd.f32 0.0, %v4507
    %4509 = vdwg.mxu0
    %v4510 = vadd.f32 %v3673, %v4501
    %v4511 = vadd.f32 %v3674, %v4503
    %v4512 = vadd.f32 %v3675, %v4506
    %v4513 = vadd.f32 %v3676, %v4508
    %v4514 = vld [vmem:[%s9 + $0x14] sm:$0x1]
    %v4515 = vperm.slane %v4514, 0
    %v4516 = vadd.f32 %v4510, %v4515
    %v4517 = vadd.f32 %v4511, %v4515
    %v4518 = vadd.f32 %v4512, %v4515
    %v4519 = vadd.f32 %v4513, %v4515
    %v4520 = vld [vmem:[%s9 + $0x11] sm:$0x1]
    %v4521 = vld [vmem:[%s9 + $0x12] sm:$0x1]
    %v4522 = vsel %vm190, %v4516, 0.0
    %4523 = vadd.xlane.f32.xlu0 %v4522
    %v4524 = vpop.xlane.xlu0 %4523
    %v4525 = vsel %vm190, %v4517, 0.0
    %4526 = vadd.xlane.f32.xlu0 %v4525
    %v4527 = vpop.xlane.xlu0 %4526
    %v4528 = vsel %vm190, %v4518, 0.0
    %4529 = vadd.xlane.f32.xlu0 %v4528
    %v4530 = vpop.xlane.xlu0 %4529
    %v4531 = vsel %vm190, %v4519, 0.0
    %4532 = vadd.xlane.f32.xlu0 %v4531
    %v4533 = vpop.xlane.xlu0 %4532
    %v4534 = vmul.f32 %v4524, %v209
    %v4535 = vmul.f32 %v4527, %v209
    %v4536 = vmul.f32 %v4530, %v209
    %v4537 = vmul.f32 %v4533, %v209
    %v4538 = vsub.f32 %v4516, %v4534
    %v4539 = vsub.f32 %v4517, %v4535
    %v4540 = vsub.f32 %v4518, %v4536
    %v4541 = vsub.f32 %v4519, %v4537
    %v4542 = vmul.f32 %v4538, %v4538
    %v4543 = vmul.f32 %v4539, %v4539
    %v4544 = vmul.f32 %v4540, %v4540
    %v4545 = vmul.f32 %v4541, %v4541
    %v4546 = vsel %vm190, %v4542, 0.0
    %4547 = vadd.xlane.f32.xlu0 %v4546
    %v4548 = vpop.xlane.xlu0 %4547
    %v4549 = vsel %vm190, %v4543, 0.0
    %4550 = vadd.xlane.f32.xlu0 %v4549
    %v4551 = vpop.xlane.xlu0 %4550
    %v4552 = vsel %vm190, %v4544, 0.0
    %4553 = vadd.xlane.f32.xlu0 %v4552
    %v4554 = vpop.xlane.xlu0 %4553
    %v4555 = vsel %vm190, %v4545, 0.0
    %4556 = vadd.xlane.f32.xlu0 %v4555
    %v4557 = vpop.xlane.xlu0 %4556
    %v4558 = vmul.f32 %v4548, %v209
    %v4559 = vmul.f32 %v4551, %v209
    %v4560 = vmul.f32 %v4554, %v209
    %v4561 = vmul.f32 %v4557, %v209
    %v4562 = vadd.f32 %v4558, 1e-05
    %v4563 = vadd.f32 %v4559, 1e-05
    %v4564 = vadd.f32 %v4560, 1e-05
    %v4565 = vadd.f32 %v4561, 1e-05
    %v4566 = vrsqrt.pop %v4562
    %v4567 = vmul.f32 %v4566, %v4562
    %v4568 = vmul.f32 %v4567, %v4566
    %v4569 = vmul.f32 0.5, %v4568
    %v4570 = vsub.f32 1.5, %v4569
    %v4571 = vmul.f32 %v4566, %v4570
    %vm4572 = vweird.f32 %v4562
    %vm4573 = vweird.f32 %v4566
    %vm4574 = vmor %vm4572, %vm4573
    %v4575 = vsel %vm4574, %v4566, %v4571
    %v4576 = vrsqrt.pop %v4563
    %v4577 = vmul.f32 %v4576, %v4563
    %v4578 = vmul.f32 %v4577, %v4576
    %v4579 = vmul.f32 0.5, %v4578
    %v4580 = vsub.f32 1.5, %v4579
    %v4581 = vmul.f32 %v4576, %v4580
    %vm4582 = vweird.f32 %v4563
    %vm4583 = vweird.f32 %v4576
    %vm4584 = vmor %vm4582, %vm4583
    %v4585 = vsel %vm4584, %v4576, %v4581
    %v4586 = vrsqrt.pop %v4564
    %v4587 = vmul.f32 %v4586, %v4564
    %v4588 = vmul.f32 %v4587, %v4586
    %v4589 = vmul.f32 0.5, %v4588
    %v4590 = vsub.f32 1.5, %v4589
    %v4591 = vmul.f32 %v4586, %v4590
    %vm4592 = vweird.f32 %v4564
    %vm4593 = vweird.f32 %v4586
    %vm4594 = vmor %vm4592, %vm4593
    %v4595 = vsel %vm4594, %v4586, %v4591
    %v4596 = vrsqrt.pop %v4565
    %v4597 = vmul.f32 %v4596, %v4565
    %v4598 = vmul.f32 %v4597, %v4596
    %v4599 = vmul.f32 0.5, %v4598
    %v4600 = vsub.f32 1.5, %v4599
    %v4601 = vmul.f32 %v4596, %v4600
    %vm4602 = vweird.f32 %v4565
    %vm4603 = vweird.f32 %v4596
    %vm4604 = vmor %vm4602, %vm4603
    %v4605 = vsel %vm4604, %v4596, %v4601
    %v4606 = vmul.f32 %v4538, %v4575
    %v4607 = vmul.f32 %v4539, %v4585
    %v4608 = vmul.f32 %v4540, %v4595
    %v4609 = vmul.f32 %v4541, %v4605
    %v4610 = vperm.slane %v4520, 0
    %v4611 = vmul.f32 %v3821, %v4610
    %v4612 = vmul.f32 %v3822, %v4610
    %v4613 = vmul.f32 %v4606, %v4610
    %v4614 = vmul.f32 %v4607, %v4610
    %v4615 = vmul.f32 %v4608, %v4610
    %v4616 = vmul.f32 %v4609, %v4610
    %v4617 = vperm.slane %v4521, 0
    %v4618 = vadd.f32 %v4611, %v4617
    %v4619 = vadd.f32 %v4612, %v4617
    %v4620 = vadd.f32 %v4613, %v4617
    %v4621 = vadd.f32 %v4614, %v4617
    %v4622 = vadd.f32 %v4615, %v4617
    %v4623 = vadd.f32 %v4616, %v4617
    %s4624 = scalar_lea.vmem [#allocation7], 64
    %v4625 = vld [vmem:[%s4624] sm:$0xff]
    %v4626 = vld [vmem:[%s4624 + $0x8] sm:$0xff]
    %v4627 = vld [vmem:[%s4624 + $0x10] sm:$0xff]
    %v4628 = vld [vmem:[%s4624 + $0x18] sm:$0xff]
    %v4629 = vld [vmem:[%s4624 + $0x20] sm:$0xff]
    %v4630 = vld [vmem:[%s4624 + $0x28] sm:$0xff]
    %v4631 = vld [vmem:[%s4624 + $0x30] sm:$0xff]
    %v4632 = vld [vmem:[%s4624 + $0x38] sm:$0xff]
    %v4633 = vpack.c.bf16 %v4619, %v4618
    %v4634 = vpack.c.bf16 %v4621, %v4620
    %v4635 = vpack.c.bf16 %v4623, %v4622
    %s4636 = scalar_lea.vmem [#allocation9], 7
    %v4637 = vld [vmem:[%s4636] ss:$8 sm:$0x3]
    %v4639 = vperm.slane %v4637, 0
    %v4640 = vperm.slane %v4637, 1
    %v4651 = vunpack.c.l.b16 %v4625
    %v4652 = vunpack.c.h.b16 %v4625
    %v4653 = vunpack.c.l.b16 %v4626
    %v4654 = vunpack.c.h.b16 %v4626
    %v4655 = vunpack.c.l.b16 %v4627
    %v4656 = vunpack.c.h.b16 %v4627
    %v4657 = vunpack.c.l.b16 %v4628
    %v4658 = vunpack.c.h.b16 %v4628
    %v4659 = vunpack.c.l.b16 %v4629
    %v4660 = vunpack.c.h.b16 %v4629
    %v4661 = vunpack.c.l.b16 %v4630
    %v4662 = vunpack.c.h.b16 %v4630
    %v4663 = vunpack.c.l.b16 %v4631
    %v4664 = vunpack.c.h.b16 %v4631
    %v4665 = vunpack.c.l.b16 %v4632
    %v4666 = vunpack.c.h.b16 %v4632
    %v4667 = vpack.c.b16 %v4653, %v4651
    %v4668 = vpack.c.b16 %v4654, %v4652
    %v4669 = vpack.c.b16 %v4657, %v4655
    %v4670 = vpack.c.b16 %v4658, %v4656
    %v4671 = vpack.c.b16 %v4661, %v4659
    %v4672 = vpack.c.b16 %v4662, %v4660
    %v4673 = vpack.c.b16 %v4665, %v4663
    %v4674 = vpack.c.b16 %v4666, %v4664
    %v4684 = vsel %vm190, %v4633, 0
    %v4687 = vsel %vm190, %v4634, 0
    %v4690 = vsel %vm190, %v4635, 0
    %4692 = vmatpush.bf16.msra.mxu0 0
    %4693 = vmatpush.bf16.msra.mxu0 0
    %4694 = vmatpush.bf16.msra.mxu0 0
    %4695 = vmatpush.bf16.msra.mxu0 0
    %4696 = vmatpush.bf16.msra.mxu0 %v4673
    %4697 = vmatpush.bf16.msra.mxu0 %v4671
    %4698 = vmatpush.bf16.msra.mxu0 %v4669
    %4699 = vmatpush.bf16.msra.mxu0 %v4667
    %4700 = vmatmul.bf16.gmra.mxu0 %v4684
    %v4701 = vpop.f32.mrf.mxu0
    %v4702 = vadd.f32 %v4639, %v4701
    %v4703 = vpop.f32.mrf.mxu0
    %v4704 = vadd.f32 %v4639, %v4703
    %4705 = vmatmul.bf16.gmra.mxu0 %v4687
    %v4706 = vpop.f32.mrf.mxu0
    %v4707 = vadd.f32 %v4639, %v4706
    %v4708 = vpop.f32.mrf.mxu0
    %v4709 = vadd.f32 %v4639, %v4708
    %4710 = vmatmul.bf16.gmra.mxu0 %v4690
    %v4711 = vpop.f32.mrf.mxu0
    %v4712 = vadd.f32 %v4639, %v4711
    %v4713 = vpop.f32.mrf.mxu0
    %v4714 = vadd.f32 %v4639, %v4713
    %4715 = vdwg.mxu0
    %4716 = vmatpush.bf16.msra.mxu0 0
    %4717 = vmatpush.bf16.msra.mxu0 0
    %4718 = vmatpush.bf16.msra.mxu0 0
    %4719 = vmatpush.bf16.msra.mxu0 0
    %4720 = vmatpush.bf16.msra.mxu0 %v4674
    %4721 = vmatpush.bf16.msra.mxu0 %v4672
    %4722 = vmatpush.bf16.msra.mxu0 %v4670
    %4723 = vmatpush.bf16.msra.mxu0 %v4668
    %4724 = vmatmul.bf16.gmra.mxu0 %v4684
    %v4725 = vpop.f32.mrf.mxu0
    %v4726 = vadd.f32 %v4640, %v4725
    %v4727 = vpop.f32.mrf.mxu0
    %v4728 = vadd.f32 %v4640, %v4727
    %4729 = vmatmul.bf16.gmra.mxu0 %v4687
    %v4730 = vpop.f32.mrf.mxu0
    %v4731 = vadd.f32 %v4640, %v4730
    %v4732 = vpop.f32.mrf.mxu0
    %v4733 = vadd.f32 %v4640, %v4732
    %4734 = vmatmul.bf16.gmra.mxu0 %v4690
    %v4735 = vpop.f32.mrf.mxu0
    %v4736 = vadd.f32 %v4640, %v4735
    %v4737 = vpop.f32.mrf.mxu0
    %v4738 = vadd.f32 %v4640, %v4737
    %4739 = vdwg.mxu0
    %v4740 = vmul.f32 %v4702, 0.5
    %v4741 = vmul.f32 %v4726, 0.5
    %v4742 = vmul.f32 %v4704, 0.5
    %v4743 = vmul.f32 %v4728, 0.5
    %v4744 = vmul.f32 %v4707, 0.5
    %v4745 = vmul.f32 %v4731, 0.5
    %v4746 = vmul.f32 %v4709, 0.5
    %v4747 = vmul.f32 %v4733, 0.5
    %v4748 = vmul.f32 %v4712, 0.5
    %v4749 = vmul.f32 %v4736, 0.5
    %v4750 = vmul.f32 %v4714, 0.5
    %v4751 = vmul.f32 %v4738, 0.5
    %v4752 = vmul.f32 %v4702, 0.70710677
    %v4753 = vmul.f32 %v4726, 0.70710677
    %v4754 = vmul.f32 %v4704, 0.70710677
    %v4755 = vmul.f32 %v4728, 0.70710677
    %v4756 = vmul.f32 %v4707, 0.70710677
    %v4757 = vmul.f32 %v4731, 0.70710677
    %v4758 = vmul.f32 %v4709, 0.70710677
    %v4759 = vmul.f32 %v4733, 0.70710677
    %v4760 = vmul.f32 %v4712, 0.70710677
    %v4761 = vmul.f32 %v4736, 0.70710677
    %v4762 = vmul.f32 %v4714, 0.70710677
    %v4763 = vmul.f32 %v4738, 0.70710677
    %v4764 = vand.u32 2147483647, %v4752
    %v4765 = vand.u32 2147483647, %v4753
    %v4766 = vand.u32 2147483647, %v4754
    %v4767 = vand.u32 2147483647, %v4755
    %v4768 = vand.u32 2147483647, %v4756
    %v4769 = vand.u32 2147483647, %v4757
    %v4770 = vand.u32 2147483647, %v4758
    %v4771 = vand.u32 2147483647, %v4759
    %v4772 = vand.u32 2147483647, %v4760
    %v4773 = vand.u32 2147483647, %v4761
    %v4774 = vand.u32 2147483647, %v4762
    %v4775 = vand.u32 2147483647, %v4763
    %v4776 = vmul.f32 %v4764, 0.3275911
    %v4777 = vmul.f32 %v4765, 0.3275911
    %v4778 = vmul.f32 %v4766, 0.3275911
    %v4779 = vmul.f32 %v4767, 0.3275911
    %v4780 = vmul.f32 %v4768, 0.3275911
    %v4781 = vmul.f32 %v4769, 0.3275911
    %v4782 = vmul.f32 %v4770, 0.3275911
    %v4783 = vmul.f32 %v4771, 0.3275911
    %v4784 = vmul.f32 %v4772, 0.3275911
    %v4785 = vmul.f32 %v4773, 0.3275911
    %v4786 = vmul.f32 %v4774, 0.3275911
    %v4787 = vmul.f32 %v4775, 0.3275911
    %v4788 = vadd.f32 %v4776, 1.0
    %v4789 = vadd.f32 %v4777, 1.0
    %v4790 = vadd.f32 %v4778, 1.0
    %v4791 = vadd.f32 %v4779, 1.0
    %v4792 = vadd.f32 %v4780, 1.0
    %v4793 = vadd.f32 %v4781, 1.0
    %v4794 = vadd.f32 %v4782, 1.0
    %v4795 = vadd.f32 %v4783, 1.0
    %v4796 = vadd.f32 %v4784, 1.0
    %v4797 = vadd.f32 %v4785, 1.0
    %v4798 = vadd.f32 %v4786, 1.0
    %v4799 = vadd.f32 %v4787, 1.0
    %v4800 = vrcp.pop %v4788
    %v4801 = vrcp.pop %v4789
    %v4802 = vrcp.pop %v4790
    %v4803 = vrcp.pop %v4791
    %v4804 = vrcp.pop %v4792
    %v4805 = vrcp.pop %v4793
    %v4806 = vrcp.pop %v4794
    %v4807 = vrcp.pop %v4795
    %v4808 = vrcp.pop %v4796
    %v4809 = vrcp.pop %v4797
    %v4810 = vrcp.pop %v4798
    %v4811 = vrcp.pop %v4799
    %v4812 = vmul.f32 %v4800, 1.0614054
    %v4813 = vmul.f32 %v4801, 1.0614054
    %v4814 = vmul.f32 %v4802, 1.0614054
    %v4815 = vmul.f32 %v4803, 1.0614054
    %v4816 = vmul.f32 %v4804, 1.0614054
    %v4817 = vmul.f32 %v4805, 1.0614054
    %v4818 = vmul.f32 %v4806, 1.0614054
    %v4819 = vmul.f32 %v4807, 1.0614054
    %v4820 = vmul.f32 %v4808, 1.0614054
    %v4821 = vmul.f32 %v4809, 1.0614054
    %v4822 = vmul.f32 %v4810, 1.0614054
    %v4823 = vmul.f32 %v4811, 1.0614054
    %v4824 = vadd.f32 %v4812, -1.4531521
    %v4825 = vadd.f32 %v4813, -1.4531521
    %v4826 = vadd.f32 %v4814, -1.4531521
    %v4827 = vadd.f32 %v4815, -1.4531521
    %v4828 = vadd.f32 %v4816, -1.4531521
    %v4829 = vadd.f32 %v4817, -1.4531521
    %v4830 = vadd.f32 %v4818, -1.4531521
    %v4831 = vadd.f32 %v4819, -1.4531521
    %v4832 = vadd.f32 %v4820, -1.4531521
    %v4833 = vadd.f32 %v4821, -1.4531521
    %v4834 = vadd.f32 %v4822, -1.4531521
    %v4835 = vadd.f32 %v4823, -1.4531521
    %v4836 = vmul.f32 %v4824, %v4800
    %v4837 = vmul.f32 %v4825, %v4801
    %v4838 = vmul.f32 %v4826, %v4802
    %v4839 = vmul.f32 %v4827, %v4803
    %v4840 = vmul.f32 %v4828, %v4804
    %v4841 = vmul.f32 %v4829, %v4805
    %v4842 = vmul.f32 %v4830, %v4806
    %v4843 = vmul.f32 %v4831, %v4807
    %v4844 = vmul.f32 %v4832, %v4808
    %v4845 = vmul.f32 %v4833, %v4809
    %v4846 = vmul.f32 %v4834, %v4810
    %v4847 = vmul.f32 %v4835, %v4811
    %v4848 = vadd.f32 %v4836, 1.4214138
    %v4849 = vadd.f32 %v4837, 1.4214138
    %v4850 = vadd.f32 %v4838, 1.4214138
    %v4851 = vadd.f32 %v4839, 1.4214138
    %v4852 = vadd.f32 %v4840, 1.4214138
    %v4853 = vadd.f32 %v4841, 1.4214138
    %v4854 = vadd.f32 %v4842, 1.4214138
    %v4855 = vadd.f32 %v4843, 1.4214138
    %v4856 = vadd.f32 %v4844, 1.4214138
    %v4857 = vadd.f32 %v4845, 1.4214138
    %v4858 = vadd.f32 %v4846, 1.4214138
    %v4859 = vadd.f32 %v4847, 1.4214138
    %v4860 = vmul.f32 %v4848, %v4800
    %v4861 = vmul.f32 %v4849, %v4801
    %v4862 = vmul.f32 %v4850, %v4802
    %v4863 = vmul.f32 %v4851, %v4803
    %v4864 = vmul.f32 %v4852, %v4804
    %v4865 = vmul.f32 %v4853, %v4805
    %v4866 = vmul.f32 %v4854, %v4806
    %v4867 = vmul.f32 %v4855, %v4807
    %v4868 = vmul.f32 %v4856, %v4808
    %v4869 = vmul.f32 %v4857, %v4809
    %v4870 = vmul.f32 %v4858, %v4810
    %v4871 = vmul.f32 %v4859, %v4811
    %v4872 = vadd.f32 %v4860, -0.28449672
    %v4873 = vadd.f32 %v4861, -0.28449672
    %v4874 = vadd.f32 %v4862, -0.28449672
    %v4875 = vadd.f32 %v4863, -0.28449672
    %v4876 = vadd.f32 %v4864, -0.28449672
    %v4877 = vadd.f32 %v4865, -0.28449672
    %v4878 = vadd.f32 %v4866, -0.28449672
    %v4879 = vadd.f32 %v4867, -0.28449672
    %v4880 = vadd.f32 %v4868, -0.28449672
    %v4881 = vadd.f32 %v4869, -0.28449672
    %v4882 = vadd.f32 %v4870, -0.28449672
    %v4883 = vadd.f32 %v4871, -0.28449672
    %v4884 = vmul.f32 %v4872, %v4800
    %v4885 = vmul.f32 %v4873, %v4801
    %v4886 = vmul.f32 %v4874, %v4802
    %v4887 = vmul.f32 %v4875, %v4803
    %v4888 = vmul.f32 %v4876, %v4804
    %v4889 = vmul.f32 %v4877, %v4805
    %v4890 = vmul.f32 %v4878, %v4806
    %v4891 = vmul.f32 %v4879, %v4807
    %v4892 = vmul.f32 %v4880, %v4808
    %v4893 = vmul.f32 %v4881, %v4809
    %v4894 = vmul.f32 %v4882, %v4810
    %v4895 = vmul.f32 %v4883, %v4811
    %v4896 = vadd.f32 %v4884, 0.2548296
    %v4897 = vadd.f32 %v4885, 0.2548296
    %v4898 = vadd.f32 %v4886, 0.2548296
    %v4899 = vadd.f32 %v4887, 0.2548296
    %v4900 = vadd.f32 %v4888, 0.2548296
    %v4901 = vadd.f32 %v4889, 0.2548296
    %v4902 = vadd.f32 %v4890, 0.2548296
    %v4903 = vadd.f32 %v4891, 0.2548296
    %v4904 = vadd.f32 %v4892, 0.2548296
    %v4905 = vadd.f32 %v4893, 0.2548296
    %v4906 = vadd.f32 %v4894, 0.2548296
    %v4907 = vadd.f32 %v4895, 0.2548296
    %v4908 = vmul.f32 %v4896, %v4800
    %v4909 = vmul.f32 %v4897, %v4801
    %v4910 = vmul.f32 %v4898, %v4802
    %v4911 = vmul.f32 %v4899, %v4803
    %v4912 = vmul.f32 %v4900, %v4804
    %v4913 = vmul.f32 %v4901, %v4805
    %v4914 = vmul.f32 %v4902, %v4806
    %v4915 = vmul.f32 %v4903, %v4807
    %v4916 = vmul.f32 %v4904, %v4808
    %v4917 = vmul.f32 %v4905, %v4809
    %v4918 = vmul.f32 %v4906, %v4810
    %v4919 = vmul.f32 %v4907, %v4811
    %v4920 = vsub.f32 0.0, %v4764
    %v4921 = vsub.f32 0.0, %v4765
    %v4922 = vsub.f32 0.0, %v4766
    %v4923 = vsub.f32 0.0, %v4767
    %v4924 = vsub.f32 0.0, %v4768
    %v4925 = vsub.f32 0.0, %v4769
    %v4926 = vsub.f32 0.0, %v4770
    %v4927 = vsub.f32 0.0, %v4771
    %v4928 = vsub.f32 0.0, %v4772
    %v4929 = vsub.f32 0.0, %v4773
    %v4930 = vsub.f32 0.0, %v4774
    %v4931 = vsub.f32 0.0, %v4775
    %v4932 = vmul.f32 %v4920, %v4764
    %v4933 = vmul.f32 %v4921, %v4765
    %v4934 = vmul.f32 %v4922, %v4766
    %v4935 = vmul.f32 %v4923, %v4767
    %v4936 = vmul.f32 %v4924, %v4768
    %v4937 = vmul.f32 %v4925, %v4769
    %v4938 = vmul.f32 %v4926, %v4770
    %v4939 = vmul.f32 %v4927, %v4771
    %v4940 = vmul.f32 %v4928, %v4772
    %v4941 = vmul.f32 %v4929, %v4773
    %v4942 = vmul.f32 %v4930, %v4774
    %v4943 = vmul.f32 %v4931, %v4775
    %v4944 = vmul.f32 %v4932, 1.442695
    %v4945 = vpow.pop %v4944
    %v4946 = vmul.f32 %v4933, 1.442695
    %v4947 = vpow.pop %v4946
    %v4948 = vmul.f32 %v4934, 1.442695
    %v4949 = vpow.pop %v4948
    %v4950 = vmul.f32 %v4935, 1.442695
    %v4951 = vpow.pop %v4950
    %v4952 = vmul.f32 %v4936, 1.442695
    %v4953 = vpow.pop %v4952
    %v4954 = vmul.f32 %v4937, 1.442695
    %v4955 = vpow.pop %v4954
    %v4956 = vmul.f32 %v4938, 1.442695
    %v4957 = vpow.pop %v4956
    %v4958 = vmul.f32 %v4939, 1.442695
    %v4959 = vpow.pop %v4958
    %v4960 = vmul.f32 %v4940, 1.442695
    %v4961 = vpow.pop %v4960
    %v4962 = vmul.f32 %v4941, 1.442695
    %v4963 = vpow.pop %v4962
    %v4964 = vmul.f32 %v4942, 1.442695
    %v4965 = vpow.pop %v4964
    %v4966 = vmul.f32 %v4943, 1.442695
    %v4967 = vpow.pop %v4966
    %v4968 = vmul.f32 %v4908, %v4945
    %v4969 = vmul.f32 %v4909, %v4947
    %v4970 = vmul.f32 %v4910, %v4949
    %v4971 = vmul.f32 %v4911, %v4951
    %v4972 = vmul.f32 %v4912, %v4953
    %v4973 = vmul.f32 %v4913, %v4955
    %v4974 = vmul.f32 %v4914, %v4957
    %v4975 = vmul.f32 %v4915, %v4959
    %v4976 = vmul.f32 %v4916, %v4961
    %v4977 = vmul.f32 %v4917, %v4963
    %v4978 = vmul.f32 %v4918, %v4965
    %v4979 = vmul.f32 %v4919, %v4967
    %v4980 = vsub.f32 1.0, %v4968
    %v4981 = vsub.f32 1.0, %v4969
    %v4982 = vsub.f32 1.0, %v4970
    %v4983 = vsub.f32 1.0, %v4971
    %v4984 = vsub.f32 1.0, %v4972
    %v4985 = vsub.f32 1.0, %v4973
    %v4986 = vsub.f32 1.0, %v4974
    %v4987 = vsub.f32 1.0, %v4975
    %v4988 = vsub.f32 1.0, %v4976
    %v4989 = vsub.f32 1.0, %v4977
    %v4990 = vsub.f32 1.0, %v4978
    %v4991 = vsub.f32 1.0, %v4979
    %vm4992 = vcmp.ge.f32.partialorder %v4752, 0.0
    %vm4993 = vcmp.ge.f32.partialorder %v4753, 0.0
    %vm4994 = vcmp.ge.f32.partialorder %v4754, 0.0
    %vm4995 = vcmp.ge.f32.partialorder %v4755, 0.0
    %vm4996 = vcmp.ge.f32.partialorder %v4756, 0.0
    %vm4997 = vcmp.ge.f32.partialorder %v4757, 0.0
    %vm4998 = vcmp.ge.f32.partialorder %v4758, 0.0
    %vm4999 = vcmp.ge.f32.partialorder %v4759, 0.0
    %vm5000 = vcmp.ge.f32.partialorder %v4760, 0.0
    %vm5001 = vcmp.ge.f32.partialorder %v4761, 0.0
    %vm5002 = vcmp.ge.f32.partialorder %v4762, 0.0
    %vm5003 = vcmp.ge.f32.partialorder %v4763, 0.0
    %v5004 = vsub.f32 0.0, %v4980
    %v5005 = vsub.f32 0.0, %v4981
    %v5006 = vsub.f32 0.0, %v4982
    %v5007 = vsub.f32 0.0, %v4983
    %v5008 = vsub.f32 0.0, %v4984
    %v5009 = vsub.f32 0.0, %v4985
    %v5010 = vsub.f32 0.0, %v4986
    %v5011 = vsub.f32 0.0, %v4987
    %v5012 = vsub.f32 0.0, %v4988
    %v5013 = vsub.f32 0.0, %v4989
    %v5014 = vsub.f32 0.0, %v4990
    %v5015 = vsub.f32 0.0, %v4991
    %v5016 = vsel %vm4992, %v4980, %v5004
    %v5017 = vsel %vm4993, %v4981, %v5005
    %v5018 = vsel %vm4994, %v4982, %v5006
    %v5019 = vsel %vm4995, %v4983, %v5007
    %v5020 = vsel %vm4996, %v4984, %v5008
    %v5021 = vsel %vm4997, %v4985, %v5009
    %v5022 = vsel %vm4998, %v4986, %v5010
    %v5023 = vsel %vm4999, %v4987, %v5011
    %v5024 = vsel %vm5000, %v4988, %v5012
    %v5025 = vsel %vm5001, %v4989, %v5013
    %v5026 = vsel %vm5002, %v4990, %v5014
    %v5027 = vsel %vm5003, %v4991, %v5015
    %v5028 = vadd.f32 %v5016, 1.0
    %v5029 = vadd.f32 %v5017, 1.0
    %v5030 = vadd.f32 %v5018, 1.0
    %v5031 = vadd.f32 %v5019, 1.0
    %v5032 = vadd.f32 %v5020, 1.0
    %v5033 = vadd.f32 %v5021, 1.0
    %v5034 = vadd.f32 %v5022, 1.0
    %v5035 = vadd.f32 %v5023, 1.0
    %v5036 = vadd.f32 %v5024, 1.0
    %v5037 = vadd.f32 %v5025, 1.0
    %v5038 = vadd.f32 %v5026, 1.0
    %v5039 = vadd.f32 %v5027, 1.0
    %v5040 = vmul.f32 %v4740, %v5028
    %v5041 = vmul.f32 %v4741, %v5029
    %v5042 = vmul.f32 %v4742, %v5030
    %v5043 = vmul.f32 %v4743, %v5031
    %v5044 = vmul.f32 %v4744, %v5032
    %v5045 = vmul.f32 %v4745, %v5033
    %v5046 = vmul.f32 %v4746, %v5034
    %v5047 = vmul.f32 %v4747, %v5035
    %v5048 = vmul.f32 %v4748, %v5036
    %v5049 = vmul.f32 %v4749, %v5037
    %v5050 = vmul.f32 %v4750, %v5038
    %v5051 = vmul.f32 %v4751, %v5039
    %s5052 = scalar_lea.vmem %s14, 128
    %v5053 = vld [vmem:[%s5052] sm:$0xf]
    %v5054 = vld [vmem:[%s5052 + $0x4] sm:$0xf]
    %v5055 = vld [vmem:[%s5052 + $0x8] sm:$0xf]
    %v5056 = vld [vmem:[%s5052 + $0xc] sm:$0xf]
    %v5057 = vld [vmem:[%s5052 + $0x10] sm:$0xf]
    %v5058 = vld [vmem:[%s5052 + $0x14] sm:$0xf]
    %v5059 = vld [vmem:[%s5052 + $0x18] sm:$0xf]
    %v5060 = vld [vmem:[%s5052 + $0x1c] sm:$0xf]
    %v5061 = vld [vmem:[%s5052 + $0x20] sm:$0xf]
    %v5062 = vld [vmem:[%s5052 + $0x24] sm:$0xf]
    %v5063 = vld [vmem:[%s5052 + $0x28] sm:$0xf]
    %v5064 = vld [vmem:[%s5052 + $0x2c] sm:$0xf]
    %v5065 = vld [vmem:[%s5052 + $0x30] sm:$0xf]
    %v5066 = vld [vmem:[%s5052 + $0x34] sm:$0xf]
    %v5067 = vld [vmem:[%s5052 + $0x38] sm:$0xf]
    %v5068 = vld [vmem:[%s5052 + $0x3c] sm:$0xf]
    %v5069 = vld [vmem:[%s5052 + $0x40] sm:$0xf]
    %v5070 = vld [vmem:[%s5052 + $0x44] sm:$0xf]
    %v5071 = vld [vmem:[%s5052 + $0x48] sm:$0xf]
    %v5072 = vld [vmem:[%s5052 + $0x4c] sm:$0xf]
    %v5073 = vld [vmem:[%s5052 + $0x50] sm:$0xf]
    %v5074 = vld [vmem:[%s5052 + $0x54] sm:$0xf]
    %v5075 = vld [vmem:[%s5052 + $0x58] sm:$0xf]
    %v5076 = vld [vmem:[%s5052 + $0x5c] sm:$0xf]
    %v5077 = vld [vmem:[%s5052 + $0x60] sm:$0xf]
    %v5078 = vld [vmem:[%s5052 + $0x64] sm:$0xf]
    %v5079 = vld [vmem:[%s5052 + $0x68] sm:$0xf]
    %v5080 = vld [vmem:[%s5052 + $0x6c] sm:$0xf]
    %v5081 = vld [vmem:[%s5052 + $0x70] sm:$0xf]
    %v5082 = vld [vmem:[%s5052 + $0x74] sm:$0xf]
    %v5083 = vld [vmem:[%s5052 + $0x78] sm:$0xf]
    %v5084 = vld [vmem:[%s5052 + $0x7c] sm:$0xf]
    %v5085 = vpack.c.bf16 %v5042, %v5040
    %v5086 = vpack.c.bf16 %v5043, %v5041
    %v5087 = vpack.c.bf16 %v5046, %v5044
    %v5088 = vpack.c.bf16 %v5047, %v5045
    %v5089 = vpack.c.bf16 %v5050, %v5048
    %v5090 = vpack.c.bf16 %v5051, %v5049
    %v5091 = vld [vmem:[%s9 + $0x15] sm:$0x1]
    %v5092 = vperm.slane %v5091, 0
    %v5125 = vunpack.c.l.b16 %v5053
    %v5126 = vunpack.c.l.b16 %v5054
    %v5127 = vunpack.c.l.b16 %v5055
    %v5128 = vunpack.c.l.b16 %v5056
    %v5129 = vunpack.c.l.b16 %v5057
    %v5130 = vunpack.c.l.b16 %v5058
    %v5131 = vunpack.c.l.b16 %v5059
    %v5132 = vunpack.c.l.b16 %v5060
    %v5133 = vunpack.c.l.b16 %v5061
    %v5134 = vunpack.c.l.b16 %v5062
    %v5135 = vunpack.c.l.b16 %v5063
    %v5136 = vunpack.c.l.b16 %v5064
    %v5137 = vunpack.c.l.b16 %v5065
    %v5138 = vunpack.c.l.b16 %v5066
    %v5139 = vunpack.c.l.b16 %v5067
    %v5140 = vunpack.c.l.b16 %v5068
    %v5141 = vunpack.c.l.b16 %v5069
    %v5142 = vunpack.c.l.b16 %v5070
    %v5143 = vunpack.c.l.b16 %v5071
    %v5144 = vunpack.c.l.b16 %v5072
    %v5145 = vunpack.c.l.b16 %v5073
    %v5146 = vunpack.c.l.b16 %v5074
    %v5147 = vunpack.c.l.b16 %v5075
    %v5148 = vunpack.c.l.b16 %v5076
    %v5149 = vunpack.c.l.b16 %v5077
    %v5150 = vunpack.c.l.b16 %v5078
    %v5151 = vunpack.c.l.b16 %v5079
    %v5152 = vunpack.c.l.b16 %v5080
    %v5153 = vunpack.c.l.b16 %v5081
    %v5154 = vunpack.c.l.b16 %v5082
    %v5155 = vunpack.c.l.b16 %v5083
    %v5156 = vunpack.c.l.b16 %v5084
    %v5157 = vpack.c.b16 %v5126, %v5125
    %v5158 = vpack.c.b16 %v5128, %v5127
    %v5159 = vpack.c.b16 %v5130, %v5129
    %v5160 = vpack.c.b16 %v5132, %v5131
    %v5161 = vpack.c.b16 %v5134, %v5133
    %v5162 = vpack.c.b16 %v5136, %v5135
    %v5163 = vpack.c.b16 %v5138, %v5137
    %v5164 = vpack.c.b16 %v5140, %v5139
    %v5165 = vpack.c.b16 %v5142, %v5141
    %v5166 = vpack.c.b16 %v5144, %v5143
    %v5167 = vpack.c.b16 %v5146, %v5145
    %v5168 = vpack.c.b16 %v5148, %v5147
    %v5169 = vpack.c.b16 %v5150, %v5149
    %v5170 = vpack.c.b16 %v5152, %v5151
    %v5171 = vpack.c.b16 %v5154, %v5153
    %v5172 = vpack.c.b16 %v5156, %v5155
    %5189 = vmatpush.bf16.msra.mxu0 %v5164
    %5190 = vmatpush.bf16.msra.mxu0 %v5163
    %5191 = vmatpush.bf16.msra.mxu0 %v5162
    %5192 = vmatpush.bf16.msra.mxu0 %v5161
    %5193 = vmatpush.bf16.msra.mxu0 %v5160
    %5194 = vmatpush.bf16.msra.mxu0 %v5159
    %5195 = vmatpush.bf16.msra.mxu0 %v5158
    %5196 = vmatpush.bf16.msra.mxu0 %v5157
    %5197 = vmatmul.bf16.gmra.mxu0 %v5085
    %v5198 = vpop.f32.mrf.mxu0
    %v5199 = vadd.f32 %v5092, %v5198
    %v5200 = vpop.f32.mrf.mxu0
    %v5201 = vadd.f32 %v5092, %v5200
    %5202 = vmatmul.bf16.gmra.mxu0 %v5087
    %v5203 = vpop.f32.mrf.mxu0
    %v5204 = vadd.f32 %v5092, %v5203
    %v5205 = vpop.f32.mrf.mxu0
    %v5206 = vadd.f32 %v5092, %v5205
    %5207 = vmatmul.bf16.gmra.mxu0 %v5089
    %v5208 = vpop.f32.mrf.mxu0
    %v5209 = vadd.f32 %v5092, %v5208
    %v5210 = vpop.f32.mrf.mxu0
    %v5211 = vadd.f32 %v5092, %v5210
    %5212 = vdwg.mxu0
    %5213 = vmatpush.bf16.msra.mxu0 %v5172
    %5214 = vmatpush.bf16.msra.mxu0 %v5171
    %5215 = vmatpush.bf16.msra.mxu0 %v5170
    %5216 = vmatpush.bf16.msra.mxu0 %v5169
    %5217 = vmatpush.bf16.msra.mxu0 %v5168
    %5218 = vmatpush.bf16.msra.mxu0 %v5167
    %5219 = vmatpush.bf16.msra.mxu0 %v5166
    %5220 = vmatpush.bf16.msra.mxu0 %v5165
    %5221 = vmatmul.bf16.gmra.mxu0 %v5086
    %v5222 = vpop.f32.mrf.mxu0
    %v5223 = vadd.f32 %v5199, %v5222
    %v5224 = vpop.f32.mrf.mxu0
    %v5225 = vadd.f32 %v5201, %v5224
    %5226 = vmatmul.bf16.gmra.mxu0 %v5088
    %v5227 = vpop.f32.mrf.mxu0
    %v5228 = vadd.f32 %v5204, %v5227
    %v5229 = vpop.f32.mrf.mxu0
    %v5230 = vadd.f32 %v5206, %v5229
    %5231 = vmatmul.bf16.gmra.mxu0 %v5090
    %v5232 = vpop.f32.mrf.mxu0
    %v5233 = vadd.f32 %v5209, %v5232
    %v5234 = vpop.f32.mrf.mxu0
    %v5235 = vadd.f32 %v5211, %v5234
    %5236 = vdwg.mxu0
    %v5237 = vadd.f32 %v2810, %v5223
    %v5238 = vadd.f32 %v2811, %v5225
    %v5239 = vadd.f32 %v4516, %v5228
    %v5240 = vadd.f32 %v4517, %v5230
    %v5241 = vadd.f32 %v4518, %v5233
    %v5242 = vadd.f32 %v4519, %v5235
    %v5243 = vld [vmem:[%s8 + $0x3] sm:$0x1]
    %v5244 = vld [vmem:[%s8 + $0x4] sm:$0x1]
    %v5245 = vsel %vm190, %v5237, 0.0
    %5246 = vadd.xlane.f32.xlu0 %v5245
    %v5247 = vpop.xlane.xlu0 %5246
    %v5248 = vsel %vm190, %v5238, 0.0
    %5249 = vadd.xlane.f32.xlu0 %v5248
    %v5250 = vpop.xlane.xlu0 %5249
    %v5251 = vmul.f32 %v5247, %v209
    %v5252 = vmul.f32 %v5250, %v209
    %v5253 = vsub.f32 %v5237, %v5251
    %v5254 = vsub.f32 %v5238, %v5252
    %v5255 = vmul.f32 %v5253, %v5253
    %v5256 = vmul.f32 %v5254, %v5254
    %v5257 = vsel %vm190, %v5255, 0.0
    %5258 = vadd.xlane.f32.xlu0 %v5257
    %v5259 = vpop.xlane.xlu0 %5258
    %v5260 = vsel %vm190, %v5256, 0.0
    %5261 = vadd.xlane.f32.xlu0 %v5260
    %v5262 = vpop.xlane.xlu0 %5261
    %v5263 = vmul.f32 %v5259, %v209
    %v5264 = vmul.f32 %v5262, %v209
    %v5265 = vadd.f32 %v5263, 1e-05
    %v5266 = vadd.f32 %v5264, 1e-05
    %v5267 = vrsqrt.pop %v5265
    %v5268 = vmul.f32 %v5267, %v5265
    %v5269 = vmul.f32 %v5268, %v5267
    %v5270 = vmul.f32 0.5, %v5269
    %v5271 = vsub.f32 1.5, %v5270
    %v5272 = vmul.f32 %v5267, %v5271
    %vm5273 = vweird.f32 %v5265
    %vm5274 = vweird.f32 %v5267
    %vm5275 = vmor %vm5273, %vm5274
    %v5276 = vsel %vm5275, %v5267, %v5272
    %v5277 = vrsqrt.pop %v5266
    %v5278 = vmul.f32 %v5277, %v5266
    %v5279 = vmul.f32 %v5278, %v5277
    %v5280 = vmul.f32 0.5, %v5279
    %v5281 = vsub.f32 1.5, %v5280
    %v5282 = vmul.f32 %v5277, %v5281
    %vm5283 = vweird.f32 %v5266
    %vm5284 = vweird.f32 %v5277
    %vm5285 = vmor %vm5283, %vm5284
    %v5286 = vsel %vm5285, %v5277, %v5282
    %v5287 = vmul.f32 %v5253, %v5276
    %v5288 = vmul.f32 %v5254, %v5286
    %v5289 = vperm.slane %v5243, 0
    %v5290 = vmul.f32 %v5287, %v5289
    %v5291 = vmul.f32 %v5288, %v5289
    %v5292 = vperm.slane %v5244, 0
    %v5293 = vadd.f32 %v5290, %v5292
    %v5294 = vadd.f32 %v5291, %v5292
    %v5295 = vsel %vm190, %v5239, 0.0
    %5296 = vadd.xlane.f32.xlu0 %v5295
    %v5297 = vpop.xlane.xlu0 %5296
    %v5298 = vsel %vm190, %v5240, 0.0
    %5299 = vadd.xlane.f32.xlu0 %v5298
    %v5300 = vpop.xlane.xlu0 %5299
    %v5301 = vsel %vm190, %v5241, 0.0
    %5302 = vadd.xlane.f32.xlu0 %v5301
    %v5303 = vpop.xlane.xlu0 %5302
    %v5304 = vsel %vm190, %v5242, 0.0
    %5305 = vadd.xlane.f32.xlu0 %v5304
    %v5306 = vpop.xlane.xlu0 %5305
    %v5307 = vmul.f32 %v5297, %v209
    %v5308 = vmul.f32 %v5300, %v209
    %v5309 = vmul.f32 %v5303, %v209
    %v5310 = vmul.f32 %v5306, %v209
    %v5311 = vsub.f32 %v5239, %v5307
    %v5312 = vsub.f32 %v5240, %v5308
    %v5313 = vsub.f32 %v5241, %v5309
    %v5314 = vsub.f32 %v5242, %v5310
    %v5315 = vmul.f32 %v5311, %v5311
    %v5316 = vmul.f32 %v5312, %v5312
    %v5317 = vmul.f32 %v5313, %v5313
    %v5318 = vmul.f32 %v5314, %v5314
    %v5319 = vsel %vm190, %v5315, 0.0
    %5320 = vadd.xlane.f32.xlu0 %v5319
    %v5321 = vpop.xlane.xlu0 %5320
    %v5322 = vsel %vm190, %v5316, 0.0
    %5323 = vadd.xlane.f32.xlu0 %v5322
    %v5324 = vpop.xlane.xlu0 %5323
    %v5325 = vsel %vm190, %v5317, 0.0
    %5326 = vadd.xlane.f32.xlu0 %v5325
    %v5327 = vpop.xlane.xlu0 %5326
    %v5328 = vsel %vm190, %v5318, 0.0
    %5329 = vadd.xlane.f32.xlu0 %v5328
    %v5330 = vpop.xlane.xlu0 %5329
    %v5331 = vmul.f32 %v5321, %v209
    %v5332 = vmul.f32 %v5324, %v209
    %v5333 = vmul.f32 %v5327, %v209
    %v5334 = vmul.f32 %v5330, %v209
    %v5335 = vadd.f32 %v5331, 1e-05
    %v5336 = vadd.f32 %v5332, 1e-05
    %v5337 = vadd.f32 %v5333, 1e-05
    %v5338 = vadd.f32 %v5334, 1e-05
    %v5339 = vrsqrt.pop %v5335
    %v5340 = vmul.f32 %v5339, %v5335
    %v5341 = vmul.f32 %v5340, %v5339
    %v5342 = vmul.f32 0.5, %v5341
    %v5343 = vsub.f32 1.5, %v5342
    %v5344 = vmul.f32 %v5339, %v5343
    %vm5345 = vweird.f32 %v5335
    %vm5346 = vweird.f32 %v5339
    %vm5347 = vmor %vm5345, %vm5346
    %v5348 = vsel %vm5347, %v5339, %v5344
    %v5349 = vrsqrt.pop %v5336
    %v5350 = vmul.f32 %v5349, %v5336
    %v5351 = vmul.f32 %v5350, %v5349
    %v5352 = vmul.f32 0.5, %v5351
    %v5353 = vsub.f32 1.5, %v5352
    %v5354 = vmul.f32 %v5349, %v5353
    %vm5355 = vweird.f32 %v5336
    %vm5356 = vweird.f32 %v5349
    %vm5357 = vmor %vm5355, %vm5356
    %v5358 = vsel %vm5357, %v5349, %v5354
    %v5359 = vrsqrt.pop %v5337
    %v5360 = vmul.f32 %v5359, %v5337
    %v5361 = vmul.f32 %v5360, %v5359
    %v5362 = vmul.f32 0.5, %v5361
    %v5363 = vsub.f32 1.5, %v5362
    %v5364 = vmul.f32 %v5359, %v5363
    %vm5365 = vweird.f32 %v5337
    %vm5366 = vweird.f32 %v5359
    %vm5367 = vmor %vm5365, %vm5366
    %v5368 = vsel %vm5367, %v5359, %v5364
    %v5369 = vrsqrt.pop %v5338
    %v5370 = vmul.f32 %v5369, %v5338
    %v5371 = vmul.f32 %v5370, %v5369
    %v5372 = vmul.f32 0.5, %v5371
    %v5373 = vsub.f32 1.5, %v5372
    %v5374 = vmul.f32 %v5369, %v5373
    %vm5375 = vweird.f32 %v5338
    %vm5376 = vweird.f32 %v5369
    %vm5377 = vmor %vm5375, %vm5376
    %v5378 = vsel %vm5377, %v5369, %v5374
    %v5379 = vmul.f32 %v5311, %v5348
    %v5380 = vmul.f32 %v5312, %v5358
    %v5381 = vmul.f32 %v5313, %v5368
    %v5382 = vmul.f32 %v5314, %v5378
    %v5383 = vmul.f32 %v5379, %v5289
    %v5384 = vmul.f32 %v5380, %v5289
    %v5385 = vmul.f32 %v5381, %v5289
    %v5386 = vmul.f32 %v5382, %v5289
    %v5387 = vadd.f32 %v5383, %v5292
    %v5388 = vadd.f32 %v5384, %v5292
    %v5389 = vadd.f32 %v5385, %v5292
    %v5390 = vadd.f32 %v5386, %v5292
    %v5391 = vld [vmem:[%s5] sm:$0xff]
    %v5392 = vld [vmem:[%s5 + $0x8] sm:$0xff]
    %v5393 = vld [vmem:[%s5 + $0x10] sm:$0xff]
    %v5394 = vld [vmem:[%s5 + $0x18] sm:$0xff]
    %vm5395 = vcmask 392192
    %v5397 = vsel %vm5395, %v5391, 0
    %v5400 = vsel %vm5395, %v5392, 0
    %v5403 = vsel %vm5395, %v5393, 0
    %v5406 = vsel %vm5395, %v5394, 0
    %5408 = vmatpush.msra.mxu0 0.0
    %5409 = vmatpush.msra.mxu0 0.0
    %5410 = vmatpush.msra.mxu0 0.0
    %5411 = vmatpush.msra.mxu0 0.0
    %5412 = vmatpush.msra.mxu0 0.0
    %5413 = vmatpush.msra.mxu0 0.0
    %5414 = vmatpush.msra.mxu0 0.0
    %5415 = vmatpush.msra.mxu0 0.0
    %5416 = vmatpush.msra.mxu0 0.0
    %5417 = vmatpush.msra.mxu0 0.0
    %5418 = vmatpush.msra.mxu0 %v5390
    %5419 = vmatpush.msra.mxu0 %v5389
    %5420 = vmatpush.msra.mxu0 %v5388
    %5421 = vmatpush.msra.mxu0 %v5387
    %5422 = vmatpush.msra.mxu0 %v5294
    %5423 = vmatpush.msra.mxu0 %v5293
    %5424 = vmatmul.f32.gmra.mxu0 %v5397
    %v5425 = vpop.f32.mrf.mxu0
    %v5426 = vadd.f32 0.0, %v5425
    %5427 = vmatmul.f32.gmra.mxu0 %v5400
    %v5428 = vpop.f32.mrf.mxu0
    %v5429 = vadd.f32 0.0, %v5428
    %5430 = vmatmul.f32.gmra.mxu0 %v5403
    %v5431 = vpop.f32.mrf.mxu0
    %v5432 = vadd.f32 0.0, %v5431
    %5433 = vmatmul.f32.gmra.mxu0 %v5406
    %v5434 = vpop.f32.mrf.mxu0
    %v5435 = vadd.f32 0.0, %v5434
    %5436 = vdwg.mxu0
    %5437 = vst.msk [vmem:[%s16] sm:$0xff] %vm190, %v5426
    %5438 = vst.msk [vmem:[%s16 + $0x8] sm:$0xff] %vm190, %v5429
    %5439 = vst.msk [vmem:[%s16 + $0x10] sm:$0xff] %vm190, %v5432
    %5440 = vst.msk [vmem:[%s16 + $0x18] sm:$0xff] %vm190, %v5435
    %5441 = vst.msk [vmem:[%s17] sm:$0xff] %vm158, %v149
    %5442 = vst.msk [vmem:[%s17 + $0x8] sm:$0xff] %vm158, %v150
    %5443 = vst.msk [vmem:[%s17 + $0x10] sm:$0xff] %vm158, %v151
    %5444 = vst.msk [vmem:[%s17 + $0x18] sm:$0xff] %vm158, %v152
    %5445 = vst.msk [vmem:[%s16 + $0x20] sm:$0xff] %vm190, %v5426
    %5446 = vst.msk [vmem:[%s16 + $0x28] sm:$0xff] %vm190, %v5429
    %5447 = vst.msk [vmem:[%s16 + $0x30] sm:$0xff] %vm190, %v5432
    %5448 = vst.msk [vmem:[%s16 + $0x38] sm:$0xff] %vm190, %v5435
    %5449 = vst.msk [vmem:[%s17 + $0x20] sm:$0xff] %vm158, %v149
    %5450 = vst.msk [vmem:[%s17 + $0x28] sm:$0xff] %vm158, %v150
    %5451 = vst.msk [vmem:[%s17 + $0x30] sm:$0xff] %vm158, %v151
    %5452 = vst.msk [vmem:[%s17 + $0x38] sm:$0xff] %vm158, %v152
    %5453 = vst.msk [vmem:[%s16 + $0x40] sm:$0xff] %vm190, %v5426
    %5454 = vst.msk [vmem:[%s16 + $0x48] sm:$0xff] %vm190, %v5429
    %5455 = vst.msk [vmem:[%s16 + $0x50] sm:$0xff] %vm190, %v5432
    %5456 = vst.msk [vmem:[%s16 + $0x58] sm:$0xff] %vm190, %v5435
    %5457 = vst.msk [vmem:[%s17 + $0x40] sm:$0xff] %vm158, %v149
    %5458 = vst.msk [vmem:[%s17 + $0x48] sm:$0xff] %vm158, %v150
    %5459 = vst.msk [vmem:[%s17 + $0x50] sm:$0xff] %vm158, %v151
    %5460 = vst.msk [vmem:[%s17 + $0x58] sm:$0xff] %vm158, %v152
    %5461 = vst.msk [vmem:[%s16 + $0x60] sm:$0xff] %vm190, %v5426
    %5462 = vst.msk [vmem:[%s16 + $0x68] sm:$0xff] %vm190, %v5429
    %5463 = vst.msk [vmem:[%s16 + $0x70] sm:$0xff] %vm190, %v5432
    %5464 = vst.msk [vmem:[%s16 + $0x78] sm:$0xff] %vm190, %v5435
    %5465 = vst.msk [vmem:[%s17 + $0x60] sm:$0xff] %vm158, %v149
    %5466 = vst.msk [vmem:[%s17 + $0x68] sm:$0xff] %vm158, %v150
    %5467 = vst.msk [vmem:[%s17 + $0x70] sm:$0xff] %vm158, %v151
    %5468 = vst.msk [vmem:[%s17 + $0x78] sm:$0xff] %vm158, %v152
    // Predicated region
    $region86: #{forward.1} parent=1 // pred_check
      _
    $region87: #{forward.1} parent=1 // pred_check_branch
      %5470 = sbr.rel (0) target = $region89
    $region88: #{forward.1} parent=1 // pred_region
      _
    $region89: #{forward.1} parent=1 // pred_fallthru
      _
    // Predicated region
    $region90: #{forward.1} parent=1 // pred_check
      _
    $region91: #{forward.1} parent=1 // pred_check_branch
      %5472 = sbr.rel (0) target = $region93
    $region92: #{forward.1} parent=1 // pred_region
      _
    $region93: #{forward.1} parent=1 // pred_fallthru
      _
    // Predicated region
    $region94: #{forward.1} parent=1 // pred_check
      _
    $region95: #{forward.1} parent=1 // pred_check_branch
      %5474 = sbr.rel (0) target = $region97
    $region96: #{forward.1} parent=1 // pred_region
      _
    $region97: #{forward.1} parent=1 // pred_fallthru
      _
    // Predicated region
    $region98: #{forward.1} parent=1 // pred_check
      _
    $region99: #{forward.1} parent=1 // pred_check_branch
      %5476 = sbr.rel (0) target = $region101
    $region100: #{forward.1} parent=1 // pred_region
      _
    $region101: #{forward.1} parent=1 // pred_fallthru
      _
    %5477 = vsyncpa [#allocation3], 1
    %5478 = vsyncpa [#allocation5], 1
    %5479 = vsyncpa [#allocation8], 1

</llo_original>
